<compile_context>
chip_gen: v7x
topology: tpu7x:2x2x1
jax: 0.10.0
libtpu: 0.0.40
codegen_flags: <defaults>
</compile_context>

<pallas_src>
import functools

import jax
import jax.numpy as jnp
import numpy as np
from jax.experimental import pallas as pl
from jax.experimental.pallas import tpu as pltpu


# ----------------------------------------------------------------------------
# Fused matmul kernels:  out = cast( relu( (A @ B) * scale + shift ) )
# scale/shift arrive as one (2, tn) operand: row 0 = scale, row 1 = shift.
# ----------------------------------------------------------------------------
def _mm_kernel_1k(a_ref, b_ref, ss_ref, o_ref, *, relu):
    prod = jnp.dot(a_ref[...], b_ref[...], preferred_element_type=jnp.float32)
    y = prod * ss_ref[0:1, :] + ss_ref[1:2, :]
    if relu:
        y = jnp.maximum(y, 0.0)
    o_ref[...] = y.astype(o_ref.dtype)


def _mm_kernel_mk(a_ref, b_ref, ss_ref, o_ref, acc_ref, *, relu, nk):
    k = pl.program_id(2)

    @pl.when(k == 0)
    def _init():
        acc_ref[...] = jnp.zeros_like(acc_ref)

    acc_ref[...] += jnp.dot(a_ref[...], b_ref[...],
                            preferred_element_type=jnp.float32)

    @pl.when(k == nk - 1)
    def _finish():
        y = acc_ref[...] * ss_ref[0:1, :] + ss_ref[1:2, :]
        if relu:
            y = jnp.maximum(y, 0.0)
        o_ref[...] = y.astype(o_ref.dtype)


def _round_up(x, m):
    return (x + m - 1) // m * m


def _num_tensorcores():
    # v7x has 2 TensorCores per chip; v5e/v6e have 1.  Conservative fallback: 1.
    try:
        kind = jax.devices()[0].device_kind.lower()
    except Exception:
        return 1
    return 2 if ("v7" in kind or "tpu7" in kind) else 1


_NUM_TC = _num_tensorcores()


def _pick_tm(mp):
    if _NUM_TC >= 2:
        # v7x: expose >= 2 blocks on the parallel M axis so both TCs get work.
        for tm in (512, 256, 128):
            if mp % tm == 0 and mp // tm >= 2:
                return tm
        return 128
    # single TC (v5e/v6e): biggest tile that divides -> fewest grid steps.
    for tm in (512, 256, 128):
        if mp % tm == 0:
            return tm
    return 128


_MAX_TK = 2048  # single K-step up to this size (all layers here are <= 1920)

# VMEM budget at the worst case here (tm=512, tk=1920, tn=128, bf16 out):
#   A: 2 x 512x1920 bf16 = 3.75 MiB,  B: 2 x 1920x128 bf16 = 0.94 MiB,
#   out: 2 x 512x128 (<=f32) = 0.5 MiB,  scratch/scale: < 0.3 MiB  ->  ~5.5 MiB.
# 32 MiB leaves ample headroom and is within the scoped default on every gen
# (v7x halves physical VMEM to 64 MiB, so re-derive this if tm/_MAX_TK grow).
_VMEM_LIMIT_BYTES = 32 * 1024 * 1024


def fused_matmul(a, b, scale=None, shift=None, relu=False,
                 out_dtype=jnp.bfloat16):
    """cast(relu((a @ b) * scale + shift)); bf16 operands, f32 MXU accumulation."""
    M, K = a.shape
    K2, N = b.shape
    assert K == K2
    if scale is None:
        scale = jnp.ones((N,), jnp.float32)
    if shift is None:
        shift = jnp.zeros((N,), jnp.float32)
    ss = jnp.stack([jnp.reshape(scale, (N,)).astype(jnp.float32),
                    jnp.reshape(shift, (N,)).astype(jnp.float32)], axis=0)  # (2, N)

    a = a.astype(jnp.bfloat16)
    b = b.astype(jnp.bfloat16)

    # Pad M, K, N to multiples of 128: K is the lane dim of A / sublane dim of B,
    # N padding keeps the output store lane-dense (no masked vst).  Zero MACs on
    # the padded columns are cheap on an unsaturated MXU.
    Mp = _round_up(M, 128)
    Kp = _round_up(K, 128)
    Np = _round_up(N, 128)
    if (Mp, Kp) != (M, K):
        a = jnp.pad(a, ((0, Mp - M), (0, Kp - K)))
    if (Kp, Np) != (K, N):
        b = jnp.pad(b, ((0, Kp - K), (0, Np - N)))
    if Np != N:
        ss = jnp.pad(ss, ((0, 0), (0, Np - N)))

    tm = _pick_tm(Mp)
    tn = 128

    if Kp <= _MAX_TK:
        tk = Kp
    else:
        tk = _MAX_TK
        Kp2 = _round_up(Kp, tk)
        if Kp2 != Kp:
            a = jnp.pad(a, ((0, 0), (0, Kp2 - Kp)))
            b = jnp.pad(b, ((0, Kp2 - Kp), (0, 0)))
            Kp = Kp2
    nk = Kp // tk

    if nk == 1:
        grid = (Mp // tm, Np // tn)
        kernel = functools.partial(_mm_kernel_1k, relu=relu)
        in_specs = [
            pl.BlockSpec((tm, tk), lambda i, j: (i, 0)),
            pl.BlockSpec((tk, tn), lambda i, j: (0, j)),
            pl.BlockSpec((2, tn), lambda i, j: (0, j)),
        ]
        out_specs = pl.BlockSpec((tm, tn), lambda i, j: (i, j))
        scratch = ()
        dims = ("parallel", "parallel")
    else:
        grid = (Mp // tm, Np // tn, nk)
        kernel = functools.partial(_mm_kernel_mk, relu=relu, nk=nk)
        in_specs = [
            pl.BlockSpec((tm, tk), lambda i, j, k: (i, k)),
            pl.BlockSpec((tk, tn), lambda i, j, k: (k, j)),
            pl.BlockSpec((2, tn), lambda i, j, k: (0, j)),
        ]
        out_specs = pl.BlockSpec((tm, tn), lambda i, j, k: (i, j))
        scratch = (pltpu.VMEM((tm, tn), jnp.float32),)
        dims = ("parallel", "parallel", "arbitrary")

    out = pl.pallas_call(
        kernel,
        out_shape=jax.ShapeDtypeStruct((Mp, Np), out_dtype),
        grid_spec=pltpu.PrefetchScalarGridSpec(
            num_scalar_prefetch=0,
            grid=grid,
            in_specs=in_specs,
            out_specs=out_specs,
            scratch_shapes=scratch),
        compiler_params=pltpu.CompilerParams(
            dimension_semantics=dims,
            vmem_limit_bytes=_VMEM_LIMIT_BYTES),
    )(a, b, ss)

    if (Mp, Np) != (M, N):
        out = out[:M, :N]
    return out


# ----------------------------------------------------------------------------
# Conv glue (im2col in bf16) -- heavy math runs in the Pallas kernel above.
# ----------------------------------------------------------------------------
def _im2col_3d(x, ksize, pad):
    D, H, W, C = x.shape
    xp = jnp.pad(x, ((pad, pad), (pad, pad), (pad, pad), (0, 0)))
    patches = [xp[kd:kd + D, kh:kh + H, kw:kw + W, :]
               for kd in range(ksize) for kh in range(ksize) for kw in range(ksize)]
    col = jnp.stack(patches, axis=3)                      # [D,H,W,k^3,C]
    return col.reshape(D * H * W, ksize ** 3 * C)


def _conv3d_cl(x, wm, scale=None, shift=None, relu=False, ksize=3, pad=1,
               out_dtype=jnp.bfloat16):
    # x: [D,H,W,Cin] ; wm: [k^3*Cin, Cout] (pre-reshaped, bf16)
    D, H, W, _ = x.shape
    col = _im2col_3d(x.astype(jnp.bfloat16), ksize, pad)
    out = fused_matmul(col, wm, scale=scale, shift=shift, relu=relu,
                       out_dtype=out_dtype)
    return out.reshape(D, H, W, -1)


def _conv_transpose3d_cl(x, wm_phase, shift):
    # ConvTranspose3d(k=3, stride=2, pad=1, output_padding=1) via sub-pixel
    # decomposition: one matmul over a 2x2x2 im2col window, weight matrix has
    # one column block per output phase (rd,rh,rw).  Output stays f32 (feeds
    # the Sobel stencil and the trilinear sampler).
    D, H, W, Cin = x.shape
    Cout = wm_phase.shape[1] // 8
    xp = jnp.pad(x.astype(jnp.bfloat16), ((0, 1), (0, 1), (0, 1), (0, 0)))
    patches = [xp[od:od + D, oh:oh + H, ow:ow + W, :]
               for od in range(2) for oh in range(2) for ow in range(2)]
    col = jnp.stack(patches, axis=3).reshape(D * H * W, 8 * Cin)
    y = fused_matmul(col, wm_phase, shift=shift, out_dtype=jnp.float32)
    y = y.reshape(D, H, W, 2, 2, 2, Cout)
    out = jnp.transpose(y, (0, 3, 1, 4, 2, 5, 6)).reshape(2 * D, 2 * H, 2 * W, Cout)
    return out


# ----------------------------------------------------------------------------
# Sobel gradients: F.conv3d(density, sobel_kernel, padding=2) replaced by the
# exact separable form (the 5x5x5 kernels are outer products of 1D taps).
# Runs in f32 on the VPU -- keeps derivative precision (perf review item) and
# removes the 125-slice im2col + N=3 masked-store matmul.
# ----------------------------------------------------------------------------
def _sobel_gradients(density):
    # density: [D,H,W] f32 ; returns [D,H,W,3] f32
    h_dash = jnp.array([-1., -2., 0., 2., 1.], jnp.float32) / 8.0   # derivative
    h = jnp.array([1., 4., 6., 4., 1.], jnp.float32) / 16.0         # smoothing

    def conv1d(x, taps, axis):
        pad_width = [(0, 0)] * 3
        pad_width[axis] = (2, 2)
        xp = jnp.pad(x, pad_width)                        # zeros padding, as F.conv3d
        n = x.shape[axis]
        out = jnp.zeros_like(x)
        for t in range(5):
            sl = [slice(None)] * 3
            sl[axis] = slice(t, t + n)
            out = out + taps[t] * xp[tuple(sl)]
        return out

    sw = conv1d(density, h, 2)          # smooth W
    dw = conv1d(density, h_dash, 2)     # deriv  W
    swh = conv1d(sw, h, 1)              # smooth W,H
    sdh = conv1d(sw, h_dash, 1)         # smooth W, deriv H
    dwh = conv1d(dw, h, 1)              # deriv  W, smooth H
    gx = conv1d(swh, h_dash, 0)         # deriv D, smooth H,W   (kernel_x)
    gy = conv1d(sdh, h, 0)              # smooth D, deriv H     (kernel_y)
    gz = conv1d(dwh, h, 0)              # smooth D,H, deriv W   (kernel_z)
    return jnp.stack([gx, gy, gz], axis=-1)


# ----------------------------------------------------------------------------
# grid_sampler: trilinear F.grid_sample(align_corners=True, padding='zeros')
# as an 8-corner gather.  torch flips the coord order, so world-x indexes D,
# world-y -> H, world-z -> W (the flip and grid_sample's x->W convention cancel).
# ----------------------------------------------------------------------------
def _grid_sampler(xyz, grids, xyz_min, xyz_max):
    shape = xyz.shape[:-1]
    pts = xyz.reshape(-1, 3)
    nrm = (pts - xyz_min) / (xyz_max - xyz_min)           # [0,1] inside the volume
    D, H, W = grids[0].shape[:3]
    gcat = jnp.concatenate([g.reshape(D * H * W, -1) for g in grids], axis=-1)

    def corners(f, size):
        i0f = jnp.floor(f)
        t = f - i0f
        i0 = i0f.astype(jnp.int32)
        i1 = i0 + 1

        def mk(i, w):
            ok = ((i >= 0) & (i < size)).astype(jnp.float32)   # zeros padding
            return jnp.clip(i, 0, size - 1), w * ok

        return [mk(i0, 1.0 - t), mk(i1, t)]

    cd = corners(nrm[:, 0] * (D - 1), D)   # world-x -> D
    ch = corners(nrm[:, 1] * (H - 1), H)   # world-y -> H
    cw = corners(nrm[:, 2] * (W - 1), W)   # world-z -> W

    acc = jnp.zeros((pts.shape[0], gcat.shape[-1]), jnp.float32)
    for idd, wd in cd:
        for ihh, wh in ch:
            for iww, ww in cw:
                flat = (idd * H + ihh) * W + iww
                acc = acc + (wd * wh * ww)[:, None] * jnp.take(gcat, flat, axis=0)

    outs, start = [], 0
    for g in grids:
        C = g.shape[-1]
        r = acc[:, start:start + C].reshape(*shape, C)
        if C == 1:
            r = r.reshape(shape)
        outs.append(r)
        start += C
    return outs


# ----------------------------------------------------------------------------
# One-time parameter preparation (outside jit): reshape weights to matmul
# layout, fold BatchNorm (eval mode) + conv bias into scale/shift, build the
# phase-structured ConvTranspose weight, cast weights to bf16.
# ----------------------------------------------------------------------------
def _conv_weight_matrix(w):
    # [Cout,Cin,k,k,k] (PyTorch Conv3d layout) -> [k^3*Cin, Cout]
    Cout, Cin, k = w.shape[0], w.shape[1], w.shape[2]
    return jnp.transpose(w, (2, 3, 4, 1, 0)).reshape(k ** 3 * Cin, Cout)


def _prep_convtranspose_weight(w, bias):
    # w: [Cin, Cout, 3,3,3] (PyTorch ConvTranspose3d layout).
    # Sub-pixel decomposition for stride=2, pad=1, output_padding=1:
    #   output o = 2*i + r per dim;  r=0 -> tap (input offset 0, weight idx 1)
    #   r=1 -> taps (offset 0, weight idx 2) and (offset 1, weight idx 0)
    Cin, Cout = w.shape[0], w.shape[1]
    widx = np.array([[1, 0], [2, 0]])                      # [r, offset] (dummy where invalid)
    valid = np.array([[1.0, 0.0], [1.0, 1.0]], np.float32)

    od, oh, ow, rd, rh, rw = np.meshgrid(*([np.arange(2)] * 6), indexing="ij")
    idx_d, idx_h, idx_w = widx[rd, od], widx[rh, oh], widx[rw, ow]
    v = valid[rd, od] * valid[rh, oh] * valid[rw, ow]      # [2]*6

    wt = jnp.transpose(w, (2, 3, 4, 0, 1))                 # [3,3,3,Cin,Cout]
    sel = wt[idx_d, idx_h, idx_w]                          # [2,2,2,2,2,2,Cin,Cout]
    sel = sel * jnp.asarray(v)[..., None, None]
    # rows: (od,oh,ow,cin)  cols: (rd,rh,rw,cout)
    wm = jnp.transpose(sel, (0, 1, 2, 6, 3, 4, 5, 7)).reshape(8 * Cin, 8 * Cout)
    shift = jnp.tile(bias, 8).reshape(1, 8 * Cout).astype(jnp.float32)
    return wm.astype(jnp.bfloat16), shift


def _bn_fold(gamma, beta, mean, var, bias, eps=1e-5):
    # TODO(synk): BatchNorm3d is reproduced in eval mode (running stats folded
    # into per-channel scale/shift); training-mode batch statistics are not.
    scale = gamma / jnp.sqrt(var + eps)
    shift = (bias - mean) * scale + beta                   # conv bias folded in
    return scale.reshape(1, -1), shift.reshape(1, -1)


def prepare_params(p):
    prep = {"grid": p["grid"]}
    prep["w1m"] = _conv_weight_matrix(p["w1"]).astype(jnp.bfloat16)
    prep["s1"], prep["t1"] = _bn_fold(p["bn1_gamma"], p["bn1_beta"],
                                      p["bn1_mean"], p["bn1_var"], p["b1"])
    prep["w2m"] = _conv_weight_matrix(p["w2"]).astype(jnp.bfloat16)
    prep["s2"], prep["t2"] = _bn_fold(p["bn2_gamma"], p["bn2_beta"],
                                      p["bn2_mean"], p["bn2_var"], p["b2"])
    prep["w3m"], prep["t3"] = _prep_convtranspose_weight(p["w3"], p["b3"])
    return prep


# ----------------------------------------------------------------------------
# ImplicitNetwork forward
# ----------------------------------------------------------------------------
def implicit_network_forward(prep, xyz, xyz_min, xyz_max):
    g = prep["grid"]                                       # [R,R,R,L] f32
    gb = g.astype(jnp.bfloat16)

    x1 = _conv3d_cl(gb, prep["w1m"], prep["s1"], prep["t1"], relu=True)   # bf16
    x = jnp.concatenate([gb, x1], axis=-1)

    x2 = _conv3d_cl(x, prep["w2m"], prep["s2"], prep["t2"], relu=True)    # bf16
    x = jnp.concatenate([x, x2], axis=-1)

    y = _conv_transpose3d_cl(x, prep["w3m"], prep["t3"])   # [2R,2R,2R,1+F] f32

    density = y[..., :1]
    feature = y[..., 1:]
    gradients = _sobel_gradients(density[..., 0])          # f32, separable stencil

    sdf, feats, grads = _grid_sampler(xyz, [density, feature, gradients],
                                      xyz_min, xyz_max)
    return sdf, feats, grads


# ----------------------------------------------------------------------------
# Deterministic parameter initialization (synthetic, no checkpoint)
# ----------------------------------------------------------------------------
def init_params(key, resolution, latent_dim, feature_size):
    R, L, F = resolution, latent_dim, feature_size
    ks = jax.random.split(key, 16)
    p = {}
    # grid is nn.Parameter(zeros) in torch; random-init here so the test is non-trivial
    p["grid"] = 0.1 * jax.random.normal(ks[0], (R, R, R, L), jnp.float32)
    p["w1"] = 0.05 * jax.random.normal(ks[1], (64, L, 3, 3, 3), jnp.float32)
    p["b1"] = 0.01 * jax.random.normal(ks[2], (64,), jnp.float32)
    p["bn1_gamma"] = 1.0 + 0.05 * jax.random.normal(ks[3], (64,), jnp.float32)
    p["bn1_beta"] = 0.01 * jax.random.normal(ks[4], (64,), jnp.float32)
    p["bn1_mean"] = 0.01 * jax.random.normal(ks[5], (64,), jnp.float32)
    p["bn1_var"] = 1.0 + 0.1 * jax.random.uniform(ks[6], (64,), jnp.float32)
    p["w2"] = 0.05 * jax.random.normal(ks[7], (64, 64 + L, 3, 3, 3), jnp.float32)
    p["b2"] = 0.01 * jax.random.normal(ks[8], (64,), jnp.float32)
    p["bn2_gamma"] = 1.0 + 0.05 * jax.random.normal(ks[9], (64,), jnp.float32)
    p["bn2_beta"] = 0.01 * jax.random.normal(ks[10], (64,), jnp.float32)
    p["bn2_mean"] = 0.01 * jax.random.normal(ks[11], (64,), jnp.float32)
    p["bn2_var"] = 1.0 + 0.1 * jax.random.uniform(ks[12], (64,), jnp.float32)
    p["w3"] = 0.05 * jax.random.normal(ks[13], (64 * 2 + L, 1 + F, 3, 3, 3), jnp.float32)
    p["b3"] = 0.01 * jax.random.normal(ks[14], (1 + F,), jnp.float32)
    return p


# ----------------------------------------------------------------------------
if __name__ == "__main__":
    resolution = 8        # grid resolution R (output grids are 2R = 16)
    latent_dim = 4
    feature_size = 8

    xyz_min = jnp.array([-1.0, -1.0, -1.0], jnp.float32)
    xyz_max = jnp.array([1.0, 1.0, 1.0], jnp.float32)

    key = jax.random.PRNGKey(0)
    pkey, xkey = jax.random.split(key)
    params = init_params(pkey, resolution, latent_dim, feature_size)
    prep = prepare_params(params)        # one-time weight prep, outside the jitted forward

    # query points, shape (2, 32, 3), inside [xyz_min, xyz_max]
    xyz = jax.random.uniform(xkey, (2, 32, 3), jnp.float32,
                             minval=-0.95, maxval=0.95)

    fwd = jax.jit(functools.partial(implicit_network_forward,
                                    xyz_min=xyz_min, xyz_max=xyz_max))
    sdf, feats, grads = fwd(prep, xyz)
    jax.block_until_ready((sdf, feats, grads))

    assert sdf.shape == (2, 32)
    assert feats.shape == (2, 32, feature_size)
    assert grads.shape == (2, 32, 3)
    assert jnp.all(jnp.isfinite(sdf)) and jnp.all(jnp.isfinite(feats)) \
        and jnp.all(jnp.isfinite(grads))
    print("KERNEL_OK")
</pallas_src>

<mosaic_0001>
module attributes {stable_mosaic.version = 11 : i64} {
  func.func @_mm_kernel_1k(%arg0: i32, %arg1: i32, %arg2: memref<512x128xbf16, #tpu.memory_space<vmem>>, %arg3: memref<128x128xbf16, #tpu.memory_space<vmem>>, %arg4: memref<2x128xf32, #tpu.memory_space<vmem>>, %arg5: memref<512x128xbf16, #tpu.memory_space<vmem>>) attributes {dimension_semantics = [#tpu.dimension_semantics<parallel>, #tpu.dimension_semantics<parallel>], iteration_bounds = array<i64: 1, 1>, scalar_prefetch = 0 : i64, scratch_operands = 0 : i64, tpu.core_type = #tpu.core_type<tc>, window_params = [{transform_indices = @transform_0, window_bounds = array<i64: 512, 128>}, {transform_indices = @transform_1, window_bounds = array<i64: 128, 128>}, {transform_indices = @transform_2, window_bounds = array<i64: 2, 128>}, {transform_indices = @transform_3, window_bounds = array<i64: 512, 128>}]} {
    %c0 = arith.constant 0 : index
    %c0_0 = arith.constant 0 : index
    %0 = vector.load %arg2[%c0, %c0_0] : memref<512x128xbf16, #tpu.memory_space<vmem>>, vector<512x128xbf16>
    %c0_1 = arith.constant 0 : index
    %c0_2 = arith.constant 0 : index
    %1 = vector.load %arg3[%c0_1, %c0_2] : memref<128x128xbf16, #tpu.memory_space<vmem>>, vector<128x128xbf16>
    %cst = arith.constant dense<0.000000e+00> : vector<512x128xf32>
    %2 = tpu.matmul %0, %1, %cst {dimension_numbers = #tpu.dot_dimension_numbers<[1], [0], [0], [1], [0, 0, 1, 1], [], []>} : vector<512x128xbf16>, vector<128x128xbf16>, vector<512x128xf32> -> vector<512x128xf32>
    %c0_3 = arith.constant 0 : index
    %c0_4 = arith.constant 0 : index
    %3 = vector.load %arg4[%c0_3, %c0_4] : memref<2x128xf32, #tpu.memory_space<vmem>>, vector<1x128xf32>
    %4 = vector.broadcast %3 : vector<1x128xf32> to vector<512x128xf32>
    %5 = arith.mulf %2, %4 : vector<512x128xf32>
    %c1 = arith.constant 1 : index
    %c0_5 = arith.constant 0 : index
    %6 = vector.load %arg4[%c1, %c0_5] : memref<2x128xf32, #tpu.memory_space<vmem>>, vector<1x128xf32>
    %7 = vector.broadcast %6 : vector<1x128xf32> to vector<512x128xf32>
    %8 = arith.addf %5, %7 : vector<512x128xf32>
    %cst_6 = arith.constant 0.000000e+00 : f32
    %9 = vector.broadcast %cst_6 : f32 to vector<512x128xf32>
    %10 = arith.maximumf %8, %9 : vector<512x128xf32>
    %11 = arith.truncf %10 : vector<512x128xf32> to vector<512x128xbf16>
    %c0_7 = arith.constant 0 : index
    %c0_8 = arith.constant 0 : index
    %12 = vector.load %arg5[%c0_7, %c0_8] : memref<512x128xbf16, #tpu.memory_space<vmem>>, vector<512x128xbf16>
    tpu.vector_store %arg5[%c0_7, %c0_8], %11 {strides = array<i32>} : memref<512x128xbf16, #tpu.memory_space<vmem>>, vector<512x128xbf16>,
    return
  }
  func.func @transform_0(%arg0: i32, %arg1: i32) -> (i32, i32) {
    %c0_i32 = arith.constant 0 : i32
    %c0_i32_0 = arith.constant 0 : i32
    return %arg0, %c0_i32 : i32, i32
  }
  func.func @transform_1(%arg0: i32, %arg1: i32) -> (i32, i32) {
    %c0_i32 = arith.constant 0 : i32
    %c0_i32_0 = arith.constant 0 : i32
    return %c0_i32, %arg1 : i32, i32
  }
  func.func @transform_2(%arg0: i32, %arg1: i32) -> (i32, i32) {
    %c0_i32 = arith.constant 0 : i32
    %c0_i32_0 = arith.constant 0 : i32
    return %c0_i32, %arg1 : i32, i32
  }
  func.func @transform_3(%arg0: i32, %arg1: i32) -> (i32, i32) {
    %c0_i32 = arith.constant 0 : i32
    return %arg0, %arg1 : i32, i32
  }
}

module attributes {stable_mosaic.version = 11 : i64} {
  func.func @_mm_kernel_1k(%arg0: i32, %arg1: i32, %arg2: memref<512x1920xbf16, #tpu.memory_space<vmem>>, %arg3: memref<1920x128xbf16, #tpu.memory_space<vmem>>, %arg4: memref<2x128xf32, #tpu.memory_space<vmem>>, %arg5: memref<512x128xbf16, #tpu.memory_space<vmem>>) attributes {dimension_semantics = [#tpu.dimension_semantics<parallel>, #tpu.dimension_semantics<parallel>], iteration_bounds = array<i64: 1, 1>, scalar_prefetch = 0 : i64, scratch_operands = 0 : i64, tpu.core_type = #tpu.core_type<tc>, window_params = [{transform_indices = @transform_0, window_bounds = array<i64: 512, 1920>}, {transform_indices = @transform_1, window_bounds = array<i64: 1920, 128>}, {transform_indices = @transform_2, window_bounds = array<i64: 2, 128>}, {transform_indices = @transform_3, window_bounds = array<i64: 512, 128>}]} {
    %c0 = arith.constant 0 : index
    %c0_0 = arith.constant 0 : index
    %0 = vector.load %arg2[%c0, %c0_0] : memref<512x1920xbf16, #tpu.memory_space<vmem>>, vector<512x1920xbf16>
    %c0_1 = arith.constant 0 : index
    %c0_2 = arith.constant 0 : index
    %1 = vector.load %arg3[%c0_1, %c0_2] : memref<1920x128xbf16, #tpu.memory_space<vmem>>, vector<1920x128xbf16>
    %cst = arith.constant dense<0.000000e+00> : vector<512x128xf32>
    %2 = tpu.matmul %0, %1, %cst {dimension_numbers = #tpu.dot_dimension_numbers<[1], [0], [0], [1], [0, 0, 1, 1], [], []>} : vector<512x1920xbf16>, vector<1920x128xbf16>, vector<512x128xf32> -> vector<512x128xf32>
    %c0_3 = arith.constant 0 : index
    %c0_4 = arith.constant 0 : index
    %3 = vector.load %arg4[%c0_3, %c0_4] : memref<2x128xf32, #tpu.memory_space<vmem>>, vector<1x128xf32>
    %4 = vector.broadcast %3 : vector<1x128xf32> to vector<512x128xf32>
    %5 = arith.mulf %2, %4 : vector<512x128xf32>
    %c1 = arith.constant 1 : index
    %c0_5 = arith.constant 0 : index
    %6 = vector.load %arg4[%c1, %c0_5] : memref<2x128xf32, #tpu.memory_space<vmem>>, vector<1x128xf32>
    %7 = vector.broadcast %6 : vector<1x128xf32> to vector<512x128xf32>
    %8 = arith.addf %5, %7 : vector<512x128xf32>
    %cst_6 = arith.constant 0.000000e+00 : f32
    %9 = vector.broadcast %cst_6 : f32 to vector<512x128xf32>
    %10 = arith.maximumf %8, %9 : vector<512x128xf32>
    %11 = arith.truncf %10 : vector<512x128xf32> to vector<512x128xbf16>
    %c0_7 = arith.constant 0 : index
    %c0_8 = arith.constant 0 : index
    %12 = vector.load %arg5[%c0_7, %c0_8] : memref<512x128xbf16, #tpu.memory_space<vmem>>, vector<512x128xbf16>
    tpu.vector_store %arg5[%c0_7, %c0_8], %11 {strides = array<i32>} : memref<512x128xbf16, #tpu.memory_space<vmem>>, vector<512x128xbf16>,
    return
  }
  func.func @transform_0(%arg0: i32, %arg1: i32) -> (i32, i32) {
    %c0_i32 = arith.constant 0 : i32
    %c0_i32_0 = arith.constant 0 : i32
    return %arg0, %c0_i32 : i32, i32
  }
  func.func @transform_1(%arg0: i32, %arg1: i32) -> (i32, i32) {
    %c0_i32 = arith.constant 0 : i32
    %c0_i32_0 = arith.constant 0 : i32
    return %c0_i32, %arg1 : i32, i32
  }
  func.func @transform_2(%arg0: i32, %arg1: i32) -> (i32, i32) {
    %c0_i32 = arith.constant 0 : i32
    %c0_i32_0 = arith.constant 0 : i32
    return %c0_i32, %arg1 : i32, i32
  }
  func.func @transform_3(%arg0: i32, %arg1: i32) -> (i32, i32) {
    %c0_i32 = arith.constant 0 : i32
    return %arg0, %arg1 : i32, i32
  }
}

module attributes {stable_mosaic.version = 11 : i64} {
  func.func @_mm_kernel_1k(%arg0: i32, %arg1: i32, %arg2: memref<512x1152xbf16, #tpu.memory_space<vmem>>, %arg3: memref<1152x128xbf16, #tpu.memory_space<vmem>>, %arg4: memref<2x128xf32, #tpu.memory_space<vmem>>, %arg5: memref<512x128xf32, #tpu.memory_space<vmem>>) attributes {dimension_semantics = [#tpu.dimension_semantics<parallel>, #tpu.dimension_semantics<parallel>], iteration_bounds = array<i64: 1, 1>, scalar_prefetch = 0 : i64, scratch_operands = 0 : i64, tpu.core_type = #tpu.core_type<tc>, window_params = [{transform_indices = @transform_0, window_bounds = array<i64: 512, 1152>}, {transform_indices = @transform_1, window_bounds = array<i64: 1152, 128>}, {transform_indices = @transform_2, window_bounds = array<i64: 2, 128>}, {transform_indices = @transform_3, window_bounds = array<i64: 512, 128>}]} {
    %c0 = arith.constant 0 : index
    %c0_0 = arith.constant 0 : index
    %0 = vector.load %arg2[%c0, %c0_0] : memref<512x1152xbf16, #tpu.memory_space<vmem>>, vector<512x1152xbf16>
    %c0_1 = arith.constant 0 : index
    %c0_2 = arith.constant 0 : index
    %1 = vector.load %arg3[%c0_1, %c0_2] : memref<1152x128xbf16, #tpu.memory_space<vmem>>, vector<1152x128xbf16>
    %cst = arith.constant dense<0.000000e+00> : vector<512x128xf32>
    %2 = tpu.matmul %0, %1, %cst {dimension_numbers = #tpu.dot_dimension_numbers<[1], [0], [0], [1], [0, 0, 1, 1], [], []>} : vector<512x1152xbf16>, vector<1152x128xbf16>, vector<512x128xf32> -> vector<512x128xf32>
    %c0_3 = arith.constant 0 : index
    %c0_4 = arith.constant 0 : index
    %3 = vector.load %arg4[%c0_3, %c0_4] : memref<2x128xf32, #tpu.memory_space<vmem>>, vector<1x128xf32>
    %4 = vector.broadcast %3 : vector<1x128xf32> to vector<512x128xf32>
    %5 = arith.mulf %2, %4 : vector<512x128xf32>
    %c1 = arith.constant 1 : index
    %c0_5 = arith.constant 0 : index
    %6 = vector.load %arg4[%c1, %c0_5] : memref<2x128xf32, #tpu.memory_space<vmem>>, vector<1x128xf32>
    %7 = vector.broadcast %6 : vector<1x128xf32> to vector<512x128xf32>
    %8 = arith.addf %5, %7 : vector<512x128xf32>
    %c0_6 = arith.constant 0 : index
    %c0_7 = arith.constant 0 : index
    %9 = vector.load %arg5[%c0_6, %c0_7] : memref<512x128xf32, #tpu.memory_space<vmem>>, vector<512x128xf32>
    tpu.vector_store %arg5[%c0_6, %c0_7], %8 {strides = array<i32>} : memref<512x128xf32, #tpu.memory_space<vmem>>, vector<512x128xf32>,
    return
  }
  func.func @transform_0(%arg0: i32, %arg1: i32) -> (i32, i32) {
    %c0_i32 = arith.constant 0 : i32
    %c0_i32_0 = arith.constant 0 : i32
    return %arg0, %c0_i32 : i32, i32
  }
  func.func @transform_1(%arg0: i32, %arg1: i32) -> (i32, i32) {
    %c0_i32 = arith.constant 0 : i32
    %c0_i32_0 = arith.constant 0 : i32
    return %c0_i32, %arg1 : i32, i32
  }
  func.func @transform_2(%arg0: i32, %arg1: i32) -> (i32, i32) {
    %c0_i32 = arith.constant 0 : i32
    %c0_i32_0 = arith.constant 0 : i32
    return %c0_i32, %arg1 : i32, i32
  }
  func.func @transform_3(%arg0: i32, %arg1: i32) -> (i32, i32) {
    %c0_i32 = arith.constant 0 : i32
    return %arg0, %arg1 : i32, i32
  }
}

</mosaic_0001>

<llo_original>
// kernel: implicit_network_forward.3
$region0: #{implicit_network_forward.3}
  #allocation0 [shape = 'u32[]', space=smem, size = 0x4, offset = 0x4, fixed_abs, tag = 'smem constant byte address 0x4 - core index']
  #allocation1 [shape = 'u32[144,128]{1,0:T(1,128)}', space=vmem, size = 0x12000, scoped, tag = 'internal scratch']
  %s0 = inlined_call_operand.vmem [shape: bf16[512,128], index: 0, kind: input, shape index: {}]
  %s1 = inlined_call_operand.vmem [shape: bf16[128,128], index: 1, kind: input, shape index: {}]
  %s2 = inlined_call_operand.vmem [shape: f32[2,128], index: 2, kind: input, shape index: {}]
  %s3 = inlined_call_operand.vmem [shape: bf16[512,128], index: 3, kind: output, shape index: {}]
  %s4 = sld [smem:[#allocation0]]
  $region22: #{implicit_network_forward.3} parent=0
    _
  %s6 = ssub.s32 1, %s4
  %s7 = scalar_select 0, %s6, %s4
  // Predicated region
  $region2: #{implicit_network_forward.3} parent=0 // pred_check
    _
  $region3: #{implicit_network_forward.3} parent=0 // pred_check_branch
    %9 = sbr.rel (0) target = $region5
  $region4: #{implicit_network_forward.3} parent=0 // pred_region
    _
  $region5: #{implicit_network_forward.3} parent=0 // pred_fallthru
    _
  // Predicated region
  $region6: #{implicit_network_forward.3} parent=0 // pred_check
    _
  $region7: #{implicit_network_forward.3} parent=0 // pred_check_branch
    %11 = sbr.rel (0) target = $region9
  $region8: #{implicit_network_forward.3} parent=0 // pred_region
    _
  $region9: #{implicit_network_forward.3} parent=0 // pred_fallthru
    _
  // Predicated region
  $region10: #{implicit_network_forward.3} parent=0 // pred_check
    _
  $region11: #{implicit_network_forward.3} parent=0 // pred_check_branch
    %13 = sbr.rel (0) target = $region13
  $region12: #{implicit_network_forward.3} parent=0 // pred_region
    _
  $region13: #{implicit_network_forward.3} parent=0 // pred_fallthru
    _
  %v15 = vld [vmem:[%s0] sm:$0xf]
  %v16 = vld [vmem:[%s0 + $0x4] sm:$0xf]
  %v17 = vld [vmem:[%s0 + $0x8] sm:$0xf]
  %v18 = vld [vmem:[%s0 + $0xc] sm:$0xf]
  %v19 = vld [vmem:[%s0 + $0x10] sm:$0xf]
  %v20 = vld [vmem:[%s0 + $0x14] sm:$0xf]
  %v21 = vld [vmem:[%s0 + $0x18] sm:$0xf]
  %v22 = vld [vmem:[%s0 + $0x1c] sm:$0xf]
  %v23 = vld [vmem:[%s0 + $0x20] sm:$0xf]
  %v24 = vld [vmem:[%s0 + $0x24] sm:$0xf]
  %v25 = vld [vmem:[%s0 + $0x28] sm:$0xf]
  %v26 = vld [vmem:[%s0 + $0x2c] sm:$0xf]
  %v27 = vld [vmem:[%s0 + $0x30] sm:$0xf]
  %v28 = vld [vmem:[%s0 + $0x34] sm:$0xf]
  %v29 = vld [vmem:[%s0 + $0x38] sm:$0xf]
  %v30 = vld [vmem:[%s0 + $0x3c] sm:$0xf]
  %v31 = vld [vmem:[%s0 + $0x40] sm:$0xf]
  %v32 = vld [vmem:[%s0 + $0x44] sm:$0xf]
  %v33 = vld [vmem:[%s0 + $0x48] sm:$0xf]
  %v34 = vld [vmem:[%s0 + $0x4c] sm:$0xf]
  %v35 = vld [vmem:[%s0 + $0x50] sm:$0xf]
  %v36 = vld [vmem:[%s0 + $0x54] sm:$0xf]
  %v37 = vld [vmem:[%s0 + $0x58] sm:$0xf]
  %v38 = vld [vmem:[%s0 + $0x5c] sm:$0xf]
  %v39 = vld [vmem:[%s0 + $0x60] sm:$0xf]
  %v40 = vld [vmem:[%s0 + $0x64] sm:$0xf]
  %v41 = vld [vmem:[%s0 + $0x68] sm:$0xf]
  %v42 = vld [vmem:[%s0 + $0x6c] sm:$0xf]
  %v43 = vld [vmem:[%s0 + $0x70] sm:$0xf]
  %v44 = vld [vmem:[%s0 + $0x74] sm:$0xf]
  %v45 = vld [vmem:[%s0 + $0x78] sm:$0xf]
  %v46 = vld [vmem:[%s0 + $0x7c] sm:$0xf]
  %v47 = vld [vmem:[%s0 + $0x80] sm:$0xf]
  %v48 = vld [vmem:[%s0 + $0x84] sm:$0xf]
  %v49 = vld [vmem:[%s0 + $0x88] sm:$0xf]
  %v50 = vld [vmem:[%s0 + $0x8c] sm:$0xf]
  %v51 = vld [vmem:[%s0 + $0x90] sm:$0xf]
  %v52 = vld [vmem:[%s0 + $0x94] sm:$0xf]
  %v53 = vld [vmem:[%s0 + $0x98] sm:$0xf]
  %v54 = vld [vmem:[%s0 + $0x9c] sm:$0xf]
  %v55 = vld [vmem:[%s0 + $0xa0] sm:$0xf]
  %v56 = vld [vmem:[%s0 + $0xa4] sm:$0xf]
  %v57 = vld [vmem:[%s0 + $0xa8] sm:$0xf]
  %v58 = vld [vmem:[%s0 + $0xac] sm:$0xf]
  %v59 = vld [vmem:[%s0 + $0xb0] sm:$0xf]
  %v60 = vld [vmem:[%s0 + $0xb4] sm:$0xf]
  %v61 = vld [vmem:[%s0 + $0xb8] sm:$0xf]
  %v62 = vld [vmem:[%s0 + $0xbc] sm:$0xf]
  %v63 = vld [vmem:[%s0 + $0xc0] sm:$0xf]
  %v64 = vld [vmem:[%s0 + $0xc4] sm:$0xf]
  %v65 = vld [vmem:[%s0 + $0xc8] sm:$0xf]
  %v66 = vld [vmem:[%s0 + $0xcc] sm:$0xf]
  %v67 = vld [vmem:[%s0 + $0xd0] sm:$0xf]
  %v68 = vld [vmem:[%s0 + $0xd4] sm:$0xf]
  %v69 = vld [vmem:[%s0 + $0xd8] sm:$0xf]
  %v70 = vld [vmem:[%s0 + $0xdc] sm:$0xf]
  %v71 = vld [vmem:[%s0 + $0xe0] sm:$0xf]
  %v72 = vld [vmem:[%s0 + $0xe4] sm:$0xf]
  %v73 = vld [vmem:[%s0 + $0xe8] sm:$0xf]
  %v74 = vld [vmem:[%s0 + $0xec] sm:$0xf]
  %v75 = vld [vmem:[%s0 + $0xf0] sm:$0xf]
  %v76 = vld [vmem:[%s0 + $0xf4] sm:$0xf]
  %v77 = vld [vmem:[%s0 + $0xf8] sm:$0xf]
  %v78 = vld [vmem:[%s0 + $0xfc] sm:$0xf]
  %v79 = vld [vmem:[%s1] sm:$0xf]
  %v80 = vld [vmem:[%s1 + $0x4] sm:$0xf]
  %v81 = vld [vmem:[%s1 + $0x8] sm:$0xf]
  %v82 = vld [vmem:[%s1 + $0xc] sm:$0xf]
  %v83 = vld [vmem:[%s1 + $0x10] sm:$0xf]
  %v84 = vld [vmem:[%s1 + $0x14] sm:$0xf]
  %v85 = vld [vmem:[%s1 + $0x18] sm:$0xf]
  %v86 = vld [vmem:[%s1 + $0x1c] sm:$0xf]
  %v87 = vld [vmem:[%s1 + $0x20] sm:$0xf]
  %v88 = vld [vmem:[%s1 + $0x24] sm:$0xf]
  %v89 = vld [vmem:[%s1 + $0x28] sm:$0xf]
  %v90 = vld [vmem:[%s1 + $0x2c] sm:$0xf]
  %v91 = vld [vmem:[%s1 + $0x30] sm:$0xf]
  %v92 = vld [vmem:[%s1 + $0x34] sm:$0xf]
  %v93 = vld [vmem:[%s1 + $0x38] sm:$0xf]
  %v94 = vld [vmem:[%s1 + $0x3c] sm:$0xf]
  %v159 = vunpack.c.l.b16 %v15
  %v160 = vunpack.c.l.b16 %v16
  %v161 = vunpack.c.l.b16 %v17
  %v162 = vunpack.c.l.b16 %v18
  %v163 = vunpack.c.l.b16 %v19
  %v164 = vunpack.c.l.b16 %v20
  %v165 = vunpack.c.l.b16 %v21
  %v166 = vunpack.c.l.b16 %v22
  %v167 = vunpack.c.l.b16 %v23
  %v168 = vunpack.c.l.b16 %v24
  %v169 = vunpack.c.l.b16 %v25
  %v170 = vunpack.c.l.b16 %v26
  %v171 = vunpack.c.l.b16 %v27
  %v172 = vunpack.c.l.b16 %v28
  %v173 = vunpack.c.l.b16 %v29
  %v174 = vunpack.c.l.b16 %v30
  %v175 = vunpack.c.l.b16 %v31
  %v176 = vunpack.c.l.b16 %v32
  %v177 = vunpack.c.l.b16 %v33
  %v178 = vunpack.c.l.b16 %v34
  %v179 = vunpack.c.l.b16 %v35
  %v180 = vunpack.c.l.b16 %v36
  %v181 = vunpack.c.l.b16 %v37
  %v182 = vunpack.c.l.b16 %v38
  %v183 = vunpack.c.l.b16 %v39
  %v184 = vunpack.c.l.b16 %v40
  %v185 = vunpack.c.l.b16 %v41
  %v186 = vunpack.c.l.b16 %v42
  %v187 = vunpack.c.l.b16 %v43
  %v188 = vunpack.c.l.b16 %v44
  %v189 = vunpack.c.l.b16 %v45
  %v190 = vunpack.c.l.b16 %v46
  %v191 = vunpack.c.l.b16 %v47
  %v192 = vunpack.c.l.b16 %v48
  %v193 = vunpack.c.l.b16 %v49
  %v194 = vunpack.c.l.b16 %v50
  %v195 = vunpack.c.l.b16 %v51
  %v196 = vunpack.c.l.b16 %v52
  %v197 = vunpack.c.l.b16 %v53
  %v198 = vunpack.c.l.b16 %v54
  %v199 = vunpack.c.l.b16 %v55
  %v200 = vunpack.c.l.b16 %v56
  %v201 = vunpack.c.l.b16 %v57
  %v202 = vunpack.c.l.b16 %v58
  %v203 = vunpack.c.l.b16 %v59
  %v204 = vunpack.c.l.b16 %v60
  %v205 = vunpack.c.l.b16 %v61
  %v206 = vunpack.c.l.b16 %v62
  %v207 = vunpack.c.l.b16 %v63
  %v208 = vunpack.c.l.b16 %v64
  %v209 = vunpack.c.l.b16 %v65
  %v210 = vunpack.c.l.b16 %v66
  %v211 = vunpack.c.l.b16 %v67
  %v212 = vunpack.c.l.b16 %v68
  %v213 = vunpack.c.l.b16 %v69
  %v214 = vunpack.c.l.b16 %v70
  %v215 = vunpack.c.l.b16 %v71
  %v216 = vunpack.c.l.b16 %v72
  %v217 = vunpack.c.l.b16 %v73
  %v218 = vunpack.c.l.b16 %v74
  %v219 = vunpack.c.l.b16 %v75
  %v220 = vunpack.c.l.b16 %v76
  %v221 = vunpack.c.l.b16 %v77
  %v222 = vunpack.c.l.b16 %v78
  %v223 = vpack.c.b16 %v160, %v159
  %v224 = vpack.c.b16 %v162, %v161
  %v225 = vpack.c.b16 %v164, %v163
  %v226 = vpack.c.b16 %v166, %v165
  %v227 = vpack.c.b16 %v168, %v167
  %v228 = vpack.c.b16 %v170, %v169
  %v229 = vpack.c.b16 %v172, %v171
  %v230 = vpack.c.b16 %v174, %v173
  %v231 = vpack.c.b16 %v176, %v175
  %v232 = vpack.c.b16 %v178, %v177
  %v233 = vpack.c.b16 %v180, %v179
  %v234 = vpack.c.b16 %v182, %v181
  %v235 = vpack.c.b16 %v184, %v183
  %v236 = vpack.c.b16 %v186, %v185
  %v237 = vpack.c.b16 %v188, %v187
  %v238 = vpack.c.b16 %v190, %v189
  %v239 = vpack.c.b16 %v192, %v191
  %v240 = vpack.c.b16 %v194, %v193
  %v241 = vpack.c.b16 %v196, %v195
  %v242 = vpack.c.b16 %v198, %v197
  %v243 = vpack.c.b16 %v200, %v199
  %v244 = vpack.c.b16 %v202, %v201
  %v245 = vpack.c.b16 %v204, %v203
  %v246 = vpack.c.b16 %v206, %v205
  %v247 = vpack.c.b16 %v208, %v207
  %v248 = vpack.c.b16 %v210, %v209
  %v249 = vpack.c.b16 %v212, %v211
  %v250 = vpack.c.b16 %v214, %v213
  %v251 = vpack.c.b16 %v216, %v215
  %v252 = vpack.c.b16 %v218, %v217
  %v253 = vpack.c.b16 %v220, %v219
  %v254 = vpack.c.b16 %v222, %v221
  %v303 = vunpack.c.l.b16 %v79
  %v304 = vunpack.c.l.b16 %v80
  %v305 = vunpack.c.l.b16 %v81
  %v306 = vunpack.c.l.b16 %v82
  %v307 = vunpack.c.l.b16 %v83
  %v308 = vunpack.c.l.b16 %v84
  %v309 = vunpack.c.l.b16 %v85
  %v310 = vunpack.c.l.b16 %v86
  %v311 = vunpack.c.l.b16 %v87
  %v312 = vunpack.c.l.b16 %v88
  %v313 = vunpack.c.l.b16 %v89
  %v314 = vunpack.c.l.b16 %v90
  %v315 = vunpack.c.l.b16 %v91
  %v316 = vunpack.c.l.b16 %v92
  %v317 = vunpack.c.l.b16 %v93
  %v318 = vunpack.c.l.b16 %v94
  %v319 = vpack.c.b16 %v304, %v303
  %v320 = vpack.c.b16 %v306, %v305
  %v321 = vpack.c.b16 %v308, %v307
  %v322 = vpack.c.b16 %v310, %v309
  %v323 = vpack.c.b16 %v312, %v311
  %v324 = vpack.c.b16 %v314, %v313
  %v325 = vpack.c.b16 %v316, %v315
  %v326 = vpack.c.b16 %v318, %v317
  %335 = vmatprep.subr.bf16.mxu0 0
  %336 = vmatpush1.bf16.msra.mxu0 %v319
  %337 = vmatprep.subr.bf16.mxu0 0
  %338 = vmatpush1.bf16.msra.mxu0 %v320
  %339 = vmatprep.subr.bf16.mxu0 0
  %340 = vmatpush1.bf16.msra.mxu0 %v321
  %341 = vmatprep.subr.bf16.mxu0 0
  %342 = vmatpush1.bf16.msra.mxu0 %v322
  %343 = vmatprep.subr.bf16.mxu0 0
  %344 = vmatpush1.bf16.msra.mxu0 %v323
  %345 = vmatprep.subr.bf16.mxu0 0
  %346 = vmatpush1.bf16.msra.mxu0 %v324
  %347 = vmatprep.subr.bf16.mxu0 0
  %348 = vmatpush1.bf16.msra.mxu0 %v325
  %349 = vmatprep.subr.bf16.mxu0 0
  %350 = vmatpush1.bf16.msra.mxu0 %v326
  %351 = vmatprep.subr.bf16.mxu0 0
  %352 = vmatpush1.bf16.msra.mxu0 0
  %353 = vmatprep.subr.bf16.mxu0 0
  %354 = vmatpush1.bf16.msra.mxu0 0
  %355 = vmatprep.subr.bf16.mxu0 0
  %356 = vmatpush1.bf16.msra.mxu0 0
  %357 = vmatprep.subr.bf16.mxu0 0
  %358 = vmatpush1.bf16.msra.mxu0 0
  %359 = vmatprep.subr.bf16.mxu0 0
  %360 = vmatpush1.bf16.msra.mxu0 0
  %361 = vmatprep.subr.bf16.mxu0 0
  %362 = vmatpush1.bf16.msra.mxu0 0
  %363 = vmatprep.subr.bf16.mxu0 0
  %364 = vmatpush1.bf16.msra.mxu0 0
  %365 = vmatprep.subr.bf16.mxu0 0
  %366 = vmatpush1.bf16.msra.mxu0 0
  %367 = vmatprep.mubr.bf16.mxu0 0
  %368 = vmatmul.mubr.bf16.gmra.mrb[0].mxu0 %v223
  %v369 = vpop.f32.mrb[0].mxu0
  %v370 = vadd.f32 0.0, %v369
  %v371 = vpop.f32.mrb[0].mxu0
  %v372 = vpop.f32.mrb[0].mxu0
  %v373 = vadd.f32 0.0, %v372
  %v374 = vpop.f32.mrb[0].mxu0
  %375 = vmatprep.mubr.bf16.mxu0 0
  %376 = vmatmul.mubr.bf16.gmra.mrb[0].mxu0 %v224
  %v377 = vpop.f32.mrb[0].mxu0
  %v378 = vadd.f32 0.0, %v377
  %v379 = vpop.f32.mrb[0].mxu0
  %v380 = vpop.f32.mrb[0].mxu0
  %v381 = vadd.f32 0.0, %v380
  %v382 = vpop.f32.mrb[0].mxu0
  %383 = vmatprep.mubr.bf16.mxu0 0
  %384 = vmatmul.mubr.bf16.gmra.mrb[0].mxu0 %v225
  %v385 = vpop.f32.mrb[0].mxu0
  %v386 = vadd.f32 0.0, %v385
  %v387 = vpop.f32.mrb[0].mxu0
  %v388 = vpop.f32.mrb[0].mxu0
  %v389 = vadd.f32 0.0, %v388
  %v390 = vpop.f32.mrb[0].mxu0
  %391 = vmatprep.mubr.bf16.mxu0 0
  %392 = vmatmul.mubr.bf16.gmra.mrb[0].mxu0 %v226
  %v393 = vpop.f32.mrb[0].mxu0
  %v394 = vadd.f32 0.0, %v393
  %v395 = vpop.f32.mrb[0].mxu0
  %v396 = vpop.f32.mrb[0].mxu0
  %v397 = vadd.f32 0.0, %v396
  %v398 = vpop.f32.mrb[0].mxu0
  %399 = vmatprep.mubr.bf16.mxu0 0
  %400 = vmatmul.mubr.bf16.gmra.mrb[0].mxu0 %v227
  %v401 = vpop.f32.mrb[0].mxu0
  %v402 = vadd.f32 0.0, %v401
  %v403 = vpop.f32.mrb[0].mxu0
  %v404 = vpop.f32.mrb[0].mxu0
  %v405 = vadd.f32 0.0, %v404
  %v406 = vpop.f32.mrb[0].mxu0
  %407 = vmatprep.mubr.bf16.mxu0 0
  %408 = vmatmul.mubr.bf16.gmra.mrb[0].mxu0 %v228
  %v409 = vpop.f32.mrb[0].mxu0
  %v410 = vadd.f32 0.0, %v409
  %v411 = vpop.f32.mrb[0].mxu0
  %v412 = vpop.f32.mrb[0].mxu0
  %v413 = vadd.f32 0.0, %v412
  %v414 = vpop.f32.mrb[0].mxu0
  %415 = vmatprep.mubr.bf16.mxu0 0
  %416 = vmatmul.mubr.bf16.gmra.mrb[0].mxu0 %v229
  %v417 = vpop.f32.mrb[0].mxu0
  %v418 = vadd.f32 0.0, %v417
  %v419 = vpop.f32.mrb[0].mxu0
  %v420 = vpop.f32.mrb[0].mxu0
  %v421 = vadd.f32 0.0, %v420
  %v422 = vpop.f32.mrb[0].mxu0
  %423 = vmatprep.mubr.bf16.mxu0 0
  %424 = vmatmul.mubr.bf16.gmra.mrb[0].mxu0 %v230
  %v425 = vpop.f32.mrb[0].mxu0
  %v426 = vadd.f32 0.0, %v425
  %v427 = vpop.f32.mrb[0].mxu0
  %v428 = vpop.f32.mrb[0].mxu0
  %v429 = vadd.f32 0.0, %v428
  %v430 = vpop.f32.mrb[0].mxu0
  %431 = vmatprep.mubr.bf16.mxu0 0
  %432 = vmatmul.mubr.bf16.gmra.mrb[0].mxu0 %v231
  %v433 = vpop.f32.mrb[0].mxu0
  %v434 = vadd.f32 0.0, %v433
  %v435 = vpop.f32.mrb[0].mxu0
  %v436 = vpop.f32.mrb[0].mxu0
  %v437 = vadd.f32 0.0, %v436
  %v438 = vpop.f32.mrb[0].mxu0
  %439 = vmatprep.mubr.bf16.mxu0 0
  %440 = vmatmul.mubr.bf16.gmra.mrb[0].mxu0 %v232
  %v441 = vpop.f32.mrb[0].mxu0
  %v442 = vadd.f32 0.0, %v441
  %v443 = vpop.f32.mrb[0].mxu0
  %v444 = vpop.f32.mrb[0].mxu0
  %v445 = vadd.f32 0.0, %v444
  %v446 = vpop.f32.mrb[0].mxu0
  %447 = vmatprep.mubr.bf16.mxu0 0
  %448 = vmatmul.mubr.bf16.gmra.mrb[0].mxu0 %v233
  %v449 = vpop.f32.mrb[0].mxu0
  %v450 = vadd.f32 0.0, %v449
  %v451 = vpop.f32.mrb[0].mxu0
  %v452 = vpop.f32.mrb[0].mxu0
  %v453 = vadd.f32 0.0, %v452
  %v454 = vpop.f32.mrb[0].mxu0
  %455 = vmatprep.mubr.bf16.mxu0 0
  %456 = vmatmul.mubr.bf16.gmra.mrb[0].mxu0 %v234
  %v457 = vpop.f32.mrb[0].mxu0
  %v458 = vadd.f32 0.0, %v457
  %v459 = vpop.f32.mrb[0].mxu0
  %v460 = vpop.f32.mrb[0].mxu0
  %v461 = vadd.f32 0.0, %v460
  %v462 = vpop.f32.mrb[0].mxu0
  %463 = vmatprep.mubr.bf16.mxu0 0
  %464 = vmatmul.mubr.bf16.gmra.mrb[0].mxu0 %v235
  %v465 = vpop.f32.mrb[0].mxu0
  %v466 = vadd.f32 0.0, %v465
  %v467 = vpop.f32.mrb[0].mxu0
  %v468 = vpop.f32.mrb[0].mxu0
  %v469 = vadd.f32 0.0, %v468
  %v470 = vpop.f32.mrb[0].mxu0
  %471 = vmatprep.mubr.bf16.mxu0 0
  %472 = vmatmul.mubr.bf16.gmra.mrb[0].mxu0 %v236
  %v473 = vpop.f32.mrb[0].mxu0
  %v474 = vadd.f32 0.0, %v473
  %v475 = vpop.f32.mrb[0].mxu0
  %v476 = vpop.f32.mrb[0].mxu0
  %v477 = vadd.f32 0.0, %v476
  %v478 = vpop.f32.mrb[0].mxu0
  %479 = vmatprep.mubr.bf16.mxu0 0
  %480 = vmatmul.mubr.bf16.gmra.mrb[0].mxu0 %v237
  %v481 = vpop.f32.mrb[0].mxu0
  %v482 = vadd.f32 0.0, %v481
  %v483 = vpop.f32.mrb[0].mxu0
  %v484 = vpop.f32.mrb[0].mxu0
  %v485 = vadd.f32 0.0, %v484
  %v486 = vpop.f32.mrb[0].mxu0
  %487 = vmatprep.mubr.bf16.mxu0 0
  %488 = vmatmul.mubr.bf16.gmra.mrb[0].mxu0 %v238
  %v489 = vpop.f32.mrb[0].mxu0
  %v490 = vadd.f32 0.0, %v489
  %v491 = vpop.f32.mrb[0].mxu0
  %v492 = vpop.f32.mrb[0].mxu0
  %v493 = vadd.f32 0.0, %v492
  %v494 = vpop.f32.mrb[0].mxu0
  %495 = vmatprep.mubr.bf16.mxu0 0
  %496 = vmatmul.mubr.bf16.gmra.mrb[0].mxu0 %v239
  %v497 = vpop.f32.mrb[0].mxu0
  %v498 = vadd.f32 0.0, %v497
  %v499 = vpop.f32.mrb[0].mxu0
  %v500 = vpop.f32.mrb[0].mxu0
  %v501 = vadd.f32 0.0, %v500
  %v502 = vpop.f32.mrb[0].mxu0
  %503 = vmatprep.mubr.bf16.mxu0 0
  %504 = vmatmul.mubr.bf16.gmra.mrb[0].mxu0 %v240
  %v505 = vpop.f32.mrb[0].mxu0
  %v506 = vadd.f32 0.0, %v505
  %v507 = vpop.f32.mrb[0].mxu0
  %v508 = vpop.f32.mrb[0].mxu0
  %v509 = vadd.f32 0.0, %v508
  %v510 = vpop.f32.mrb[0].mxu0
  %511 = vmatprep.mubr.bf16.mxu0 0
  %512 = vmatmul.mubr.bf16.gmra.mrb[0].mxu0 %v241
  %v513 = vpop.f32.mrb[0].mxu0
  %v514 = vadd.f32 0.0, %v513
  %v515 = vpop.f32.mrb[0].mxu0
  %v516 = vpop.f32.mrb[0].mxu0
  %v517 = vadd.f32 0.0, %v516
  %v518 = vpop.f32.mrb[0].mxu0
  %519 = vmatprep.mubr.bf16.mxu0 0
  %520 = vmatmul.mubr.bf16.gmra.mrb[0].mxu0 %v242
  %v521 = vpop.f32.mrb[0].mxu0
  %v522 = vadd.f32 0.0, %v521
  %v523 = vpop.f32.mrb[0].mxu0
  %v524 = vpop.f32.mrb[0].mxu0
  %v525 = vadd.f32 0.0, %v524
  %v526 = vpop.f32.mrb[0].mxu0
  %527 = vmatprep.mubr.bf16.mxu0 0
  %528 = vmatmul.mubr.bf16.gmra.mrb[0].mxu0 %v243
  %v529 = vpop.f32.mrb[0].mxu0
  %v530 = vadd.f32 0.0, %v529
  %v531 = vpop.f32.mrb[0].mxu0
  %v532 = vpop.f32.mrb[0].mxu0
  %v533 = vadd.f32 0.0, %v532
  %v534 = vpop.f32.mrb[0].mxu0
  %535 = vmatprep.mubr.bf16.mxu0 0
  %536 = vmatmul.mubr.bf16.gmra.mrb[0].mxu0 %v244
  %v537 = vpop.f32.mrb[0].mxu0
  %v538 = vadd.f32 0.0, %v537
  %v539 = vpop.f32.mrb[0].mxu0
  %v540 = vpop.f32.mrb[0].mxu0
  %v541 = vadd.f32 0.0, %v540
  %v542 = vpop.f32.mrb[0].mxu0
  %543 = vmatprep.mubr.bf16.mxu0 0
  %544 = vmatmul.mubr.bf16.gmra.mrb[0].mxu0 %v245
  %v545 = vpop.f32.mrb[0].mxu0
  %v546 = vadd.f32 0.0, %v545
  %v547 = vpop.f32.mrb[0].mxu0
  %v548 = vpop.f32.mrb[0].mxu0
  %v549 = vadd.f32 0.0, %v548
  %v550 = vpop.f32.mrb[0].mxu0
  %551 = vmatprep.mubr.bf16.mxu0 0
  %552 = vmatmul.mubr.bf16.gmra.mrb[0].mxu0 %v246
  %v553 = vpop.f32.mrb[0].mxu0
  %v554 = vadd.f32 0.0, %v553
  %v555 = vpop.f32.mrb[0].mxu0
  %v556 = vpop.f32.mrb[0].mxu0
  %v557 = vadd.f32 0.0, %v556
  %v558 = vpop.f32.mrb[0].mxu0
  %559 = vmatprep.mubr.bf16.mxu0 0
  %560 = vmatmul.mubr.bf16.gmra.mrb[0].mxu0 %v247
  %v561 = vpop.f32.mrb[0].mxu0
  %v562 = vadd.f32 0.0, %v561
  %v563 = vpop.f32.mrb[0].mxu0
  %v564 = vpop.f32.mrb[0].mxu0
  %v565 = vadd.f32 0.0, %v564
  %v566 = vpop.f32.mrb[0].mxu0
  %567 = vmatprep.mubr.bf16.mxu0 0
  %568 = vmatmul.mubr.bf16.gmra.mrb[0].mxu0 %v248
  %v569 = vpop.f32.mrb[0].mxu0
  %v570 = vadd.f32 0.0, %v569
  %v571 = vpop.f32.mrb[0].mxu0
  %v572 = vpop.f32.mrb[0].mxu0
  %v573 = vadd.f32 0.0, %v572
  %v574 = vpop.f32.mrb[0].mxu0
  %575 = vmatprep.mubr.bf16.mxu0 0
  %576 = vmatmul.mubr.bf16.gmra.mrb[0].mxu0 %v249
  %v577 = vpop.f32.mrb[0].mxu0
  %v578 = vadd.f32 0.0, %v577
  %v579 = vpop.f32.mrb[0].mxu0
  %v580 = vpop.f32.mrb[0].mxu0
  %v581 = vadd.f32 0.0, %v580
  %v582 = vpop.f32.mrb[0].mxu0
  %583 = vmatprep.mubr.bf16.mxu0 0
  %584 = vmatmul.mubr.bf16.gmra.mrb[0].mxu0 %v250
  %v585 = vpop.f32.mrb[0].mxu0
  %v586 = vadd.f32 0.0, %v585
  %v587 = vpop.f32.mrb[0].mxu0
  %v588 = vpop.f32.mrb[0].mxu0
  %v589 = vadd.f32 0.0, %v588
  %v590 = vpop.f32.mrb[0].mxu0
  %591 = vmatprep.mubr.bf16.mxu0 0
  %592 = vmatmul.mubr.bf16.gmra.mrb[0].mxu0 %v251
  %v593 = vpop.f32.mrb[0].mxu0
  %v594 = vadd.f32 0.0, %v593
  %v595 = vpop.f32.mrb[0].mxu0
  %v596 = vpop.f32.mrb[0].mxu0
  %v597 = vadd.f32 0.0, %v596
  %v598 = vpop.f32.mrb[0].mxu0
  %599 = vmatprep.mubr.bf16.mxu0 0
  %600 = vmatmul.mubr.bf16.gmra.mrb[0].mxu0 %v252
  %v601 = vpop.f32.mrb[0].mxu0
  %v602 = vadd.f32 0.0, %v601
  %v603 = vpop.f32.mrb[0].mxu0
  %v604 = vpop.f32.mrb[0].mxu0
  %v605 = vadd.f32 0.0, %v604
  %v606 = vpop.f32.mrb[0].mxu0
  %607 = vmatprep.mubr.bf16.mxu0 0
  %608 = vmatmul.mubr.bf16.gmra.mrb[0].mxu0 %v253
  %v609 = vpop.f32.mrb[0].mxu0
  %v610 = vadd.f32 0.0, %v609
  %v611 = vpop.f32.mrb[0].mxu0
  %v612 = vpop.f32.mrb[0].mxu0
  %v613 = vadd.f32 0.0, %v612
  %v614 = vpop.f32.mrb[0].mxu0
  %615 = vmatprep.mubr.bf16.mxu0 0
  %616 = vmatmul.mubr.bf16.gmra.mrb[0].mxu0 %v254
  %v617 = vpop.f32.mrb[0].mxu0
  %v618 = vadd.f32 0.0, %v617
  %v619 = vpop.f32.mrb[0].mxu0
  %v620 = vpop.f32.mrb[0].mxu0
  %v621 = vadd.f32 0.0, %v620
  %v622 = vpop.f32.mrb[0].mxu0
  %623 = vdwg.mxu0
  %v624 = vld [vmem:[%s2] sm:$0x1]
  %v625 = vlaneseq
  %v626 = vshrl.u32 %v625, 7
  %v627 = vsub.s32 0, %v626
  %v628 = vrot.slane %v624, %v627
  %v629 = vmul.f32 %v370, %v628
  %v630 = vmul.f32 %v373, %v628
  %v631 = vmul.f32 %v378, %v628
  %v632 = vmul.f32 %v381, %v628
  %v633 = vmul.f32 %v386, %v628
  %v634 = vmul.f32 %v389, %v628
  %v635 = vmul.f32 %v394, %v628
  %v636 = vmul.f32 %v397, %v628
  %v637 = vmul.f32 %v402, %v628
  %v638 = vmul.f32 %v405, %v628
  %v639 = vmul.f32 %v410, %v628
  %v640 = vmul.f32 %v413, %v628
  %v641 = vmul.f32 %v418, %v628
  %v642 = vmul.f32 %v421, %v628
  %v643 = vmul.f32 %v426, %v628
  %v644 = vmul.f32 %v429, %v628
  %v645 = vmul.f32 %v434, %v628
  %v646 = vmul.f32 %v437, %v628
  %v647 = vmul.f32 %v442, %v628
  %v648 = vmul.f32 %v445, %v628
  %v649 = vmul.f32 %v450, %v628
  %v650 = vmul.f32 %v453, %v628
  %v651 = vmul.f32 %v458, %v628
  %v652 = vmul.f32 %v461, %v628
  %v653 = vmul.f32 %v466, %v628
  %v654 = vmul.f32 %v469, %v628
  %v655 = vmul.f32 %v474, %v628
  %v656 = vmul.f32 %v477, %v628
  %v657 = vmul.f32 %v482, %v628
  %v658 = vmul.f32 %v485, %v628
  %v659 = vmul.f32 %v490, %v628
  %v660 = vmul.f32 %v493, %v628
  %v661 = vmul.f32 %v498, %v628
  %v662 = vmul.f32 %v501, %v628
  %v663 = vmul.f32 %v506, %v628
  %v664 = vmul.f32 %v509, %v628
  %v665 = vmul.f32 %v514, %v628
  %v666 = vmul.f32 %v517, %v628
  %v667 = vmul.f32 %v522, %v628
  %v668 = vmul.f32 %v525, %v628
  %v669 = vmul.f32 %v530, %v628
  %v670 = vmul.f32 %v533, %v628
  %v671 = vmul.f32 %v538, %v628
  %v672 = vmul.f32 %v541, %v628
  %v673 = vmul.f32 %v546, %v628
  %v674 = vmul.f32 %v549, %v628
  %v675 = vmul.f32 %v554, %v628
  %v676 = vmul.f32 %v557, %v628
  %v677 = vmul.f32 %v562, %v628
  %v678 = vmul.f32 %v565, %v628
  %v679 = vmul.f32 %v570, %v628
  %v680 = vmul.f32 %v573, %v628
  %v681 = vmul.f32 %v578, %v628
  %v682 = vmul.f32 %v581, %v628
  %v683 = vmul.f32 %v586, %v628
  %v684 = vmul.f32 %v589, %v628
  %v685 = vmul.f32 %v594, %v628
  %v686 = vmul.f32 %v597, %v628
  %v687 = vmul.f32 %v602, %v628
  %v688 = vmul.f32 %v605, %v628
  %v689 = vmul.f32 %v610, %v628
  %v690 = vmul.f32 %v613, %v628
  %v691 = vmul.f32 %v618, %v628
  %v692 = vmul.f32 %v621, %v628
  %v693 = vld [vmem:[%s2 + $0x1] sm:$0x1]
  %v694 = vlaneseq
  %v695 = vshrl.u32 %v694, 7
  %v696 = vsub.s32 0, %v695
  %v697 = vrot.slane %v693, %v696
  %v698 = vadd.f32 %v629, %v697
  %v699 = vadd.f32 %v630, %v697
  %v700 = vadd.f32 %v631, %v697
  %v701 = vadd.f32 %v632, %v697
  %v702 = vadd.f32 %v633, %v697
  %v703 = vadd.f32 %v634, %v697
  %v704 = vadd.f32 %v635, %v697
  %v705 = vadd.f32 %v636, %v697
  %v706 = vadd.f32 %v637, %v697
  %v707 = vadd.f32 %v638, %v697
  %v708 = vadd.f32 %v639, %v697
  %v709 = vadd.f32 %v640, %v697
  %v710 = vadd.f32 %v641, %v697
  %v711 = vadd.f32 %v642, %v697
  %v712 = vadd.f32 %v643, %v697
  %v713 = vadd.f32 %v644, %v697
  %v714 = vadd.f32 %v645, %v697
  %v715 = vadd.f32 %v646, %v697
  %v716 = vadd.f32 %v647, %v697
  %v717 = vadd.f32 %v648, %v697
  %v718 = vadd.f32 %v649, %v697
  %v719 = vadd.f32 %v650, %v697
  %v720 = vadd.f32 %v651, %v697
  %v721 = vadd.f32 %v652, %v697
  %v722 = vadd.f32 %v653, %v697
  %v723 = vadd.f32 %v654, %v697
  %v724 = vadd.f32 %v655, %v697
  %v725 = vadd.f32 %v656, %v697
  %v726 = vadd.f32 %v657, %v697
  %v727 = vadd.f32 %v658, %v697
  %v728 = vadd.f32 %v659, %v697
  %v729 = vadd.f32 %v660, %v697
  %v730 = vadd.f32 %v661, %v697
  %v731 = vadd.f32 %v662, %v697
  %v732 = vadd.f32 %v663, %v697
  %v733 = vadd.f32 %v664, %v697
  %v734 = vadd.f32 %v665, %v697
  %v735 = vadd.f32 %v666, %v697
  %v736 = vadd.f32 %v667, %v697
  %v737 = vadd.f32 %v668, %v697
  %v738 = vadd.f32 %v669, %v697
  %v739 = vadd.f32 %v670, %v697
  %v740 = vadd.f32 %v671, %v697
  %v741 = vadd.f32 %v672, %v697
  %v742 = vadd.f32 %v673, %v697
  %v743 = vadd.f32 %v674, %v697
  %v744 = vadd.f32 %v675, %v697
  %v745 = vadd.f32 %v676, %v697
  %v746 = vadd.f32 %v677, %v697
  %v747 = vadd.f32 %v678, %v697
  %v748 = vadd.f32 %v679, %v697
  %v749 = vadd.f32 %v680, %v697
  %v750 = vadd.f32 %v681, %v697
  %v751 = vadd.f32 %v682, %v697
  %v752 = vadd.f32 %v683, %v697
  %v753 = vadd.f32 %v684, %v697
  %v754 = vadd.f32 %v685, %v697
  %v755 = vadd.f32 %v686, %v697
  %v756 = vadd.f32 %v687, %v697
  %v757 = vadd.f32 %v688, %v697
  %v758 = vadd.f32 %v689, %v697
  %v759 = vadd.f32 %v690, %v697
  %v760 = vadd.f32 %v691, %v697
  %v761 = vadd.f32 %v692, %v697
  %v762 = vmax.f32 %v698, 0.0
  %v763 = vmax.f32 %v699, 0.0
  %v764 = vmax.f32 %v700, 0.0
  %v765 = vmax.f32 %v701, 0.0
  %v766 = vmax.f32 %v702, 0.0
  %v767 = vmax.f32 %v703, 0.0
  %v768 = vmax.f32 %v704, 0.0
  %v769 = vmax.f32 %v705, 0.0
  %v770 = vmax.f32 %v706, 0.0
  %v771 = vmax.f32 %v707, 0.0
  %v772 = vmax.f32 %v708, 0.0
  %v773 = vmax.f32 %v709, 0.0
  %v774 = vmax.f32 %v710, 0.0
  %v775 = vmax.f32 %v711, 0.0
  %v776 = vmax.f32 %v712, 0.0
  %v777 = vmax.f32 %v713, 0.0
  %v778 = vmax.f32 %v714, 0.0
  %v779 = vmax.f32 %v715, 0.0
  %v780 = vmax.f32 %v716, 0.0
  %v781 = vmax.f32 %v717, 0.0
  %v782 = vmax.f32 %v718, 0.0
  %v783 = vmax.f32 %v719, 0.0
  %v784 = vmax.f32 %v720, 0.0
  %v785 = vmax.f32 %v721, 0.0
  %v786 = vmax.f32 %v722, 0.0
  %v787 = vmax.f32 %v723, 0.0
  %v788 = vmax.f32 %v724, 0.0
  %v789 = vmax.f32 %v725, 0.0
  %v790 = vmax.f32 %v726, 0.0
  %v791 = vmax.f32 %v727, 0.0
  %v792 = vmax.f32 %v728, 0.0
  %v793 = vmax.f32 %v729, 0.0
  %v794 = vmax.f32 %v730, 0.0
  %v795 = vmax.f32 %v731, 0.0
  %v796 = vmax.f32 %v732, 0.0
  %v797 = vmax.f32 %v733, 0.0
  %v798 = vmax.f32 %v734, 0.0
  %v799 = vmax.f32 %v735, 0.0
  %v800 = vmax.f32 %v736, 0.0
  %v801 = vmax.f32 %v737, 0.0
  %v802 = vmax.f32 %v738, 0.0
  %v803 = vmax.f32 %v739, 0.0
  %v804 = vmax.f32 %v740, 0.0
  %v805 = vmax.f32 %v741, 0.0
  %v806 = vmax.f32 %v742, 0.0
  %v807 = vmax.f32 %v743, 0.0
  %v808 = vmax.f32 %v744, 0.0
  %v809 = vmax.f32 %v745, 0.0
  %v810 = vmax.f32 %v746, 0.0
  %v811 = vmax.f32 %v747, 0.0
  %v812 = vmax.f32 %v748, 0.0
  %v813 = vmax.f32 %v749, 0.0
  %v814 = vmax.f32 %v750, 0.0
  %v815 = vmax.f32 %v751, 0.0
  %v816 = vmax.f32 %v752, 0.0
  %v817 = vmax.f32 %v753, 0.0
  %v818 = vmax.f32 %v754, 0.0
  %v819 = vmax.f32 %v755, 0.0
  %v820 = vmax.f32 %v756, 0.0
  %v821 = vmax.f32 %v757, 0.0
  %v822 = vmax.f32 %v758, 0.0
  %v823 = vmax.f32 %v759, 0.0
  %v824 = vmax.f32 %v760, 0.0
  %v825 = vmax.f32 %v761, 0.0
  %v826 = vpack.c.bf16 %v763, %v762
  %v827 = vpack.c.bf16 %v765, %v764
  %v828 = vpack.c.bf16 %v767, %v766
  %v829 = vpack.c.bf16 %v769, %v768
  %v830 = vpack.c.bf16 %v771, %v770
  %v831 = vpack.c.bf16 %v773, %v772
  %v832 = vpack.c.bf16 %v775, %v774
  %v833 = vpack.c.bf16 %v777, %v776
  %v834 = vpack.c.bf16 %v779, %v778
  %v835 = vpack.c.bf16 %v781, %v780
  %v836 = vpack.c.bf16 %v783, %v782
  %v837 = vpack.c.bf16 %v785, %v784
  %v838 = vpack.c.bf16 %v787, %v786
  %v839 = vpack.c.bf16 %v789, %v788
  %v840 = vpack.c.bf16 %v791, %v790
  %v841 = vpack.c.bf16 %v793, %v792
  %v842 = vpack.c.bf16 %v795, %v794
  %v843 = vpack.c.bf16 %v797, %v796
  %v844 = vpack.c.bf16 %v799, %v798
  %v845 = vpack.c.bf16 %v801, %v800
  %v846 = vpack.c.bf16 %v803, %v802
  %v847 = vpack.c.bf16 %v805, %v804
  %v848 = vpack.c.bf16 %v807, %v806
  %v849 = vpack.c.bf16 %v809, %v808
  %v850 = vpack.c.bf16 %v811, %v810
  %v851 = vpack.c.bf16 %v813, %v812
  %v852 = vpack.c.bf16 %v815, %v814
  %v853 = vpack.c.bf16 %v817, %v816
  %v854 = vpack.c.bf16 %v819, %v818
  %v855 = vpack.c.bf16 %v821, %v820
  %v856 = vpack.c.bf16 %v823, %v822
  %v857 = vpack.c.bf16 %v825, %v824
  %v890 = vunpack.c.l.b16 %v826
  %v891 = vunpack.c.h.b16 %v826
  %v892 = vunpack.c.l.b16 %v827
  %v893 = vunpack.c.h.b16 %v827
  %v894 = vunpack.c.l.b16 %v828
  %v895 = vunpack.c.h.b16 %v828
  %v896 = vunpack.c.l.b16 %v829
  %v897 = vunpack.c.h.b16 %v829
  %v898 = vunpack.c.l.b16 %v830
  %v899 = vunpack.c.h.b16 %v830
  %v900 = vunpack.c.l.b16 %v831
  %v901 = vunpack.c.h.b16 %v831
  %v902 = vunpack.c.l.b16 %v832
  %v903 = vunpack.c.h.b16 %v832
  %v904 = vunpack.c.l.b16 %v833
  %v905 = vunpack.c.h.b16 %v833
  %v906 = vunpack.c.l.b16 %v834
  %v907 = vunpack.c.h.b16 %v834
  %v908 = vunpack.c.l.b16 %v835
  %v909 = vunpack.c.h.b16 %v835
  %v910 = vunpack.c.l.b16 %v836
  %v911 = vunpack.c.h.b16 %v836
  %v912 = vunpack.c.l.b16 %v837
  %v913 = vunpack.c.h.b16 %v837
  %v914 = vunpack.c.l.b16 %v838
  %v915 = vunpack.c.h.b16 %v838
  %v916 = vunpack.c.l.b16 %v839
  %v917 = vunpack.c.h.b16 %v839
  %v918 = vunpack.c.l.b16 %v840
  %v919 = vunpack.c.h.b16 %v840
  %v920 = vunpack.c.l.b16 %v841
  %v921 = vunpack.c.h.b16 %v841
  %v922 = vunpack.c.l.b16 %v842
  %v923 = vunpack.c.h.b16 %v842
  %v924 = vunpack.c.l.b16 %v843
  %v925 = vunpack.c.h.b16 %v843
  %v926 = vunpack.c.l.b16 %v844
  %v927 = vunpack.c.h.b16 %v844
  %v928 = vunpack.c.l.b16 %v845
  %v929 = vunpack.c.h.b16 %v845
  %v930 = vunpack.c.l.b16 %v846
  %v931 = vunpack.c.h.b16 %v846
  %v932 = vunpack.c.l.b16 %v847
  %v933 = vunpack.c.h.b16 %v847
  %v934 = vunpack.c.l.b16 %v848
  %v935 = vunpack.c.h.b16 %v848
  %v936 = vunpack.c.l.b16 %v849
  %v937 = vunpack.c.h.b16 %v849
  %v938 = vunpack.c.l.b16 %v850
  %v939 = vunpack.c.h.b16 %v850
  %v940 = vunpack.c.l.b16 %v851
  %v941 = vunpack.c.h.b16 %v851
  %v942 = vunpack.c.l.b16 %v852
  %v943 = vunpack.c.h.b16 %v852
  %v944 = vunpack.c.l.b16 %v853
  %v945 = vunpack.c.h.b16 %v853
  %v946 = vunpack.c.l.b16 %v854
  %v947 = vunpack.c.h.b16 %v854
  %v948 = vunpack.c.l.b16 %v855
  %v949 = vunpack.c.h.b16 %v855
  %v950 = vunpack.c.l.b16 %v856
  %v951 = vunpack.c.h.b16 %v856
  %v952 = vunpack.c.l.b16 %v857
  %v953 = vunpack.c.h.b16 %v857
  %v954 = vpack.c.b16 %v890, %v890
  %v955 = vpack.c.b16 %v891, %v891
  %v956 = vpack.c.b16 %v892, %v892
  %v957 = vpack.c.b16 %v893, %v893
  %v958 = vpack.c.b16 %v894, %v894
  %v959 = vpack.c.b16 %v895, %v895
  %v960 = vpack.c.b16 %v896, %v896
  %v961 = vpack.c.b16 %v897, %v897
  %v962 = vpack.c.b16 %v898, %v898
  %v963 = vpack.c.b16 %v899, %v899
  %v964 = vpack.c.b16 %v900, %v900
  %v965 = vpack.c.b16 %v901, %v901
  %v966 = vpack.c.b16 %v902, %v902
  %v967 = vpack.c.b16 %v903, %v903
  %v968 = vpack.c.b16 %v904, %v904
  %v969 = vpack.c.b16 %v905, %v905
  %v970 = vpack.c.b16 %v906, %v906
  %v971 = vpack.c.b16 %v907, %v907
  %v972 = vpack.c.b16 %v908, %v908
  %v973 = vpack.c.b16 %v909, %v909
  %v974 = vpack.c.b16 %v910, %v910
  %v975 = vpack.c.b16 %v911, %v911
  %v976 = vpack.c.b16 %v912, %v912
  %v977 = vpack.c.b16 %v913, %v913
  %v978 = vpack.c.b16 %v914, %v914
  %v979 = vpack.c.b16 %v915, %v915
  %v980 = vpack.c.b16 %v916, %v916
  %v981 = vpack.c.b16 %v917, %v917
  %v982 = vpack.c.b16 %v918, %v918
  %v983 = vpack.c.b16 %v919, %v919
  %v984 = vpack.c.b16 %v920, %v920
  %v985 = vpack.c.b16 %v921, %v921
  %v986 = vpack.c.b16 %v922, %v922
  %v987 = vpack.c.b16 %v923, %v923
  %v988 = vpack.c.b16 %v924, %v924
  %v989 = vpack.c.b16 %v925, %v925
  %v990 = vpack.c.b16 %v926, %v926
  %v991 = vpack.c.b16 %v927, %v927
  %v992 = vpack.c.b16 %v928, %v928
  %v993 = vpack.c.b16 %v929, %v929
  %v994 = vpack.c.b16 %v930, %v930
  %v995 = vpack.c.b16 %v931, %v931
  %v996 = vpack.c.b16 %v932, %v932
  %v997 = vpack.c.b16 %v933, %v933
  %v998 = vpack.c.b16 %v934, %v934
  %v999 = vpack.c.b16 %v935, %v935
  %v1000 = vpack.c.b16 %v936, %v936
  %v1001 = vpack.c.b16 %v937, %v937
  %v1002 = vpack.c.b16 %v938, %v938
  %v1003 = vpack.c.b16 %v939, %v939
  %v1004 = vpack.c.b16 %v940, %v940
  %v1005 = vpack.c.b16 %v941, %v941
  %v1006 = vpack.c.b16 %v942, %v942
  %v1007 = vpack.c.b16 %v943, %v943
  %v1008 = vpack.c.b16 %v944, %v944
  %v1009 = vpack.c.b16 %v945, %v945
  %v1010 = vpack.c.b16 %v946, %v946
  %v1011 = vpack.c.b16 %v947, %v947
  %v1012 = vpack.c.b16 %v948, %v948
  %v1013 = vpack.c.b16 %v949, %v949
  %v1014 = vpack.c.b16 %v950, %v950
  %v1015 = vpack.c.b16 %v951, %v951
  %v1016 = vpack.c.b16 %v952, %v952
  %v1017 = vpack.c.b16 %v953, %v953
  %1082 = vst [vmem:[%s3] sm:$0xf] %v954
  %1083 = vst [vmem:[%s3 + $0x4] sm:$0xf] %v955
  %1084 = vst [vmem:[%s3 + $0x8] sm:$0xf] %v956
  %1085 = vst [vmem:[%s3 + $0xc] sm:$0xf] %v957
  %1086 = vst [vmem:[%s3 + $0x10] sm:$0xf] %v958
  %1087 = vst [vmem:[%s3 + $0x14] sm:$0xf] %v959
  %1088 = vst [vmem:[%s3 + $0x18] sm:$0xf] %v960
  %1089 = vst [vmem:[%s3 + $0x1c] sm:$0xf] %v961
  %1090 = vst [vmem:[%s3 + $0x20] sm:$0xf] %v962
  %1091 = vst [vmem:[%s3 + $0x24] sm:$0xf] %v963
  %1092 = vst [vmem:[%s3 + $0x28] sm:$0xf] %v964
  %1093 = vst [vmem:[%s3 + $0x2c] sm:$0xf] %v965
  %1094 = vst [vmem:[%s3 + $0x30] sm:$0xf] %v966
  %1095 = vst [vmem:[%s3 + $0x34] sm:$0xf] %v967
  %1096 = vst [vmem:[%s3 + $0x38] sm:$0xf] %v968
  %1097 = vst [vmem:[%s3 + $0x3c] sm:$0xf] %v969
  %1098 = vst [vmem:[%s3 + $0x40] sm:$0xf] %v970
  %1099 = vst [vmem:[%s3 + $0x44] sm:$0xf] %v971
  %1100 = vst [vmem:[%s3 + $0x48] sm:$0xf] %v972
  %1101 = vst [vmem:[%s3 + $0x4c] sm:$0xf] %v973
  %1102 = vst [vmem:[%s3 + $0x50] sm:$0xf] %v974
  %1103 = vst [vmem:[%s3 + $0x54] sm:$0xf] %v975
  %1104 = vst [vmem:[%s3 + $0x58] sm:$0xf] %v976
  %1105 = vst [vmem:[%s3 + $0x5c] sm:$0xf] %v977
  %1106 = vst [vmem:[%s3 + $0x60] sm:$0xf] %v978
  %1107 = vst [vmem:[%s3 + $0x64] sm:$0xf] %v979
  %1108 = vst [vmem:[%s3 + $0x68] sm:$0xf] %v980
  %1109 = vst [vmem:[%s3 + $0x6c] sm:$0xf] %v981
  %1110 = vst [vmem:[%s3 + $0x70] sm:$0xf] %v982
  %1111 = vst [vmem:[%s3 + $0x74] sm:$0xf] %v983
  %1112 = vst [vmem:[%s3 + $0x78] sm:$0xf] %v984
  %1113 = vst [vmem:[%s3 + $0x7c] sm:$0xf] %v985
  %1114 = vst [vmem:[%s3 + $0x80] sm:$0xf] %v986
  %1115 = vst [vmem:[%s3 + $0x84] sm:$0xf] %v987
  %1116 = vst [vmem:[%s3 + $0x88] sm:$0xf] %v988
  %1117 = vst [vmem:[%s3 + $0x8c] sm:$0xf] %v989
  %1118 = vst [vmem:[%s3 + $0x90] sm:$0xf] %v990
  %1119 = vst [vmem:[%s3 + $0x94] sm:$0xf] %v991
  %1120 = vst [vmem:[%s3 + $0x98] sm:$0xf] %v992
  %1121 = vst [vmem:[%s3 + $0x9c] sm:$0xf] %v993
  %1122 = vst [vmem:[%s3 + $0xa0] sm:$0xf] %v994
  %1123 = vst [vmem:[%s3 + $0xa4] sm:$0xf] %v995
  %1124 = vst [vmem:[%s3 + $0xa8] sm:$0xf] %v996
  %1125 = vst [vmem:[%s3 + $0xac] sm:$0xf] %v997
  %1126 = vst [vmem:[%s3 + $0xb0] sm:$0xf] %v998
  %1127 = vst [vmem:[%s3 + $0xb4] sm:$0xf] %v999
  %1128 = vst [vmem:[%s3 + $0xb8] sm:$0xf] %v1000
  %1129 = vst [vmem:[%s3 + $0xbc] sm:$0xf] %v1001
  %1130 = vst [vmem:[%s3 + $0xc0] sm:$0xf] %v1002
  %1131 = vst [vmem:[%s3 + $0xc4] sm:$0xf] %v1003
  %1132 = vst [vmem:[%s3 + $0xc8] sm:$0xf] %v1004
  %1133 = vst [vmem:[%s3 + $0xcc] sm:$0xf] %v1005
  %1134 = vst [vmem:[%s3 + $0xd0] sm:$0xf] %v1006
  %1135 = vst [vmem:[%s3 + $0xd4] sm:$0xf] %v1007
  %1136 = vst [vmem:[%s3 + $0xd8] sm:$0xf] %v1008
  %1137 = vst [vmem:[%s3 + $0xdc] sm:$0xf] %v1009
  %1138 = vst [vmem:[%s3 + $0xe0] sm:$0xf] %v1010
  %1139 = vst [vmem:[%s3 + $0xe4] sm:$0xf] %v1011
  %1140 = vst [vmem:[%s3 + $0xe8] sm:$0xf] %v1012
  %1141 = vst [vmem:[%s3 + $0xec] sm:$0xf] %v1013
  %1142 = vst [vmem:[%s3 + $0xf0] sm:$0xf] %v1014
  %1143 = vst [vmem:[%s3 + $0xf4] sm:$0xf] %v1015
  %1144 = vst [vmem:[%s3 + $0xf8] sm:$0xf] %v1016
  %1145 = vst [vmem:[%s3 + $0xfc] sm:$0xf] %v1017
  // Predicated region
  $region14: #{implicit_network_forward.3} parent=0 // pred_check
    _
  $region15: #{implicit_network_forward.3} parent=0 // pred_check_branch
    %1147 = sbr.rel (0) target = $region17
  $region16: #{implicit_network_forward.3} parent=0 // pred_region
    _
  $region17: #{implicit_network_forward.3} parent=0 // pred_fallthru
    _
  // Predicated region
  $region18: #{implicit_network_forward.3} parent=0 // pred_check
    _
  $region19: #{implicit_network_forward.3} parent=0 // pred_check_branch
    %1149 = sbr.rel (0) target = $region21
  $region20: #{implicit_network_forward.3} parent=0 // pred_region
    _
  $region21: #{implicit_network_forward.3} parent=0 // pred_fallthru
    _

// kernel: implicit_network_forward.4
$region0: #{implicit_network_forward.4}
  #allocation0 [shape = 'u32[]', space=smem, size = 0x4, offset = 0x4, fixed_abs, tag = 'smem constant byte address 0x4 - core index']
  #allocation1 [shape = 'u32[144,128]{1,0:T(1,128)}', space=vmem, size = 0x12000, scoped, tag = 'internal scratch']
  %s0 = inlined_call_operand.vmem [shape: bf16[512,1920], index: 0, kind: input, shape index: {}]
  %s1 = inlined_call_operand.vmem [shape: bf16[1920,128], index: 1, kind: input, shape index: {}]
  %s2 = inlined_call_operand.vmem [shape: f32[2,128], index: 2, kind: input, shape index: {}]
  %s3 = inlined_call_operand.vmem [shape: bf16[512,128], index: 3, kind: output, shape index: {}]
  %s4 = sld [smem:[#allocation0]]
  $region22: #{implicit_network_forward.4} parent=0
    _
  %s6 = ssub.s32 1, %s4
  %s7 = scalar_select 0, %s6, %s4
  // Predicated region
  $region2: #{implicit_network_forward.4} parent=0 // pred_check
    _
  $region3: #{implicit_network_forward.4} parent=0 // pred_check_branch
    %9 = sbr.rel (0) target = $region5
  $region4: #{implicit_network_forward.4} parent=0 // pred_region
    _
  $region5: #{implicit_network_forward.4} parent=0 // pred_fallthru
    _
  // Predicated region
  $region6: #{implicit_network_forward.4} parent=0 // pred_check
    _
  $region7: #{implicit_network_forward.4} parent=0 // pred_check_branch
    %11 = sbr.rel (0) target = $region9
  $region8: #{implicit_network_forward.4} parent=0 // pred_region
    _
  $region9: #{implicit_network_forward.4} parent=0 // pred_fallthru
    _
  // Predicated region
  $region10: #{implicit_network_forward.4} parent=0 // pred_check
    _
  $region11: #{implicit_network_forward.4} parent=0 // pred_check_branch
    %13 = sbr.rel (0) target = $region13
  $region12: #{implicit_network_forward.4} parent=0 // pred_region
    _
  $region13: #{implicit_network_forward.4} parent=0 // pred_fallthru
    _
  %v15 = vld [vmem:[%s0] sm:$0xff]
  %v16 = vld [vmem:[%s0 + $0x8] sm:$0xff]
  %v17 = vld [vmem:[%s0 + $0x10] sm:$0xff]
  %v18 = vld [vmem:[%s0 + $0x18] sm:$0xff]
  %v19 = vld [vmem:[%s0 + $0x20] sm:$0xff]
  %v20 = vld [vmem:[%s0 + $0x28] sm:$0xff]
  %v21 = vld [vmem:[%s0 + $0x30] sm:$0xff]
  %v22 = vld [vmem:[%s0 + $0x38] sm:$0xf]
  %v23 = vld [vmem:[%s0 + $0x3c] sm:$0xff]
  %v24 = vld [vmem:[%s0 + $0x44] sm:$0xff]
  %v25 = vld [vmem:[%s0 + $0x4c] sm:$0xff]
  %v26 = vld [vmem:[%s0 + $0x54] sm:$0xff]
  %v27 = vld [vmem:[%s0 + $0x5c] sm:$0xff]
  %v28 = vld [vmem:[%s0 + $0x64] sm:$0xff]
  %v29 = vld [vmem:[%s0 + $0x6c] sm:$0xff]
  %v30 = vld [vmem:[%s0 + $0x74] sm:$0xf]
  %v31 = vld [vmem:[%s0 + $0x78] sm:$0xff]
  %v32 = vld [vmem:[%s0 + $0x80] sm:$0xff]
  %v33 = vld [vmem:[%s0 + $0x88] sm:$0xff]
  %v34 = vld [vmem:[%s0 + $0x90] sm:$0xff]
  %v35 = vld [vmem:[%s0 + $0x98] sm:$0xff]
  %v36 = vld [vmem:[%s0 + $0xa0] sm:$0xff]
  %v37 = vld [vmem:[%s0 + $0xa8] sm:$0xff]
  %v38 = vld [vmem:[%s0 + $0xb0] sm:$0xf]
  %v39 = vld [vmem:[%s0 + $0xb4] sm:$0xff]
  %v40 = vld [vmem:[%s0 + $0xbc] sm:$0xff]
  %v41 = vld [vmem:[%s0 + $0xc4] sm:$0xff]
  %v42 = vld [vmem:[%s0 + $0xcc] sm:$0xff]
  %v43 = vld [vmem:[%s0 + $0xd4] sm:$0xff]
  %v44 = vld [vmem:[%s0 + $0xdc] sm:$0xff]
  %v45 = vld [vmem:[%s0 + $0xe4] sm:$0xff]
  %v46 = vld [vmem:[%s0 + $0xec] sm:$0xf]
  %v47 = vld [vmem:[%s0 + $0xf0] sm:$0xff]
  %v48 = vld [vmem:[%s0 + $0xf8] sm:$0xff]
  %v49 = vld [vmem:[%s0 + $0x100] sm:$0xff]
  %v50 = vld [vmem:[%s0 + $0x108] sm:$0xff]
  %v51 = vld [vmem:[%s0 + $0x110] sm:$0xff]
  %v52 = vld [vmem:[%s0 + $0x118] sm:$0xff]
  %v53 = vld [vmem:[%s0 + $0x120] sm:$0xff]
  %v54 = vld [vmem:[%s0 + $0x128] sm:$0xf]
  %v55 = vld [vmem:[%s0 + $0x12c] sm:$0xff]
  %v56 = vld [vmem:[%s0 + $0x134] sm:$0xff]
  %v57 = vld [vmem:[%s0 + $0x13c] sm:$0xff]
  %v58 = vld [vmem:[%s0 + $0x144] sm:$0xff]
  %v59 = vld [vmem:[%s0 + $0x14c] sm:$0xff]
  %v60 = vld [vmem:[%s0 + $0x154] sm:$0xff]
  %v61 = vld [vmem:[%s0 + $0x15c] sm:$0xff]
  %v62 = vld [vmem:[%s0 + $0x164] sm:$0xf]
  %v63 = vld [vmem:[%s0 + $0x168] sm:$0xff]
  %v64 = vld [vmem:[%s0 + $0x170] sm:$0xff]
  %v65 = vld [vmem:[%s0 + $0x178] sm:$0xff]
  %v66 = vld [vmem:[%s0 + $0x180] sm:$0xff]
  %v67 = vld [vmem:[%s0 + $0x188] sm:$0xff]
  %v68 = vld [vmem:[%s0 + $0x190] sm:$0xff]
  %v69 = vld [vmem:[%s0 + $0x198] sm:$0xff]
  %v70 = vld [vmem:[%s0 + $0x1a0] sm:$0xf]
  %v71 = vld [vmem:[%s0 + $0x1a4] sm:$0xff]
  %v72 = vld [vmem:[%s0 + $0x1ac] sm:$0xff]
  %v73 = vld [vmem:[%s0 + $0x1b4] sm:$0xff]
  %v74 = vld [vmem:[%s0 + $0x1bc] sm:$0xff]
  %v75 = vld [vmem:[%s0 + $0x1c4] sm:$0xff]
  %v76 = vld [vmem:[%s0 + $0x1cc] sm:$0xff]
  %v77 = vld [vmem:[%s0 + $0x1d4] sm:$0xff]
  %v78 = vld [vmem:[%s0 + $0x1dc] sm:$0xf]
  %v79 = vld [vmem:[%s0 + $0x1e0] sm:$0xff]
  %v80 = vld [vmem:[%s0 + $0x1e8] sm:$0xff]
  %v81 = vld [vmem:[%s0 + $0x1f0] sm:$0xff]
  %v82 = vld [vmem:[%s0 + $0x1f8] sm:$0xff]
  %v83 = vld [vmem:[%s0 + $0x200] sm:$0xff]
  %v84 = vld [vmem:[%s0 + $0x208] sm:$0xff]
  %v85 = vld [vmem:[%s0 + $0x210] sm:$0xff]
  %v86 = vld [vmem:[%s0 + $0x218] sm:$0xf]
  %v87 = vld [vmem:[%s0 + $0x21c] sm:$0xff]
  %v88 = vld [vmem:[%s0 + $0x224] sm:$0xff]
  %v89 = vld [vmem:[%s0 + $0x22c] sm:$0xff]
  %v90 = vld [vmem:[%s0 + $0x234] sm:$0xff]
  %v91 = vld [vmem:[%s0 + $0x23c] sm:$0xff]
  %v92 = vld [vmem:[%s0 + $0x244] sm:$0xff]
  %v93 = vld [vmem:[%s0 + $0x24c] sm:$0xff]
  %v94 = vld [vmem:[%s0 + $0x254] sm:$0xf]
  %v95 = vld [vmem:[%s0 + $0x258] sm:$0xff]
  %v96 = vld [vmem:[%s0 + $0x260] sm:$0xff]
  %v97 = vld [vmem:[%s0 + $0x268] sm:$0xff]
  %v98 = vld [vmem:[%s0 + $0x270] sm:$0xff]
  %v99 = vld [vmem:[%s0 + $0x278] sm:$0xff]
  %v100 = vld [vmem:[%s0 + $0x280] sm:$0xff]
  %v101 = vld [vmem:[%s0 + $0x288] sm:$0xff]
  %v102 = vld [vmem:[%s0 + $0x290] sm:$0xf]
  %v103 = vld [vmem:[%s0 + $0x294] sm:$0xff]
  %v104 = vld [vmem:[%s0 + $0x29c] sm:$0xff]
  %v105 = vld [vmem:[%s0 + $0x2a4] sm:$0xff]
  %v106 = vld [vmem:[%s0 + $0x2ac] sm:$0xff]
  %v107 = vld [vmem:[%s0 + $0x2b4] sm:$0xff]
  %v108 = vld [vmem:[%s0 + $0x2bc] sm:$0xff]
  %v109 = vld [vmem:[%s0 + $0x2c4] sm:$0xff]
  %v110 = vld [vmem:[%s0 + $0x2cc] sm:$0xf]
  %v111 = vld [vmem:[%s0 + $0x2d0] sm:$0xff]
  %v112 = vld [vmem:[%s0 + $0x2d8] sm:$0xff]
  %v113 = vld [vmem:[%s0 + $0x2e0] sm:$0xff]
  %v114 = vld [vmem:[%s0 + $0x2e8] sm:$0xff]
  %v115 = vld [vmem:[%s0 + $0x2f0] sm:$0xff]
  %v116 = vld [vmem:[%s0 + $0x2f8] sm:$0xff]
  %v117 = vld [vmem:[%s0 + $0x300] sm:$0xff]
  %v118 = vld [vmem:[%s0 + $0x308] sm:$0xf]
  %v119 = vld [vmem:[%s0 + $0x30c] sm:$0xff]
  %v120 = vld [vmem:[%s0 + $0x314] sm:$0xff]
  %v121 = vld [vmem:[%s0 + $0x31c] sm:$0xff]
  %v122 = vld [vmem:[%s0 + $0x324] sm:$0xff]
  %v123 = vld [vmem:[%s0 + $0x32c] sm:$0xff]
  %v124 = vld [vmem:[%s0 + $0x334] sm:$0xff]
  %v125 = vld [vmem:[%s0 + $0x33c] sm:$0xff]
  %v126 = vld [vmem:[%s0 + $0x344] sm:$0xf]
  %v127 = vld [vmem:[%s0 + $0x348] sm:$0xff]
  %v128 = vld [vmem:[%s0 + $0x350] sm:$0xff]
  %v129 = vld [vmem:[%s0 + $0x358] sm:$0xff]
  %v130 = vld [vmem:[%s0 + $0x360] sm:$0xff]
  %v131 = vld [vmem:[%s0 + $0x368] sm:$0xff]
  %v132 = vld [vmem:[%s0 + $0x370] sm:$0xff]
  %v133 = vld [vmem:[%s0 + $0x378] sm:$0xff]
  %v134 = vld [vmem:[%s0 + $0x380] sm:$0xf]
  %v135 = vld [vmem:[%s0 + $0x384] sm:$0xff]
  %v136 = vld [vmem:[%s0 + $0x38c] sm:$0xff]
  %v137 = vld [vmem:[%s0 + $0x394] sm:$0xff]
  %v138 = vld [vmem:[%s0 + $0x39c] sm:$0xff]
  %v139 = vld [vmem:[%s0 + $0x3a4] sm:$0xff]
  %v140 = vld [vmem:[%s0 + $0x3ac] sm:$0xff]
  %v141 = vld [vmem:[%s0 + $0x3b4] sm:$0xff]
  %v142 = vld [vmem:[%s0 + $0x3bc] sm:$0xf]
  %v143 = vld [vmem:[%s0 + $0x3c0] sm:$0xff]
  %v144 = vld [vmem:[%s0 + $0x3c8] sm:$0xff]
  %v145 = vld [vmem:[%s0 + $0x3d0] sm:$0xff]
  %v146 = vld [vmem:[%s0 + $0x3d8] sm:$0xff]
  %v147 = vld [vmem:[%s0 + $0x3e0] sm:$0xff]
  %v148 = vld [vmem:[%s0 + $0x3e8] sm:$0xff]
  %v149 = vld [vmem:[%s0 + $0x3f0] sm:$0xff]
  %v150 = vld [vmem:[%s0 + $0x3f8] sm:$0xf]
  %v151 = vld [vmem:[%s0 + $0x3fc] sm:$0xff]
  %v152 = vld [vmem:[%s0 + $0x404] sm:$0xff]
  %v153 = vld [vmem:[%s0 + $0x40c] sm:$0xff]
  %v154 = vld [vmem:[%s0 + $0x414] sm:$0xff]
  %v155 = vld [vmem:[%s0 + $0x41c] sm:$0xff]
  %v156 = vld [vmem:[%s0 + $0x424] sm:$0xff]
  %v157 = vld [vmem:[%s0 + $0x42c] sm:$0xff]
  %v158 = vld [vmem:[%s0 + $0x434] sm:$0xf]
  %v159 = vld [vmem:[%s0 + $0x438] sm:$0xff]
  %v160 = vld [vmem:[%s0 + $0x440] sm:$0xff]
  %v161 = vld [vmem:[%s0 + $0x448] sm:$0xff]
  %v162 = vld [vmem:[%s0 + $0x450] sm:$0xff]
  %v163 = vld [vmem:[%s0 + $0x458] sm:$0xff]
  %v164 = vld [vmem:[%s0 + $0x460] sm:$0xff]
  %v165 = vld [vmem:[%s0 + $0x468] sm:$0xff]
  %v166 = vld [vmem:[%s0 + $0x470] sm:$0xf]
  %v167 = vld [vmem:[%s0 + $0x474] sm:$0xff]
  %v168 = vld [vmem:[%s0 + $0x47c] sm:$0xff]
  %v169 = vld [vmem:[%s0 + $0x484] sm:$0xff]
  %v170 = vld [vmem:[%s0 + $0x48c] sm:$0xff]
  %v171 = vld [vmem:[%s0 + $0x494] sm:$0xff]
  %v172 = vld [vmem:[%s0 + $0x49c] sm:$0xff]
  %v173 = vld [vmem:[%s0 + $0x4a4] sm:$0xff]
  %v174 = vld [vmem:[%s0 + $0x4ac] sm:$0xf]
  %v175 = vld [vmem:[%s0 + $0x4b0] sm:$0xff]
  %v176 = vld [vmem:[%s0 + $0x4b8] sm:$0xff]
  %v177 = vld [vmem:[%s0 + $0x4c0] sm:$0xff]
  %v178 = vld [vmem:[%s0 + $0x4c8] sm:$0xff]
  %v179 = vld [vmem:[%s0 + $0x4d0] sm:$0xff]
  %v180 = vld [vmem:[%s0 + $0x4d8] sm:$0xff]
  %v181 = vld [vmem:[%s0 + $0x4e0] sm:$0xff]
  %v182 = vld [vmem:[%s0 + $0x4e8] sm:$0xf]
  %v183 = vld [vmem:[%s0 + $0x4ec] sm:$0xff]
  %v184 = vld [vmem:[%s0 + $0x4f4] sm:$0xff]
  %v185 = vld [vmem:[%s0 + $0x4fc] sm:$0xff]
  %v186 = vld [vmem:[%s0 + $0x504] sm:$0xff]
  %v187 = vld [vmem:[%s0 + $0x50c] sm:$0xff]
  %v188 = vld [vmem:[%s0 + $0x514] sm:$0xff]
  %v189 = vld [vmem:[%s0 + $0x51c] sm:$0xff]
  %v190 = vld [vmem:[%s0 + $0x524] sm:$0xf]
  %v191 = vld [vmem:[%s0 + $0x528] sm:$0xff]
  %v192 = vld [vmem:[%s0 + $0x530] sm:$0xff]
  %v193 = vld [vmem:[%s0 + $0x538] sm:$0xff]
  %v194 = vld [vmem:[%s0 + $0x540] sm:$0xff]
  %v195 = vld [vmem:[%s0 + $0x548] sm:$0xff]
  %v196 = vld [vmem:[%s0 + $0x550] sm:$0xff]
  %v197 = vld [vmem:[%s0 + $0x558] sm:$0xff]
  %v198 = vld [vmem:[%s0 + $0x560] sm:$0xf]
  %v199 = vld [vmem:[%s0 + $0x564] sm:$0xff]
  %v200 = vld [vmem:[%s0 + $0x56c] sm:$0xff]
  %v201 = vld [vmem:[%s0 + $0x574] sm:$0xff]
  %v202 = vld [vmem:[%s0 + $0x57c] sm:$0xff]
  %v203 = vld [vmem:[%s0 + $0x584] sm:$0xff]
  %v204 = vld [vmem:[%s0 + $0x58c] sm:$0xff]
  %v205 = vld [vmem:[%s0 + $0x594] sm:$0xff]
  %v206 = vld [vmem:[%s0 + $0x59c] sm:$0xf]
  %v207 = vld [vmem:[%s0 + $0x5a0] sm:$0xff]
  %v208 = vld [vmem:[%s0 + $0x5a8] sm:$0xff]
  %v209 = vld [vmem:[%s0 + $0x5b0] sm:$0xff]
  %v210 = vld [vmem:[%s0 + $0x5b8] sm:$0xff]
  %v211 = vld [vmem:[%s0 + $0x5c0] sm:$0xff]
  %v212 = vld [vmem:[%s0 + $0x5c8] sm:$0xff]
  %v213 = vld [vmem:[%s0 + $0x5d0] sm:$0xff]
  %v214 = vld [vmem:[%s0 + $0x5d8] sm:$0xf]
  %v215 = vld [vmem:[%s0 + $0x5dc] sm:$0xff]
  %v216 = vld [vmem:[%s0 + $0x5e4] sm:$0xff]
  %v217 = vld [vmem:[%s0 + $0x5ec] sm:$0xff]
  %v218 = vld [vmem:[%s0 + $0x5f4] sm:$0xff]
  %v219 = vld [vmem:[%s0 + $0x5fc] sm:$0xff]
  %v220 = vld [vmem:[%s0 + $0x604] sm:$0xff]
  %v221 = vld [vmem:[%s0 + $0x60c] sm:$0xff]
  %v222 = vld [vmem:[%s0 + $0x614] sm:$0xf]
  %v223 = vld [vmem:[%s0 + $0x618] sm:$0xff]
  %v224 = vld [vmem:[%s0 + $0x620] sm:$0xff]
  %v225 = vld [vmem:[%s0 + $0x628] sm:$0xff]
  %v226 = vld [vmem:[%s0 + $0x630] sm:$0xff]
  %v227 = vld [vmem:[%s0 + $0x638] sm:$0xff]
  %v228 = vld [vmem:[%s0 + $0x640] sm:$0xff]
  %v229 = vld [vmem:[%s0 + $0x648] sm:$0xff]
  %v230 = vld [vmem:[%s0 + $0x650] sm:$0xf]
  %v231 = vld [vmem:[%s0 + $0x654] sm:$0xff]
  %v232 = vld [vmem:[%s0 + $0x65c] sm:$0xff]
  %v233 = vld [vmem:[%s0 + $0x664] sm:$0xff]
  %v234 = vld [vmem:[%s0 + $0x66c] sm:$0xff]
  %v235 = vld [vmem:[%s0 + $0x674] sm:$0xff]
  %v236 = vld [vmem:[%s0 + $0x67c] sm:$0xff]
  %v237 = vld [vmem:[%s0 + $0x684] sm:$0xff]
  %v238 = vld [vmem:[%s0 + $0x68c] sm:$0xf]
  %v239 = vld [vmem:[%s0 + $0x690] sm:$0xff]
  %v240 = vld [vmem:[%s0 + $0x698] sm:$0xff]
  %v241 = vld [vmem:[%s0 + $0x6a0] sm:$0xff]
  %v242 = vld [vmem:[%s0 + $0x6a8] sm:$0xff]
  %v243 = vld [vmem:[%s0 + $0x6b0] sm:$0xff]
  %v244 = vld [vmem:[%s0 + $0x6b8] sm:$0xff]
  %v245 = vld [vmem:[%s0 + $0x6c0] sm:$0xff]
  %v246 = vld [vmem:[%s0 + $0x6c8] sm:$0xf]
  %v247 = vld [vmem:[%s0 + $0x6cc] sm:$0xff]
  %v248 = vld [vmem:[%s0 + $0x6d4] sm:$0xff]
  %v249 = vld [vmem:[%s0 + $0x6dc] sm:$0xff]
  %v250 = vld [vmem:[%s0 + $0x6e4] sm:$0xff]
  %v251 = vld [vmem:[%s0 + $0x6ec] sm:$0xff]
  %v252 = vld [vmem:[%s0 + $0x6f4] sm:$0xff]
  %v253 = vld [vmem:[%s0 + $0x6fc] sm:$0xff]
  %v254 = vld [vmem:[%s0 + $0x704] sm:$0xf]
  %v255 = vld [vmem:[%s0 + $0x708] sm:$0xff]
  %v256 = vld [vmem:[%s0 + $0x710] sm:$0xff]
  %v257 = vld [vmem:[%s0 + $0x718] sm:$0xff]
  %v258 = vld [vmem:[%s0 + $0x720] sm:$0xff]
  %v259 = vld [vmem:[%s0 + $0x728] sm:$0xff]
  %v260 = vld [vmem:[%s0 + $0x730] sm:$0xff]
  %v261 = vld [vmem:[%s0 + $0x738] sm:$0xff]
  %v262 = vld [vmem:[%s0 + $0x740] sm:$0xf]
  %v263 = vld [vmem:[%s0 + $0x744] sm:$0xff]
  %v264 = vld [vmem:[%s0 + $0x74c] sm:$0xff]
  %v265 = vld [vmem:[%s0 + $0x754] sm:$0xff]
  %v266 = vld [vmem:[%s0 + $0x75c] sm:$0xff]
  %v267 = vld [vmem:[%s0 + $0x764] sm:$0xff]
  %v268 = vld [vmem:[%s0 + $0x76c] sm:$0xff]
  %v269 = vld [vmem:[%s0 + $0x774] sm:$0xff]
  %v270 = vld [vmem:[%s0 + $0x77c] sm:$0xf]
  %v271 = vld [vmem:[%s0 + $0x780] sm:$0xff]
  %v272 = vld [vmem:[%s0 + $0x788] sm:$0xff]
  %v273 = vld [vmem:[%s0 + $0x790] sm:$0xff]
  %v274 = vld [vmem:[%s0 + $0x798] sm:$0xff]
  %v275 = vld [vmem:[%s0 + $0x7a0] sm:$0xff]
  %v276 = vld [vmem:[%s0 + $0x7a8] sm:$0xff]
  %v277 = vld [vmem:[%s0 + $0x7b0] sm:$0xff]
  %v278 = vld [vmem:[%s0 + $0x7b8] sm:$0xf]
  %v279 = vld [vmem:[%s0 + $0x7bc] sm:$0xff]
  %v280 = vld [vmem:[%s0 + $0x7c4] sm:$0xff]
  %v281 = vld [vmem:[%s0 + $0x7cc] sm:$0xff]
  %v282 = vld [vmem:[%s0 + $0x7d4] sm:$0xff]
  %v283 = vld [vmem:[%s0 + $0x7dc] sm:$0xff]
  %v284 = vld [vmem:[%s0 + $0x7e4] sm:$0xff]
  %v285 = vld [vmem:[%s0 + $0x7ec] sm:$0xff]
  %v286 = vld [vmem:[%s0 + $0x7f4] sm:$0xf]
  %v287 = vld [vmem:[%s0 + $0x7f8] sm:$0xff]
  %v288 = vld [vmem:[%s0 + $0x800] sm:$0xff]
  %v289 = vld [vmem:[%s0 + $0x808] sm:$0xff]
  %v290 = vld [vmem:[%s0 + $0x810] sm:$0xff]
  %v291 = vld [vmem:[%s0 + $0x818] sm:$0xff]
  %v292 = vld [vmem:[%s0 + $0x820] sm:$0xff]
  %v293 = vld [vmem:[%s0 + $0x828] sm:$0xff]
  %v294 = vld [vmem:[%s0 + $0x830] sm:$0xf]
  %v295 = vld [vmem:[%s0 + $0x834] sm:$0xff]
  %v296 = vld [vmem:[%s0 + $0x83c] sm:$0xff]
  %v297 = vld [vmem:[%s0 + $0x844] sm:$0xff]
  %v298 = vld [vmem:[%s0 + $0x84c] sm:$0xff]
  %v299 = vld [vmem:[%s0 + $0x854] sm:$0xff]
  %v300 = vld [vmem:[%s0 + $0x85c] sm:$0xff]
  %v301 = vld [vmem:[%s0 + $0x864] sm:$0xff]
  %v302 = vld [vmem:[%s0 + $0x86c] sm:$0xf]
  %v303 = vld [vmem:[%s0 + $0x870] sm:$0xff]
  %v304 = vld [vmem:[%s0 + $0x878] sm:$0xff]
  %v305 = vld [vmem:[%s0 + $0x880] sm:$0xff]
  %v306 = vld [vmem:[%s0 + $0x888] sm:$0xff]
  %v307 = vld [vmem:[%s0 + $0x890] sm:$0xff]
  %v308 = vld [vmem:[%s0 + $0x898] sm:$0xff]
  %v309 = vld [vmem:[%s0 + $0x8a0] sm:$0xff]
  %v310 = vld [vmem:[%s0 + $0x8a8] sm:$0xf]
  %v311 = vld [vmem:[%s0 + $0x8ac] sm:$0xff]
  %v312 = vld [vmem:[%s0 + $0x8b4] sm:$0xff]
  %v313 = vld [vmem:[%s0 + $0x8bc] sm:$0xff]
  %v314 = vld [vmem:[%s0 + $0x8c4] sm:$0xff]
  %v315 = vld [vmem:[%s0 + $0x8cc] sm:$0xff]
  %v316 = vld [vmem:[%s0 + $0x8d4] sm:$0xff]
  %v317 = vld [vmem:[%s0 + $0x8dc] sm:$0xff]
  %v318 = vld [vmem:[%s0 + $0x8e4] sm:$0xf]
  %v319 = vld [vmem:[%s0 + $0x8e8] sm:$0xff]
  %v320 = vld [vmem:[%s0 + $0x8f0] sm:$0xff]
  %v321 = vld [vmem:[%s0 + $0x8f8] sm:$0xff]
  %v322 = vld [vmem:[%s0 + $0x900] sm:$0xff]
  %v323 = vld [vmem:[%s0 + $0x908] sm:$0xff]
  %v324 = vld [vmem:[%s0 + $0x910] sm:$0xff]
  %v325 = vld [vmem:[%s0 + $0x918] sm:$0xff]
  %v326 = vld [vmem:[%s0 + $0x920] sm:$0xf]
  %v327 = vld [vmem:[%s0 + $0x924] sm:$0xff]
  %v328 = vld [vmem:[%s0 + $0x92c] sm:$0xff]
  %v329 = vld [vmem:[%s0 + $0x934] sm:$0xff]
  %v330 = vld [vmem:[%s0 + $0x93c] sm:$0xff]
  %v331 = vld [vmem:[%s0 + $0x944] sm:$0xff]
  %v332 = vld [vmem:[%s0 + $0x94c] sm:$0xff]
  %v333 = vld [vmem:[%s0 + $0x954] sm:$0xff]
  %v334 = vld [vmem:[%s0 + $0x95c] sm:$0xf]
  %v335 = vld [vmem:[%s0 + $0x960] sm:$0xff]
  %v336 = vld [vmem:[%s0 + $0x968] sm:$0xff]
  %v337 = vld [vmem:[%s0 + $0x970] sm:$0xff]
  %v338 = vld [vmem:[%s0 + $0x978] sm:$0xff]
  %v339 = vld [vmem:[%s0 + $0x980] sm:$0xff]
  %v340 = vld [vmem:[%s0 + $0x988] sm:$0xff]
  %v341 = vld [vmem:[%s0 + $0x990] sm:$0xff]
  %v342 = vld [vmem:[%s0 + $0x998] sm:$0xf]
  %v343 = vld [vmem:[%s0 + $0x99c] sm:$0xff]
  %v344 = vld [vmem:[%s0 + $0x9a4] sm:$0xff]
  %v345 = vld [vmem:[%s0 + $0x9ac] sm:$0xff]
  %v346 = vld [vmem:[%s0 + $0x9b4] sm:$0xff]
  %v347 = vld [vmem:[%s0 + $0x9bc] sm:$0xff]
  %v348 = vld [vmem:[%s0 + $0x9c4] sm:$0xff]
  %v349 = vld [vmem:[%s0 + $0x9cc] sm:$0xff]
  %v350 = vld [vmem:[%s0 + $0x9d4] sm:$0xf]
  %v351 = vld [vmem:[%s0 + $0x9d8] sm:$0xff]
  %v352 = vld [vmem:[%s0 + $0x9e0] sm:$0xff]
  %v353 = vld [vmem:[%s0 + $0x9e8] sm:$0xff]
  %v354 = vld [vmem:[%s0 + $0x9f0] sm:$0xff]
  %v355 = vld [vmem:[%s0 + $0x9f8] sm:$0xff]
  %v356 = vld [vmem:[%s0 + $0xa00] sm:$0xff]
  %v357 = vld [vmem:[%s0 + $0xa08] sm:$0xff]
  %v358 = vld [vmem:[%s0 + $0xa10] sm:$0xf]
  %v359 = vld [vmem:[%s0 + $0xa14] sm:$0xff]
  %v360 = vld [vmem:[%s0 + $0xa1c] sm:$0xff]
  %v361 = vld [vmem:[%s0 + $0xa24] sm:$0xff]
  %v362 = vld [vmem:[%s0 + $0xa2c] sm:$0xff]
  %v363 = vld [vmem:[%s0 + $0xa34] sm:$0xff]
  %v364 = vld [vmem:[%s0 + $0xa3c] sm:$0xff]
  %v365 = vld [vmem:[%s0 + $0xa44] sm:$0xff]
  %v366 = vld [vmem:[%s0 + $0xa4c] sm:$0xf]
  %v367 = vld [vmem:[%s0 + $0xa50] sm:$0xff]
  %v368 = vld [vmem:[%s0 + $0xa58] sm:$0xff]
  %v369 = vld [vmem:[%s0 + $0xa60] sm:$0xff]
  %v370 = vld [vmem:[%s0 + $0xa68] sm:$0xff]
  %v371 = vld [vmem:[%s0 + $0xa70] sm:$0xff]
  %v372 = vld [vmem:[%s0 + $0xa78] sm:$0xff]
  %v373 = vld [vmem:[%s0 + $0xa80] sm:$0xff]
  %v374 = vld [vmem:[%s0 + $0xa88] sm:$0xf]
  %v375 = vld [vmem:[%s0 + $0xa8c] sm:$0xff]
  %v376 = vld [vmem:[%s0 + $0xa94] sm:$0xff]
  %v377 = vld [vmem:[%s0 + $0xa9c] sm:$0xff]
  %v378 = vld [vmem:[%s0 + $0xaa4] sm:$0xff]
  %v379 = vld [vmem:[%s0 + $0xaac] sm:$0xff]
  %v380 = vld [vmem:[%s0 + $0xab4] sm:$0xff]
  %v381 = vld [vmem:[%s0 + $0xabc] sm:$0xff]
  %v382 = vld [vmem:[%s0 + $0xac4] sm:$0xf]
  %v383 = vld [vmem:[%s0 + $0xac8] sm:$0xff]
  %v384 = vld [vmem:[%s0 + $0xad0] sm:$0xff]
  %v385 = vld [vmem:[%s0 + $0xad8] sm:$0xff]
  %v386 = vld [vmem:[%s0 + $0xae0] sm:$0xff]
  %v387 = vld [vmem:[%s0 + $0xae8] sm:$0xff]
  %v388 = vld [vmem:[%s0 + $0xaf0] sm:$0xff]
  %v389 = vld [vmem:[%s0 + $0xaf8] sm:$0xff]
  %v390 = vld [vmem:[%s0 + $0xb00] sm:$0xf]
  %v391 = vld [vmem:[%s0 + $0xb04] sm:$0xff]
  %v392 = vld [vmem:[%s0 + $0xb0c] sm:$0xff]
  %v393 = vld [vmem:[%s0 + $0xb14] sm:$0xff]
  %v394 = vld [vmem:[%s0 + $0xb1c] sm:$0xff]
  %v395 = vld [vmem:[%s0 + $0xb24] sm:$0xff]
  %v396 = vld [vmem:[%s0 + $0xb2c] sm:$0xff]
  %v397 = vld [vmem:[%s0 + $0xb34] sm:$0xff]
  %v398 = vld [vmem:[%s0 + $0xb3c] sm:$0xf]
  %v399 = vld [vmem:[%s0 + $0xb40] sm:$0xff]
  %v400 = vld [vmem:[%s0 + $0xb48] sm:$0xff]
  %v401 = vld [vmem:[%s0 + $0xb50] sm:$0xff]
  %v402 = vld [vmem:[%s0 + $0xb58] sm:$0xff]
  %v403 = vld [vmem:[%s0 + $0xb60] sm:$0xff]
  %v404 = vld [vmem:[%s0 + $0xb68] sm:$0xff]
  %v405 = vld [vmem:[%s0 + $0xb70] sm:$0xff]
  %v406 = vld [vmem:[%s0 + $0xb78] sm:$0xf]
  %v407 = vld [vmem:[%s0 + $0xb7c] sm:$0xff]
  %v408 = vld [vmem:[%s0 + $0xb84] sm:$0xff]
  %v409 = vld [vmem:[%s0 + $0xb8c] sm:$0xff]
  %v410 = vld [vmem:[%s0 + $0xb94] sm:$0xff]
  %v411 = vld [vmem:[%s0 + $0xb9c] sm:$0xff]
  %v412 = vld [vmem:[%s0 + $0xba4] sm:$0xff]
  %v413 = vld [vmem:[%s0 + $0xbac] sm:$0xff]
  %v414 = vld [vmem:[%s0 + $0xbb4] sm:$0xf]
  %v415 = vld [vmem:[%s0 + $0xbb8] sm:$0xff]
  %v416 = vld [vmem:[%s0 + $0xbc0] sm:$0xff]
  %v417 = vld [vmem:[%s0 + $0xbc8] sm:$0xff]
  %v418 = vld [vmem:[%s0 + $0xbd0] sm:$0xff]
  %v419 = vld [vmem:[%s0 + $0xbd8] sm:$0xff]
  %v420 = vld [vmem:[%s0 + $0xbe0] sm:$0xff]
  %v421 = vld [vmem:[%s0 + $0xbe8] sm:$0xff]
  %v422 = vld [vmem:[%s0 + $0xbf0] sm:$0xf]
  %v423 = vld [vmem:[%s0 + $0xbf4] sm:$0xff]
  %v424 = vld [vmem:[%s0 + $0xbfc] sm:$0xff]
  %v425 = vld [vmem:[%s0 + $0xc04] sm:$0xff]
  %v426 = vld [vmem:[%s0 + $0xc0c] sm:$0xff]
  %v427 = vld [vmem:[%s0 + $0xc14] sm:$0xff]
  %v428 = vld [vmem:[%s0 + $0xc1c] sm:$0xff]
  %v429 = vld [vmem:[%s0 + $0xc24] sm:$0xff]
  %v430 = vld [vmem:[%s0 + $0xc2c] sm:$0xf]
  %v431 = vld [vmem:[%s0 + $0xc30] sm:$0xff]
  %v432 = vld [vmem:[%s0 + $0xc38] sm:$0xff]
  %v433 = vld [vmem:[%s0 + $0xc40] sm:$0xff]
  %v434 = vld [vmem:[%s0 + $0xc48] sm:$0xff]
  %v435 = vld [vmem:[%s0 + $0xc50] sm:$0xff]
  %v436 = vld [vmem:[%s0 + $0xc58] sm:$0xff]
  %v437 = vld [vmem:[%s0 + $0xc60] sm:$0xff]
  %v438 = vld [vmem:[%s0 + $0xc68] sm:$0xf]
  %v439 = vld [vmem:[%s0 + $0xc6c] sm:$0xff]
  %v440 = vld [vmem:[%s0 + $0xc74] sm:$0xff]
  %v441 = vld [vmem:[%s0 + $0xc7c] sm:$0xff]
  %v442 = vld [vmem:[%s0 + $0xc84] sm:$0xff]
  %v443 = vld [vmem:[%s0 + $0xc8c] sm:$0xff]
  %v444 = vld [vmem:[%s0 + $0xc94] sm:$0xff]
  %v445 = vld [vmem:[%s0 + $0xc9c] sm:$0xff]
  %v446 = vld [vmem:[%s0 + $0xca4] sm:$0xf]
  %v447 = vld [vmem:[%s0 + $0xca8] sm:$0xff]
  %v448 = vld [vmem:[%s0 + $0xcb0] sm:$0xff]
  %v449 = vld [vmem:[%s0 + $0xcb8] sm:$0xff]
  %v450 = vld [vmem:[%s0 + $0xcc0] sm:$0xff]
  %v451 = vld [vmem:[%s0 + $0xcc8] sm:$0xff]
  %v452 = vld [vmem:[%s0 + $0xcd0] sm:$0xff]
  %v453 = vld [vmem:[%s0 + $0xcd8] sm:$0xff]
  %v454 = vld [vmem:[%s0 + $0xce0] sm:$0xf]
  %v455 = vld [vmem:[%s0 + $0xce4] sm:$0xff]
  %v456 = vld [vmem:[%s0 + $0xcec] sm:$0xff]
  %v457 = vld [vmem:[%s0 + $0xcf4] sm:$0xff]
  %v458 = vld [vmem:[%s0 + $0xcfc] sm:$0xff]
  %v459 = vld [vmem:[%s0 + $0xd04] sm:$0xff]
  %v460 = vld [vmem:[%s0 + $0xd0c] sm:$0xff]
  %v461 = vld [vmem:[%s0 + $0xd14] sm:$0xff]
  %v462 = vld [vmem:[%s0 + $0xd1c] sm:$0xf]
  %v463 = vld [vmem:[%s0 + $0xd20] sm:$0xff]
  %v464 = vld [vmem:[%s0 + $0xd28] sm:$0xff]
  %v465 = vld [vmem:[%s0 + $0xd30] sm:$0xff]
  %v466 = vld [vmem:[%s0 + $0xd38] sm:$0xff]
  %v467 = vld [vmem:[%s0 + $0xd40] sm:$0xff]
  %v468 = vld [vmem:[%s0 + $0xd48] sm:$0xff]
  %v469 = vld [vmem:[%s0 + $0xd50] sm:$0xff]
  %v470 = vld [vmem:[%s0 + $0xd58] sm:$0xf]
  %v471 = vld [vmem:[%s0 + $0xd5c] sm:$0xff]
  %v472 = vld [vmem:[%s0 + $0xd64] sm:$0xff]
  %v473 = vld [vmem:[%s0 + $0xd6c] sm:$0xff]
  %v474 = vld [vmem:[%s0 + $0xd74] sm:$0xff]
  %v475 = vld [vmem:[%s0 + $0xd7c] sm:$0xff]
  %v476 = vld [vmem:[%s0 + $0xd84] sm:$0xff]
  %v477 = vld [vmem:[%s0 + $0xd8c] sm:$0xff]
  %v478 = vld [vmem:[%s0 + $0xd94] sm:$0xf]
  %v479 = vld [vmem:[%s0 + $0xd98] sm:$0xff]
  %v480 = vld [vmem:[%s0 + $0xda0] sm:$0xff]
  %v481 = vld [vmem:[%s0 + $0xda8] sm:$0xff]
  %v482 = vld [vmem:[%s0 + $0xdb0] sm:$0xff]
  %v483 = vld [vmem:[%s0 + $0xdb8] sm:$0xff]
  %v484 = vld [vmem:[%s0 + $0xdc0] sm:$0xff]
  %v485 = vld [vmem:[%s0 + $0xdc8] sm:$0xff]
  %v486 = vld [vmem:[%s0 + $0xdd0] sm:$0xf]
  %v487 = vld [vmem:[%s0 + $0xdd4] sm:$0xff]
  %v488 = vld [vmem:[%s0 + $0xddc] sm:$0xff]
  %v489 = vld [vmem:[%s0 + $0xde4] sm:$0xff]
  %v490 = vld [vmem:[%s0 + $0xdec] sm:$0xff]
  %v491 = vld [vmem:[%s0 + $0xdf4] sm:$0xff]
  %v492 = vld [vmem:[%s0 + $0xdfc] sm:$0xff]
  %v493 = vld [vmem:[%s0 + $0xe04] sm:$0xff]
  %v494 = vld [vmem:[%s0 + $0xe0c] sm:$0xf]
  %v495 = vld [vmem:[%s0 + $0xe10] sm:$0xff]
  %v496 = vld [vmem:[%s0 + $0xe18] sm:$0xff]
  %v497 = vld [vmem:[%s0 + $0xe20] sm:$0xff]
  %v498 = vld [vmem:[%s0 + $0xe28] sm:$0xff]
  %v499 = vld [vmem:[%s0 + $0xe30] sm:$0xff]
  %v500 = vld [vmem:[%s0 + $0xe38] sm:$0xff]
  %v501 = vld [vmem:[%s0 + $0xe40] sm:$0xff]
  %v502 = vld [vmem:[%s0 + $0xe48] sm:$0xf]
  %v503 = vld [vmem:[%s0 + $0xe4c] sm:$0xff]
  %v504 = vld [vmem:[%s0 + $0xe54] sm:$0xff]
  %v505 = vld [vmem:[%s0 + $0xe5c] sm:$0xff]
  %v506 = vld [vmem:[%s0 + $0xe64] sm:$0xff]
  %v507 = vld [vmem:[%s0 + $0xe6c] sm:$0xff]
  %v508 = vld [vmem:[%s0 + $0xe74] sm:$0xff]
  %v509 = vld [vmem:[%s0 + $0xe7c] sm:$0xff]
  %v510 = vld [vmem:[%s0 + $0xe84] sm:$0xf]
  %v511 = vld [vmem:[%s0 + $0xe88] sm:$0xff]
  %v512 = vld [vmem:[%s0 + $0xe90] sm:$0xff]
  %v513 = vld [vmem:[%s0 + $0xe98] sm:$0xff]
  %v514 = vld [vmem:[%s0 + $0xea0] sm:$0xff]
  %v515 = vld [vmem:[%s0 + $0xea8] sm:$0xff]
  %v516 = vld [vmem:[%s0 + $0xeb0] sm:$0xff]
  %v517 = vld [vmem:[%s0 + $0xeb8] sm:$0xff]
  %v518 = vld [vmem:[%s0 + $0xec0] sm:$0xf]
  %v519 = vld [vmem:[%s0 + $0xec4] sm:$0xff]
  %v520 = vld [vmem:[%s0 + $0xecc] sm:$0xff]
  %v521 = vld [vmem:[%s0 + $0xed4] sm:$0xff]
  %v522 = vld [vmem:[%s0 + $0xedc] sm:$0xff]
  %v523 = vld [vmem:[%s0 + $0xee4] sm:$0xff]
  %v524 = vld [vmem:[%s0 + $0xeec] sm:$0xff]
  %v525 = vld [vmem:[%s0 + $0xef4] sm:$0xff]
  %v526 = vld [vmem:[%s0 + $0xefc] sm:$0xf]
  %v527 = vld [vmem:[%s1] sm:$0xf]
  %v528 = vld [vmem:[%s1 + $0x4] sm:$0xf]
  %v529 = vld [vmem:[%s1 + $0x8] sm:$0xf]
  %v530 = vld [vmem:[%s1 + $0xc] sm:$0xf]
  %v531 = vld [vmem:[%s1 + $0x10] sm:$0xf]
  %v532 = vld [vmem:[%s1 + $0x14] sm:$0xf]
  %v533 = vld [vmem:[%s1 + $0x18] sm:$0xf]
  %v534 = vld [vmem:[%s1 + $0x1c] sm:$0xf]
  %v535 = vld [vmem:[%s1 + $0x20] sm:$0xf]
  %v536 = vld [vmem:[%s1 + $0x24] sm:$0xf]
  %v537 = vld [vmem:[%s1 + $0x28] sm:$0xf]
  %v538 = vld [vmem:[%s1 + $0x2c] sm:$0xf]
  %v539 = vld [vmem:[%s1 + $0x30] sm:$0xf]
  %v540 = vld [vmem:[%s1 + $0x34] sm:$0xf]
  %v541 = vld [vmem:[%s1 + $0x38] sm:$0xf]
  %v542 = vld [vmem:[%s1 + $0x3c] sm:$0xf]
  %v543 = vld [vmem:[%s1 + $0x40] sm:$0xf]
  %v544 = vld [vmem:[%s1 + $0x44] sm:$0xf]
  %v545 = vld [vmem:[%s1 + $0x48] sm:$0xf]
  %v546 = vld [vmem:[%s1 + $0x4c] sm:$0xf]
  %v547 = vld [vmem:[%s1 + $0x50] sm:$0xf]
  %v548 = vld [vmem:[%s1 + $0x54] sm:$0xf]
  %v549 = vld [vmem:[%s1 + $0x58] sm:$0xf]
  %v550 = vld [vmem:[%s1 + $0x5c] sm:$0xf]
  %v551 = vld [vmem:[%s1 + $0x60] sm:$0xf]
  %v552 = vld [vmem:[%s1 + $0x64] sm:$0xf]
  %v553 = vld [vmem:[%s1 + $0x68] sm:$0xf]
  %v554 = vld [vmem:[%s1 + $0x6c] sm:$0xf]
  %v555 = vld [vmem:[%s1 + $0x70] sm:$0xf]
  %v556 = vld [vmem:[%s1 + $0x74] sm:$0xf]
  %v557 = vld [vmem:[%s1 + $0x78] sm:$0xf]
  %v558 = vld [vmem:[%s1 + $0x7c] sm:$0xf]
  %v559 = vld [vmem:[%s1 + $0x80] sm:$0xf]
  %v560 = vld [vmem:[%s1 + $0x84] sm:$0xf]
  %v561 = vld [vmem:[%s1 + $0x88] sm:$0xf]
  %v562 = vld [vmem:[%s1 + $0x8c] sm:$0xf]
  %v563 = vld [vmem:[%s1 + $0x90] sm:$0xf]
  %v564 = vld [vmem:[%s1 + $0x94] sm:$0xf]
  %v565 = vld [vmem:[%s1 + $0x98] sm:$0xf]
  %v566 = vld [vmem:[%s1 + $0x9c] sm:$0xf]
  %v567 = vld [vmem:[%s1 + $0xa0] sm:$0xf]
  %v568 = vld [vmem:[%s1 + $0xa4] sm:$0xf]
  %v569 = vld [vmem:[%s1 + $0xa8] sm:$0xf]
  %v570 = vld [vmem:[%s1 + $0xac] sm:$0xf]
  %v571 = vld [vmem:[%s1 + $0xb0] sm:$0xf]
  %v572 = vld [vmem:[%s1 + $0xb4] sm:$0xf]
  %v573 = vld [vmem:[%s1 + $0xb8] sm:$0xf]
  %v574 = vld [vmem:[%s1 + $0xbc] sm:$0xf]
  %v575 = vld [vmem:[%s1 + $0xc0] sm:$0xf]
  %v576 = vld [vmem:[%s1 + $0xc4] sm:$0xf]
  %v577 = vld [vmem:[%s1 + $0xc8] sm:$0xf]
  %v578 = vld [vmem:[%s1 + $0xcc] sm:$0xf]
  %v579 = vld [vmem:[%s1 + $0xd0] sm:$0xf]
  %v580 = vld [vmem:[%s1 + $0xd4] sm:$0xf]
  %v581 = vld [vmem:[%s1 + $0xd8] sm:$0xf]
  %v582 = vld [vmem:[%s1 + $0xdc] sm:$0xf]
  %v583 = vld [vmem:[%s1 + $0xe0] sm:$0xf]
  %v584 = vld [vmem:[%s1 + $0xe4] sm:$0xf]
  %v585 = vld [vmem:[%s1 + $0xe8] sm:$0xf]
  %v586 = vld [vmem:[%s1 + $0xec] sm:$0xf]
  %v587 = vld [vmem:[%s1 + $0xf0] sm:$0xf]
  %v588 = vld [vmem:[%s1 + $0xf4] sm:$0xf]
  %v589 = vld [vmem:[%s1 + $0xf8] sm:$0xf]
  %v590 = vld [vmem:[%s1 + $0xfc] sm:$0xf]
  %v591 = vld [vmem:[%s1 + $0x100] sm:$0xf]
  %v592 = vld [vmem:[%s1 + $0x104] sm:$0xf]
  %v593 = vld [vmem:[%s1 + $0x108] sm:$0xf]
  %v594 = vld [vmem:[%s1 + $0x10c] sm:$0xf]
  %v595 = vld [vmem:[%s1 + $0x110] sm:$0xf]
  %v596 = vld [vmem:[%s1 + $0x114] sm:$0xf]
  %v597 = vld [vmem:[%s1 + $0x118] sm:$0xf]
  %v598 = vld [vmem:[%s1 + $0x11c] sm:$0xf]
  %v599 = vld [vmem:[%s1 + $0x120] sm:$0xf]
  %v600 = vld [vmem:[%s1 + $0x124] sm:$0xf]
  %v601 = vld [vmem:[%s1 + $0x128] sm:$0xf]
  %v602 = vld [vmem:[%s1 + $0x12c] sm:$0xf]
  %v603 = vld [vmem:[%s1 + $0x130] sm:$0xf]
  %v604 = vld [vmem:[%s1 + $0x134] sm:$0xf]
  %v605 = vld [vmem:[%s1 + $0x138] sm:$0xf]
  %v606 = vld [vmem:[%s1 + $0x13c] sm:$0xf]
  %v607 = vld [vmem:[%s1 + $0x140] sm:$0xf]
  %v608 = vld [vmem:[%s1 + $0x144] sm:$0xf]
  %v609 = vld [vmem:[%s1 + $0x148] sm:$0xf]
  %v610 = vld [vmem:[%s1 + $0x14c] sm:$0xf]
  %v611 = vld [vmem:[%s1 + $0x150] sm:$0xf]
  %v612 = vld [vmem:[%s1 + $0x154] sm:$0xf]
  %v613 = vld [vmem:[%s1 + $0x158] sm:$0xf]
  %v614 = vld [vmem:[%s1 + $0x15c] sm:$0xf]
  %v615 = vld [vmem:[%s1 + $0x160] sm:$0xf]
  %v616 = vld [vmem:[%s1 + $0x164] sm:$0xf]
  %v617 = vld [vmem:[%s1 + $0x168] sm:$0xf]
  %v618 = vld [vmem:[%s1 + $0x16c] sm:$0xf]
  %v619 = vld [vmem:[%s1 + $0x170] sm:$0xf]
  %v620 = vld [vmem:[%s1 + $0x174] sm:$0xf]
  %v621 = vld [vmem:[%s1 + $0x178] sm:$0xf]
  %v622 = vld [vmem:[%s1 + $0x17c] sm:$0xf]
  %v623 = vld [vmem:[%s1 + $0x180] sm:$0xf]
  %v624 = vld [vmem:[%s1 + $0x184] sm:$0xf]
  %v625 = vld [vmem:[%s1 + $0x188] sm:$0xf]
  %v626 = vld [vmem:[%s1 + $0x18c] sm:$0xf]
  %v627 = vld [vmem:[%s1 + $0x190] sm:$0xf]
  %v628 = vld [vmem:[%s1 + $0x194] sm:$0xf]
  %v629 = vld [vmem:[%s1 + $0x198] sm:$0xf]
  %v630 = vld [vmem:[%s1 + $0x19c] sm:$0xf]
  %v631 = vld [vmem:[%s1 + $0x1a0] sm:$0xf]
  %v632 = vld [vmem:[%s1 + $0x1a4] sm:$0xf]
  %v633 = vld [vmem:[%s1 + $0x1a8] sm:$0xf]
  %v634 = vld [vmem:[%s1 + $0x1ac] sm:$0xf]
  %v635 = vld [vmem:[%s1 + $0x1b0] sm:$0xf]
  %v636 = vld [vmem:[%s1 + $0x1b4] sm:$0xf]
  %v637 = vld [vmem:[%s1 + $0x1b8] sm:$0xf]
  %v638 = vld [vmem:[%s1 + $0x1bc] sm:$0xf]
  %v639 = vld [vmem:[%s1 + $0x1c0] sm:$0xf]
  %v640 = vld [vmem:[%s1 + $0x1c4] sm:$0xf]
  %v641 = vld [vmem:[%s1 + $0x1c8] sm:$0xf]
  %v642 = vld [vmem:[%s1 + $0x1cc] sm:$0xf]
  %v643 = vld [vmem:[%s1 + $0x1d0] sm:$0xf]
  %v644 = vld [vmem:[%s1 + $0x1d4] sm:$0xf]
  %v645 = vld [vmem:[%s1 + $0x1d8] sm:$0xf]
  %v646 = vld [vmem:[%s1 + $0x1dc] sm:$0xf]
  %v647 = vld [vmem:[%s1 + $0x1e0] sm:$0xf]
  %v648 = vld [vmem:[%s1 + $0x1e4] sm:$0xf]
  %v649 = vld [vmem:[%s1 + $0x1e8] sm:$0xf]
  %v650 = vld [vmem:[%s1 + $0x1ec] sm:$0xf]
  %v651 = vld [vmem:[%s1 + $0x1f0] sm:$0xf]
  %v652 = vld [vmem:[%s1 + $0x1f4] sm:$0xf]
  %v653 = vld [vmem:[%s1 + $0x1f8] sm:$0xf]
  %v654 = vld [vmem:[%s1 + $0x1fc] sm:$0xf]
  %v655 = vld [vmem:[%s1 + $0x200] sm:$0xf]
  %v656 = vld [vmem:[%s1 + $0x204] sm:$0xf]
  %v657 = vld [vmem:[%s1 + $0x208] sm:$0xf]
  %v658 = vld [vmem:[%s1 + $0x20c] sm:$0xf]
  %v659 = vld [vmem:[%s1 + $0x210] sm:$0xf]
  %v660 = vld [vmem:[%s1 + $0x214] sm:$0xf]
  %v661 = vld [vmem:[%s1 + $0x218] sm:$0xf]
  %v662 = vld [vmem:[%s1 + $0x21c] sm:$0xf]
  %v663 = vld [vmem:[%s1 + $0x220] sm:$0xf]
  %v664 = vld [vmem:[%s1 + $0x224] sm:$0xf]
  %v665 = vld [vmem:[%s1 + $0x228] sm:$0xf]
  %v666 = vld [vmem:[%s1 + $0x22c] sm:$0xf]
  %v667 = vld [vmem:[%s1 + $0x230] sm:$0xf]
  %v668 = vld [vmem:[%s1 + $0x234] sm:$0xf]
  %v669 = vld [vmem:[%s1 + $0x238] sm:$0xf]
  %v670 = vld [vmem:[%s1 + $0x23c] sm:$0xf]
  %v671 = vld [vmem:[%s1 + $0x240] sm:$0xf]
  %v672 = vld [vmem:[%s1 + $0x244] sm:$0xf]
  %v673 = vld [vmem:[%s1 + $0x248] sm:$0xf]
  %v674 = vld [vmem:[%s1 + $0x24c] sm:$0xf]
  %v675 = vld [vmem:[%s1 + $0x250] sm:$0xf]
  %v676 = vld [vmem:[%s1 + $0x254] sm:$0xf]
  %v677 = vld [vmem:[%s1 + $0x258] sm:$0xf]
  %v678 = vld [vmem:[%s1 + $0x25c] sm:$0xf]
  %v679 = vld [vmem:[%s1 + $0x260] sm:$0xf]
  %v680 = vld [vmem:[%s1 + $0x264] sm:$0xf]
  %v681 = vld [vmem:[%s1 + $0x268] sm:$0xf]
  %v682 = vld [vmem:[%s1 + $0x26c] sm:$0xf]
  %v683 = vld [vmem:[%s1 + $0x270] sm:$0xf]
  %v684 = vld [vmem:[%s1 + $0x274] sm:$0xf]
  %v685 = vld [vmem:[%s1 + $0x278] sm:$0xf]
  %v686 = vld [vmem:[%s1 + $0x27c] sm:$0xf]
  %v687 = vld [vmem:[%s1 + $0x280] sm:$0xf]
  %v688 = vld [vmem:[%s1 + $0x284] sm:$0xf]
  %v689 = vld [vmem:[%s1 + $0x288] sm:$0xf]
  %v690 = vld [vmem:[%s1 + $0x28c] sm:$0xf]
  %v691 = vld [vmem:[%s1 + $0x290] sm:$0xf]
  %v692 = vld [vmem:[%s1 + $0x294] sm:$0xf]
  %v693 = vld [vmem:[%s1 + $0x298] sm:$0xf]
  %v694 = vld [vmem:[%s1 + $0x29c] sm:$0xf]
  %v695 = vld [vmem:[%s1 + $0x2a0] sm:$0xf]
  %v696 = vld [vmem:[%s1 + $0x2a4] sm:$0xf]
  %v697 = vld [vmem:[%s1 + $0x2a8] sm:$0xf]
  %v698 = vld [vmem:[%s1 + $0x2ac] sm:$0xf]
  %v699 = vld [vmem:[%s1 + $0x2b0] sm:$0xf]
  %v700 = vld [vmem:[%s1 + $0x2b4] sm:$0xf]
  %v701 = vld [vmem:[%s1 + $0x2b8] sm:$0xf]
  %v702 = vld [vmem:[%s1 + $0x2bc] sm:$0xf]
  %v703 = vld [vmem:[%s1 + $0x2c0] sm:$0xf]
  %v704 = vld [vmem:[%s1 + $0x2c4] sm:$0xf]
  %v705 = vld [vmem:[%s1 + $0x2c8] sm:$0xf]
  %v706 = vld [vmem:[%s1 + $0x2cc] sm:$0xf]
  %v707 = vld [vmem:[%s1 + $0x2d0] sm:$0xf]
  %v708 = vld [vmem:[%s1 + $0x2d4] sm:$0xf]
  %v709 = vld [vmem:[%s1 + $0x2d8] sm:$0xf]
  %v710 = vld [vmem:[%s1 + $0x2dc] sm:$0xf]
  %v711 = vld [vmem:[%s1 + $0x2e0] sm:$0xf]
  %v712 = vld [vmem:[%s1 + $0x2e4] sm:$0xf]
  %v713 = vld [vmem:[%s1 + $0x2e8] sm:$0xf]
  %v714 = vld [vmem:[%s1 + $0x2ec] sm:$0xf]
  %v715 = vld [vmem:[%s1 + $0x2f0] sm:$0xf]
  %v716 = vld [vmem:[%s1 + $0x2f4] sm:$0xf]
  %v717 = vld [vmem:[%s1 + $0x2f8] sm:$0xf]
  %v718 = vld [vmem:[%s1 + $0x2fc] sm:$0xf]
  %v719 = vld [vmem:[%s1 + $0x300] sm:$0xf]
  %v720 = vld [vmem:[%s1 + $0x304] sm:$0xf]
  %v721 = vld [vmem:[%s1 + $0x308] sm:$0xf]
  %v722 = vld [vmem:[%s1 + $0x30c] sm:$0xf]
  %v723 = vld [vmem:[%s1 + $0x310] sm:$0xf]
  %v724 = vld [vmem:[%s1 + $0x314] sm:$0xf]
  %v725 = vld [vmem:[%s1 + $0x318] sm:$0xf]
  %v726 = vld [vmem:[%s1 + $0x31c] sm:$0xf]
  %v727 = vld [vmem:[%s1 + $0x320] sm:$0xf]
  %v728 = vld [vmem:[%s1 + $0x324] sm:$0xf]
  %v729 = vld [vmem:[%s1 + $0x328] sm:$0xf]
  %v730 = vld [vmem:[%s1 + $0x32c] sm:$0xf]
  %v731 = vld [vmem:[%s1 + $0x330] sm:$0xf]
  %v732 = vld [vmem:[%s1 + $0x334] sm:$0xf]
  %v733 = vld [vmem:[%s1 + $0x338] sm:$0xf]
  %v734 = vld [vmem:[%s1 + $0x33c] sm:$0xf]
  %v735 = vld [vmem:[%s1 + $0x340] sm:$0xf]
  %v736 = vld [vmem:[%s1 + $0x344] sm:$0xf]
  %v737 = vld [vmem:[%s1 + $0x348] sm:$0xf]
  %v738 = vld [vmem:[%s1 + $0x34c] sm:$0xf]
  %v739 = vld [vmem:[%s1 + $0x350] sm:$0xf]
  %v740 = vld [vmem:[%s1 + $0x354] sm:$0xf]
  %v741 = vld [vmem:[%s1 + $0x358] sm:$0xf]
  %v742 = vld [vmem:[%s1 + $0x35c] sm:$0xf]
  %v743 = vld [vmem:[%s1 + $0x360] sm:$0xf]
  %v744 = vld [vmem:[%s1 + $0x364] sm:$0xf]
  %v745 = vld [vmem:[%s1 + $0x368] sm:$0xf]
  %v746 = vld [vmem:[%s1 + $0x36c] sm:$0xf]
  %v747 = vld [vmem:[%s1 + $0x370] sm:$0xf]
  %v748 = vld [vmem:[%s1 + $0x374] sm:$0xf]
  %v749 = vld [vmem:[%s1 + $0x378] sm:$0xf]
  %v750 = vld [vmem:[%s1 + $0x37c] sm:$0xf]
  %v751 = vld [vmem:[%s1 + $0x380] sm:$0xf]
  %v752 = vld [vmem:[%s1 + $0x384] sm:$0xf]
  %v753 = vld [vmem:[%s1 + $0x388] sm:$0xf]
  %v754 = vld [vmem:[%s1 + $0x38c] sm:$0xf]
  %v755 = vld [vmem:[%s1 + $0x390] sm:$0xf]
  %v756 = vld [vmem:[%s1 + $0x394] sm:$0xf]
  %v757 = vld [vmem:[%s1 + $0x398] sm:$0xf]
  %v758 = vld [vmem:[%s1 + $0x39c] sm:$0xf]
  %v759 = vld [vmem:[%s1 + $0x3a0] sm:$0xf]
  %v760 = vld [vmem:[%s1 + $0x3a4] sm:$0xf]
  %v761 = vld [vmem:[%s1 + $0x3a8] sm:$0xf]
  %v762 = vld [vmem:[%s1 + $0x3ac] sm:$0xf]
  %v763 = vld [vmem:[%s1 + $0x3b0] sm:$0xf]
  %v764 = vld [vmem:[%s1 + $0x3b4] sm:$0xf]
  %v765 = vld [vmem:[%s1 + $0x3b8] sm:$0xf]
  %v766 = vld [vmem:[%s1 + $0x3bc] sm:$0xf]
  %v1279 = vunpack.c.l.b16 %v15
  %v1280 = vunpack.c.h.b16 %v15
  %v1281 = vunpack.c.l.b16 %v16
  %v1282 = vunpack.c.h.b16 %v16
  %v1283 = vunpack.c.l.b16 %v17
  %v1284 = vunpack.c.h.b16 %v17
  %v1285 = vunpack.c.l.b16 %v18
  %v1286 = vunpack.c.h.b16 %v18
  %v1287 = vunpack.c.l.b16 %v19
  %v1288 = vunpack.c.h.b16 %v19
  %v1289 = vunpack.c.l.b16 %v20
  %v1290 = vunpack.c.h.b16 %v20
  %v1291 = vunpack.c.l.b16 %v21
  %v1292 = vunpack.c.h.b16 %v21
  %v1293 = vunpack.c.l.b16 %v22
  %v1294 = vunpack.c.l.b16 %v23
  %v1295 = vunpack.c.h.b16 %v23
  %v1296 = vunpack.c.l.b16 %v24
  %v1297 = vunpack.c.h.b16 %v24
  %v1298 = vunpack.c.l.b16 %v25
  %v1299 = vunpack.c.h.b16 %v25
  %v1300 = vunpack.c.l.b16 %v26
  %v1301 = vunpack.c.h.b16 %v26
  %v1302 = vunpack.c.l.b16 %v27
  %v1303 = vunpack.c.h.b16 %v27
  %v1304 = vunpack.c.l.b16 %v28
  %v1305 = vunpack.c.h.b16 %v28
  %v1306 = vunpack.c.l.b16 %v29
  %v1307 = vunpack.c.h.b16 %v29
  %v1308 = vunpack.c.l.b16 %v30
  %v1309 = vunpack.c.l.b16 %v31
  %v1310 = vunpack.c.h.b16 %v31
  %v1311 = vunpack.c.l.b16 %v32
  %v1312 = vunpack.c.h.b16 %v32
  %v1313 = vunpack.c.l.b16 %v33
  %v1314 = vunpack.c.h.b16 %v33
  %v1315 = vunpack.c.l.b16 %v34
  %v1316 = vunpack.c.h.b16 %v34
  %v1317 = vunpack.c.l.b16 %v35
  %v1318 = vunpack.c.h.b16 %v35
  %v1319 = vunpack.c.l.b16 %v36
  %v1320 = vunpack.c.h.b16 %v36
  %v1321 = vunpack.c.l.b16 %v37
  %v1322 = vunpack.c.h.b16 %v37
  %v1323 = vunpack.c.l.b16 %v38
  %v1324 = vunpack.c.l.b16 %v39
  %v1325 = vunpack.c.h.b16 %v39
  %v1326 = vunpack.c.l.b16 %v40
  %v1327 = vunpack.c.h.b16 %v40
  %v1328 = vunpack.c.l.b16 %v41
  %v1329 = vunpack.c.h.b16 %v41
  %v1330 = vunpack.c.l.b16 %v42
  %v1331 = vunpack.c.h.b16 %v42
  %v1332 = vunpack.c.l.b16 %v43
  %v1333 = vunpack.c.h.b16 %v43
  %v1334 = vunpack.c.l.b16 %v44
  %v1335 = vunpack.c.h.b16 %v44
  %v1336 = vunpack.c.l.b16 %v45
  %v1337 = vunpack.c.h.b16 %v45
  %v1338 = vunpack.c.l.b16 %v46
  %v1339 = vunpack.c.l.b16 %v47
  %v1340 = vunpack.c.h.b16 %v47
  %v1341 = vunpack.c.l.b16 %v48
  %v1342 = vunpack.c.h.b16 %v48
  %v1343 = vunpack.c.l.b16 %v49
  %v1344 = vunpack.c.h.b16 %v49
  %v1345 = vunpack.c.l.b16 %v50
  %v1346 = vunpack.c.h.b16 %v50
  %v1347 = vunpack.c.l.b16 %v51
  %v1348 = vunpack.c.h.b16 %v51
  %v1349 = vunpack.c.l.b16 %v52
  %v1350 = vunpack.c.h.b16 %v52
  %v1351 = vunpack.c.l.b16 %v53
  %v1352 = vunpack.c.h.b16 %v53
  %v1353 = vunpack.c.l.b16 %v54
  %v1354 = vunpack.c.l.b16 %v55
  %v1355 = vunpack.c.h.b16 %v55
  %v1356 = vunpack.c.l.b16 %v56
  %v1357 = vunpack.c.h.b16 %v56
  %v1358 = vunpack.c.l.b16 %v57
  %v1359 = vunpack.c.h.b16 %v57
  %v1360 = vunpack.c.l.b16 %v58
  %v1361 = vunpack.c.h.b16 %v58
  %v1362 = vunpack.c.l.b16 %v59
  %v1363 = vunpack.c.h.b16 %v59
  %v1364 = vunpack.c.l.b16 %v60
  %v1365 = vunpack.c.h.b16 %v60
  %v1366 = vunpack.c.l.b16 %v61
  %v1367 = vunpack.c.h.b16 %v61
  %v1368 = vunpack.c.l.b16 %v62
  %v1369 = vunpack.c.l.b16 %v63
  %v1370 = vunpack.c.h.b16 %v63
  %v1371 = vunpack.c.l.b16 %v64
  %v1372 = vunpack.c.h.b16 %v64
  %v1373 = vunpack.c.l.b16 %v65
  %v1374 = vunpack.c.h.b16 %v65
  %v1375 = vunpack.c.l.b16 %v66
  %v1376 = vunpack.c.h.b16 %v66
  %v1377 = vunpack.c.l.b16 %v67
  %v1378 = vunpack.c.h.b16 %v67
  %v1379 = vunpack.c.l.b16 %v68
  %v1380 = vunpack.c.h.b16 %v68
  %v1381 = vunpack.c.l.b16 %v69
  %v1382 = vunpack.c.h.b16 %v69
  %v1383 = vunpack.c.l.b16 %v70
  %v1384 = vunpack.c.l.b16 %v71
  %v1385 = vunpack.c.h.b16 %v71
  %v1386 = vunpack.c.l.b16 %v72
  %v1387 = vunpack.c.h.b16 %v72
  %v1388 = vunpack.c.l.b16 %v73
  %v1389 = vunpack.c.h.b16 %v73
  %v1390 = vunpack.c.l.b16 %v74
  %v1391 = vunpack.c.h.b16 %v74
  %v1392 = vunpack.c.l.b16 %v75
  %v1393 = vunpack.c.h.b16 %v75
  %v1394 = vunpack.c.l.b16 %v76
  %v1395 = vunpack.c.h.b16 %v76
  %v1396 = vunpack.c.l.b16 %v77
  %v1397 = vunpack.c.h.b16 %v77
  %v1398 = vunpack.c.l.b16 %v78
  %v1399 = vunpack.c.l.b16 %v79
  %v1400 = vunpack.c.h.b16 %v79
  %v1401 = vunpack.c.l.b16 %v80
  %v1402 = vunpack.c.h.b16 %v80
  %v1403 = vunpack.c.l.b16 %v81
  %v1404 = vunpack.c.h.b16 %v81
  %v1405 = vunpack.c.l.b16 %v82
  %v1406 = vunpack.c.h.b16 %v82
  %v1407 = vunpack.c.l.b16 %v83
  %v1408 = vunpack.c.h.b16 %v83
  %v1409 = vunpack.c.l.b16 %v84
  %v1410 = vunpack.c.h.b16 %v84
  %v1411 = vunpack.c.l.b16 %v85
  %v1412 = vunpack.c.h.b16 %v85
  %v1413 = vunpack.c.l.b16 %v86
  %v1414 = vunpack.c.l.b16 %v87
  %v1415 = vunpack.c.h.b16 %v87
  %v1416 = vunpack.c.l.b16 %v88
  %v1417 = vunpack.c.h.b16 %v88
  %v1418 = vunpack.c.l.b16 %v89
  %v1419 = vunpack.c.h.b16 %v89
  %v1420 = vunpack.c.l.b16 %v90
  %v1421 = vunpack.c.h.b16 %v90
  %v1422 = vunpack.c.l.b16 %v91
  %v1423 = vunpack.c.h.b16 %v91
  %v1424 = vunpack.c.l.b16 %v92
  %v1425 = vunpack.c.h.b16 %v92
  %v1426 = vunpack.c.l.b16 %v93
  %v1427 = vunpack.c.h.b16 %v93
  %v1428 = vunpack.c.l.b16 %v94
  %v1429 = vunpack.c.l.b16 %v95
  %v1430 = vunpack.c.h.b16 %v95
  %v1431 = vunpack.c.l.b16 %v96
  %v1432 = vunpack.c.h.b16 %v96
  %v1433 = vunpack.c.l.b16 %v97
  %v1434 = vunpack.c.h.b16 %v97
  %v1435 = vunpack.c.l.b16 %v98
  %v1436 = vunpack.c.h.b16 %v98
  %v1437 = vunpack.c.l.b16 %v99
  %v1438 = vunpack.c.h.b16 %v99
  %v1439 = vunpack.c.l.b16 %v100
  %v1440 = vunpack.c.h.b16 %v100
  %v1441 = vunpack.c.l.b16 %v101
  %v1442 = vunpack.c.h.b16 %v101
  %v1443 = vunpack.c.l.b16 %v102
  %v1444 = vunpack.c.l.b16 %v103
  %v1445 = vunpack.c.h.b16 %v103
  %v1446 = vunpack.c.l.b16 %v104
  %v1447 = vunpack.c.h.b16 %v104
  %v1448 = vunpack.c.l.b16 %v105
  %v1449 = vunpack.c.h.b16 %v105
  %v1450 = vunpack.c.l.b16 %v106
  %v1451 = vunpack.c.h.b16 %v106
  %v1452 = vunpack.c.l.b16 %v107
  %v1453 = vunpack.c.h.b16 %v107
  %v1454 = vunpack.c.l.b16 %v108
  %v1455 = vunpack.c.h.b16 %v108
  %v1456 = vunpack.c.l.b16 %v109
  %v1457 = vunpack.c.h.b16 %v109
  %v1458 = vunpack.c.l.b16 %v110
  %v1459 = vunpack.c.l.b16 %v111
  %v1460 = vunpack.c.h.b16 %v111
  %v1461 = vunpack.c.l.b16 %v112
  %v1462 = vunpack.c.h.b16 %v112
  %v1463 = vunpack.c.l.b16 %v113
  %v1464 = vunpack.c.h.b16 %v113
  %v1465 = vunpack.c.l.b16 %v114
  %v1466 = vunpack.c.h.b16 %v114
  %v1467 = vunpack.c.l.b16 %v115
  %v1468 = vunpack.c.h.b16 %v115
  %v1469 = vunpack.c.l.b16 %v116
  %v1470 = vunpack.c.h.b16 %v116
  %v1471 = vunpack.c.l.b16 %v117
  %v1472 = vunpack.c.h.b16 %v117
  %v1473 = vunpack.c.l.b16 %v118
  %v1474 = vunpack.c.l.b16 %v119
  %v1475 = vunpack.c.h.b16 %v119
  %v1476 = vunpack.c.l.b16 %v120
  %v1477 = vunpack.c.h.b16 %v120
  %v1478 = vunpack.c.l.b16 %v121
  %v1479 = vunpack.c.h.b16 %v121
  %v1480 = vunpack.c.l.b16 %v122
  %v1481 = vunpack.c.h.b16 %v122
  %v1482 = vunpack.c.l.b16 %v123
  %v1483 = vunpack.c.h.b16 %v123
  %v1484 = vunpack.c.l.b16 %v124
  %v1485 = vunpack.c.h.b16 %v124
  %v1486 = vunpack.c.l.b16 %v125
  %v1487 = vunpack.c.h.b16 %v125
  %v1488 = vunpack.c.l.b16 %v126
  %v1489 = vunpack.c.l.b16 %v127
  %v1490 = vunpack.c.h.b16 %v127
  %v1491 = vunpack.c.l.b16 %v128
  %v1492 = vunpack.c.h.b16 %v128
  %v1493 = vunpack.c.l.b16 %v129
  %v1494 = vunpack.c.h.b16 %v129
  %v1495 = vunpack.c.l.b16 %v130
  %v1496 = vunpack.c.h.b16 %v130
  %v1497 = vunpack.c.l.b16 %v131
  %v1498 = vunpack.c.h.b16 %v131
  %v1499 = vunpack.c.l.b16 %v132
  %v1500 = vunpack.c.h.b16 %v132
  %v1501 = vunpack.c.l.b16 %v133
  %v1502 = vunpack.c.h.b16 %v133
  %v1503 = vunpack.c.l.b16 %v134
  %v1504 = vunpack.c.l.b16 %v135
  %v1505 = vunpack.c.h.b16 %v135
  %v1506 = vunpack.c.l.b16 %v136
  %v1507 = vunpack.c.h.b16 %v136
  %v1508 = vunpack.c.l.b16 %v137
  %v1509 = vunpack.c.h.b16 %v137
  %v1510 = vunpack.c.l.b16 %v138
  %v1511 = vunpack.c.h.b16 %v138
  %v1512 = vunpack.c.l.b16 %v139
  %v1513 = vunpack.c.h.b16 %v139
  %v1514 = vunpack.c.l.b16 %v140
  %v1515 = vunpack.c.h.b16 %v140
  %v1516 = vunpack.c.l.b16 %v141
  %v1517 = vunpack.c.h.b16 %v141
  %v1518 = vunpack.c.l.b16 %v142
  %v1519 = vunpack.c.l.b16 %v143
  %v1520 = vunpack.c.h.b16 %v143
  %v1521 = vunpack.c.l.b16 %v144
  %v1522 = vunpack.c.h.b16 %v144
  %v1523 = vunpack.c.l.b16 %v145
  %v1524 = vunpack.c.h.b16 %v145
  %v1525 = vunpack.c.l.b16 %v146
  %v1526 = vunpack.c.h.b16 %v146
  %v1527 = vunpack.c.l.b16 %v147
  %v1528 = vunpack.c.h.b16 %v147
  %v1529 = vunpack.c.l.b16 %v148
  %v1530 = vunpack.c.h.b16 %v148
  %v1531 = vunpack.c.l.b16 %v149
  %v1532 = vunpack.c.h.b16 %v149
  %v1533 = vunpack.c.l.b16 %v150
  %v1534 = vunpack.c.l.b16 %v151
  %v1535 = vunpack.c.h.b16 %v151
  %v1536 = vunpack.c.l.b16 %v152
  %v1537 = vunpack.c.h.b16 %v152
  %v1538 = vunpack.c.l.b16 %v153
  %v1539 = vunpack.c.h.b16 %v153
  %v1540 = vunpack.c.l.b16 %v154
  %v1541 = vunpack.c.h.b16 %v154
  %v1542 = vunpack.c.l.b16 %v155
  %v1543 = vunpack.c.h.b16 %v155
  %v1544 = vunpack.c.l.b16 %v156
  %v1545 = vunpack.c.h.b16 %v156
  %v1546 = vunpack.c.l.b16 %v157
  %v1547 = vunpack.c.h.b16 %v157
  %v1548 = vunpack.c.l.b16 %v158
  %v1549 = vunpack.c.l.b16 %v159
  %v1550 = vunpack.c.h.b16 %v159
  %v1551 = vunpack.c.l.b16 %v160
  %v1552 = vunpack.c.h.b16 %v160
  %v1553 = vunpack.c.l.b16 %v161
  %v1554 = vunpack.c.h.b16 %v161
  %v1555 = vunpack.c.l.b16 %v162
  %v1556 = vunpack.c.h.b16 %v162
  %v1557 = vunpack.c.l.b16 %v163
  %v1558 = vunpack.c.h.b16 %v163
  %v1559 = vunpack.c.l.b16 %v164
  %v1560 = vunpack.c.h.b16 %v164
  %v1561 = vunpack.c.l.b16 %v165
  %v1562 = vunpack.c.h.b16 %v165
  %v1563 = vunpack.c.l.b16 %v166
  %v1564 = vunpack.c.l.b16 %v167
  %v1565 = vunpack.c.h.b16 %v167
  %v1566 = vunpack.c.l.b16 %v168
  %v1567 = vunpack.c.h.b16 %v168
  %v1568 = vunpack.c.l.b16 %v169
  %v1569 = vunpack.c.h.b16 %v169
  %v1570 = vunpack.c.l.b16 %v170
  %v1571 = vunpack.c.h.b16 %v170
  %v1572 = vunpack.c.l.b16 %v171
  %v1573 = vunpack.c.h.b16 %v171
  %v1574 = vunpack.c.l.b16 %v172
  %v1575 = vunpack.c.h.b16 %v172
  %v1576 = vunpack.c.l.b16 %v173
  %v1577 = vunpack.c.h.b16 %v173
  %v1578 = vunpack.c.l.b16 %v174
  %v1579 = vunpack.c.l.b16 %v175
  %v1580 = vunpack.c.h.b16 %v175
  %v1581 = vunpack.c.l.b16 %v176
  %v1582 = vunpack.c.h.b16 %v176
  %v1583 = vunpack.c.l.b16 %v177
  %v1584 = vunpack.c.h.b16 %v177
  %v1585 = vunpack.c.l.b16 %v178
  %v1586 = vunpack.c.h.b16 %v178
  %v1587 = vunpack.c.l.b16 %v179
  %v1588 = vunpack.c.h.b16 %v179
  %v1589 = vunpack.c.l.b16 %v180
  %v1590 = vunpack.c.h.b16 %v180
  %v1591 = vunpack.c.l.b16 %v181
  %v1592 = vunpack.c.h.b16 %v181
  %v1593 = vunpack.c.l.b16 %v182
  %v1594 = vunpack.c.l.b16 %v183
  %v1595 = vunpack.c.h.b16 %v183
  %v1596 = vunpack.c.l.b16 %v184
  %v1597 = vunpack.c.h.b16 %v184
  %v1598 = vunpack.c.l.b16 %v185
  %v1599 = vunpack.c.h.b16 %v185
  %v1600 = vunpack.c.l.b16 %v186
  %v1601 = vunpack.c.h.b16 %v186
  %v1602 = vunpack.c.l.b16 %v187
  %v1603 = vunpack.c.h.b16 %v187
  %v1604 = vunpack.c.l.b16 %v188
  %v1605 = vunpack.c.h.b16 %v188
  %v1606 = vunpack.c.l.b16 %v189
  %v1607 = vunpack.c.h.b16 %v189
  %v1608 = vunpack.c.l.b16 %v190
  %v1609 = vunpack.c.l.b16 %v191
  %v1610 = vunpack.c.h.b16 %v191
  %v1611 = vunpack.c.l.b16 %v192
  %v1612 = vunpack.c.h.b16 %v192
  %v1613 = vunpack.c.l.b16 %v193
  %v1614 = vunpack.c.h.b16 %v193
  %v1615 = vunpack.c.l.b16 %v194
  %v1616 = vunpack.c.h.b16 %v194
  %v1617 = vunpack.c.l.b16 %v195
  %v1618 = vunpack.c.h.b16 %v195
  %v1619 = vunpack.c.l.b16 %v196
  %v1620 = vunpack.c.h.b16 %v196
  %v1621 = vunpack.c.l.b16 %v197
  %v1622 = vunpack.c.h.b16 %v197
  %v1623 = vunpack.c.l.b16 %v198
  %v1624 = vunpack.c.l.b16 %v199
  %v1625 = vunpack.c.h.b16 %v199
  %v1626 = vunpack.c.l.b16 %v200
  %v1627 = vunpack.c.h.b16 %v200
  %v1628 = vunpack.c.l.b16 %v201
  %v1629 = vunpack.c.h.b16 %v201
  %v1630 = vunpack.c.l.b16 %v202
  %v1631 = vunpack.c.h.b16 %v202
  %v1632 = vunpack.c.l.b16 %v203
  %v1633 = vunpack.c.h.b16 %v203
  %v1634 = vunpack.c.l.b16 %v204
  %v1635 = vunpack.c.h.b16 %v204
  %v1636 = vunpack.c.l.b16 %v205
  %v1637 = vunpack.c.h.b16 %v205
  %v1638 = vunpack.c.l.b16 %v206
  %v1639 = vunpack.c.l.b16 %v207
  %v1640 = vunpack.c.h.b16 %v207
  %v1641 = vunpack.c.l.b16 %v208
  %v1642 = vunpack.c.h.b16 %v208
  %v1643 = vunpack.c.l.b16 %v209
  %v1644 = vunpack.c.h.b16 %v209
  %v1645 = vunpack.c.l.b16 %v210
  %v1646 = vunpack.c.h.b16 %v210
  %v1647 = vunpack.c.l.b16 %v211
  %v1648 = vunpack.c.h.b16 %v211
  %v1649 = vunpack.c.l.b16 %v212
  %v1650 = vunpack.c.h.b16 %v212
  %v1651 = vunpack.c.l.b16 %v213
  %v1652 = vunpack.c.h.b16 %v213
  %v1653 = vunpack.c.l.b16 %v214
  %v1654 = vunpack.c.l.b16 %v215
  %v1655 = vunpack.c.h.b16 %v215
  %v1656 = vunpack.c.l.b16 %v216
  %v1657 = vunpack.c.h.b16 %v216
  %v1658 = vunpack.c.l.b16 %v217
  %v1659 = vunpack.c.h.b16 %v217
  %v1660 = vunpack.c.l.b16 %v218
  %v1661 = vunpack.c.h.b16 %v218
  %v1662 = vunpack.c.l.b16 %v219
  %v1663 = vunpack.c.h.b16 %v219
  %v1664 = vunpack.c.l.b16 %v220
  %v1665 = vunpack.c.h.b16 %v220
  %v1666 = vunpack.c.l.b16 %v221
  %v1667 = vunpack.c.h.b16 %v221
  %v1668 = vunpack.c.l.b16 %v222
  %v1669 = vunpack.c.l.b16 %v223
  %v1670 = vunpack.c.h.b16 %v223
  %v1671 = vunpack.c.l.b16 %v224
  %v1672 = vunpack.c.h.b16 %v224
  %v1673 = vunpack.c.l.b16 %v225
  %v1674 = vunpack.c.h.b16 %v225
  %v1675 = vunpack.c.l.b16 %v226
  %v1676 = vunpack.c.h.b16 %v226
  %v1677 = vunpack.c.l.b16 %v227
  %v1678 = vunpack.c.h.b16 %v227
  %v1679 = vunpack.c.l.b16 %v228
  %v1680 = vunpack.c.h.b16 %v228
  %v1681 = vunpack.c.l.b16 %v229
  %v1682 = vunpack.c.h.b16 %v229
  %v1683 = vunpack.c.l.b16 %v230
  %v1684 = vunpack.c.l.b16 %v231
  %v1685 = vunpack.c.h.b16 %v231
  %v1686 = vunpack.c.l.b16 %v232
  %v1687 = vunpack.c.h.b16 %v232
  %v1688 = vunpack.c.l.b16 %v233
  %v1689 = vunpack.c.h.b16 %v233
  %v1690 = vunpack.c.l.b16 %v234
  %v1691 = vunpack.c.h.b16 %v234
  %v1692 = vunpack.c.l.b16 %v235
  %v1693 = vunpack.c.h.b16 %v235
  %v1694 = vunpack.c.l.b16 %v236
  %v1695 = vunpack.c.h.b16 %v236
  %v1696 = vunpack.c.l.b16 %v237
  %v1697 = vunpack.c.h.b16 %v237
  %v1698 = vunpack.c.l.b16 %v238
  %v1699 = vunpack.c.l.b16 %v239
  %v1700 = vunpack.c.h.b16 %v239
  %v1701 = vunpack.c.l.b16 %v240
  %v1702 = vunpack.c.h.b16 %v240
  %v1703 = vunpack.c.l.b16 %v241
  %v1704 = vunpack.c.h.b16 %v241
  %v1705 = vunpack.c.l.b16 %v242
  %v1706 = vunpack.c.h.b16 %v242
  %v1707 = vunpack.c.l.b16 %v243
  %v1708 = vunpack.c.h.b16 %v243
  %v1709 = vunpack.c.l.b16 %v244
  %v1710 = vunpack.c.h.b16 %v244
  %v1711 = vunpack.c.l.b16 %v245
  %v1712 = vunpack.c.h.b16 %v245
  %v1713 = vunpack.c.l.b16 %v246
  %v1714 = vunpack.c.l.b16 %v247
  %v1715 = vunpack.c.h.b16 %v247
  %v1716 = vunpack.c.l.b16 %v248
  %v1717 = vunpack.c.h.b16 %v248
  %v1718 = vunpack.c.l.b16 %v249
  %v1719 = vunpack.c.h.b16 %v249
  %v1720 = vunpack.c.l.b16 %v250
  %v1721 = vunpack.c.h.b16 %v250
  %v1722 = vunpack.c.l.b16 %v251
  %v1723 = vunpack.c.h.b16 %v251
  %v1724 = vunpack.c.l.b16 %v252
  %v1725 = vunpack.c.h.b16 %v252
  %v1726 = vunpack.c.l.b16 %v253
  %v1727 = vunpack.c.h.b16 %v253
  %v1728 = vunpack.c.l.b16 %v254
  %v1729 = vunpack.c.l.b16 %v255
  %v1730 = vunpack.c.h.b16 %v255
  %v1731 = vunpack.c.l.b16 %v256
  %v1732 = vunpack.c.h.b16 %v256
  %v1733 = vunpack.c.l.b16 %v257
  %v1734 = vunpack.c.h.b16 %v257
  %v1735 = vunpack.c.l.b16 %v258
  %v1736 = vunpack.c.h.b16 %v258
  %v1737 = vunpack.c.l.b16 %v259
  %v1738 = vunpack.c.h.b16 %v259
  %v1739 = vunpack.c.l.b16 %v260
  %v1740 = vunpack.c.h.b16 %v260
  %v1741 = vunpack.c.l.b16 %v261
  %v1742 = vunpack.c.h.b16 %v261
  %v1743 = vunpack.c.l.b16 %v262
  %v1744 = vunpack.c.l.b16 %v263
  %v1745 = vunpack.c.h.b16 %v263
  %v1746 = vunpack.c.l.b16 %v264
  %v1747 = vunpack.c.h.b16 %v264
  %v1748 = vunpack.c.l.b16 %v265
  %v1749 = vunpack.c.h.b16 %v265
  %v1750 = vunpack.c.l.b16 %v266
  %v1751 = vunpack.c.h.b16 %v266
  %v1752 = vunpack.c.l.b16 %v267
  %v1753 = vunpack.c.h.b16 %v267
  %v1754 = vunpack.c.l.b16 %v268
  %v1755 = vunpack.c.h.b16 %v268
  %v1756 = vunpack.c.l.b16 %v269
  %v1757 = vunpack.c.h.b16 %v269
  %v1758 = vunpack.c.l.b16 %v270
  %v1759 = vunpack.c.l.b16 %v271
  %v1760 = vunpack.c.h.b16 %v271
  %v1761 = vunpack.c.l.b16 %v272
  %v1762 = vunpack.c.h.b16 %v272
  %v1763 = vunpack.c.l.b16 %v273
  %v1764 = vunpack.c.h.b16 %v273
  %v1765 = vunpack.c.l.b16 %v274
  %v1766 = vunpack.c.h.b16 %v274
  %v1767 = vunpack.c.l.b16 %v275
  %v1768 = vunpack.c.h.b16 %v275
  %v1769 = vunpack.c.l.b16 %v276
  %v1770 = vunpack.c.h.b16 %v276
  %v1771 = vunpack.c.l.b16 %v277
  %v1772 = vunpack.c.h.b16 %v277
  %v1773 = vunpack.c.l.b16 %v278
  %v1774 = vunpack.c.l.b16 %v279
  %v1775 = vunpack.c.h.b16 %v279
  %v1776 = vunpack.c.l.b16 %v280
  %v1777 = vunpack.c.h.b16 %v280
  %v1778 = vunpack.c.l.b16 %v281
  %v1779 = vunpack.c.h.b16 %v281
  %v1780 = vunpack.c.l.b16 %v282
  %v1781 = vunpack.c.h.b16 %v282
  %v1782 = vunpack.c.l.b16 %v283
  %v1783 = vunpack.c.h.b16 %v283
  %v1784 = vunpack.c.l.b16 %v284
  %v1785 = vunpack.c.h.b16 %v284
  %v1786 = vunpack.c.l.b16 %v285
  %v1787 = vunpack.c.h.b16 %v285
  %v1788 = vunpack.c.l.b16 %v286
  %v1789 = vunpack.c.l.b16 %v287
  %v1790 = vunpack.c.h.b16 %v287
  %v1791 = vunpack.c.l.b16 %v288
  %v1792 = vunpack.c.h.b16 %v288
  %v1793 = vunpack.c.l.b16 %v289
  %v1794 = vunpack.c.h.b16 %v289
  %v1795 = vunpack.c.l.b16 %v290
  %v1796 = vunpack.c.h.b16 %v290
  %v1797 = vunpack.c.l.b16 %v291
  %v1798 = vunpack.c.h.b16 %v291
  %v1799 = vunpack.c.l.b16 %v292
  %v1800 = vunpack.c.h.b16 %v292
  %v1801 = vunpack.c.l.b16 %v293
  %v1802 = vunpack.c.h.b16 %v293
  %v1803 = vunpack.c.l.b16 %v294
  %v1804 = vunpack.c.l.b16 %v295
  %v1805 = vunpack.c.h.b16 %v295
  %v1806 = vunpack.c.l.b16 %v296
  %v1807 = vunpack.c.h.b16 %v296
  %v1808 = vunpack.c.l.b16 %v297
  %v1809 = vunpack.c.h.b16 %v297
  %v1810 = vunpack.c.l.b16 %v298
  %v1811 = vunpack.c.h.b16 %v298
  %v1812 = vunpack.c.l.b16 %v299
  %v1813 = vunpack.c.h.b16 %v299
  %v1814 = vunpack.c.l.b16 %v300
  %v1815 = vunpack.c.h.b16 %v300
  %v1816 = vunpack.c.l.b16 %v301
  %v1817 = vunpack.c.h.b16 %v301
  %v1818 = vunpack.c.l.b16 %v302
  %v1819 = vunpack.c.l.b16 %v303
  %v1820 = vunpack.c.h.b16 %v303
  %v1821 = vunpack.c.l.b16 %v304
  %v1822 = vunpack.c.h.b16 %v304
  %v1823 = vunpack.c.l.b16 %v305
  %v1824 = vunpack.c.h.b16 %v305
  %v1825 = vunpack.c.l.b16 %v306
  %v1826 = vunpack.c.h.b16 %v306
  %v1827 = vunpack.c.l.b16 %v307
  %v1828 = vunpack.c.h.b16 %v307
  %v1829 = vunpack.c.l.b16 %v308
  %v1830 = vunpack.c.h.b16 %v308
  %v1831 = vunpack.c.l.b16 %v309
  %v1832 = vunpack.c.h.b16 %v309
  %v1833 = vunpack.c.l.b16 %v310
  %v1834 = vunpack.c.l.b16 %v311
  %v1835 = vunpack.c.h.b16 %v311
  %v1836 = vunpack.c.l.b16 %v312
  %v1837 = vunpack.c.h.b16 %v312
  %v1838 = vunpack.c.l.b16 %v313
  %v1839 = vunpack.c.h.b16 %v313
  %v1840 = vunpack.c.l.b16 %v314
  %v1841 = vunpack.c.h.b16 %v314
  %v1842 = vunpack.c.l.b16 %v315
  %v1843 = vunpack.c.h.b16 %v315
  %v1844 = vunpack.c.l.b16 %v316
  %v1845 = vunpack.c.h.b16 %v316
  %v1846 = vunpack.c.l.b16 %v317
  %v1847 = vunpack.c.h.b16 %v317
  %v1848 = vunpack.c.l.b16 %v318
  %v1849 = vunpack.c.l.b16 %v319
  %v1850 = vunpack.c.h.b16 %v319
  %v1851 = vunpack.c.l.b16 %v320
  %v1852 = vunpack.c.h.b16 %v320
  %v1853 = vunpack.c.l.b16 %v321
  %v1854 = vunpack.c.h.b16 %v321
  %v1855 = vunpack.c.l.b16 %v322
  %v1856 = vunpack.c.h.b16 %v322
  %v1857 = vunpack.c.l.b16 %v323
  %v1858 = vunpack.c.h.b16 %v323
  %v1859 = vunpack.c.l.b16 %v324
  %v1860 = vunpack.c.h.b16 %v324
  %v1861 = vunpack.c.l.b16 %v325
  %v1862 = vunpack.c.h.b16 %v325
  %v1863 = vunpack.c.l.b16 %v326
  %v1864 = vunpack.c.l.b16 %v327
  %v1865 = vunpack.c.h.b16 %v327
  %v1866 = vunpack.c.l.b16 %v328
  %v1867 = vunpack.c.h.b16 %v328
  %v1868 = vunpack.c.l.b16 %v329
  %v1869 = vunpack.c.h.b16 %v329
  %v1870 = vunpack.c.l.b16 %v330
  %v1871 = vunpack.c.h.b16 %v330
  %v1872 = vunpack.c.l.b16 %v331
  %v1873 = vunpack.c.h.b16 %v331
  %v1874 = vunpack.c.l.b16 %v332
  %v1875 = vunpack.c.h.b16 %v332
  %v1876 = vunpack.c.l.b16 %v333
  %v1877 = vunpack.c.h.b16 %v333
  %v1878 = vunpack.c.l.b16 %v334
  %v1879 = vunpack.c.l.b16 %v335
  %v1880 = vunpack.c.h.b16 %v335
  %v1881 = vunpack.c.l.b16 %v336
  %v1882 = vunpack.c.h.b16 %v336
  %v1883 = vunpack.c.l.b16 %v337
  %v1884 = vunpack.c.h.b16 %v337
  %v1885 = vunpack.c.l.b16 %v338
  %v1886 = vunpack.c.h.b16 %v338
  %v1887 = vunpack.c.l.b16 %v339
  %v1888 = vunpack.c.h.b16 %v339
  %v1889 = vunpack.c.l.b16 %v340
  %v1890 = vunpack.c.h.b16 %v340
  %v1891 = vunpack.c.l.b16 %v341
  %v1892 = vunpack.c.h.b16 %v341
  %v1893 = vunpack.c.l.b16 %v342
  %v1894 = vunpack.c.l.b16 %v343
  %v1895 = vunpack.c.h.b16 %v343
  %v1896 = vunpack.c.l.b16 %v344
  %v1897 = vunpack.c.h.b16 %v344
  %v1898 = vunpack.c.l.b16 %v345
  %v1899 = vunpack.c.h.b16 %v345
  %v1900 = vunpack.c.l.b16 %v346
  %v1901 = vunpack.c.h.b16 %v346
  %v1902 = vunpack.c.l.b16 %v347
  %v1903 = vunpack.c.h.b16 %v347
  %v1904 = vunpack.c.l.b16 %v348
  %v1905 = vunpack.c.h.b16 %v348
  %v1906 = vunpack.c.l.b16 %v349
  %v1907 = vunpack.c.h.b16 %v349
  %v1908 = vunpack.c.l.b16 %v350
  %v1909 = vunpack.c.l.b16 %v351
  %v1910 = vunpack.c.h.b16 %v351
  %v1911 = vunpack.c.l.b16 %v352
  %v1912 = vunpack.c.h.b16 %v352
  %v1913 = vunpack.c.l.b16 %v353
  %v1914 = vunpack.c.h.b16 %v353
  %v1915 = vunpack.c.l.b16 %v354
  %v1916 = vunpack.c.h.b16 %v354
  %v1917 = vunpack.c.l.b16 %v355
  %v1918 = vunpack.c.h.b16 %v355
  %v1919 = vunpack.c.l.b16 %v356
  %v1920 = vunpack.c.h.b16 %v356
  %v1921 = vunpack.c.l.b16 %v357
  %v1922 = vunpack.c.h.b16 %v357
  %v1923 = vunpack.c.l.b16 %v358
  %v1924 = vunpack.c.l.b16 %v359
  %v1925 = vunpack.c.h.b16 %v359
  %v1926 = vunpack.c.l.b16 %v360
  %v1927 = vunpack.c.h.b16 %v360
  %v1928 = vunpack.c.l.b16 %v361
  %v1929 = vunpack.c.h.b16 %v361
  %v1930 = vunpack.c.l.b16 %v362
  %v1931 = vunpack.c.h.b16 %v362
  %v1932 = vunpack.c.l.b16 %v363
  %v1933 = vunpack.c.h.b16 %v363
  %v1934 = vunpack.c.l.b16 %v364
  %v1935 = vunpack.c.h.b16 %v364
  %v1936 = vunpack.c.l.b16 %v365
  %v1937 = vunpack.c.h.b16 %v365
  %v1938 = vunpack.c.l.b16 %v366
  %v1939 = vunpack.c.l.b16 %v367
  %v1940 = vunpack.c.h.b16 %v367
  %v1941 = vunpack.c.l.b16 %v368
  %v1942 = vunpack.c.h.b16 %v368
  %v1943 = vunpack.c.l.b16 %v369
  %v1944 = vunpack.c.h.b16 %v369
  %v1945 = vunpack.c.l.b16 %v370
  %v1946 = vunpack.c.h.b16 %v370
  %v1947 = vunpack.c.l.b16 %v371
  %v1948 = vunpack.c.h.b16 %v371
  %v1949 = vunpack.c.l.b16 %v372
  %v1950 = vunpack.c.h.b16 %v372
  %v1951 = vunpack.c.l.b16 %v373
  %v1952 = vunpack.c.h.b16 %v373
  %v1953 = vunpack.c.l.b16 %v374
  %v1954 = vunpack.c.l.b16 %v375
  %v1955 = vunpack.c.h.b16 %v375
  %v1956 = vunpack.c.l.b16 %v376
  %v1957 = vunpack.c.h.b16 %v376
  %v1958 = vunpack.c.l.b16 %v377
  %v1959 = vunpack.c.h.b16 %v377
  %v1960 = vunpack.c.l.b16 %v378
  %v1961 = vunpack.c.h.b16 %v378
  %v1962 = vunpack.c.l.b16 %v379
  %v1963 = vunpack.c.h.b16 %v379
  %v1964 = vunpack.c.l.b16 %v380
  %v1965 = vunpack.c.h.b16 %v380
  %v1966 = vunpack.c.l.b16 %v381
  %v1967 = vunpack.c.h.b16 %v381
  %v1968 = vunpack.c.l.b16 %v382
  %v1969 = vunpack.c.l.b16 %v383
  %v1970 = vunpack.c.h.b16 %v383
  %v1971 = vunpack.c.l.b16 %v384
  %v1972 = vunpack.c.h.b16 %v384
  %v1973 = vunpack.c.l.b16 %v385
  %v1974 = vunpack.c.h.b16 %v385
  %v1975 = vunpack.c.l.b16 %v386
  %v1976 = vunpack.c.h.b16 %v386
  %v1977 = vunpack.c.l.b16 %v387
  %v1978 = vunpack.c.h.b16 %v387
  %v1979 = vunpack.c.l.b16 %v388
  %v1980 = vunpack.c.h.b16 %v388
  %v1981 = vunpack.c.l.b16 %v389
  %v1982 = vunpack.c.h.b16 %v389
  %v1983 = vunpack.c.l.b16 %v390
  %v1984 = vunpack.c.l.b16 %v391
  %v1985 = vunpack.c.h.b16 %v391
  %v1986 = vunpack.c.l.b16 %v392
  %v1987 = vunpack.c.h.b16 %v392
  %v1988 = vunpack.c.l.b16 %v393
  %v1989 = vunpack.c.h.b16 %v393
  %v1990 = vunpack.c.l.b16 %v394
  %v1991 = vunpack.c.h.b16 %v394
  %v1992 = vunpack.c.l.b16 %v395
  %v1993 = vunpack.c.h.b16 %v395
  %v1994 = vunpack.c.l.b16 %v396
  %v1995 = vunpack.c.h.b16 %v396
  %v1996 = vunpack.c.l.b16 %v397
  %v1997 = vunpack.c.h.b16 %v397
  %v1998 = vunpack.c.l.b16 %v398
  %v1999 = vunpack.c.l.b16 %v399
  %v2000 = vunpack.c.h.b16 %v399
  %v2001 = vunpack.c.l.b16 %v400
  %v2002 = vunpack.c.h.b16 %v400
  %v2003 = vunpack.c.l.b16 %v401
  %v2004 = vunpack.c.h.b16 %v401
  %v2005 = vunpack.c.l.b16 %v402
  %v2006 = vunpack.c.h.b16 %v402
  %v2007 = vunpack.c.l.b16 %v403
  %v2008 = vunpack.c.h.b16 %v403
  %v2009 = vunpack.c.l.b16 %v404
  %v2010 = vunpack.c.h.b16 %v404
  %v2011 = vunpack.c.l.b16 %v405
  %v2012 = vunpack.c.h.b16 %v405
  %v2013 = vunpack.c.l.b16 %v406
  %v2014 = vunpack.c.l.b16 %v407
  %v2015 = vunpack.c.h.b16 %v407
  %v2016 = vunpack.c.l.b16 %v408
  %v2017 = vunpack.c.h.b16 %v408
  %v2018 = vunpack.c.l.b16 %v409
  %v2019 = vunpack.c.h.b16 %v409
  %v2020 = vunpack.c.l.b16 %v410
  %v2021 = vunpack.c.h.b16 %v410
  %v2022 = vunpack.c.l.b16 %v411
  %v2023 = vunpack.c.h.b16 %v411
  %v2024 = vunpack.c.l.b16 %v412
  %v2025 = vunpack.c.h.b16 %v412
  %v2026 = vunpack.c.l.b16 %v413
  %v2027 = vunpack.c.h.b16 %v413
  %v2028 = vunpack.c.l.b16 %v414
  %v2029 = vunpack.c.l.b16 %v415
  %v2030 = vunpack.c.h.b16 %v415
  %v2031 = vunpack.c.l.b16 %v416
  %v2032 = vunpack.c.h.b16 %v416
  %v2033 = vunpack.c.l.b16 %v417
  %v2034 = vunpack.c.h.b16 %v417
  %v2035 = vunpack.c.l.b16 %v418
  %v2036 = vunpack.c.h.b16 %v418
  %v2037 = vunpack.c.l.b16 %v419
  %v2038 = vunpack.c.h.b16 %v419
  %v2039 = vunpack.c.l.b16 %v420
  %v2040 = vunpack.c.h.b16 %v420
  %v2041 = vunpack.c.l.b16 %v421
  %v2042 = vunpack.c.h.b16 %v421
  %v2043 = vunpack.c.l.b16 %v422
  %v2044 = vunpack.c.l.b16 %v423
  %v2045 = vunpack.c.h.b16 %v423
  %v2046 = vunpack.c.l.b16 %v424
  %v2047 = vunpack.c.h.b16 %v424
  %v2048 = vunpack.c.l.b16 %v425
  %v2049 = vunpack.c.h.b16 %v425
  %v2050 = vunpack.c.l.b16 %v426
  %v2051 = vunpack.c.h.b16 %v426
  %v2052 = vunpack.c.l.b16 %v427
  %v2053 = vunpack.c.h.b16 %v427
  %v2054 = vunpack.c.l.b16 %v428
  %v2055 = vunpack.c.h.b16 %v428
  %v2056 = vunpack.c.l.b16 %v429
  %v2057 = vunpack.c.h.b16 %v429
  %v2058 = vunpack.c.l.b16 %v430
  %v2059 = vunpack.c.l.b16 %v431
  %v2060 = vunpack.c.h.b16 %v431
  %v2061 = vunpack.c.l.b16 %v432
  %v2062 = vunpack.c.h.b16 %v432
  %v2063 = vunpack.c.l.b16 %v433
  %v2064 = vunpack.c.h.b16 %v433
  %v2065 = vunpack.c.l.b16 %v434
  %v2066 = vunpack.c.h.b16 %v434
  %v2067 = vunpack.c.l.b16 %v435
  %v2068 = vunpack.c.h.b16 %v435
  %v2069 = vunpack.c.l.b16 %v436
  %v2070 = vunpack.c.h.b16 %v436
  %v2071 = vunpack.c.l.b16 %v437
  %v2072 = vunpack.c.h.b16 %v437
  %v2073 = vunpack.c.l.b16 %v438
  %v2074 = vunpack.c.l.b16 %v439
  %v2075 = vunpack.c.h.b16 %v439
  %v2076 = vunpack.c.l.b16 %v440
  %v2077 = vunpack.c.h.b16 %v440
  %v2078 = vunpack.c.l.b16 %v441
  %v2079 = vunpack.c.h.b16 %v441
  %v2080 = vunpack.c.l.b16 %v442
  %v2081 = vunpack.c.h.b16 %v442
  %v2082 = vunpack.c.l.b16 %v443
  %v2083 = vunpack.c.h.b16 %v443
  %v2084 = vunpack.c.l.b16 %v444
  %v2085 = vunpack.c.h.b16 %v444
  %v2086 = vunpack.c.l.b16 %v445
  %v2087 = vunpack.c.h.b16 %v445
  %v2088 = vunpack.c.l.b16 %v446
  %v2089 = vunpack.c.l.b16 %v447
  %v2090 = vunpack.c.h.b16 %v447
  %v2091 = vunpack.c.l.b16 %v448
  %v2092 = vunpack.c.h.b16 %v448
  %v2093 = vunpack.c.l.b16 %v449
  %v2094 = vunpack.c.h.b16 %v449
  %v2095 = vunpack.c.l.b16 %v450
  %v2096 = vunpack.c.h.b16 %v450
  %v2097 = vunpack.c.l.b16 %v451
  %v2098 = vunpack.c.h.b16 %v451
  %v2099 = vunpack.c.l.b16 %v452
  %v2100 = vunpack.c.h.b16 %v452
  %v2101 = vunpack.c.l.b16 %v453
  %v2102 = vunpack.c.h.b16 %v453
  %v2103 = vunpack.c.l.b16 %v454
  %v2104 = vunpack.c.l.b16 %v455
  %v2105 = vunpack.c.h.b16 %v455
  %v2106 = vunpack.c.l.b16 %v456
  %v2107 = vunpack.c.h.b16 %v456
  %v2108 = vunpack.c.l.b16 %v457
  %v2109 = vunpack.c.h.b16 %v457
  %v2110 = vunpack.c.l.b16 %v458
  %v2111 = vunpack.c.h.b16 %v458
  %v2112 = vunpack.c.l.b16 %v459
  %v2113 = vunpack.c.h.b16 %v459
  %v2114 = vunpack.c.l.b16 %v460
  %v2115 = vunpack.c.h.b16 %v460
  %v2116 = vunpack.c.l.b16 %v461
  %v2117 = vunpack.c.h.b16 %v461
  %v2118 = vunpack.c.l.b16 %v462
  %v2119 = vunpack.c.l.b16 %v463
  %v2120 = vunpack.c.h.b16 %v463
  %v2121 = vunpack.c.l.b16 %v464
  %v2122 = vunpack.c.h.b16 %v464
  %v2123 = vunpack.c.l.b16 %v465
  %v2124 = vunpack.c.h.b16 %v465
  %v2125 = vunpack.c.l.b16 %v466
  %v2126 = vunpack.c.h.b16 %v466
  %v2127 = vunpack.c.l.b16 %v467
  %v2128 = vunpack.c.h.b16 %v467
  %v2129 = vunpack.c.l.b16 %v468
  %v2130 = vunpack.c.h.b16 %v468
  %v2131 = vunpack.c.l.b16 %v469
  %v2132 = vunpack.c.h.b16 %v469
  %v2133 = vunpack.c.l.b16 %v470
  %v2134 = vunpack.c.l.b16 %v471
  %v2135 = vunpack.c.h.b16 %v471
  %v2136 = vunpack.c.l.b16 %v472
  %v2137 = vunpack.c.h.b16 %v472
  %v2138 = vunpack.c.l.b16 %v473
  %v2139 = vunpack.c.h.b16 %v473
  %v2140 = vunpack.c.l.b16 %v474
  %v2141 = vunpack.c.h.b16 %v474
  %v2142 = vunpack.c.l.b16 %v475
  %v2143 = vunpack.c.h.b16 %v475
  %v2144 = vunpack.c.l.b16 %v476
  %v2145 = vunpack.c.h.b16 %v476
  %v2146 = vunpack.c.l.b16 %v477
  %v2147 = vunpack.c.h.b16 %v477
  %v2148 = vunpack.c.l.b16 %v478
  %v2149 = vunpack.c.l.b16 %v479
  %v2150 = vunpack.c.h.b16 %v479
  %v2151 = vunpack.c.l.b16 %v480
  %v2152 = vunpack.c.h.b16 %v480
  %v2153 = vunpack.c.l.b16 %v481
  %v2154 = vunpack.c.h.b16 %v481
  %v2155 = vunpack.c.l.b16 %v482
  %v2156 = vunpack.c.h.b16 %v482
  %v2157 = vunpack.c.l.b16 %v483
  %v2158 = vunpack.c.h.b16 %v483
  %v2159 = vunpack.c.l.b16 %v484
  %v2160 = vunpack.c.h.b16 %v484
  %v2161 = vunpack.c.l.b16 %v485
  %v2162 = vunpack.c.h.b16 %v485
  %v2163 = vunpack.c.l.b16 %v486
  %v2164 = vunpack.c.l.b16 %v487
  %v2165 = vunpack.c.h.b16 %v487
  %v2166 = vunpack.c.l.b16 %v488
  %v2167 = vunpack.c.h.b16 %v488
  %v2168 = vunpack.c.l.b16 %v489
  %v2169 = vunpack.c.h.b16 %v489
  %v2170 = vunpack.c.l.b16 %v490
  %v2171 = vunpack.c.h.b16 %v490
  %v2172 = vunpack.c.l.b16 %v491
  %v2173 = vunpack.c.h.b16 %v491
  %v2174 = vunpack.c.l.b16 %v492
  %v2175 = vunpack.c.h.b16 %v492
  %v2176 = vunpack.c.l.b16 %v493
  %v2177 = vunpack.c.h.b16 %v493
  %v2178 = vunpack.c.l.b16 %v494
  %v2179 = vunpack.c.l.b16 %v495
  %v2180 = vunpack.c.h.b16 %v495
  %v2181 = vunpack.c.l.b16 %v496
  %v2182 = vunpack.c.h.b16 %v496
  %v2183 = vunpack.c.l.b16 %v497
  %v2184 = vunpack.c.h.b16 %v497
  %v2185 = vunpack.c.l.b16 %v498
  %v2186 = vunpack.c.h.b16 %v498
  %v2187 = vunpack.c.l.b16 %v499
  %v2188 = vunpack.c.h.b16 %v499
  %v2189 = vunpack.c.l.b16 %v500
  %v2190 = vunpack.c.h.b16 %v500
  %v2191 = vunpack.c.l.b16 %v501
  %v2192 = vunpack.c.h.b16 %v501
  %v2193 = vunpack.c.l.b16 %v502
  %v2194 = vunpack.c.l.b16 %v503
  %v2195 = vunpack.c.h.b16 %v503
  %v2196 = vunpack.c.l.b16 %v504
  %v2197 = vunpack.c.h.b16 %v504
  %v2198 = vunpack.c.l.b16 %v505
  %v2199 = vunpack.c.h.b16 %v505
  %v2200 = vunpack.c.l.b16 %v506
  %v2201 = vunpack.c.h.b16 %v506
  %v2202 = vunpack.c.l.b16 %v507
  %v2203 = vunpack.c.h.b16 %v507
  %v2204 = vunpack.c.l.b16 %v508
  %v2205 = vunpack.c.h.b16 %v508
  %v2206 = vunpack.c.l.b16 %v509
  %v2207 = vunpack.c.h.b16 %v509
  %v2208 = vunpack.c.l.b16 %v510
  %v2209 = vunpack.c.l.b16 %v511
  %v2210 = vunpack.c.h.b16 %v511
  %v2211 = vunpack.c.l.b16 %v512
  %v2212 = vunpack.c.h.b16 %v512
  %v2213 = vunpack.c.l.b16 %v513
  %v2214 = vunpack.c.h.b16 %v513
  %v2215 = vunpack.c.l.b16 %v514
  %v2216 = vunpack.c.h.b16 %v514
  %v2217 = vunpack.c.l.b16 %v515
  %v2218 = vunpack.c.h.b16 %v515
  %v2219 = vunpack.c.l.b16 %v516
  %v2220 = vunpack.c.h.b16 %v516
  %v2221 = vunpack.c.l.b16 %v517
  %v2222 = vunpack.c.h.b16 %v517
  %v2223 = vunpack.c.l.b16 %v518
  %v2224 = vunpack.c.l.b16 %v519
  %v2225 = vunpack.c.h.b16 %v519
  %v2226 = vunpack.c.l.b16 %v520
  %v2227 = vunpack.c.h.b16 %v520
  %v2228 = vunpack.c.l.b16 %v521
  %v2229 = vunpack.c.h.b16 %v521
  %v2230 = vunpack.c.l.b16 %v522
  %v2231 = vunpack.c.h.b16 %v522
  %v2232 = vunpack.c.l.b16 %v523
  %v2233 = vunpack.c.h.b16 %v523
  %v2234 = vunpack.c.l.b16 %v524
  %v2235 = vunpack.c.h.b16 %v524
  %v2236 = vunpack.c.l.b16 %v525
  %v2237 = vunpack.c.h.b16 %v525
  %v2238 = vunpack.c.l.b16 %v526
  %v2239 = vpack.c.b16 %v1294, %v1279
  %v2240 = vpack.c.b16 %v1295, %v1280
  %v2241 = vpack.c.b16 %v1296, %v1281
  %v2242 = vpack.c.b16 %v1297, %v1282
  %v2243 = vpack.c.b16 %v1298, %v1283
  %v2244 = vpack.c.b16 %v1299, %v1284
  %v2245 = vpack.c.b16 %v1300, %v1285
  %v2246 = vpack.c.b16 %v1301, %v1286
  %v2247 = vpack.c.b16 %v1302, %v1287
  %v2248 = vpack.c.b16 %v1303, %v1288
  %v2249 = vpack.c.b16 %v1304, %v1289
  %v2250 = vpack.c.b16 %v1305, %v1290
  %v2251 = vpack.c.b16 %v1306, %v1291
  %v2252 = vpack.c.b16 %v1307, %v1292
  %v2253 = vpack.c.b16 %v1308, %v1293
  %v2254 = vpack.c.b16 %v1324, %v1309
  %v2255 = vpack.c.b16 %v1325, %v1310
  %v2256 = vpack.c.b16 %v1326, %v1311
  %v2257 = vpack.c.b16 %v1327, %v1312
  %v2258 = vpack.c.b16 %v1328, %v1313
  %v2259 = vpack.c.b16 %v1329, %v1314
  %v2260 = vpack.c.b16 %v1330, %v1315
  %v2261 = vpack.c.b16 %v1331, %v1316
  %v2262 = vpack.c.b16 %v1332, %v1317
  %v2263 = vpack.c.b16 %v1333, %v1318
  %v2264 = vpack.c.b16 %v1334, %v1319
  %v2265 = vpack.c.b16 %v1335, %v1320
  %v2266 = vpack.c.b16 %v1336, %v1321
  %v2267 = vpack.c.b16 %v1337, %v1322
  %v2268 = vpack.c.b16 %v1338, %v1323
  %v2269 = vpack.c.b16 %v1354, %v1339
  %v2270 = vpack.c.b16 %v1355, %v1340
  %v2271 = vpack.c.b16 %v1356, %v1341
  %v2272 = vpack.c.b16 %v1357, %v1342
  %v2273 = vpack.c.b16 %v1358, %v1343
  %v2274 = vpack.c.b16 %v1359, %v1344
  %v2275 = vpack.c.b16 %v1360, %v1345
  %v2276 = vpack.c.b16 %v1361, %v1346
  %v2277 = vpack.c.b16 %v1362, %v1347
  %v2278 = vpack.c.b16 %v1363, %v1348
  %v2279 = vpack.c.b16 %v1364, %v1349
  %v2280 = vpack.c.b16 %v1365, %v1350
  %v2281 = vpack.c.b16 %v1366, %v1351
  %v2282 = vpack.c.b16 %v1367, %v1352
  %v2283 = vpack.c.b16 %v1368, %v1353
  %v2284 = vpack.c.b16 %v1384, %v1369
  %v2285 = vpack.c.b16 %v1385, %v1370
  %v2286 = vpack.c.b16 %v1386, %v1371
  %v2287 = vpack.c.b16 %v1387, %v1372
  %v2288 = vpack.c.b16 %v1388, %v1373
  %v2289 = vpack.c.b16 %v1389, %v1374
  %v2290 = vpack.c.b16 %v1390, %v1375
  %v2291 = vpack.c.b16 %v1391, %v1376
  %v2292 = vpack.c.b16 %v1392, %v1377
  %v2293 = vpack.c.b16 %v1393, %v1378
  %v2294 = vpack.c.b16 %v1394, %v1379
  %v2295 = vpack.c.b16 %v1395, %v1380
  %v2296 = vpack.c.b16 %v1396, %v1381
  %v2297 = vpack.c.b16 %v1397, %v1382
  %v2298 = vpack.c.b16 %v1398, %v1383
  %v2299 = vpack.c.b16 %v1414, %v1399
  %v2300 = vpack.c.b16 %v1415, %v1400
  %v2301 = vpack.c.b16 %v1416, %v1401
  %v2302 = vpack.c.b16 %v1417, %v1402
  %v2303 = vpack.c.b16 %v1418, %v1403
  %v2304 = vpack.c.b16 %v1419, %v1404
  %v2305 = vpack.c.b16 %v1420, %v1405
  %v2306 = vpack.c.b16 %v1421, %v1406
  %v2307 = vpack.c.b16 %v1422, %v1407
  %v2308 = vpack.c.b16 %v1423, %v1408
  %v2309 = vpack.c.b16 %v1424, %v1409
  %v2310 = vpack.c.b16 %v1425, %v1410
  %v2311 = vpack.c.b16 %v1426, %v1411
  %v2312 = vpack.c.b16 %v1427, %v1412
  %v2313 = vpack.c.b16 %v1428, %v1413
  %v2314 = vpack.c.b16 %v1444, %v1429
  %v2315 = vpack.c.b16 %v1445, %v1430
  %v2316 = vpack.c.b16 %v1446, %v1431
  %v2317 = vpack.c.b16 %v1447, %v1432
  %v2318 = vpack.c.b16 %v1448, %v1433
  %v2319 = vpack.c.b16 %v1449, %v1434
  %v2320 = vpack.c.b16 %v1450, %v1435
  %v2321 = vpack.c.b16 %v1451, %v1436
  %v2322 = vpack.c.b16 %v1452, %v1437
  %v2323 = vpack.c.b16 %v1453, %v1438
  %v2324 = vpack.c.b16 %v1454, %v1439
  %v2325 = vpack.c.b16 %v1455, %v1440
  %v2326 = vpack.c.b16 %v1456, %v1441
  %v2327 = vpack.c.b16 %v1457, %v1442
  %v2328 = vpack.c.b16 %v1458, %v1443
  %v2329 = vpack.c.b16 %v1474, %v1459
  %v2330 = vpack.c.b16 %v1475, %v1460
  %v2331 = vpack.c.b16 %v1476, %v1461
  %v2332 = vpack.c.b16 %v1477, %v1462
  %v2333 = vpack.c.b16 %v1478, %v1463
  %v2334 = vpack.c.b16 %v1479, %v1464
  %v2335 = vpack.c.b16 %v1480, %v1465
  %v2336 = vpack.c.b16 %v1481, %v1466
  %v2337 = vpack.c.b16 %v1482, %v1467
  %v2338 = vpack.c.b16 %v1483, %v1468
  %v2339 = vpack.c.b16 %v1484, %v1469
  %v2340 = vpack.c.b16 %v1485, %v1470
  %v2341 = vpack.c.b16 %v1486, %v1471
  %v2342 = vpack.c.b16 %v1487, %v1472
  %v2343 = vpack.c.b16 %v1488, %v1473
  %v2344 = vpack.c.b16 %v1504, %v1489
  %v2345 = vpack.c.b16 %v1505, %v1490
  %v2346 = vpack.c.b16 %v1506, %v1491
  %v2347 = vpack.c.b16 %v1507, %v1492
  %v2348 = vpack.c.b16 %v1508, %v1493
  %v2349 = vpack.c.b16 %v1509, %v1494
  %v2350 = vpack.c.b16 %v1510, %v1495
  %v2351 = vpack.c.b16 %v1511, %v1496
  %v2352 = vpack.c.b16 %v1512, %v1497
  %v2353 = vpack.c.b16 %v1513, %v1498
  %v2354 = vpack.c.b16 %v1514, %v1499
  %v2355 = vpack.c.b16 %v1515, %v1500
  %v2356 = vpack.c.b16 %v1516, %v1501
  %v2357 = vpack.c.b16 %v1517, %v1502
  %v2358 = vpack.c.b16 %v1518, %v1503
  %v2359 = vpack.c.b16 %v1534, %v1519
  %v2360 = vpack.c.b16 %v1535, %v1520
  %v2361 = vpack.c.b16 %v1536, %v1521
  %v2362 = vpack.c.b16 %v1537, %v1522
  %v2363 = vpack.c.b16 %v1538, %v1523
  %v2364 = vpack.c.b16 %v1539, %v1524
  %v2365 = vpack.c.b16 %v1540, %v1525
  %v2366 = vpack.c.b16 %v1541, %v1526
  %v2367 = vpack.c.b16 %v1542, %v1527
  %v2368 = vpack.c.b16 %v1543, %v1528
  %v2369 = vpack.c.b16 %v1544, %v1529
  %v2370 = vpack.c.b16 %v1545, %v1530
  %v2371 = vpack.c.b16 %v1546, %v1531
  %v2372 = vpack.c.b16 %v1547, %v1532
  %v2373 = vpack.c.b16 %v1548, %v1533
  %v2374 = vpack.c.b16 %v1564, %v1549
  %v2375 = vpack.c.b16 %v1565, %v1550
  %v2376 = vpack.c.b16 %v1566, %v1551
  %v2377 = vpack.c.b16 %v1567, %v1552
  %v2378 = vpack.c.b16 %v1568, %v1553
  %v2379 = vpack.c.b16 %v1569, %v1554
  %v2380 = vpack.c.b16 %v1570, %v1555
  %v2381 = vpack.c.b16 %v1571, %v1556
  %v2382 = vpack.c.b16 %v1572, %v1557
  %v2383 = vpack.c.b16 %v1573, %v1558
  %v2384 = vpack.c.b16 %v1574, %v1559
  %v2385 = vpack.c.b16 %v1575, %v1560
  %v2386 = vpack.c.b16 %v1576, %v1561
  %v2387 = vpack.c.b16 %v1577, %v1562
  %v2388 = vpack.c.b16 %v1578, %v1563
  %v2389 = vpack.c.b16 %v1594, %v1579
  %v2390 = vpack.c.b16 %v1595, %v1580
  %v2391 = vpack.c.b16 %v1596, %v1581
  %v2392 = vpack.c.b16 %v1597, %v1582
  %v2393 = vpack.c.b16 %v1598, %v1583
  %v2394 = vpack.c.b16 %v1599, %v1584
  %v2395 = vpack.c.b16 %v1600, %v1585
  %v2396 = vpack.c.b16 %v1601, %v1586
  %v2397 = vpack.c.b16 %v1602, %v1587
  %v2398 = vpack.c.b16 %v1603, %v1588
  %v2399 = vpack.c.b16 %v1604, %v1589
  %v2400 = vpack.c.b16 %v1605, %v1590
  %v2401 = vpack.c.b16 %v1606, %v1591
  %v2402 = vpack.c.b16 %v1607, %v1592
  %v2403 = vpack.c.b16 %v1608, %v1593
  %v2404 = vpack.c.b16 %v1624, %v1609
  %v2405 = vpack.c.b16 %v1625, %v1610
  %v2406 = vpack.c.b16 %v1626, %v1611
  %v2407 = vpack.c.b16 %v1627, %v1612
  %v2408 = vpack.c.b16 %v1628, %v1613
  %v2409 = vpack.c.b16 %v1629, %v1614
  %v2410 = vpack.c.b16 %v1630, %v1615
  %v2411 = vpack.c.b16 %v1631, %v1616
  %v2412 = vpack.c.b16 %v1632, %v1617
  %v2413 = vpack.c.b16 %v1633, %v1618
  %v2414 = vpack.c.b16 %v1634, %v1619
  %v2415 = vpack.c.b16 %v1635, %v1620
  %v2416 = vpack.c.b16 %v1636, %v1621
  %v2417 = vpack.c.b16 %v1637, %v1622
  %v2418 = vpack.c.b16 %v1638, %v1623
  %v2419 = vpack.c.b16 %v1654, %v1639
  %v2420 = vpack.c.b16 %v1655, %v1640
  %v2421 = vpack.c.b16 %v1656, %v1641
  %v2422 = vpack.c.b16 %v1657, %v1642
  %v2423 = vpack.c.b16 %v1658, %v1643
  %v2424 = vpack.c.b16 %v1659, %v1644
  %v2425 = vpack.c.b16 %v1660, %v1645
  %v2426 = vpack.c.b16 %v1661, %v1646
  %v2427 = vpack.c.b16 %v1662, %v1647
  %v2428 = vpack.c.b16 %v1663, %v1648
  %v2429 = vpack.c.b16 %v1664, %v1649
  %v2430 = vpack.c.b16 %v1665, %v1650
  %v2431 = vpack.c.b16 %v1666, %v1651
  %v2432 = vpack.c.b16 %v1667, %v1652
  %v2433 = vpack.c.b16 %v1668, %v1653
  %v2434 = vpack.c.b16 %v1684, %v1669
  %v2435 = vpack.c.b16 %v1685, %v1670
  %v2436 = vpack.c.b16 %v1686, %v1671
  %v2437 = vpack.c.b16 %v1687, %v1672
  %v2438 = vpack.c.b16 %v1688, %v1673
  %v2439 = vpack.c.b16 %v1689, %v1674
  %v2440 = vpack.c.b16 %v1690, %v1675
  %v2441 = vpack.c.b16 %v1691, %v1676
  %v2442 = vpack.c.b16 %v1692, %v1677
  %v2443 = vpack.c.b16 %v1693, %v1678
  %v2444 = vpack.c.b16 %v1694, %v1679
  %v2445 = vpack.c.b16 %v1695, %v1680
  %v2446 = vpack.c.b16 %v1696, %v1681
  %v2447 = vpack.c.b16 %v1697, %v1682
  %v2448 = vpack.c.b16 %v1698, %v1683
  %v2449 = vpack.c.b16 %v1714, %v1699
  %v2450 = vpack.c.b16 %v1715, %v1700
  %v2451 = vpack.c.b16 %v1716, %v1701
  %v2452 = vpack.c.b16 %v1717, %v1702
  %v2453 = vpack.c.b16 %v1718, %v1703
  %v2454 = vpack.c.b16 %v1719, %v1704
  %v2455 = vpack.c.b16 %v1720, %v1705
  %v2456 = vpack.c.b16 %v1721, %v1706
  %v2457 = vpack.c.b16 %v1722, %v1707
  %v2458 = vpack.c.b16 %v1723, %v1708
  %v2459 = vpack.c.b16 %v1724, %v1709
  %v2460 = vpack.c.b16 %v1725, %v1710
  %v2461 = vpack.c.b16 %v1726, %v1711
  %v2462 = vpack.c.b16 %v1727, %v1712
  %v2463 = vpack.c.b16 %v1728, %v1713
  %v2464 = vpack.c.b16 %v1744, %v1729
  %v2465 = vpack.c.b16 %v1745, %v1730
  %v2466 = vpack.c.b16 %v1746, %v1731
  %v2467 = vpack.c.b16 %v1747, %v1732
  %v2468 = vpack.c.b16 %v1748, %v1733
  %v2469 = vpack.c.b16 %v1749, %v1734
  %v2470 = vpack.c.b16 %v1750, %v1735
  %v2471 = vpack.c.b16 %v1751, %v1736
  %v2472 = vpack.c.b16 %v1752, %v1737
  %v2473 = vpack.c.b16 %v1753, %v1738
  %v2474 = vpack.c.b16 %v1754, %v1739
  %v2475 = vpack.c.b16 %v1755, %v1740
  %v2476 = vpack.c.b16 %v1756, %v1741
  %v2477 = vpack.c.b16 %v1757, %v1742
  %v2478 = vpack.c.b16 %v1758, %v1743
  %v2479 = vpack.c.b16 %v1774, %v1759
  %v2480 = vpack.c.b16 %v1775, %v1760
  %v2481 = vpack.c.b16 %v1776, %v1761
  %v2482 = vpack.c.b16 %v1777, %v1762
  %v2483 = vpack.c.b16 %v1778, %v1763
  %v2484 = vpack.c.b16 %v1779, %v1764
  %v2485 = vpack.c.b16 %v1780, %v1765
  %v2486 = vpack.c.b16 %v1781, %v1766
  %v2487 = vpack.c.b16 %v1782, %v1767
  %v2488 = vpack.c.b16 %v1783, %v1768
  %v2489 = vpack.c.b16 %v1784, %v1769
  %v2490 = vpack.c.b16 %v1785, %v1770
  %v2491 = vpack.c.b16 %v1786, %v1771
  %v2492 = vpack.c.b16 %v1787, %v1772
  %v2493 = vpack.c.b16 %v1788, %v1773
  %v2494 = vpack.c.b16 %v1804, %v1789
  %v2495 = vpack.c.b16 %v1805, %v1790
  %v2496 = vpack.c.b16 %v1806, %v1791
  %v2497 = vpack.c.b16 %v1807, %v1792
  %v2498 = vpack.c.b16 %v1808, %v1793
  %v2499 = vpack.c.b16 %v1809, %v1794
  %v2500 = vpack.c.b16 %v1810, %v1795
  %v2501 = vpack.c.b16 %v1811, %v1796
  %v2502 = vpack.c.b16 %v1812, %v1797
  %v2503 = vpack.c.b16 %v1813, %v1798
  %v2504 = vpack.c.b16 %v1814, %v1799
  %v2505 = vpack.c.b16 %v1815, %v1800
  %v2506 = vpack.c.b16 %v1816, %v1801
  %v2507 = vpack.c.b16 %v1817, %v1802
  %v2508 = vpack.c.b16 %v1818, %v1803
  %v2509 = vpack.c.b16 %v1834, %v1819
  %v2510 = vpack.c.b16 %v1835, %v1820
  %v2511 = vpack.c.b16 %v1836, %v1821
  %v2512 = vpack.c.b16 %v1837, %v1822
  %v2513 = vpack.c.b16 %v1838, %v1823
  %v2514 = vpack.c.b16 %v1839, %v1824
  %v2515 = vpack.c.b16 %v1840, %v1825
  %v2516 = vpack.c.b16 %v1841, %v1826
  %v2517 = vpack.c.b16 %v1842, %v1827
  %v2518 = vpack.c.b16 %v1843, %v1828
  %v2519 = vpack.c.b16 %v1844, %v1829
  %v2520 = vpack.c.b16 %v1845, %v1830
  %v2521 = vpack.c.b16 %v1846, %v1831
  %v2522 = vpack.c.b16 %v1847, %v1832
  %v2523 = vpack.c.b16 %v1848, %v1833
  %v2524 = vpack.c.b16 %v1864, %v1849
  %v2525 = vpack.c.b16 %v1865, %v1850
  %v2526 = vpack.c.b16 %v1866, %v1851
  %v2527 = vpack.c.b16 %v1867, %v1852
  %v2528 = vpack.c.b16 %v1868, %v1853
  %v2529 = vpack.c.b16 %v1869, %v1854
  %v2530 = vpack.c.b16 %v1870, %v1855
  %v2531 = vpack.c.b16 %v1871, %v1856
  %v2532 = vpack.c.b16 %v1872, %v1857
  %v2533 = vpack.c.b16 %v1873, %v1858
  %v2534 = vpack.c.b16 %v1874, %v1859
  %v2535 = vpack.c.b16 %v1875, %v1860
  %v2536 = vpack.c.b16 %v1876, %v1861
  %v2537 = vpack.c.b16 %v1877, %v1862
  %v2538 = vpack.c.b16 %v1878, %v1863
  %v2539 = vpack.c.b16 %v1894, %v1879
  %v2540 = vpack.c.b16 %v1895, %v1880
  %v2541 = vpack.c.b16 %v1896, %v1881
  %v2542 = vpack.c.b16 %v1897, %v1882
  %v2543 = vpack.c.b16 %v1898, %v1883
  %v2544 = vpack.c.b16 %v1899, %v1884
  %v2545 = vpack.c.b16 %v1900, %v1885
  %v2546 = vpack.c.b16 %v1901, %v1886
  %v2547 = vpack.c.b16 %v1902, %v1887
  %v2548 = vpack.c.b16 %v1903, %v1888
  %v2549 = vpack.c.b16 %v1904, %v1889
  %v2550 = vpack.c.b16 %v1905, %v1890
  %v2551 = vpack.c.b16 %v1906, %v1891
  %v2552 = vpack.c.b16 %v1907, %v1892
  %v2553 = vpack.c.b16 %v1908, %v1893
  %v2554 = vpack.c.b16 %v1924, %v1909
  %v2555 = vpack.c.b16 %v1925, %v1910
  %v2556 = vpack.c.b16 %v1926, %v1911
  %v2557 = vpack.c.b16 %v1927, %v1912
  %v2558 = vpack.c.b16 %v1928, %v1913
  %v2559 = vpack.c.b16 %v1929, %v1914
  %v2560 = vpack.c.b16 %v1930, %v1915
  %v2561 = vpack.c.b16 %v1931, %v1916
  %v2562 = vpack.c.b16 %v1932, %v1917
  %v2563 = vpack.c.b16 %v1933, %v1918
  %v2564 = vpack.c.b16 %v1934, %v1919
  %v2565 = vpack.c.b16 %v1935, %v1920
  %v2566 = vpack.c.b16 %v1936, %v1921
  %v2567 = vpack.c.b16 %v1937, %v1922
  %v2568 = vpack.c.b16 %v1938, %v1923
  %v2569 = vpack.c.b16 %v1954, %v1939
  %v2570 = vpack.c.b16 %v1955, %v1940
  %v2571 = vpack.c.b16 %v1956, %v1941
  %v2572 = vpack.c.b16 %v1957, %v1942
  %v2573 = vpack.c.b16 %v1958, %v1943
  %v2574 = vpack.c.b16 %v1959, %v1944
  %v2575 = vpack.c.b16 %v1960, %v1945
  %v2576 = vpack.c.b16 %v1961, %v1946
  %v2577 = vpack.c.b16 %v1962, %v1947
  %v2578 = vpack.c.b16 %v1963, %v1948
  %v2579 = vpack.c.b16 %v1964, %v1949
  %v2580 = vpack.c.b16 %v1965, %v1950
  %v2581 = vpack.c.b16 %v1966, %v1951
  %v2582 = vpack.c.b16 %v1967, %v1952
  %v2583 = vpack.c.b16 %v1968, %v1953
  %v2584 = vpack.c.b16 %v1984, %v1969
  %v2585 = vpack.c.b16 %v1985, %v1970
  %v2586 = vpack.c.b16 %v1986, %v1971
  %v2587 = vpack.c.b16 %v1987, %v1972
  %v2588 = vpack.c.b16 %v1988, %v1973
  %v2589 = vpack.c.b16 %v1989, %v1974
  %v2590 = vpack.c.b16 %v1990, %v1975
  %v2591 = vpack.c.b16 %v1991, %v1976
  %v2592 = vpack.c.b16 %v1992, %v1977
  %v2593 = vpack.c.b16 %v1993, %v1978
  %v2594 = vpack.c.b16 %v1994, %v1979
  %v2595 = vpack.c.b16 %v1995, %v1980
  %v2596 = vpack.c.b16 %v1996, %v1981
  %v2597 = vpack.c.b16 %v1997, %v1982
  %v2598 = vpack.c.b16 %v1998, %v1983
  %v2599 = vpack.c.b16 %v2014, %v1999
  %v2600 = vpack.c.b16 %v2015, %v2000
  %v2601 = vpack.c.b16 %v2016, %v2001
  %v2602 = vpack.c.b16 %v2017, %v2002
  %v2603 = vpack.c.b16 %v2018, %v2003
  %v2604 = vpack.c.b16 %v2019, %v2004
  %v2605 = vpack.c.b16 %v2020, %v2005
  %v2606 = vpack.c.b16 %v2021, %v2006
  %v2607 = vpack.c.b16 %v2022, %v2007
  %v2608 = vpack.c.b16 %v2023, %v2008
  %v2609 = vpack.c.b16 %v2024, %v2009
  %v2610 = vpack.c.b16 %v2025, %v2010
  %v2611 = vpack.c.b16 %v2026, %v2011
  %v2612 = vpack.c.b16 %v2027, %v2012
  %v2613 = vpack.c.b16 %v2028, %v2013
  %v2614 = vpack.c.b16 %v2044, %v2029
  %v2615 = vpack.c.b16 %v2045, %v2030
  %v2616 = vpack.c.b16 %v2046, %v2031
  %v2617 = vpack.c.b16 %v2047, %v2032
  %v2618 = vpack.c.b16 %v2048, %v2033
  %v2619 = vpack.c.b16 %v2049, %v2034
  %v2620 = vpack.c.b16 %v2050, %v2035
  %v2621 = vpack.c.b16 %v2051, %v2036
  %v2622 = vpack.c.b16 %v2052, %v2037
  %v2623 = vpack.c.b16 %v2053, %v2038
  %v2624 = vpack.c.b16 %v2054, %v2039
  %v2625 = vpack.c.b16 %v2055, %v2040
  %v2626 = vpack.c.b16 %v2056, %v2041
  %v2627 = vpack.c.b16 %v2057, %v2042
  %v2628 = vpack.c.b16 %v2058, %v2043
  %v2629 = vpack.c.b16 %v2074, %v2059
  %v2630 = vpack.c.b16 %v2075, %v2060
  %v2631 = vpack.c.b16 %v2076, %v2061
  %v2632 = vpack.c.b16 %v2077, %v2062
  %v2633 = vpack.c.b16 %v2078, %v2063
  %v2634 = vpack.c.b16 %v2079, %v2064
  %v2635 = vpack.c.b16 %v2080, %v2065
  %v2636 = vpack.c.b16 %v2081, %v2066
  %v2637 = vpack.c.b16 %v2082, %v2067
  %v2638 = vpack.c.b16 %v2083, %v2068
  %v2639 = vpack.c.b16 %v2084, %v2069
  %v2640 = vpack.c.b16 %v2085, %v2070
  %v2641 = vpack.c.b16 %v2086, %v2071
  %v2642 = vpack.c.b16 %v2087, %v2072
  %v2643 = vpack.c.b16 %v2088, %v2073
  %v2644 = vpack.c.b16 %v2104, %v2089
  %v2645 = vpack.c.b16 %v2105, %v2090
  %v2646 = vpack.c.b16 %v2106, %v2091
  %v2647 = vpack.c.b16 %v2107, %v2092
  %v2648 = vpack.c.b16 %v2108, %v2093
  %v2649 = vpack.c.b16 %v2109, %v2094
  %v2650 = vpack.c.b16 %v2110, %v2095
  %v2651 = vpack.c.b16 %v2111, %v2096
  %v2652 = vpack.c.b16 %v2112, %v2097
  %v2653 = vpack.c.b16 %v2113, %v2098
  %v2654 = vpack.c.b16 %v2114, %v2099
  %v2655 = vpack.c.b16 %v2115, %v2100
  %v2656 = vpack.c.b16 %v2116, %v2101
  %v2657 = vpack.c.b16 %v2117, %v2102
  %v2658 = vpack.c.b16 %v2118, %v2103
  %v2659 = vpack.c.b16 %v2134, %v2119
  %v2660 = vpack.c.b16 %v2135, %v2120
  %v2661 = vpack.c.b16 %v2136, %v2121
  %v2662 = vpack.c.b16 %v2137, %v2122
  %v2663 = vpack.c.b16 %v2138, %v2123
  %v2664 = vpack.c.b16 %v2139, %v2124
  %v2665 = vpack.c.b16 %v2140, %v2125
  %v2666 = vpack.c.b16 %v2141, %v2126
  %v2667 = vpack.c.b16 %v2142, %v2127
  %v2668 = vpack.c.b16 %v2143, %v2128
  %v2669 = vpack.c.b16 %v2144, %v2129
  %v2670 = vpack.c.b16 %v2145, %v2130
  %v2671 = vpack.c.b16 %v2146, %v2131
  %v2672 = vpack.c.b16 %v2147, %v2132
  %v2673 = vpack.c.b16 %v2148, %v2133
  %v2674 = vpack.c.b16 %v2164, %v2149
  %v2675 = vpack.c.b16 %v2165, %v2150
  %v2676 = vpack.c.b16 %v2166, %v2151
  %v2677 = vpack.c.b16 %v2167, %v2152
  %v2678 = vpack.c.b16 %v2168, %v2153
  %v2679 = vpack.c.b16 %v2169, %v2154
  %v2680 = vpack.c.b16 %v2170, %v2155
  %v2681 = vpack.c.b16 %v2171, %v2156
  %v2682 = vpack.c.b16 %v2172, %v2157
  %v2683 = vpack.c.b16 %v2173, %v2158
  %v2684 = vpack.c.b16 %v2174, %v2159
  %v2685 = vpack.c.b16 %v2175, %v2160
  %v2686 = vpack.c.b16 %v2176, %v2161
  %v2687 = vpack.c.b16 %v2177, %v2162
  %v2688 = vpack.c.b16 %v2178, %v2163
  %v2689 = vpack.c.b16 %v2194, %v2179
  %v2690 = vpack.c.b16 %v2195, %v2180
  %v2691 = vpack.c.b16 %v2196, %v2181
  %v2692 = vpack.c.b16 %v2197, %v2182
  %v2693 = vpack.c.b16 %v2198, %v2183
  %v2694 = vpack.c.b16 %v2199, %v2184
  %v2695 = vpack.c.b16 %v2200, %v2185
  %v2696 = vpack.c.b16 %v2201, %v2186
  %v2697 = vpack.c.b16 %v2202, %v2187
  %v2698 = vpack.c.b16 %v2203, %v2188
  %v2699 = vpack.c.b16 %v2204, %v2189
  %v2700 = vpack.c.b16 %v2205, %v2190
  %v2701 = vpack.c.b16 %v2206, %v2191
  %v2702 = vpack.c.b16 %v2207, %v2192
  %v2703 = vpack.c.b16 %v2208, %v2193
  %v2704 = vpack.c.b16 %v2224, %v2209
  %v2705 = vpack.c.b16 %v2225, %v2210
  %v2706 = vpack.c.b16 %v2226, %v2211
  %v2707 = vpack.c.b16 %v2227, %v2212
  %v2708 = vpack.c.b16 %v2228, %v2213
  %v2709 = vpack.c.b16 %v2229, %v2214
  %v2710 = vpack.c.b16 %v2230, %v2215
  %v2711 = vpack.c.b16 %v2231, %v2216
  %v2712 = vpack.c.b16 %v2232, %v2217
  %v2713 = vpack.c.b16 %v2233, %v2218
  %v2714 = vpack.c.b16 %v2234, %v2219
  %v2715 = vpack.c.b16 %v2235, %v2220
  %v2716 = vpack.c.b16 %v2236, %v2221
  %v2717 = vpack.c.b16 %v2237, %v2222
  %v2718 = vpack.c.b16 %v2238, %v2223
  %v3439 = vunpack.c.l.b16 %v527
  %v3440 = vunpack.c.l.b16 %v528
  %v3441 = vunpack.c.l.b16 %v529
  %v3442 = vunpack.c.l.b16 %v530
  %v3443 = vunpack.c.l.b16 %v531
  %v3444 = vunpack.c.l.b16 %v532
  %v3445 = vunpack.c.l.b16 %v533
  %v3446 = vunpack.c.l.b16 %v534
  %v3447 = vunpack.c.l.b16 %v535
  %v3448 = vunpack.c.l.b16 %v536
  %v3449 = vunpack.c.l.b16 %v537
  %v3450 = vunpack.c.l.b16 %v538
  %v3451 = vunpack.c.l.b16 %v539
  %v3452 = vunpack.c.l.b16 %v540
  %v3453 = vunpack.c.l.b16 %v541
  %v3454 = vunpack.c.l.b16 %v542
  %v3455 = vunpack.c.l.b16 %v543
  %v3456 = vunpack.c.l.b16 %v544
  %v3457 = vunpack.c.l.b16 %v545
  %v3458 = vunpack.c.l.b16 %v546
  %v3459 = vunpack.c.l.b16 %v547
  %v3460 = vunpack.c.l.b16 %v548
  %v3461 = vunpack.c.l.b16 %v549
  %v3462 = vunpack.c.l.b16 %v550
  %v3463 = vunpack.c.l.b16 %v551
  %v3464 = vunpack.c.l.b16 %v552
  %v3465 = vunpack.c.l.b16 %v553
  %v3466 = vunpack.c.l.b16 %v554
  %v3467 = vunpack.c.l.b16 %v555
  %v3468 = vunpack.c.l.b16 %v556
  %v3469 = vunpack.c.l.b16 %v557
  %v3470 = vunpack.c.l.b16 %v558
  %v3471 = vunpack.c.l.b16 %v559
  %v3472 = vunpack.c.l.b16 %v560
  %v3473 = vunpack.c.l.b16 %v561
  %v3474 = vunpack.c.l.b16 %v562
  %v3475 = vunpack.c.l.b16 %v563
  %v3476 = vunpack.c.l.b16 %v564
  %v3477 = vunpack.c.l.b16 %v565
  %v3478 = vunpack.c.l.b16 %v566
  %v3479 = vunpack.c.l.b16 %v567
  %v3480 = vunpack.c.l.b16 %v568
  %v3481 = vunpack.c.l.b16 %v569
  %v3482 = vunpack.c.l.b16 %v570
  %v3483 = vunpack.c.l.b16 %v571
  %v3484 = vunpack.c.l.b16 %v572
  %v3485 = vunpack.c.l.b16 %v573
  %v3486 = vunpack.c.l.b16 %v574
  %v3487 = vunpack.c.l.b16 %v575
  %v3488 = vunpack.c.l.b16 %v576
  %v3489 = vunpack.c.l.b16 %v577
  %v3490 = vunpack.c.l.b16 %v578
  %v3491 = vunpack.c.l.b16 %v579
  %v3492 = vunpack.c.l.b16 %v580
  %v3493 = vunpack.c.l.b16 %v581
  %v3494 = vunpack.c.l.b16 %v582
  %v3495 = vunpack.c.l.b16 %v583
  %v3496 = vunpack.c.l.b16 %v584
  %v3497 = vunpack.c.l.b16 %v585
  %v3498 = vunpack.c.l.b16 %v586
  %v3499 = vunpack.c.l.b16 %v587
  %v3500 = vunpack.c.l.b16 %v588
  %v3501 = vunpack.c.l.b16 %v589
  %v3502 = vunpack.c.l.b16 %v590
  %v3503 = vunpack.c.l.b16 %v591
  %v3504 = vunpack.c.l.b16 %v592
  %v3505 = vunpack.c.l.b16 %v593
  %v3506 = vunpack.c.l.b16 %v594
  %v3507 = vunpack.c.l.b16 %v595
  %v3508 = vunpack.c.l.b16 %v596
  %v3509 = vunpack.c.l.b16 %v597
  %v3510 = vunpack.c.l.b16 %v598
  %v3511 = vunpack.c.l.b16 %v599
  %v3512 = vunpack.c.l.b16 %v600
  %v3513 = vunpack.c.l.b16 %v601
  %v3514 = vunpack.c.l.b16 %v602
  %v3515 = vunpack.c.l.b16 %v603
  %v3516 = vunpack.c.l.b16 %v604
  %v3517 = vunpack.c.l.b16 %v605
  %v3518 = vunpack.c.l.b16 %v606
  %v3519 = vunpack.c.l.b16 %v607
  %v3520 = vunpack.c.l.b16 %v608
  %v3521 = vunpack.c.l.b16 %v609
  %v3522 = vunpack.c.l.b16 %v610
  %v3523 = vunpack.c.l.b16 %v611
  %v3524 = vunpack.c.l.b16 %v612
  %v3525 = vunpack.c.l.b16 %v613
  %v3526 = vunpack.c.l.b16 %v614
  %v3527 = vunpack.c.l.b16 %v615
  %v3528 = vunpack.c.l.b16 %v616
  %v3529 = vunpack.c.l.b16 %v617
  %v3530 = vunpack.c.l.b16 %v618
  %v3531 = vunpack.c.l.b16 %v619
  %v3532 = vunpack.c.l.b16 %v620
  %v3533 = vunpack.c.l.b16 %v621
  %v3534 = vunpack.c.l.b16 %v622
  %v3535 = vunpack.c.l.b16 %v623
  %v3536 = vunpack.c.l.b16 %v624
  %v3537 = vunpack.c.l.b16 %v625
  %v3538 = vunpack.c.l.b16 %v626
  %v3539 = vunpack.c.l.b16 %v627
  %v3540 = vunpack.c.l.b16 %v628
  %v3541 = vunpack.c.l.b16 %v629
  %v3542 = vunpack.c.l.b16 %v630
  %v3543 = vunpack.c.l.b16 %v631
  %v3544 = vunpack.c.l.b16 %v632
  %v3545 = vunpack.c.l.b16 %v633
  %v3546 = vunpack.c.l.b16 %v634
  %v3547 = vunpack.c.l.b16 %v635
  %v3548 = vunpack.c.l.b16 %v636
  %v3549 = vunpack.c.l.b16 %v637
  %v3550 = vunpack.c.l.b16 %v638
  %v3551 = vunpack.c.l.b16 %v639
  %v3552 = vunpack.c.l.b16 %v640
  %v3553 = vunpack.c.l.b16 %v641
  %v3554 = vunpack.c.l.b16 %v642
  %v3555 = vunpack.c.l.b16 %v643
  %v3556 = vunpack.c.l.b16 %v644
  %v3557 = vunpack.c.l.b16 %v645
  %v3558 = vunpack.c.l.b16 %v646
  %v3559 = vunpack.c.l.b16 %v647
  %v3560 = vunpack.c.l.b16 %v648
  %v3561 = vunpack.c.l.b16 %v649
  %v3562 = vunpack.c.l.b16 %v650
  %v3563 = vunpack.c.l.b16 %v651
  %v3564 = vunpack.c.l.b16 %v652
  %v3565 = vunpack.c.l.b16 %v653
  %v3566 = vunpack.c.l.b16 %v654
  %v3567 = vunpack.c.l.b16 %v655
  %v3568 = vunpack.c.l.b16 %v656
  %v3569 = vunpack.c.l.b16 %v657
  %v3570 = vunpack.c.l.b16 %v658
  %v3571 = vunpack.c.l.b16 %v659
  %v3572 = vunpack.c.l.b16 %v660
  %v3573 = vunpack.c.l.b16 %v661
  %v3574 = vunpack.c.l.b16 %v662
  %v3575 = vunpack.c.l.b16 %v663
  %v3576 = vunpack.c.l.b16 %v664
  %v3577 = vunpack.c.l.b16 %v665
  %v3578 = vunpack.c.l.b16 %v666
  %v3579 = vunpack.c.l.b16 %v667
  %v3580 = vunpack.c.l.b16 %v668
  %v3581 = vunpack.c.l.b16 %v669
  %v3582 = vunpack.c.l.b16 %v670
  %v3583 = vunpack.c.l.b16 %v671
  %v3584 = vunpack.c.l.b16 %v672
  %v3585 = vunpack.c.l.b16 %v673
  %v3586 = vunpack.c.l.b16 %v674
  %v3587 = vunpack.c.l.b16 %v675
  %v3588 = vunpack.c.l.b16 %v676
  %v3589 = vunpack.c.l.b16 %v677
  %v3590 = vunpack.c.l.b16 %v678
  %v3591 = vunpack.c.l.b16 %v679
  %v3592 = vunpack.c.l.b16 %v680
  %v3593 = vunpack.c.l.b16 %v681
  %v3594 = vunpack.c.l.b16 %v682
  %v3595 = vunpack.c.l.b16 %v683
  %v3596 = vunpack.c.l.b16 %v684
  %v3597 = vunpack.c.l.b16 %v685
  %v3598 = vunpack.c.l.b16 %v686
  %v3599 = vunpack.c.l.b16 %v687
  %v3600 = vunpack.c.l.b16 %v688
  %v3601 = vunpack.c.l.b16 %v689
  %v3602 = vunpack.c.l.b16 %v690
  %v3603 = vunpack.c.l.b16 %v691
  %v3604 = vunpack.c.l.b16 %v692
  %v3605 = vunpack.c.l.b16 %v693
  %v3606 = vunpack.c.l.b16 %v694
  %v3607 = vunpack.c.l.b16 %v695
  %v3608 = vunpack.c.l.b16 %v696
  %v3609 = vunpack.c.l.b16 %v697
  %v3610 = vunpack.c.l.b16 %v698
  %v3611 = vunpack.c.l.b16 %v699
  %v3612 = vunpack.c.l.b16 %v700
  %v3613 = vunpack.c.l.b16 %v701
  %v3614 = vunpack.c.l.b16 %v702
  %v3615 = vunpack.c.l.b16 %v703
  %v3616 = vunpack.c.l.b16 %v704
  %v3617 = vunpack.c.l.b16 %v705
  %v3618 = vunpack.c.l.b16 %v706
  %v3619 = vunpack.c.l.b16 %v707
  %v3620 = vunpack.c.l.b16 %v708
  %v3621 = vunpack.c.l.b16 %v709
  %v3622 = vunpack.c.l.b16 %v710
  %v3623 = vunpack.c.l.b16 %v711
  %v3624 = vunpack.c.l.b16 %v712
  %v3625 = vunpack.c.l.b16 %v713
  %v3626 = vunpack.c.l.b16 %v714
  %v3627 = vunpack.c.l.b16 %v715
  %v3628 = vunpack.c.l.b16 %v716
  %v3629 = vunpack.c.l.b16 %v717
  %v3630 = vunpack.c.l.b16 %v718
  %v3631 = vunpack.c.l.b16 %v719
  %v3632 = vunpack.c.l.b16 %v720
  %v3633 = vunpack.c.l.b16 %v721
  %v3634 = vunpack.c.l.b16 %v722
  %v3635 = vunpack.c.l.b16 %v723
  %v3636 = vunpack.c.l.b16 %v724
  %v3637 = vunpack.c.l.b16 %v725
  %v3638 = vunpack.c.l.b16 %v726
  %v3639 = vunpack.c.l.b16 %v727
  %v3640 = vunpack.c.l.b16 %v728
  %v3641 = vunpack.c.l.b16 %v729
  %v3642 = vunpack.c.l.b16 %v730
  %v3643 = vunpack.c.l.b16 %v731
  %v3644 = vunpack.c.l.b16 %v732
  %v3645 = vunpack.c.l.b16 %v733
  %v3646 = vunpack.c.l.b16 %v734
  %v3647 = vunpack.c.l.b16 %v735
  %v3648 = vunpack.c.l.b16 %v736
  %v3649 = vunpack.c.l.b16 %v737
  %v3650 = vunpack.c.l.b16 %v738
  %v3651 = vunpack.c.l.b16 %v739
  %v3652 = vunpack.c.l.b16 %v740
  %v3653 = vunpack.c.l.b16 %v741
  %v3654 = vunpack.c.l.b16 %v742
  %v3655 = vunpack.c.l.b16 %v743
  %v3656 = vunpack.c.l.b16 %v744
  %v3657 = vunpack.c.l.b16 %v745
  %v3658 = vunpack.c.l.b16 %v746
  %v3659 = vunpack.c.l.b16 %v747
  %v3660 = vunpack.c.l.b16 %v748
  %v3661 = vunpack.c.l.b16 %v749
  %v3662 = vunpack.c.l.b16 %v750
  %v3663 = vunpack.c.l.b16 %v751
  %v3664 = vunpack.c.l.b16 %v752
  %v3665 = vunpack.c.l.b16 %v753
  %v3666 = vunpack.c.l.b16 %v754
  %v3667 = vunpack.c.l.b16 %v755
  %v3668 = vunpack.c.l.b16 %v756
  %v3669 = vunpack.c.l.b16 %v757
  %v3670 = vunpack.c.l.b16 %v758
  %v3671 = vunpack.c.l.b16 %v759
  %v3672 = vunpack.c.l.b16 %v760
  %v3673 = vunpack.c.l.b16 %v761
  %v3674 = vunpack.c.l.b16 %v762
  %v3675 = vunpack.c.l.b16 %v763
  %v3676 = vunpack.c.l.b16 %v764
  %v3677 = vunpack.c.l.b16 %v765
  %v3678 = vunpack.c.l.b16 %v766
  %v3679 = vpack.c.b16 %v3440, %v3439
  %v3680 = vpack.c.b16 %v3442, %v3441
  %v3681 = vpack.c.b16 %v3444, %v3443
  %v3682 = vpack.c.b16 %v3446, %v3445
  %v3683 = vpack.c.b16 %v3448, %v3447
  %v3684 = vpack.c.b16 %v3450, %v3449
  %v3685 = vpack.c.b16 %v3452, %v3451
  %v3686 = vpack.c.b16 %v3454, %v3453
  %v3687 = vpack.c.b16 %v3456, %v3455
  %v3688 = vpack.c.b16 %v3458, %v3457
  %v3689 = vpack.c.b16 %v3460, %v3459
  %v3690 = vpack.c.b16 %v3462, %v3461
  %v3691 = vpack.c.b16 %v3464, %v3463
  %v3692 = vpack.c.b16 %v3466, %v3465
  %v3693 = vpack.c.b16 %v3468, %v3467
  %v3694 = vpack.c.b16 %v3470, %v3469
  %v3695 = vpack.c.b16 %v3472, %v3471
  %v3696 = vpack.c.b16 %v3474, %v3473
  %v3697 = vpack.c.b16 %v3476, %v3475
  %v3698 = vpack.c.b16 %v3478, %v3477
  %v3699 = vpack.c.b16 %v3480, %v3479
  %v3700 = vpack.c.b16 %v3482, %v3481
  %v3701 = vpack.c.b16 %v3484, %v3483
  %v3702 = vpack.c.b16 %v3486, %v3485
  %v3703 = vpack.c.b16 %v3488, %v3487
  %v3704 = vpack.c.b16 %v3490, %v3489
  %v3705 = vpack.c.b16 %v3492, %v3491
  %v3706 = vpack.c.b16 %v3494, %v3493
  %v3707 = vpack.c.b16 %v3496, %v3495
  %v3708 = vpack.c.b16 %v3498, %v3497
  %v3709 = vpack.c.b16 %v3500, %v3499
  %v3710 = vpack.c.b16 %v3502, %v3501
  %v3711 = vpack.c.b16 %v3504, %v3503
  %v3712 = vpack.c.b16 %v3506, %v3505
  %v3713 = vpack.c.b16 %v3508, %v3507
  %v3714 = vpack.c.b16 %v3510, %v3509
  %v3715 = vpack.c.b16 %v3512, %v3511
  %v3716 = vpack.c.b16 %v3514, %v3513
  %v3717 = vpack.c.b16 %v3516, %v3515
  %v3718 = vpack.c.b16 %v3518, %v3517
  %v3719 = vpack.c.b16 %v3520, %v3519
  %v3720 = vpack.c.b16 %v3522, %v3521
  %v3721 = vpack.c.b16 %v3524, %v3523
  %v3722 = vpack.c.b16 %v3526, %v3525
  %v3723 = vpack.c.b16 %v3528, %v3527
  %v3724 = vpack.c.b16 %v3530, %v3529
  %v3725 = vpack.c.b16 %v3532, %v3531
  %v3726 = vpack.c.b16 %v3534, %v3533
  %v3727 = vpack.c.b16 %v3536, %v3535
  %v3728 = vpack.c.b16 %v3538, %v3537
  %v3729 = vpack.c.b16 %v3540, %v3539
  %v3730 = vpack.c.b16 %v3542, %v3541
  %v3731 = vpack.c.b16 %v3544, %v3543
  %v3732 = vpack.c.b16 %v3546, %v3545
  %v3733 = vpack.c.b16 %v3548, %v3547
  %v3734 = vpack.c.b16 %v3550, %v3549
  %v3735 = vpack.c.b16 %v3552, %v3551
  %v3736 = vpack.c.b16 %v3554, %v3553
  %v3737 = vpack.c.b16 %v3556, %v3555
  %v3738 = vpack.c.b16 %v3558, %v3557
  %v3739 = vpack.c.b16 %v3560, %v3559
  %v3740 = vpack.c.b16 %v3562, %v3561
  %v3741 = vpack.c.b16 %v3564, %v3563
  %v3742 = vpack.c.b16 %v3566, %v3565
  %v3743 = vpack.c.b16 %v3568, %v3567
  %v3744 = vpack.c.b16 %v3570, %v3569
  %v3745 = vpack.c.b16 %v3572, %v3571
  %v3746 = vpack.c.b16 %v3574, %v3573
  %v3747 = vpack.c.b16 %v3576, %v3575
  %v3748 = vpack.c.b16 %v3578, %v3577
  %v3749 = vpack.c.b16 %v3580, %v3579
  %v3750 = vpack.c.b16 %v3582, %v3581
  %v3751 = vpack.c.b16 %v3584, %v3583
  %v3752 = vpack.c.b16 %v3586, %v3585
  %v3753 = vpack.c.b16 %v3588, %v3587
  %v3754 = vpack.c.b16 %v3590, %v3589
  %v3755 = vpack.c.b16 %v3592, %v3591
  %v3756 = vpack.c.b16 %v3594, %v3593
  %v3757 = vpack.c.b16 %v3596, %v3595
  %v3758 = vpack.c.b16 %v3598, %v3597
  %v3759 = vpack.c.b16 %v3600, %v3599
  %v3760 = vpack.c.b16 %v3602, %v3601
  %v3761 = vpack.c.b16 %v3604, %v3603
  %v3762 = vpack.c.b16 %v3606, %v3605
  %v3763 = vpack.c.b16 %v3608, %v3607
  %v3764 = vpack.c.b16 %v3610, %v3609
  %v3765 = vpack.c.b16 %v3612, %v3611
  %v3766 = vpack.c.b16 %v3614, %v3613
  %v3767 = vpack.c.b16 %v3616, %v3615
  %v3768 = vpack.c.b16 %v3618, %v3617
  %v3769 = vpack.c.b16 %v3620, %v3619
  %v3770 = vpack.c.b16 %v3622, %v3621
  %v3771 = vpack.c.b16 %v3624, %v3623
  %v3772 = vpack.c.b16 %v3626, %v3625
  %v3773 = vpack.c.b16 %v3628, %v3627
  %v3774 = vpack.c.b16 %v3630, %v3629
  %v3775 = vpack.c.b16 %v3632, %v3631
  %v3776 = vpack.c.b16 %v3634, %v3633
  %v3777 = vpack.c.b16 %v3636, %v3635
  %v3778 = vpack.c.b16 %v3638, %v3637
  %v3779 = vpack.c.b16 %v3640, %v3639
  %v3780 = vpack.c.b16 %v3642, %v3641
  %v3781 = vpack.c.b16 %v3644, %v3643
  %v3782 = vpack.c.b16 %v3646, %v3645
  %v3783 = vpack.c.b16 %v3648, %v3647
  %v3784 = vpack.c.b16 %v3650, %v3649
  %v3785 = vpack.c.b16 %v3652, %v3651
  %v3786 = vpack.c.b16 %v3654, %v3653
  %v3787 = vpack.c.b16 %v3656, %v3655
  %v3788 = vpack.c.b16 %v3658, %v3657
  %v3789 = vpack.c.b16 %v3660, %v3659
  %v3790 = vpack.c.b16 %v3662, %v3661
  %v3791 = vpack.c.b16 %v3664, %v3663
  %v3792 = vpack.c.b16 %v3666, %v3665
  %v3793 = vpack.c.b16 %v3668, %v3667
  %v3794 = vpack.c.b16 %v3670, %v3669
  %v3795 = vpack.c.b16 %v3672, %v3671
  %v3796 = vpack.c.b16 %v3674, %v3673
  %v3797 = vpack.c.b16 %v3676, %v3675
  %v3798 = vpack.c.b16 %v3678, %v3677
  %3919 = vmatprep.subr.bf16.mxu0 0
  %3920 = vmatpush1.bf16.msra.mxu0 %v3679
  %3921 = vmatprep.subr.bf16.mxu0 0
  %3922 = vmatpush1.bf16.msra.mxu0 %v3680
  %3923 = vmatprep.subr.bf16.mxu0 0
  %3924 = vmatpush1.bf16.msra.mxu0 %v3681
  %3925 = vmatprep.subr.bf16.mxu0 0
  %3926 = vmatpush1.bf16.msra.mxu0 %v3682
  %3927 = vmatprep.subr.bf16.mxu0 0
  %3928 = vmatpush1.bf16.msra.mxu0 %v3683
  %3929 = vmatprep.subr.bf16.mxu0 0
  %3930 = vmatpush1.bf16.msra.mxu0 %v3684
  %3931 = vmatprep.subr.bf16.mxu0 0
  %3932 = vmatpush1.bf16.msra.mxu0 %v3685
  %3933 = vmatprep.subr.bf16.mxu0 0
  %3934 = vmatpush1.bf16.msra.mxu0 %v3686
  %3935 = vmatprep.subr.bf16.mxu0 0
  %3936 = vmatpush1.bf16.msra.mxu0 %v3687
  %3937 = vmatprep.subr.bf16.mxu0 0
  %3938 = vmatpush1.bf16.msra.mxu0 %v3688
  %3939 = vmatprep.subr.bf16.mxu0 0
  %3940 = vmatpush1.bf16.msra.mxu0 %v3689
  %3941 = vmatprep.subr.bf16.mxu0 0
  %3942 = vmatpush1.bf16.msra.mxu0 %v3690
  %3943 = vmatprep.subr.bf16.mxu0 0
  %3944 = vmatpush1.bf16.msra.mxu0 %v3691
  %3945 = vmatprep.subr.bf16.mxu0 0
  %3946 = vmatpush1.bf16.msra.mxu0 %v3692
  %3947 = vmatprep.subr.bf16.mxu0 0
  %3948 = vmatpush1.bf16.msra.mxu0 %v3693
  %3949 = vmatprep.subr.bf16.mxu0 0
  %3950 = vmatpush1.bf16.msra.mxu0 %v3694
  %3951 = vmatprep.mubr.bf16.mxu0 %v2240
  %3952 = vmatmul.mubr.bf16.gmra.mrb[0].mxu0 %v2239
  %v3953 = vpop.f32.mrb[0].mxu0
  %v3954 = vadd.f32 0.0, %v3953
  %v3955 = vpop.f32.mrb[0].mxu0
  %v3956 = vpop.f32.mrb[0].mxu0
  %v3957 = vadd.f32 0.0, %v3956
  %v3958 = vpop.f32.mrb[0].mxu0
  %3959 = vmatprep.mubr.bf16.mxu0 %v2255
  %3960 = vmatmul.mubr.bf16.gmra.mrb[0].mxu0 %v2254
  %v3961 = vpop.f32.mrb[0].mxu0
  %v3962 = vadd.f32 0.0, %v3961
  %v3963 = vpop.f32.mrb[0].mxu0
  %v3964 = vpop.f32.mrb[0].mxu0
  %v3965 = vadd.f32 0.0, %v3964
  %v3966 = vpop.f32.mrb[0].mxu0
  %3967 = vmatprep.mubr.bf16.mxu0 %v2270
  %3968 = vmatmul.mubr.bf16.gmra.mrb[0].mxu0 %v2269
  %v3969 = vpop.f32.mrb[0].mxu0
  %v3970 = vadd.f32 0.0, %v3969
  %v3971 = vpop.f32.mrb[0].mxu0
  %v3972 = vpop.f32.mrb[0].mxu0
  %v3973 = vadd.f32 0.0, %v3972
  %v3974 = vpop.f32.mrb[0].mxu0
  %3975 = vmatprep.mubr.bf16.mxu0 %v2285
  %3976 = vmatmul.mubr.bf16.gmra.mrb[0].mxu0 %v2284
  %v3977 = vpop.f32.mrb[0].mxu0
  %v3978 = vadd.f32 0.0, %v3977
  %v3979 = vpop.f32.mrb[0].mxu0
  %v3980 = vpop.f32.mrb[0].mxu0
  %v3981 = vadd.f32 0.0, %v3980
  %v3982 = vpop.f32.mrb[0].mxu0
  %3983 = vmatprep.mubr.bf16.mxu0 %v2300
  %3984 = vmatmul.mubr.bf16.gmra.mrb[0].mxu0 %v2299
  %v3985 = vpop.f32.mrb[0].mxu0
  %v3986 = vadd.f32 0.0, %v3985
  %v3987 = vpop.f32.mrb[0].mxu0
  %v3988 = vpop.f32.mrb[0].mxu0
  %v3989 = vadd.f32 0.0, %v3988
  %v3990 = vpop.f32.mrb[0].mxu0
  %3991 = vmatprep.mubr.bf16.mxu0 %v2315
  %3992 = vmatmul.mubr.bf16.gmra.mrb[0].mxu0 %v2314
  %v3993 = vpop.f32.mrb[0].mxu0
  %v3994 = vadd.f32 0.0, %v3993
  %v3995 = vpop.f32.mrb[0].mxu0
  %v3996 = vpop.f32.mrb[0].mxu0
  %v3997 = vadd.f32 0.0, %v3996
  %v3998 = vpop.f32.mrb[0].mxu0
  %3999 = vmatprep.mubr.bf16.mxu0 %v2330
  %4000 = vmatmul.mubr.bf16.gmra.mrb[0].mxu0 %v2329
  %v4001 = vpop.f32.mrb[0].mxu0
  %v4002 = vadd.f32 0.0, %v4001
  %v4003 = vpop.f32.mrb[0].mxu0
  %v4004 = vpop.f32.mrb[0].mxu0
  %v4005 = vadd.f32 0.0, %v4004
  %v4006 = vpop.f32.mrb[0].mxu0
  %4007 = vmatprep.mubr.bf16.mxu0 %v2345
  %4008 = vmatmul.mubr.bf16.gmra.mrb[0].mxu0 %v2344
  %v4009 = vpop.f32.mrb[0].mxu0
  %v4010 = vadd.f32 0.0, %v4009
  %v4011 = vpop.f32.mrb[0].mxu0
  %v4012 = vpop.f32.mrb[0].mxu0
  %v4013 = vadd.f32 0.0, %v4012
  %v4014 = vpop.f32.mrb[0].mxu0
  %4015 = vmatprep.mubr.bf16.mxu0 %v2360
  %4016 = vmatmul.mubr.bf16.gmra.mrb[0].mxu0 %v2359
  %v4017 = vpop.f32.mrb[0].mxu0
  %v4018 = vadd.f32 0.0, %v4017
  %v4019 = vpop.f32.mrb[0].mxu0
  %v4020 = vpop.f32.mrb[0].mxu0
  %v4021 = vadd.f32 0.0, %v4020
  %v4022 = vpop.f32.mrb[0].mxu0
  %4023 = vmatprep.mubr.bf16.mxu0 %v2375
  %4024 = vmatmul.mubr.bf16.gmra.mrb[0].mxu0 %v2374
  %v4025 = vpop.f32.mrb[0].mxu0
  %v4026 = vadd.f32 0.0, %v4025
  %v4027 = vpop.f32.mrb[0].mxu0
  %v4028 = vpop.f32.mrb[0].mxu0
  %v4029 = vadd.f32 0.0, %v4028
  %v4030 = vpop.f32.mrb[0].mxu0
  %4031 = vmatprep.mubr.bf16.mxu0 %v2390
  %4032 = vmatmul.mubr.bf16.gmra.mrb[0].mxu0 %v2389
  %v4033 = vpop.f32.mrb[0].mxu0
  %v4034 = vadd.f32 0.0, %v4033
  %v4035 = vpop.f32.mrb[0].mxu0
  %v4036 = vpop.f32.mrb[0].mxu0
  %v4037 = vadd.f32 0.0, %v4036
  %v4038 = vpop.f32.mrb[0].mxu0
  %4039 = vmatprep.mubr.bf16.mxu0 %v2405
  %4040 = vmatmul.mubr.bf16.gmra.mrb[0].mxu0 %v2404
  %v4041 = vpop.f32.mrb[0].mxu0
  %v4042 = vadd.f32 0.0, %v4041
  %v4043 = vpop.f32.mrb[0].mxu0
  %v4044 = vpop.f32.mrb[0].mxu0
  %v4045 = vadd.f32 0.0, %v4044
  %v4046 = vpop.f32.mrb[0].mxu0
  %4047 = vmatprep.mubr.bf16.mxu0 %v2420
  %4048 = vmatmul.mubr.bf16.gmra.mrb[0].mxu0 %v2419
  %v4049 = vpop.f32.mrb[0].mxu0
  %v4050 = vadd.f32 0.0, %v4049
  %v4051 = vpop.f32.mrb[0].mxu0
  %v4052 = vpop.f32.mrb[0].mxu0
  %v4053 = vadd.f32 0.0, %v4052
  %v4054 = vpop.f32.mrb[0].mxu0
  %4055 = vmatprep.mubr.bf16.mxu0 %v2435
  %4056 = vmatmul.mubr.bf16.gmra.mrb[0].mxu0 %v2434
  %v4057 = vpop.f32.mrb[0].mxu0
  %v4058 = vadd.f32 0.0, %v4057
  %v4059 = vpop.f32.mrb[0].mxu0
  %v4060 = vpop.f32.mrb[0].mxu0
  %v4061 = vadd.f32 0.0, %v4060
  %v4062 = vpop.f32.mrb[0].mxu0
  %4063 = vmatprep.mubr.bf16.mxu0 %v2450
  %4064 = vmatmul.mubr.bf16.gmra.mrb[0].mxu0 %v2449
  %v4065 = vpop.f32.mrb[0].mxu0
  %v4066 = vadd.f32 0.0, %v4065
  %v4067 = vpop.f32.mrb[0].mxu0
  %v4068 = vpop.f32.mrb[0].mxu0
  %v4069 = vadd.f32 0.0, %v4068
  %v4070 = vpop.f32.mrb[0].mxu0
  %4071 = vmatprep.mubr.bf16.mxu0 %v2465
  %4072 = vmatmul.mubr.bf16.gmra.mrb[0].mxu0 %v2464
  %v4073 = vpop.f32.mrb[0].mxu0
  %v4074 = vadd.f32 0.0, %v4073
  %v4075 = vpop.f32.mrb[0].mxu0
  %v4076 = vpop.f32.mrb[0].mxu0
  %v4077 = vadd.f32 0.0, %v4076
  %v4078 = vpop.f32.mrb[0].mxu0
  %4079 = vmatprep.mubr.bf16.mxu0 %v2480
  %4080 = vmatmul.mubr.bf16.gmra.mrb[0].mxu0 %v2479
  %v4081 = vpop.f32.mrb[0].mxu0
  %v4082 = vadd.f32 0.0, %v4081
  %v4083 = vpop.f32.mrb[0].mxu0
  %v4084 = vpop.f32.mrb[0].mxu0
  %v4085 = vadd.f32 0.0, %v4084
  %v4086 = vpop.f32.mrb[0].mxu0
  %4087 = vmatprep.mubr.bf16.mxu0 %v2495
  %4088 = vmatmul.mubr.bf16.gmra.mrb[0].mxu0 %v2494
  %v4089 = vpop.f32.mrb[0].mxu0
  %v4090 = vadd.f32 0.0, %v4089
  %v4091 = vpop.f32.mrb[0].mxu0
  %v4092 = vpop.f32.mrb[0].mxu0
  %v4093 = vadd.f32 0.0, %v4092
  %v4094 = vpop.f32.mrb[0].mxu0
  %4095 = vmatprep.mubr.bf16.mxu0 %v2510
  %4096 = vmatmul.mubr.bf16.gmra.mrb[0].mxu0 %v2509
  %v4097 = vpop.f32.mrb[0].mxu0
  %v4098 = vadd.f32 0.0, %v4097
  %v4099 = vpop.f32.mrb[0].mxu0
  %v4100 = vpop.f32.mrb[0].mxu0
  %v4101 = vadd.f32 0.0, %v4100
  %v4102 = vpop.f32.mrb[0].mxu0
  %4103 = vmatprep.mubr.bf16.mxu0 %v2525
  %4104 = vmatmul.mubr.bf16.gmra.mrb[0].mxu0 %v2524
  %v4105 = vpop.f32.mrb[0].mxu0
  %v4106 = vadd.f32 0.0, %v4105
  %v4107 = vpop.f32.mrb[0].mxu0
  %v4108 = vpop.f32.mrb[0].mxu0
  %v4109 = vadd.f32 0.0, %v4108
  %v4110 = vpop.f32.mrb[0].mxu0
  %4111 = vmatprep.mubr.bf16.mxu0 %v2540
  %4112 = vmatmul.mubr.bf16.gmra.mrb[0].mxu0 %v2539
  %v4113 = vpop.f32.mrb[0].mxu0
  %v4114 = vadd.f32 0.0, %v4113
  %v4115 = vpop.f32.mrb[0].mxu0
  %v4116 = vpop.f32.mrb[0].mxu0
  %v4117 = vadd.f32 0.0, %v4116
  %v4118 = vpop.f32.mrb[0].mxu0
  %4119 = vmatprep.mubr.bf16.mxu0 %v2555
  %4120 = vmatmul.mubr.bf16.gmra.mrb[0].mxu0 %v2554
  %v4121 = vpop.f32.mrb[0].mxu0
  %v4122 = vadd.f32 0.0, %v4121
  %v4123 = vpop.f32.mrb[0].mxu0
  %v4124 = vpop.f32.mrb[0].mxu0
  %v4125 = vadd.f32 0.0, %v4124
  %v4126 = vpop.f32.mrb[0].mxu0
  %4127 = vmatprep.mubr.bf16.mxu0 %v2570
  %4128 = vmatmul.mubr.bf16.gmra.mrb[0].mxu0 %v2569
  %v4129 = vpop.f32.mrb[0].mxu0
  %v4130 = vadd.f32 0.0, %v4129
  %v4131 = vpop.f32.mrb[0].mxu0
  %v4132 = vpop.f32.mrb[0].mxu0
  %v4133 = vadd.f32 0.0, %v4132
  %v4134 = vpop.f32.mrb[0].mxu0
  %4135 = vmatprep.mubr.bf16.mxu0 %v2585
  %4136 = vmatmul.mubr.bf16.gmra.mrb[0].mxu0 %v2584
  %v4137 = vpop.f32.mrb[0].mxu0
  %v4138 = vadd.f32 0.0, %v4137
  %v4139 = vpop.f32.mrb[0].mxu0
  %v4140 = vpop.f32.mrb[0].mxu0
  %v4141 = vadd.f32 0.0, %v4140
  %v4142 = vpop.f32.mrb[0].mxu0
  %4143 = vmatprep.mubr.bf16.mxu0 %v2600
  %4144 = vmatmul.mubr.bf16.gmra.mrb[0].mxu0 %v2599
  %v4145 = vpop.f32.mrb[0].mxu0
  %v4146 = vadd.f32 0.0, %v4145
  %v4147 = vpop.f32.mrb[0].mxu0
  %v4148 = vpop.f32.mrb[0].mxu0
  %v4149 = vadd.f32 0.0, %v4148
  %v4150 = vpop.f32.mrb[0].mxu0
  %4151 = vmatprep.mubr.bf16.mxu0 %v2615
  %4152 = vmatmul.mubr.bf16.gmra.mrb[0].mxu0 %v2614
  %v4153 = vpop.f32.mrb[0].mxu0
  %v4154 = vadd.f32 0.0, %v4153
  %v4155 = vpop.f32.mrb[0].mxu0
  %v4156 = vpop.f32.mrb[0].mxu0
  %v4157 = vadd.f32 0.0, %v4156
  %v4158 = vpop.f32.mrb[0].mxu0
  %4159 = vmatprep.mubr.bf16.mxu0 %v2630
  %4160 = vmatmul.mubr.bf16.gmra.mrb[0].mxu0 %v2629
  %v4161 = vpop.f32.mrb[0].mxu0
  %v4162 = vadd.f32 0.0, %v4161
  %v4163 = vpop.f32.mrb[0].mxu0
  %v4164 = vpop.f32.mrb[0].mxu0
  %v4165 = vadd.f32 0.0, %v4164
  %v4166 = vpop.f32.mrb[0].mxu0
  %4167 = vmatprep.mubr.bf16.mxu0 %v2645
  %4168 = vmatmul.mubr.bf16.gmra.mrb[0].mxu0 %v2644
  %v4169 = vpop.f32.mrb[0].mxu0
  %v4170 = vadd.f32 0.0, %v4169
  %v4171 = vpop.f32.mrb[0].mxu0
  %v4172 = vpop.f32.mrb[0].mxu0
  %v4173 = vadd.f32 0.0, %v4172
  %v4174 = vpop.f32.mrb[0].mxu0
  %4175 = vmatprep.mubr.bf16.mxu0 %v2660
  %4176 = vmatmul.mubr.bf16.gmra.mrb[0].mxu0 %v2659
  %v4177 = vpop.f32.mrb[0].mxu0
  %v4178 = vadd.f32 0.0, %v4177
  %v4179 = vpop.f32.mrb[0].mxu0
  %v4180 = vpop.f32.mrb[0].mxu0
  %v4181 = vadd.f32 0.0, %v4180
  %v4182 = vpop.f32.mrb[0].mxu0
  %4183 = vmatprep.mubr.bf16.mxu0 %v2675
  %4184 = vmatmul.mubr.bf16.gmra.mrb[0].mxu0 %v2674
  %v4185 = vpop.f32.mrb[0].mxu0
  %v4186 = vadd.f32 0.0, %v4185
  %v4187 = vpop.f32.mrb[0].mxu0
  %v4188 = vpop.f32.mrb[0].mxu0
  %v4189 = vadd.f32 0.0, %v4188
  %v4190 = vpop.f32.mrb[0].mxu0
  %4191 = vmatprep.mubr.bf16.mxu0 %v2690
  %4192 = vmatmul.mubr.bf16.gmra.mrb[0].mxu0 %v2689
  %v4193 = vpop.f32.mrb[0].mxu0
  %v4194 = vadd.f32 0.0, %v4193
  %v4195 = vpop.f32.mrb[0].mxu0
  %v4196 = vpop.f32.mrb[0].mxu0
  %v4197 = vadd.f32 0.0, %v4196
  %v4198 = vpop.f32.mrb[0].mxu0
  %4199 = vmatprep.mubr.bf16.mxu0 %v2705
  %4200 = vmatmul.mubr.bf16.gmra.mrb[0].mxu0 %v2704
  %v4201 = vpop.f32.mrb[0].mxu0
  %v4202 = vadd.f32 0.0, %v4201
  %v4203 = vpop.f32.mrb[0].mxu0
  %v4204 = vpop.f32.mrb[0].mxu0
  %v4205 = vadd.f32 0.0, %v4204
  %v4206 = vpop.f32.mrb[0].mxu0
  %4207 = vdwg.mxu0
  %4208 = vmatprep.subr.bf16.mxu0 0
  %4209 = vmatpush1.bf16.msra.mxu0 %v3695
  %4210 = vmatprep.subr.bf16.mxu0 0
  %4211 = vmatpush1.bf16.msra.mxu0 %v3696
  %4212 = vmatprep.subr.bf16.mxu0 0
  %4213 = vmatpush1.bf16.msra.mxu0 %v3697
  %4214 = vmatprep.subr.bf16.mxu0 0
  %4215 = vmatpush1.bf16.msra.mxu0 %v3698
  %4216 = vmatprep.subr.bf16.mxu0 0
  %4217 = vmatpush1.bf16.msra.mxu0 %v3699
  %4218 = vmatprep.subr.bf16.mxu0 0
  %4219 = vmatpush1.bf16.msra.mxu0 %v3700
  %4220 = vmatprep.subr.bf16.mxu0 0
  %4221 = vmatpush1.bf16.msra.mxu0 %v3701
  %4222 = vmatprep.subr.bf16.mxu0 0
  %4223 = vmatpush1.bf16.msra.mxu0 %v3702
  %4224 = vmatprep.subr.bf16.mxu0 0
  %4225 = vmatpush1.bf16.msra.mxu0 %v3703
  %4226 = vmatprep.subr.bf16.mxu0 0
  %4227 = vmatpush1.bf16.msra.mxu0 %v3704
  %4228 = vmatprep.subr.bf16.mxu0 0
  %4229 = vmatpush1.bf16.msra.mxu0 %v3705
  %4230 = vmatprep.subr.bf16.mxu0 0
  %4231 = vmatpush1.bf16.msra.mxu0 %v3706
  %4232 = vmatprep.subr.bf16.mxu0 0
  %4233 = vmatpush1.bf16.msra.mxu0 %v3707
  %4234 = vmatprep.subr.bf16.mxu0 0
  %4235 = vmatpush1.bf16.msra.mxu0 %v3708
  %4236 = vmatprep.subr.bf16.mxu0 0
  %4237 = vmatpush1.bf16.msra.mxu0 %v3709
  %4238 = vmatprep.subr.bf16.mxu0 0
  %4239 = vmatpush1.bf16.msra.mxu0 %v3710
  %4240 = vmatprep.mubr.bf16.mxu0 %v2242
  %4241 = vmatmul.mubr.bf16.gmra.mrb[0].mxu0 %v2241
  %v4242 = vpop.f32.mrb[0].mxu0
  %v4243 = vadd.f32 %v3954, %v4242
  %v4244 = vpop.f32.mrb[0].mxu0
  %v4245 = vpop.f32.mrb[0].mxu0
  %v4246 = vadd.f32 %v3957, %v4245
  %v4247 = vpop.f32.mrb[0].mxu0
  %4248 = vmatprep.mubr.bf16.mxu0 %v2257
  %4249 = vmatmul.mubr.bf16.gmra.mrb[0].mxu0 %v2256
  %v4250 = vpop.f32.mrb[0].mxu0
  %v4251 = vadd.f32 %v3962, %v4250
  %v4252 = vpop.f32.mrb[0].mxu0
  %v4253 = vpop.f32.mrb[0].mxu0
  %v4254 = vadd.f32 %v3965, %v4253
  %v4255 = vpop.f32.mrb[0].mxu0
  %4256 = vmatprep.mubr.bf16.mxu0 %v2272
  %4257 = vmatmul.mubr.bf16.gmra.mrb[0].mxu0 %v2271
  %v4258 = vpop.f32.mrb[0].mxu0
  %v4259 = vadd.f32 %v3970, %v4258
  %v4260 = vpop.f32.mrb[0].mxu0
  %v4261 = vpop.f32.mrb[0].mxu0
  %v4262 = vadd.f32 %v3973, %v4261
  %v4263 = vpop.f32.mrb[0].mxu0
  %4264 = vmatprep.mubr.bf16.mxu0 %v2287
  %4265 = vmatmul.mubr.bf16.gmra.mrb[0].mxu0 %v2286
  %v4266 = vpop.f32.mrb[0].mxu0
  %v4267 = vadd.f32 %v3978, %v4266
  %v4268 = vpop.f32.mrb[0].mxu0
  %v4269 = vpop.f32.mrb[0].mxu0
  %v4270 = vadd.f32 %v3981, %v4269
  %v4271 = vpop.f32.mrb[0].mxu0
  %4272 = vmatprep.mubr.bf16.mxu0 %v2302
  %4273 = vmatmul.mubr.bf16.gmra.mrb[0].mxu0 %v2301
  %v4274 = vpop.f32.mrb[0].mxu0
  %v4275 = vadd.f32 %v3986, %v4274
  %v4276 = vpop.f32.mrb[0].mxu0
  %v4277 = vpop.f32.mrb[0].mxu0
  %v4278 = vadd.f32 %v3989, %v4277
  %v4279 = vpop.f32.mrb[0].mxu0
  %4280 = vmatprep.mubr.bf16.mxu0 %v2317
  %4281 = vmatmul.mubr.bf16.gmra.mrb[0].mxu0 %v2316
  %v4282 = vpop.f32.mrb[0].mxu0
  %v4283 = vadd.f32 %v3994, %v4282
  %v4284 = vpop.f32.mrb[0].mxu0
  %v4285 = vpop.f32.mrb[0].mxu0
  %v4286 = vadd.f32 %v3997, %v4285
  %v4287 = vpop.f32.mrb[0].mxu0
  %4288 = vmatprep.mubr.bf16.mxu0 %v2332
  %4289 = vmatmul.mubr.bf16.gmra.mrb[0].mxu0 %v2331
  %v4290 = vpop.f32.mrb[0].mxu0
  %v4291 = vadd.f32 %v4002, %v4290
  %v4292 = vpop.f32.mrb[0].mxu0
  %v4293 = vpop.f32.mrb[0].mxu0
  %v4294 = vadd.f32 %v4005, %v4293
  %v4295 = vpop.f32.mrb[0].mxu0
  %4296 = vmatprep.mubr.bf16.mxu0 %v2347
  %4297 = vmatmul.mubr.bf16.gmra.mrb[0].mxu0 %v2346
  %v4298 = vpop.f32.mrb[0].mxu0
  %v4299 = vadd.f32 %v4010, %v4298
  %v4300 = vpop.f32.mrb[0].mxu0
  %v4301 = vpop.f32.mrb[0].mxu0
  %v4302 = vadd.f32 %v4013, %v4301
  %v4303 = vpop.f32.mrb[0].mxu0
  %4304 = vmatprep.mubr.bf16.mxu0 %v2362
  %4305 = vmatmul.mubr.bf16.gmra.mrb[0].mxu0 %v2361
  %v4306 = vpop.f32.mrb[0].mxu0
  %v4307 = vadd.f32 %v4018, %v4306
  %v4308 = vpop.f32.mrb[0].mxu0
  %v4309 = vpop.f32.mrb[0].mxu0
  %v4310 = vadd.f32 %v4021, %v4309
  %v4311 = vpop.f32.mrb[0].mxu0
  %4312 = vmatprep.mubr.bf16.mxu0 %v2377
  %4313 = vmatmul.mubr.bf16.gmra.mrb[0].mxu0 %v2376
  %v4314 = vpop.f32.mrb[0].mxu0
  %v4315 = vadd.f32 %v4026, %v4314
  %v4316 = vpop.f32.mrb[0].mxu0
  %v4317 = vpop.f32.mrb[0].mxu0
  %v4318 = vadd.f32 %v4029, %v4317
  %v4319 = vpop.f32.mrb[0].mxu0
  %4320 = vmatprep.mubr.bf16.mxu0 %v2392
  %4321 = vmatmul.mubr.bf16.gmra.mrb[0].mxu0 %v2391
  %v4322 = vpop.f32.mrb[0].mxu0
  %v4323 = vadd.f32 %v4034, %v4322
  %v4324 = vpop.f32.mrb[0].mxu0
  %v4325 = vpop.f32.mrb[0].mxu0
  %v4326 = vadd.f32 %v4037, %v4325
  %v4327 = vpop.f32.mrb[0].mxu0
  %4328 = vmatprep.mubr.bf16.mxu0 %v2407
  %4329 = vmatmul.mubr.bf16.gmra.mrb[0].mxu0 %v2406
  %v4330 = vpop.f32.mrb[0].mxu0
  %v4331 = vadd.f32 %v4042, %v4330
  %v4332 = vpop.f32.mrb[0].mxu0
  %v4333 = vpop.f32.mrb[0].mxu0
  %v4334 = vadd.f32 %v4045, %v4333
  %v4335 = vpop.f32.mrb[0].mxu0
  %4336 = vmatprep.mubr.bf16.mxu0 %v2422
  %4337 = vmatmul.mubr.bf16.gmra.mrb[0].mxu0 %v2421
  %v4338 = vpop.f32.mrb[0].mxu0
  %v4339 = vadd.f32 %v4050, %v4338
  %v4340 = vpop.f32.mrb[0].mxu0
  %v4341 = vpop.f32.mrb[0].mxu0
  %v4342 = vadd.f32 %v4053, %v4341
  %v4343 = vpop.f32.mrb[0].mxu0
  %4344 = vmatprep.mubr.bf16.mxu0 %v2437
  %4345 = vmatmul.mubr.bf16.gmra.mrb[0].mxu0 %v2436
  %v4346 = vpop.f32.mrb[0].mxu0
  %v4347 = vadd.f32 %v4058, %v4346
  %v4348 = vpop.f32.mrb[0].mxu0
  %v4349 = vpop.f32.mrb[0].mxu0
  %v4350 = vadd.f32 %v4061, %v4349
  %v4351 = vpop.f32.mrb[0].mxu0
  %4352 = vmatprep.mubr.bf16.mxu0 %v2452
  %4353 = vmatmul.mubr.bf16.gmra.mrb[0].mxu0 %v2451
  %v4354 = vpop.f32.mrb[0].mxu0
  %v4355 = vadd.f32 %v4066, %v4354
  %v4356 = vpop.f32.mrb[0].mxu0
  %v4357 = vpop.f32.mrb[0].mxu0
  %v4358 = vadd.f32 %v4069, %v4357
  %v4359 = vpop.f32.mrb[0].mxu0
  %4360 = vmatprep.mubr.bf16.mxu0 %v2467
  %4361 = vmatmul.mubr.bf16.gmra.mrb[0].mxu0 %v2466
  %v4362 = vpop.f32.mrb[0].mxu0
  %v4363 = vadd.f32 %v4074, %v4362
  %v4364 = vpop.f32.mrb[0].mxu0
  %v4365 = vpop.f32.mrb[0].mxu0
  %v4366 = vadd.f32 %v4077, %v4365
  %v4367 = vpop.f32.mrb[0].mxu0
  %4368 = vmatprep.mubr.bf16.mxu0 %v2482
  %4369 = vmatmul.mubr.bf16.gmra.mrb[0].mxu0 %v2481
  %v4370 = vpop.f32.mrb[0].mxu0
  %v4371 = vadd.f32 %v4082, %v4370
  %v4372 = vpop.f32.mrb[0].mxu0
  %v4373 = vpop.f32.mrb[0].mxu0
  %v4374 = vadd.f32 %v4085, %v4373
  %v4375 = vpop.f32.mrb[0].mxu0
  %4376 = vmatprep.mubr.bf16.mxu0 %v2497
  %4377 = vmatmul.mubr.bf16.gmra.mrb[0].mxu0 %v2496
  %v4378 = vpop.f32.mrb[0].mxu0
  %v4379 = vadd.f32 %v4090, %v4378
  %v4380 = vpop.f32.mrb[0].mxu0
  %v4381 = vpop.f32.mrb[0].mxu0
  %v4382 = vadd.f32 %v4093, %v4381
  %v4383 = vpop.f32.mrb[0].mxu0
  %4384 = vmatprep.mubr.bf16.mxu0 %v2512
  %4385 = vmatmul.mubr.bf16.gmra.mrb[0].mxu0 %v2511
  %v4386 = vpop.f32.mrb[0].mxu0
  %v4387 = vadd.f32 %v4098, %v4386
  %v4388 = vpop.f32.mrb[0].mxu0
  %v4389 = vpop.f32.mrb[0].mxu0
  %v4390 = vadd.f32 %v4101, %v4389
  %v4391 = vpop.f32.mrb[0].mxu0
  %4392 = vmatprep.mubr.bf16.mxu0 %v2527
  %4393 = vmatmul.mubr.bf16.gmra.mrb[0].mxu0 %v2526
  %v4394 = vpop.f32.mrb[0].mxu0
  %v4395 = vadd.f32 %v4106, %v4394
  %v4396 = vpop.f32.mrb[0].mxu0
  %v4397 = vpop.f32.mrb[0].mxu0
  %v4398 = vadd.f32 %v4109, %v4397
  %v4399 = vpop.f32.mrb[0].mxu0
  %4400 = vmatprep.mubr.bf16.mxu0 %v2542
  %4401 = vmatmul.mubr.bf16.gmra.mrb[0].mxu0 %v2541
  %v4402 = vpop.f32.mrb[0].mxu0
  %v4403 = vadd.f32 %v4114, %v4402
  %v4404 = vpop.f32.mrb[0].mxu0
  %v4405 = vpop.f32.mrb[0].mxu0
  %v4406 = vadd.f32 %v4117, %v4405
  %v4407 = vpop.f32.mrb[0].mxu0
  %4408 = vmatprep.mubr.bf16.mxu0 %v2557
  %4409 = vmatmul.mubr.bf16.gmra.mrb[0].mxu0 %v2556
  %v4410 = vpop.f32.mrb[0].mxu0
  %v4411 = vadd.f32 %v4122, %v4410
  %v4412 = vpop.f32.mrb[0].mxu0
  %v4413 = vpop.f32.mrb[0].mxu0
  %v4414 = vadd.f32 %v4125, %v4413
  %v4415 = vpop.f32.mrb[0].mxu0
  %4416 = vmatprep.mubr.bf16.mxu0 %v2572
  %4417 = vmatmul.mubr.bf16.gmra.mrb[0].mxu0 %v2571
  %v4418 = vpop.f32.mrb[0].mxu0
  %v4419 = vadd.f32 %v4130, %v4418
  %v4420 = vpop.f32.mrb[0].mxu0
  %v4421 = vpop.f32.mrb[0].mxu0
  %v4422 = vadd.f32 %v4133, %v4421
  %v4423 = vpop.f32.mrb[0].mxu0
  %4424 = vmatprep.mubr.bf16.mxu0 %v2587
  %4425 = vmatmul.mubr.bf16.gmra.mrb[0].mxu0 %v2586
  %v4426 = vpop.f32.mrb[0].mxu0
  %v4427 = vadd.f32 %v4138, %v4426
  %v4428 = vpop.f32.mrb[0].mxu0
  %v4429 = vpop.f32.mrb[0].mxu0
  %v4430 = vadd.f32 %v4141, %v4429
  %v4431 = vpop.f32.mrb[0].mxu0
  %4432 = vmatprep.mubr.bf16.mxu0 %v2602
  %4433 = vmatmul.mubr.bf16.gmra.mrb[0].mxu0 %v2601
  %v4434 = vpop.f32.mrb[0].mxu0
  %v4435 = vadd.f32 %v4146, %v4434
  %v4436 = vpop.f32.mrb[0].mxu0
  %v4437 = vpop.f32.mrb[0].mxu0
  %v4438 = vadd.f32 %v4149, %v4437
  %v4439 = vpop.f32.mrb[0].mxu0
  %4440 = vmatprep.mubr.bf16.mxu0 %v2617
  %4441 = vmatmul.mubr.bf16.gmra.mrb[0].mxu0 %v2616
  %v4442 = vpop.f32.mrb[0].mxu0
  %v4443 = vadd.f32 %v4154, %v4442
  %v4444 = vpop.f32.mrb[0].mxu0
  %v4445 = vpop.f32.mrb[0].mxu0
  %v4446 = vadd.f32 %v4157, %v4445
  %v4447 = vpop.f32.mrb[0].mxu0
  %4448 = vmatprep.mubr.bf16.mxu0 %v2632
  %4449 = vmatmul.mubr.bf16.gmra.mrb[0].mxu0 %v2631
  %v4450 = vpop.f32.mrb[0].mxu0
  %v4451 = vadd.f32 %v4162, %v4450
  %v4452 = vpop.f32.mrb[0].mxu0
  %v4453 = vpop.f32.mrb[0].mxu0
  %v4454 = vadd.f32 %v4165, %v4453
  %v4455 = vpop.f32.mrb[0].mxu0
  %4456 = vmatprep.mubr.bf16.mxu0 %v2647
  %4457 = vmatmul.mubr.bf16.gmra.mrb[0].mxu0 %v2646
  %v4458 = vpop.f32.mrb[0].mxu0
  %v4459 = vadd.f32 %v4170, %v4458
  %v4460 = vpop.f32.mrb[0].mxu0
  %v4461 = vpop.f32.mrb[0].mxu0
  %v4462 = vadd.f32 %v4173, %v4461
  %v4463 = vpop.f32.mrb[0].mxu0
  %4464 = vmatprep.mubr.bf16.mxu0 %v2662
  %4465 = vmatmul.mubr.bf16.gmra.mrb[0].mxu0 %v2661
  %v4466 = vpop.f32.mrb[0].mxu0
  %v4467 = vadd.f32 %v4178, %v4466
  %v4468 = vpop.f32.mrb[0].mxu0
  %v4469 = vpop.f32.mrb[0].mxu0
  %v4470 = vadd.f32 %v4181, %v4469
  %v4471 = vpop.f32.mrb[0].mxu0
  %4472 = vmatprep.mubr.bf16.mxu0 %v2677
  %4473 = vmatmul.mubr.bf16.gmra.mrb[0].mxu0 %v2676
  %v4474 = vpop.f32.mrb[0].mxu0
  %v4475 = vadd.f32 %v4186, %v4474
  %v4476 = vpop.f32.mrb[0].mxu0
  %v4477 = vpop.f32.mrb[0].mxu0
  %v4478 = vadd.f32 %v4189, %v4477
  %v4479 = vpop.f32.mrb[0].mxu0
  %4480 = vmatprep.mubr.bf16.mxu0 %v2692
  %4481 = vmatmul.mubr.bf16.gmra.mrb[0].mxu0 %v2691
  %v4482 = vpop.f32.mrb[0].mxu0
  %v4483 = vadd.f32 %v4194, %v4482
  %v4484 = vpop.f32.mrb[0].mxu0
  %v4485 = vpop.f32.mrb[0].mxu0
  %v4486 = vadd.f32 %v4197, %v4485
  %v4487 = vpop.f32.mrb[0].mxu0
  %4488 = vmatprep.mubr.bf16.mxu0 %v2707
  %4489 = vmatmul.mubr.bf16.gmra.mrb[0].mxu0 %v2706
  %v4490 = vpop.f32.mrb[0].mxu0
  %v4491 = vadd.f32 %v4202, %v4490
  %v4492 = vpop.f32.mrb[0].mxu0
  %v4493 = vpop.f32.mrb[0].mxu0
  %v4494 = vadd.f32 %v4205, %v4493
  %v4495 = vpop.f32.mrb[0].mxu0
  %4496 = vdwg.mxu0
  %4497 = vmatprep.subr.bf16.mxu0 0
  %4498 = vmatpush1.bf16.msra.mxu0 %v3711
  %4499 = vmatprep.subr.bf16.mxu0 0
  %4500 = vmatpush1.bf16.msra.mxu0 %v3712
  %4501 = vmatprep.subr.bf16.mxu0 0
  %4502 = vmatpush1.bf16.msra.mxu0 %v3713
  %4503 = vmatprep.subr.bf16.mxu0 0
  %4504 = vmatpush1.bf16.msra.mxu0 %v3714
  %4505 = vmatprep.subr.bf16.mxu0 0
  %4506 = vmatpush1.bf16.msra.mxu0 %v3715
  %4507 = vmatprep.subr.bf16.mxu0 0
  %4508 = vmatpush1.bf16.msra.mxu0 %v3716
  %4509 = vmatprep.subr.bf16.mxu0 0
  %4510 = vmatpush1.bf16.msra.mxu0 %v3717
  %4511 = vmatprep.subr.bf16.mxu0 0
  %4512 = vmatpush1.bf16.msra.mxu0 %v3718
  %4513 = vmatprep.subr.bf16.mxu0 0
  %4514 = vmatpush1.bf16.msra.mxu0 %v3719
  %4515 = vmatprep.subr.bf16.mxu0 0
  %4516 = vmatpush1.bf16.msra.mxu0 %v3720
  %4517 = vmatprep.subr.bf16.mxu0 0
  %4518 = vmatpush1.bf16.msra.mxu0 %v3721
  %4519 = vmatprep.subr.bf16.mxu0 0
  %4520 = vmatpush1.bf16.msra.mxu0 %v3722
  %4521 = vmatprep.subr.bf16.mxu0 0
  %4522 = vmatpush1.bf16.msra.mxu0 %v3723
  %4523 = vmatprep.subr.bf16.mxu0 0
  %4524 = vmatpush1.bf16.msra.mxu0 %v3724
  %4525 = vmatprep.subr.bf16.mxu0 0
  %4526 = vmatpush1.bf16.msra.mxu0 %v3725
  %4527 = vmatprep.subr.bf16.mxu0 0
  %4528 = vmatpush1.bf16.msra.mxu0 %v3726
  %4529 = vmatprep.mubr.bf16.mxu0 %v2244
  %4530 = vmatmul.mubr.bf16.gmra.mrb[0].mxu0 %v2243
  %v4531 = vpop.f32.mrb[0].mxu0
  %v4532 = vadd.f32 %v4243, %v4531
  %v4533 = vpop.f32.mrb[0].mxu0
  %v4534 = vpop.f32.mrb[0].mxu0
  %v4535 = vadd.f32 %v4246, %v4534
  %v4536 = vpop.f32.mrb[0].mxu0
  %4537 = vmatprep.mubr.bf16.mxu0 %v2259
  %4538 = vmatmul.mubr.bf16.gmra.mrb[0].mxu0 %v2258
  %v4539 = vpop.f32.mrb[0].mxu0
  %v4540 = vadd.f32 %v4251, %v4539
  %v4541 = vpop.f32.mrb[0].mxu0
  %v4542 = vpop.f32.mrb[0].mxu0
  %v4543 = vadd.f32 %v4254, %v4542
  %v4544 = vpop.f32.mrb[0].mxu0
  %4545 = vmatprep.mubr.bf16.mxu0 %v2274
  %4546 = vmatmul.mubr.bf16.gmra.mrb[0].mxu0 %v2273
  %v4547 = vpop.f32.mrb[0].mxu0
  %v4548 = vadd.f32 %v4259, %v4547
  %v4549 = vpop.f32.mrb[0].mxu0
  %v4550 = vpop.f32.mrb[0].mxu0
  %v4551 = vadd.f32 %v4262, %v4550
  %v4552 = vpop.f32.mrb[0].mxu0
  %4553 = vmatprep.mubr.bf16.mxu0 %v2289
  %4554 = vmatmul.mubr.bf16.gmra.mrb[0].mxu0 %v2288
  %v4555 = vpop.f32.mrb[0].mxu0
  %v4556 = vadd.f32 %v4267, %v4555
  %v4557 = vpop.f32.mrb[0].mxu0
  %v4558 = vpop.f32.mrb[0].mxu0
  %v4559 = vadd.f32 %v4270, %v4558
  %v4560 = vpop.f32.mrb[0].mxu0
  %4561 = vmatprep.mubr.bf16.mxu0 %v2304
  %4562 = vmatmul.mubr.bf16.gmra.mrb[0].mxu0 %v2303
  %v4563 = vpop.f32.mrb[0].mxu0
  %v4564 = vadd.f32 %v4275, %v4563
  %v4565 = vpop.f32.mrb[0].mxu0
  %v4566 = vpop.f32.mrb[0].mxu0
  %v4567 = vadd.f32 %v4278, %v4566
  %v4568 = vpop.f32.mrb[0].mxu0
  %4569 = vmatprep.mubr.bf16.mxu0 %v2319
  %4570 = vmatmul.mubr.bf16.gmra.mrb[0].mxu0 %v2318
  %v4571 = vpop.f32.mrb[0].mxu0
  %v4572 = vadd.f32 %v4283, %v4571
  %v4573 = vpop.f32.mrb[0].mxu0
  %v4574 = vpop.f32.mrb[0].mxu0
  %v4575 = vadd.f32 %v4286, %v4574
  %v4576 = vpop.f32.mrb[0].mxu0
  %4577 = vmatprep.mubr.bf16.mxu0 %v2334
  %4578 = vmatmul.mubr.bf16.gmra.mrb[0].mxu0 %v2333
  %v4579 = vpop.f32.mrb[0].mxu0
  %v4580 = vadd.f32 %v4291, %v4579
  %v4581 = vpop.f32.mrb[0].mxu0
  %v4582 = vpop.f32.mrb[0].mxu0
  %v4583 = vadd.f32 %v4294, %v4582
  %v4584 = vpop.f32.mrb[0].mxu0
  %4585 = vmatprep.mubr.bf16.mxu0 %v2349
  %4586 = vmatmul.mubr.bf16.gmra.mrb[0].mxu0 %v2348
  %v4587 = vpop.f32.mrb[0].mxu0
  %v4588 = vadd.f32 %v4299, %v4587
  %v4589 = vpop.f32.mrb[0].mxu0
  %v4590 = vpop.f32.mrb[0].mxu0
  %v4591 = vadd.f32 %v4302, %v4590
  %v4592 = vpop.f32.mrb[0].mxu0
  %4593 = vmatprep.mubr.bf16.mxu0 %v2364
  %4594 = vmatmul.mubr.bf16.gmra.mrb[0].mxu0 %v2363
  %v4595 = vpop.f32.mrb[0].mxu0
  %v4596 = vadd.f32 %v4307, %v4595
  %v4597 = vpop.f32.mrb[0].mxu0
  %v4598 = vpop.f32.mrb[0].mxu0
  %v4599 = vadd.f32 %v4310, %v4598
  %v4600 = vpop.f32.mrb[0].mxu0
  %4601 = vmatprep.mubr.bf16.mxu0 %v2379
  %4602 = vmatmul.mubr.bf16.gmra.mrb[0].mxu0 %v2378
  %v4603 = vpop.f32.mrb[0].mxu0
  %v4604 = vadd.f32 %v4315, %v4603
  %v4605 = vpop.f32.mrb[0].mxu0
  %v4606 = vpop.f32.mrb[0].mxu0
  %v4607 = vadd.f32 %v4318, %v4606
  %v4608 = vpop.f32.mrb[0].mxu0
  %4609 = vmatprep.mubr.bf16.mxu0 %v2394
  %4610 = vmatmul.mubr.bf16.gmra.mrb[0].mxu0 %v2393
  %v4611 = vpop.f32.mrb[0].mxu0
  %v4612 = vadd.f32 %v4323, %v4611
  %v4613 = vpop.f32.mrb[0].mxu0
  %v4614 = vpop.f32.mrb[0].mxu0
  %v4615 = vadd.f32 %v4326, %v4614
  %v4616 = vpop.f32.mrb[0].mxu0
  %4617 = vmatprep.mubr.bf16.mxu0 %v2409
  %4618 = vmatmul.mubr.bf16.gmra.mrb[0].mxu0 %v2408
  %v4619 = vpop.f32.mrb[0].mxu0
  %v4620 = vadd.f32 %v4331, %v4619
  %v4621 = vpop.f32.mrb[0].mxu0
  %v4622 = vpop.f32.mrb[0].mxu0
  %v4623 = vadd.f32 %v4334, %v4622
  %v4624 = vpop.f32.mrb[0].mxu0
  %4625 = vmatprep.mubr.bf16.mxu0 %v2424
  %4626 = vmatmul.mubr.bf16.gmra.mrb[0].mxu0 %v2423
  %v4627 = vpop.f32.mrb[0].mxu0
  %v4628 = vadd.f32 %v4339, %v4627
  %v4629 = vpop.f32.mrb[0].mxu0
  %v4630 = vpop.f32.mrb[0].mxu0
  %v4631 = vadd.f32 %v4342, %v4630
  %v4632 = vpop.f32.mrb[0].mxu0
  %4633 = vmatprep.mubr.bf16.mxu0 %v2439
  %4634 = vmatmul.mubr.bf16.gmra.mrb[0].mxu0 %v2438
  %v4635 = vpop.f32.mrb[0].mxu0
  %v4636 = vadd.f32 %v4347, %v4635
  %v4637 = vpop.f32.mrb[0].mxu0
  %v4638 = vpop.f32.mrb[0].mxu0
  %v4639 = vadd.f32 %v4350, %v4638
  %v4640 = vpop.f32.mrb[0].mxu0
  %4641 = vmatprep.mubr.bf16.mxu0 %v2454
  %4642 = vmatmul.mubr.bf16.gmra.mrb[0].mxu0 %v2453
  %v4643 = vpop.f32.mrb[0].mxu0
  %v4644 = vadd.f32 %v4355, %v4643
  %v4645 = vpop.f32.mrb[0].mxu0
  %v4646 = vpop.f32.mrb[0].mxu0
  %v4647 = vadd.f32 %v4358, %v4646
  %v4648 = vpop.f32.mrb[0].mxu0
  %4649 = vmatprep.mubr.bf16.mxu0 %v2469
  %4650 = vmatmul.mubr.bf16.gmra.mrb[0].mxu0 %v2468
  %v4651 = vpop.f32.mrb[0].mxu0
  %v4652 = vadd.f32 %v4363, %v4651
  %v4653 = vpop.f32.mrb[0].mxu0
  %v4654 = vpop.f32.mrb[0].mxu0
  %v4655 = vadd.f32 %v4366, %v4654
  %v4656 = vpop.f32.mrb[0].mxu0
  %4657 = vmatprep.mubr.bf16.mxu0 %v2484
  %4658 = vmatmul.mubr.bf16.gmra.mrb[0].mxu0 %v2483
  %v4659 = vpop.f32.mrb[0].mxu0
  %v4660 = vadd.f32 %v4371, %v4659
  %v4661 = vpop.f32.mrb[0].mxu0
  %v4662 = vpop.f32.mrb[0].mxu0
  %v4663 = vadd.f32 %v4374, %v4662
  %v4664 = vpop.f32.mrb[0].mxu0
  %4665 = vmatprep.mubr.bf16.mxu0 %v2499
  %4666 = vmatmul.mubr.bf16.gmra.mrb[0].mxu0 %v2498
  %v4667 = vpop.f32.mrb[0].mxu0
  %v4668 = vadd.f32 %v4379, %v4667
  %v4669 = vpop.f32.mrb[0].mxu0
  %v4670 = vpop.f32.mrb[0].mxu0
  %v4671 = vadd.f32 %v4382, %v4670
  %v4672 = vpop.f32.mrb[0].mxu0
  %4673 = vmatprep.mubr.bf16.mxu0 %v2514
  %4674 = vmatmul.mubr.bf16.gmra.mrb[0].mxu0 %v2513
  %v4675 = vpop.f32.mrb[0].mxu0
  %v4676 = vadd.f32 %v4387, %v4675
  %v4677 = vpop.f32.mrb[0].mxu0
  %v4678 = vpop.f32.mrb[0].mxu0
  %v4679 = vadd.f32 %v4390, %v4678
  %v4680 = vpop.f32.mrb[0].mxu0
  %4681 = vmatprep.mubr.bf16.mxu0 %v2529
  %4682 = vmatmul.mubr.bf16.gmra.mrb[0].mxu0 %v2528
  %v4683 = vpop.f32.mrb[0].mxu0
  %v4684 = vadd.f32 %v4395, %v4683
  %v4685 = vpop.f32.mrb[0].mxu0
  %v4686 = vpop.f32.mrb[0].mxu0
  %v4687 = vadd.f32 %v4398, %v4686
  %v4688 = vpop.f32.mrb[0].mxu0
  %4689 = vmatprep.mubr.bf16.mxu0 %v2544
  %4690 = vmatmul.mubr.bf16.gmra.mrb[0].mxu0 %v2543
  %v4691 = vpop.f32.mrb[0].mxu0
  %v4692 = vadd.f32 %v4403, %v4691
  %v4693 = vpop.f32.mrb[0].mxu0
  %v4694 = vpop.f32.mrb[0].mxu0
  %v4695 = vadd.f32 %v4406, %v4694
  %v4696 = vpop.f32.mrb[0].mxu0
  %4697 = vmatprep.mubr.bf16.mxu0 %v2559
  %4698 = vmatmul.mubr.bf16.gmra.mrb[0].mxu0 %v2558
  %v4699 = vpop.f32.mrb[0].mxu0
  %v4700 = vadd.f32 %v4411, %v4699
  %v4701 = vpop.f32.mrb[0].mxu0
  %v4702 = vpop.f32.mrb[0].mxu0
  %v4703 = vadd.f32 %v4414, %v4702
  %v4704 = vpop.f32.mrb[0].mxu0
  %4705 = vmatprep.mubr.bf16.mxu0 %v2574
  %4706 = vmatmul.mubr.bf16.gmra.mrb[0].mxu0 %v2573
  %v4707 = vpop.f32.mrb[0].mxu0
  %v4708 = vadd.f32 %v4419, %v4707
  %v4709 = vpop.f32.mrb[0].mxu0
  %v4710 = vpop.f32.mrb[0].mxu0
  %v4711 = vadd.f32 %v4422, %v4710
  %v4712 = vpop.f32.mrb[0].mxu0
  %4713 = vmatprep.mubr.bf16.mxu0 %v2589
  %4714 = vmatmul.mubr.bf16.gmra.mrb[0].mxu0 %v2588
  %v4715 = vpop.f32.mrb[0].mxu0
  %v4716 = vadd.f32 %v4427, %v4715
  %v4717 = vpop.f32.mrb[0].mxu0
  %v4718 = vpop.f32.mrb[0].mxu0
  %v4719 = vadd.f32 %v4430, %v4718
  %v4720 = vpop.f32.mrb[0].mxu0
  %4721 = vmatprep.mubr.bf16.mxu0 %v2604
  %4722 = vmatmul.mubr.bf16.gmra.mrb[0].mxu0 %v2603
  %v4723 = vpop.f32.mrb[0].mxu0
  %v4724 = vadd.f32 %v4435, %v4723
  %v4725 = vpop.f32.mrb[0].mxu0
  %v4726 = vpop.f32.mrb[0].mxu0
  %v4727 = vadd.f32 %v4438, %v4726
  %v4728 = vpop.f32.mrb[0].mxu0
  %4729 = vmatprep.mubr.bf16.mxu0 %v2619
  %4730 = vmatmul.mubr.bf16.gmra.mrb[0].mxu0 %v2618
  %v4731 = vpop.f32.mrb[0].mxu0
  %v4732 = vadd.f32 %v4443, %v4731
  %v4733 = vpop.f32.mrb[0].mxu0
  %v4734 = vpop.f32.mrb[0].mxu0
  %v4735 = vadd.f32 %v4446, %v4734
  %v4736 = vpop.f32.mrb[0].mxu0
  %4737 = vmatprep.mubr.bf16.mxu0 %v2634
  %4738 = vmatmul.mubr.bf16.gmra.mrb[0].mxu0 %v2633
  %v4739 = vpop.f32.mrb[0].mxu0
  %v4740 = vadd.f32 %v4451, %v4739
  %v4741 = vpop.f32.mrb[0].mxu0
  %v4742 = vpop.f32.mrb[0].mxu0
  %v4743 = vadd.f32 %v4454, %v4742
  %v4744 = vpop.f32.mrb[0].mxu0
  %4745 = vmatprep.mubr.bf16.mxu0 %v2649
  %4746 = vmatmul.mubr.bf16.gmra.mrb[0].mxu0 %v2648
  %v4747 = vpop.f32.mrb[0].mxu0
  %v4748 = vadd.f32 %v4459, %v4747
  %v4749 = vpop.f32.mrb[0].mxu0
  %v4750 = vpop.f32.mrb[0].mxu0
  %v4751 = vadd.f32 %v4462, %v4750
  %v4752 = vpop.f32.mrb[0].mxu0
  %4753 = vmatprep.mubr.bf16.mxu0 %v2664
  %4754 = vmatmul.mubr.bf16.gmra.mrb[0].mxu0 %v2663
  %v4755 = vpop.f32.mrb[0].mxu0
  %v4756 = vadd.f32 %v4467, %v4755
  %v4757 = vpop.f32.mrb[0].mxu0
  %v4758 = vpop.f32.mrb[0].mxu0
  %v4759 = vadd.f32 %v4470, %v4758
  %v4760 = vpop.f32.mrb[0].mxu0
  %4761 = vmatprep.mubr.bf16.mxu0 %v2679
  %4762 = vmatmul.mubr.bf16.gmra.mrb[0].mxu0 %v2678
  %v4763 = vpop.f32.mrb[0].mxu0
  %v4764 = vadd.f32 %v4475, %v4763
  %v4765 = vpop.f32.mrb[0].mxu0
  %v4766 = vpop.f32.mrb[0].mxu0
  %v4767 = vadd.f32 %v4478, %v4766
  %v4768 = vpop.f32.mrb[0].mxu0
  %4769 = vmatprep.mubr.bf16.mxu0 %v2694
  %4770 = vmatmul.mubr.bf16.gmra.mrb[0].mxu0 %v2693
  %v4771 = vpop.f32.mrb[0].mxu0
  %v4772 = vadd.f32 %v4483, %v4771
  %v4773 = vpop.f32.mrb[0].mxu0
  %v4774 = vpop.f32.mrb[0].mxu0
  %v4775 = vadd.f32 %v4486, %v4774
  %v4776 = vpop.f32.mrb[0].mxu0
  %4777 = vmatprep.mubr.bf16.mxu0 %v2709
  %4778 = vmatmul.mubr.bf16.gmra.mrb[0].mxu0 %v2708
  %v4779 = vpop.f32.mrb[0].mxu0
  %v4780 = vadd.f32 %v4491, %v4779
  %v4781 = vpop.f32.mrb[0].mxu0
  %v4782 = vpop.f32.mrb[0].mxu0
  %v4783 = vadd.f32 %v4494, %v4782
  %v4784 = vpop.f32.mrb[0].mxu0
  %4785 = vdwg.mxu0
  %4786 = vmatprep.subr.bf16.mxu0 0
  %4787 = vmatpush1.bf16.msra.mxu0 %v3727
  %4788 = vmatprep.subr.bf16.mxu0 0
  %4789 = vmatpush1.bf16.msra.mxu0 %v3728
  %4790 = vmatprep.subr.bf16.mxu0 0
  %4791 = vmatpush1.bf16.msra.mxu0 %v3729
  %4792 = vmatprep.subr.bf16.mxu0 0
  %4793 = vmatpush1.bf16.msra.mxu0 %v3730
  %4794 = vmatprep.subr.bf16.mxu0 0
  %4795 = vmatpush1.bf16.msra.mxu0 %v3731
  %4796 = vmatprep.subr.bf16.mxu0 0
  %4797 = vmatpush1.bf16.msra.mxu0 %v3732
  %4798 = vmatprep.subr.bf16.mxu0 0
  %4799 = vmatpush1.bf16.msra.mxu0 %v3733
  %4800 = vmatprep.subr.bf16.mxu0 0
  %4801 = vmatpush1.bf16.msra.mxu0 %v3734
  %4802 = vmatprep.subr.bf16.mxu0 0
  %4803 = vmatpush1.bf16.msra.mxu0 %v3735
  %4804 = vmatprep.subr.bf16.mxu0 0
  %4805 = vmatpush1.bf16.msra.mxu0 %v3736
  %4806 = vmatprep.subr.bf16.mxu0 0
  %4807 = vmatpush1.bf16.msra.mxu0 %v3737
  %4808 = vmatprep.subr.bf16.mxu0 0
  %4809 = vmatpush1.bf16.msra.mxu0 %v3738
  %4810 = vmatprep.subr.bf16.mxu0 0
  %4811 = vmatpush1.bf16.msra.mxu0 %v3739
  %4812 = vmatprep.subr.bf16.mxu0 0
  %4813 = vmatpush1.bf16.msra.mxu0 %v3740
  %4814 = vmatprep.subr.bf16.mxu0 0
  %4815 = vmatpush1.bf16.msra.mxu0 %v3741
  %4816 = vmatprep.subr.bf16.mxu0 0
  %4817 = vmatpush1.bf16.msra.mxu0 %v3742
  %4818 = vmatprep.mubr.bf16.mxu0 %v2246
  %4819 = vmatmul.mubr.bf16.gmra.mrb[0].mxu0 %v2245
  %v4820 = vpop.f32.mrb[0].mxu0
  %v4821 = vadd.f32 %v4532, %v4820
  %v4822 = vpop.f32.mrb[0].mxu0
  %v4823 = vpop.f32.mrb[0].mxu0
  %v4824 = vadd.f32 %v4535, %v4823
  %v4825 = vpop.f32.mrb[0].mxu0
  %4826 = vmatprep.mubr.bf16.mxu0 %v2261
  %4827 = vmatmul.mubr.bf16.gmra.mrb[0].mxu0 %v2260
  %v4828 = vpop.f32.mrb[0].mxu0
  %v4829 = vadd.f32 %v4540, %v4828
  %v4830 = vpop.f32.mrb[0].mxu0
  %v4831 = vpop.f32.mrb[0].mxu0
  %v4832 = vadd.f32 %v4543, %v4831
  %v4833 = vpop.f32.mrb[0].mxu0
  %4834 = vmatprep.mubr.bf16.mxu0 %v2276
  %4835 = vmatmul.mubr.bf16.gmra.mrb[0].mxu0 %v2275
  %v4836 = vpop.f32.mrb[0].mxu0
  %v4837 = vadd.f32 %v4548, %v4836
  %v4838 = vpop.f32.mrb[0].mxu0
  %v4839 = vpop.f32.mrb[0].mxu0
  %v4840 = vadd.f32 %v4551, %v4839
  %v4841 = vpop.f32.mrb[0].mxu0
  %4842 = vmatprep.mubr.bf16.mxu0 %v2291
  %4843 = vmatmul.mubr.bf16.gmra.mrb[0].mxu0 %v2290
  %v4844 = vpop.f32.mrb[0].mxu0
  %v4845 = vadd.f32 %v4556, %v4844
  %v4846 = vpop.f32.mrb[0].mxu0
  %v4847 = vpop.f32.mrb[0].mxu0
  %v4848 = vadd.f32 %v4559, %v4847
  %v4849 = vpop.f32.mrb[0].mxu0
  %4850 = vmatprep.mubr.bf16.mxu0 %v2306
  %4851 = vmatmul.mubr.bf16.gmra.mrb[0].mxu0 %v2305
  %v4852 = vpop.f32.mrb[0].mxu0
  %v4853 = vadd.f32 %v4564, %v4852
  %v4854 = vpop.f32.mrb[0].mxu0
  %v4855 = vpop.f32.mrb[0].mxu0
  %v4856 = vadd.f32 %v4567, %v4855
  %v4857 = vpop.f32.mrb[0].mxu0
  %4858 = vmatprep.mubr.bf16.mxu0 %v2321
  %4859 = vmatmul.mubr.bf16.gmra.mrb[0].mxu0 %v2320
  %v4860 = vpop.f32.mrb[0].mxu0
  %v4861 = vadd.f32 %v4572, %v4860
  %v4862 = vpop.f32.mrb[0].mxu0
  %v4863 = vpop.f32.mrb[0].mxu0
  %v4864 = vadd.f32 %v4575, %v4863
  %v4865 = vpop.f32.mrb[0].mxu0
  %4866 = vmatprep.mubr.bf16.mxu0 %v2336
  %4867 = vmatmul.mubr.bf16.gmra.mrb[0].mxu0 %v2335
  %v4868 = vpop.f32.mrb[0].mxu0
  %v4869 = vadd.f32 %v4580, %v4868
  %v4870 = vpop.f32.mrb[0].mxu0
  %v4871 = vpop.f32.mrb[0].mxu0
  %v4872 = vadd.f32 %v4583, %v4871
  %v4873 = vpop.f32.mrb[0].mxu0
  %4874 = vmatprep.mubr.bf16.mxu0 %v2351
  %4875 = vmatmul.mubr.bf16.gmra.mrb[0].mxu0 %v2350
  %v4876 = vpop.f32.mrb[0].mxu0
  %v4877 = vadd.f32 %v4588, %v4876
  %v4878 = vpop.f32.mrb[0].mxu0
  %v4879 = vpop.f32.mrb[0].mxu0
  %v4880 = vadd.f32 %v4591, %v4879
  %v4881 = vpop.f32.mrb[0].mxu0
  %4882 = vmatprep.mubr.bf16.mxu0 %v2366
  %4883 = vmatmul.mubr.bf16.gmra.mrb[0].mxu0 %v2365
  %v4884 = vpop.f32.mrb[0].mxu0
  %v4885 = vadd.f32 %v4596, %v4884
  %v4886 = vpop.f32.mrb[0].mxu0
  %v4887 = vpop.f32.mrb[0].mxu0
  %v4888 = vadd.f32 %v4599, %v4887
  %v4889 = vpop.f32.mrb[0].mxu0
  %4890 = vmatprep.mubr.bf16.mxu0 %v2381
  %4891 = vmatmul.mubr.bf16.gmra.mrb[0].mxu0 %v2380
  %v4892 = vpop.f32.mrb[0].mxu0
  %v4893 = vadd.f32 %v4604, %v4892
  %v4894 = vpop.f32.mrb[0].mxu0
  %v4895 = vpop.f32.mrb[0].mxu0
  %v4896 = vadd.f32 %v4607, %v4895
  %v4897 = vpop.f32.mrb[0].mxu0
  %4898 = vmatprep.mubr.bf16.mxu0 %v2396
  %4899 = vmatmul.mubr.bf16.gmra.mrb[0].mxu0 %v2395
  %v4900 = vpop.f32.mrb[0].mxu0
  %v4901 = vadd.f32 %v4612, %v4900
  %v4902 = vpop.f32.mrb[0].mxu0
  %v4903 = vpop.f32.mrb[0].mxu0
  %v4904 = vadd.f32 %v4615, %v4903
  %v4905 = vpop.f32.mrb[0].mxu0
  %4906 = vmatprep.mubr.bf16.mxu0 %v2411
  %4907 = vmatmul.mubr.bf16.gmra.mrb[0].mxu0 %v2410
  %v4908 = vpop.f32.mrb[0].mxu0
  %v4909 = vadd.f32 %v4620, %v4908
  %v4910 = vpop.f32.mrb[0].mxu0
  %v4911 = vpop.f32.mrb[0].mxu0
  %v4912 = vadd.f32 %v4623, %v4911
  %v4913 = vpop.f32.mrb[0].mxu0
  %4914 = vmatprep.mubr.bf16.mxu0 %v2426
  %4915 = vmatmul.mubr.bf16.gmra.mrb[0].mxu0 %v2425
  %v4916 = vpop.f32.mrb[0].mxu0
  %v4917 = vadd.f32 %v4628, %v4916
  %v4918 = vpop.f32.mrb[0].mxu0
  %v4919 = vpop.f32.mrb[0].mxu0
  %v4920 = vadd.f32 %v4631, %v4919
  %v4921 = vpop.f32.mrb[0].mxu0
  %4922 = vmatprep.mubr.bf16.mxu0 %v2441
  %4923 = vmatmul.mubr.bf16.gmra.mrb[0].mxu0 %v2440
  %v4924 = vpop.f32.mrb[0].mxu0
  %v4925 = vadd.f32 %v4636, %v4924
  %v4926 = vpop.f32.mrb[0].mxu0
  %v4927 = vpop.f32.mrb[0].mxu0
  %v4928 = vadd.f32 %v4639, %v4927
  %v4929 = vpop.f32.mrb[0].mxu0
  %4930 = vmatprep.mubr.bf16.mxu0 %v2456
  %4931 = vmatmul.mubr.bf16.gmra.mrb[0].mxu0 %v2455
  %v4932 = vpop.f32.mrb[0].mxu0
  %v4933 = vadd.f32 %v4644, %v4932
  %v4934 = vpop.f32.mrb[0].mxu0
  %v4935 = vpop.f32.mrb[0].mxu0
  %v4936 = vadd.f32 %v4647, %v4935
  %v4937 = vpop.f32.mrb[0].mxu0
  %4938 = vmatprep.mubr.bf16.mxu0 %v2471
  %4939 = vmatmul.mubr.bf16.gmra.mrb[0].mxu0 %v2470
  %v4940 = vpop.f32.mrb[0].mxu0
  %v4941 = vadd.f32 %v4652, %v4940
  %v4942 = vpop.f32.mrb[0].mxu0
  %v4943 = vpop.f32.mrb[0].mxu0
  %v4944 = vadd.f32 %v4655, %v4943
  %v4945 = vpop.f32.mrb[0].mxu0
  %4946 = vmatprep.mubr.bf16.mxu0 %v2486
  %4947 = vmatmul.mubr.bf16.gmra.mrb[0].mxu0 %v2485
  %v4948 = vpop.f32.mrb[0].mxu0
  %v4949 = vadd.f32 %v4660, %v4948
  %v4950 = vpop.f32.mrb[0].mxu0
  %v4951 = vpop.f32.mrb[0].mxu0
  %v4952 = vadd.f32 %v4663, %v4951
  %v4953 = vpop.f32.mrb[0].mxu0
  %4954 = vmatprep.mubr.bf16.mxu0 %v2501
  %4955 = vmatmul.mubr.bf16.gmra.mrb[0].mxu0 %v2500
  %v4956 = vpop.f32.mrb[0].mxu0
  %v4957 = vadd.f32 %v4668, %v4956
  %v4958 = vpop.f32.mrb[0].mxu0
  %v4959 = vpop.f32.mrb[0].mxu0
  %v4960 = vadd.f32 %v4671, %v4959
  %v4961 = vpop.f32.mrb[0].mxu0
  %4962 = vmatprep.mubr.bf16.mxu0 %v2516
  %4963 = vmatmul.mubr.bf16.gmra.mrb[0].mxu0 %v2515
  %v4964 = vpop.f32.mrb[0].mxu0
  %v4965 = vadd.f32 %v4676, %v4964
  %v4966 = vpop.f32.mrb[0].mxu0
  %v4967 = vpop.f32.mrb[0].mxu0
  %v4968 = vadd.f32 %v4679, %v4967
  %v4969 = vpop.f32.mrb[0].mxu0
  %4970 = vmatprep.mubr.bf16.mxu0 %v2531
  %4971 = vmatmul.mubr.bf16.gmra.mrb[0].mxu0 %v2530
  %v4972 = vpop.f32.mrb[0].mxu0
  %v4973 = vadd.f32 %v4684, %v4972
  %v4974 = vpop.f32.mrb[0].mxu0
  %v4975 = vpop.f32.mrb[0].mxu0
  %v4976 = vadd.f32 %v4687, %v4975
  %v4977 = vpop.f32.mrb[0].mxu0
  %4978 = vmatprep.mubr.bf16.mxu0 %v2546
  %4979 = vmatmul.mubr.bf16.gmra.mrb[0].mxu0 %v2545
  %v4980 = vpop.f32.mrb[0].mxu0
  %v4981 = vadd.f32 %v4692, %v4980
  %v4982 = vpop.f32.mrb[0].mxu0
  %v4983 = vpop.f32.mrb[0].mxu0
  %v4984 = vadd.f32 %v4695, %v4983
  %v4985 = vpop.f32.mrb[0].mxu0
  %4986 = vmatprep.mubr.bf16.mxu0 %v2561
  %4987 = vmatmul.mubr.bf16.gmra.mrb[0].mxu0 %v2560
  %v4988 = vpop.f32.mrb[0].mxu0
  %v4989 = vadd.f32 %v4700, %v4988
  %v4990 = vpop.f32.mrb[0].mxu0
  %v4991 = vpop.f32.mrb[0].mxu0
  %v4992 = vadd.f32 %v4703, %v4991
  %v4993 = vpop.f32.mrb[0].mxu0
  %4994 = vmatprep.mubr.bf16.mxu0 %v2576
  %4995 = vmatmul.mubr.bf16.gmra.mrb[0].mxu0 %v2575
  %v4996 = vpop.f32.mrb[0].mxu0
  %v4997 = vadd.f32 %v4708, %v4996
  %v4998 = vpop.f32.mrb[0].mxu0
  %v4999 = vpop.f32.mrb[0].mxu0
  %v5000 = vadd.f32 %v4711, %v4999
  %v5001 = vpop.f32.mrb[0].mxu0
  %5002 = vmatprep.mubr.bf16.mxu0 %v2591
  %5003 = vmatmul.mubr.bf16.gmra.mrb[0].mxu0 %v2590
  %v5004 = vpop.f32.mrb[0].mxu0
  %v5005 = vadd.f32 %v4716, %v5004
  %v5006 = vpop.f32.mrb[0].mxu0
  %v5007 = vpop.f32.mrb[0].mxu0
  %v5008 = vadd.f32 %v4719, %v5007
  %v5009 = vpop.f32.mrb[0].mxu0
  %5010 = vmatprep.mubr.bf16.mxu0 %v2606
  %5011 = vmatmul.mubr.bf16.gmra.mrb[0].mxu0 %v2605
  %v5012 = vpop.f32.mrb[0].mxu0
  %v5013 = vadd.f32 %v4724, %v5012
  %v5014 = vpop.f32.mrb[0].mxu0
  %v5015 = vpop.f32.mrb[0].mxu0
  %v5016 = vadd.f32 %v4727, %v5015
  %v5017 = vpop.f32.mrb[0].mxu0
  %5018 = vmatprep.mubr.bf16.mxu0 %v2621
  %5019 = vmatmul.mubr.bf16.gmra.mrb[0].mxu0 %v2620
  %v5020 = vpop.f32.mrb[0].mxu0
  %v5021 = vadd.f32 %v4732, %v5020
  %v5022 = vpop.f32.mrb[0].mxu0
  %v5023 = vpop.f32.mrb[0].mxu0
  %v5024 = vadd.f32 %v4735, %v5023
  %v5025 = vpop.f32.mrb[0].mxu0
  %5026 = vmatprep.mubr.bf16.mxu0 %v2636
  %5027 = vmatmul.mubr.bf16.gmra.mrb[0].mxu0 %v2635
  %v5028 = vpop.f32.mrb[0].mxu0
  %v5029 = vadd.f32 %v4740, %v5028
  %v5030 = vpop.f32.mrb[0].mxu0
  %v5031 = vpop.f32.mrb[0].mxu0
  %v5032 = vadd.f32 %v4743, %v5031
  %v5033 = vpop.f32.mrb[0].mxu0
  %5034 = vmatprep.mubr.bf16.mxu0 %v2651
  %5035 = vmatmul.mubr.bf16.gmra.mrb[0].mxu0 %v2650
  %v5036 = vpop.f32.mrb[0].mxu0
  %v5037 = vadd.f32 %v4748, %v5036
  %v5038 = vpop.f32.mrb[0].mxu0
  %v5039 = vpop.f32.mrb[0].mxu0
  %v5040 = vadd.f32 %v4751, %v5039
  %v5041 = vpop.f32.mrb[0].mxu0
  %5042 = vmatprep.mubr.bf16.mxu0 %v2666
  %5043 = vmatmul.mubr.bf16.gmra.mrb[0].mxu0 %v2665
  %v5044 = vpop.f32.mrb[0].mxu0
  %v5045 = vadd.f32 %v4756, %v5044
  %v5046 = vpop.f32.mrb[0].mxu0
  %v5047 = vpop.f32.mrb[0].mxu0
  %v5048 = vadd.f32 %v4759, %v5047
  %v5049 = vpop.f32.mrb[0].mxu0
  %5050 = vmatprep.mubr.bf16.mxu0 %v2681
  %5051 = vmatmul.mubr.bf16.gmra.mrb[0].mxu0 %v2680
  %v5052 = vpop.f32.mrb[0].mxu0
  %v5053 = vadd.f32 %v4764, %v5052
  %v5054 = vpop.f32.mrb[0].mxu0
  %v5055 = vpop.f32.mrb[0].mxu0
  %v5056 = vadd.f32 %v4767, %v5055
  %v5057 = vpop.f32.mrb[0].mxu0
  %5058 = vmatprep.mubr.bf16.mxu0 %v2696
  %5059 = vmatmul.mubr.bf16.gmra.mrb[0].mxu0 %v2695
  %v5060 = vpop.f32.mrb[0].mxu0
  %v5061 = vadd.f32 %v4772, %v5060
  %v5062 = vpop.f32.mrb[0].mxu0
  %v5063 = vpop.f32.mrb[0].mxu0
  %v5064 = vadd.f32 %v4775, %v5063
  %v5065 = vpop.f32.mrb[0].mxu0
  %5066 = vmatprep.mubr.bf16.mxu0 %v2711
  %5067 = vmatmul.mubr.bf16.gmra.mrb[0].mxu0 %v2710
  %v5068 = vpop.f32.mrb[0].mxu0
  %v5069 = vadd.f32 %v4780, %v5068
  %v5070 = vpop.f32.mrb[0].mxu0
  %v5071 = vpop.f32.mrb[0].mxu0
  %v5072 = vadd.f32 %v4783, %v5071
  %v5073 = vpop.f32.mrb[0].mxu0
  %5074 = vdwg.mxu0
  %5075 = vmatprep.subr.bf16.mxu0 0
  %5076 = vmatpush1.bf16.msra.mxu0 %v3743
  %5077 = vmatprep.subr.bf16.mxu0 0
  %5078 = vmatpush1.bf16.msra.mxu0 %v3744
  %5079 = vmatprep.subr.bf16.mxu0 0
  %5080 = vmatpush1.bf16.msra.mxu0 %v3745
  %5081 = vmatprep.subr.bf16.mxu0 0
  %5082 = vmatpush1.bf16.msra.mxu0 %v3746
  %5083 = vmatprep.subr.bf16.mxu0 0
  %5084 = vmatpush1.bf16.msra.mxu0 %v3747
  %5085 = vmatprep.subr.bf16.mxu0 0
  %5086 = vmatpush1.bf16.msra.mxu0 %v3748
  %5087 = vmatprep.subr.bf16.mxu0 0
  %5088 = vmatpush1.bf16.msra.mxu0 %v3749
  %5089 = vmatprep.subr.bf16.mxu0 0
  %5090 = vmatpush1.bf16.msra.mxu0 %v3750
  %5091 = vmatprep.subr.bf16.mxu0 0
  %5092 = vmatpush1.bf16.msra.mxu0 %v3751
  %5093 = vmatprep.subr.bf16.mxu0 0
  %5094 = vmatpush1.bf16.msra.mxu0 %v3752
  %5095 = vmatprep.subr.bf16.mxu0 0
  %5096 = vmatpush1.bf16.msra.mxu0 %v3753
  %5097 = vmatprep.subr.bf16.mxu0 0
  %5098 = vmatpush1.bf16.msra.mxu0 %v3754
  %5099 = vmatprep.subr.bf16.mxu0 0
  %5100 = vmatpush1.bf16.msra.mxu0 %v3755
  %5101 = vmatprep.subr.bf16.mxu0 0
  %5102 = vmatpush1.bf16.msra.mxu0 %v3756
  %5103 = vmatprep.subr.bf16.mxu0 0
  %5104 = vmatpush1.bf16.msra.mxu0 %v3757
  %5105 = vmatprep.subr.bf16.mxu0 0
  %5106 = vmatpush1.bf16.msra.mxu0 %v3758
  %5107 = vmatprep.mubr.bf16.mxu0 %v2248
  %5108 = vmatmul.mubr.bf16.gmra.mrb[0].mxu0 %v2247
  %v5109 = vpop.f32.mrb[0].mxu0
  %v5110 = vadd.f32 %v4821, %v5109
  %v5111 = vpop.f32.mrb[0].mxu0
  %v5112 = vpop.f32.mrb[0].mxu0
  %v5113 = vadd.f32 %v4824, %v5112
  %v5114 = vpop.f32.mrb[0].mxu0
  %5115 = vmatprep.mubr.bf16.mxu0 %v2263
  %5116 = vmatmul.mubr.bf16.gmra.mrb[0].mxu0 %v2262
  %v5117 = vpop.f32.mrb[0].mxu0
  %v5118 = vadd.f32 %v4829, %v5117
  %v5119 = vpop.f32.mrb[0].mxu0
  %v5120 = vpop.f32.mrb[0].mxu0
  %v5121 = vadd.f32 %v4832, %v5120
  %v5122 = vpop.f32.mrb[0].mxu0
  %5123 = vmatprep.mubr.bf16.mxu0 %v2278
  %5124 = vmatmul.mubr.bf16.gmra.mrb[0].mxu0 %v2277
  %v5125 = vpop.f32.mrb[0].mxu0
  %v5126 = vadd.f32 %v4837, %v5125
  %v5127 = vpop.f32.mrb[0].mxu0
  %v5128 = vpop.f32.mrb[0].mxu0
  %v5129 = vadd.f32 %v4840, %v5128
  %v5130 = vpop.f32.mrb[0].mxu0
  %5131 = vmatprep.mubr.bf16.mxu0 %v2293
  %5132 = vmatmul.mubr.bf16.gmra.mrb[0].mxu0 %v2292
  %v5133 = vpop.f32.mrb[0].mxu0
  %v5134 = vadd.f32 %v4845, %v5133
  %v5135 = vpop.f32.mrb[0].mxu0
  %v5136 = vpop.f32.mrb[0].mxu0
  %v5137 = vadd.f32 %v4848, %v5136
  %v5138 = vpop.f32.mrb[0].mxu0
  %5139 = vmatprep.mubr.bf16.mxu0 %v2308
  %5140 = vmatmul.mubr.bf16.gmra.mrb[0].mxu0 %v2307
  %v5141 = vpop.f32.mrb[0].mxu0
  %v5142 = vadd.f32 %v4853, %v5141
  %v5143 = vpop.f32.mrb[0].mxu0
  %v5144 = vpop.f32.mrb[0].mxu0
  %v5145 = vadd.f32 %v4856, %v5144
  %v5146 = vpop.f32.mrb[0].mxu0
  %5147 = vmatprep.mubr.bf16.mxu0 %v2323
  %5148 = vmatmul.mubr.bf16.gmra.mrb[0].mxu0 %v2322
  %v5149 = vpop.f32.mrb[0].mxu0
  %v5150 = vadd.f32 %v4861, %v5149
  %v5151 = vpop.f32.mrb[0].mxu0
  %v5152 = vpop.f32.mrb[0].mxu0
  %v5153 = vadd.f32 %v4864, %v5152
  %v5154 = vpop.f32.mrb[0].mxu0
  %5155 = vmatprep.mubr.bf16.mxu0 %v2338
  %5156 = vmatmul.mubr.bf16.gmra.mrb[0].mxu0 %v2337
  %v5157 = vpop.f32.mrb[0].mxu0
  %v5158 = vadd.f32 %v4869, %v5157
  %v5159 = vpop.f32.mrb[0].mxu0
  %v5160 = vpop.f32.mrb[0].mxu0
  %v5161 = vadd.f32 %v4872, %v5160
  %v5162 = vpop.f32.mrb[0].mxu0
  %5163 = vmatprep.mubr.bf16.mxu0 %v2353
  %5164 = vmatmul.mubr.bf16.gmra.mrb[0].mxu0 %v2352
  %v5165 = vpop.f32.mrb[0].mxu0
  %v5166 = vadd.f32 %v4877, %v5165
  %v5167 = vpop.f32.mrb[0].mxu0
  %v5168 = vpop.f32.mrb[0].mxu0
  %v5169 = vadd.f32 %v4880, %v5168
  %v5170 = vpop.f32.mrb[0].mxu0
  %5171 = vmatprep.mubr.bf16.mxu0 %v2368
  %5172 = vmatmul.mubr.bf16.gmra.mrb[0].mxu0 %v2367
  %v5173 = vpop.f32.mrb[0].mxu0
  %v5174 = vadd.f32 %v4885, %v5173
  %v5175 = vpop.f32.mrb[0].mxu0
  %v5176 = vpop.f32.mrb[0].mxu0
  %v5177 = vadd.f32 %v4888, %v5176
  %v5178 = vpop.f32.mrb[0].mxu0
  %5179 = vmatprep.mubr.bf16.mxu0 %v2383
  %5180 = vmatmul.mubr.bf16.gmra.mrb[0].mxu0 %v2382
  %v5181 = vpop.f32.mrb[0].mxu0
  %v5182 = vadd.f32 %v4893, %v5181
  %v5183 = vpop.f32.mrb[0].mxu0
  %v5184 = vpop.f32.mrb[0].mxu0
  %v5185 = vadd.f32 %v4896, %v5184
  %v5186 = vpop.f32.mrb[0].mxu0
  %5187 = vmatprep.mubr.bf16.mxu0 %v2398
  %5188 = vmatmul.mubr.bf16.gmra.mrb[0].mxu0 %v2397
  %v5189 = vpop.f32.mrb[0].mxu0
  %v5190 = vadd.f32 %v4901, %v5189
  %v5191 = vpop.f32.mrb[0].mxu0
  %v5192 = vpop.f32.mrb[0].mxu0
  %v5193 = vadd.f32 %v4904, %v5192
  %v5194 = vpop.f32.mrb[0].mxu0
  %5195 = vmatprep.mubr.bf16.mxu0 %v2413
  %5196 = vmatmul.mubr.bf16.gmra.mrb[0].mxu0 %v2412
  %v5197 = vpop.f32.mrb[0].mxu0
  %v5198 = vadd.f32 %v4909, %v5197
  %v5199 = vpop.f32.mrb[0].mxu0
  %v5200 = vpop.f32.mrb[0].mxu0
  %v5201 = vadd.f32 %v4912, %v5200
  %v5202 = vpop.f32.mrb[0].mxu0
  %5203 = vmatprep.mubr.bf16.mxu0 %v2428
  %5204 = vmatmul.mubr.bf16.gmra.mrb[0].mxu0 %v2427
  %v5205 = vpop.f32.mrb[0].mxu0
  %v5206 = vadd.f32 %v4917, %v5205
  %v5207 = vpop.f32.mrb[0].mxu0
  %v5208 = vpop.f32.mrb[0].mxu0
  %v5209 = vadd.f32 %v4920, %v5208
  %v5210 = vpop.f32.mrb[0].mxu0
  %5211 = vmatprep.mubr.bf16.mxu0 %v2443
  %5212 = vmatmul.mubr.bf16.gmra.mrb[0].mxu0 %v2442
  %v5213 = vpop.f32.mrb[0].mxu0
  %v5214 = vadd.f32 %v4925, %v5213
  %v5215 = vpop.f32.mrb[0].mxu0
  %v5216 = vpop.f32.mrb[0].mxu0
  %v5217 = vadd.f32 %v4928, %v5216
  %v5218 = vpop.f32.mrb[0].mxu0
  %5219 = vmatprep.mubr.bf16.mxu0 %v2458
  %5220 = vmatmul.mubr.bf16.gmra.mrb[0].mxu0 %v2457
  %v5221 = vpop.f32.mrb[0].mxu0
  %v5222 = vadd.f32 %v4933, %v5221
  %v5223 = vpop.f32.mrb[0].mxu0
  %v5224 = vpop.f32.mrb[0].mxu0
  %v5225 = vadd.f32 %v4936, %v5224
  %v5226 = vpop.f32.mrb[0].mxu0
  %5227 = vmatprep.mubr.bf16.mxu0 %v2473
  %5228 = vmatmul.mubr.bf16.gmra.mrb[0].mxu0 %v2472
  %v5229 = vpop.f32.mrb[0].mxu0
  %v5230 = vadd.f32 %v4941, %v5229
  %v5231 = vpop.f32.mrb[0].mxu0
  %v5232 = vpop.f32.mrb[0].mxu0
  %v5233 = vadd.f32 %v4944, %v5232
  %v5234 = vpop.f32.mrb[0].mxu0
  %5235 = vmatprep.mubr.bf16.mxu0 %v2488
  %5236 = vmatmul.mubr.bf16.gmra.mrb[0].mxu0 %v2487
  %v5237 = vpop.f32.mrb[0].mxu0
  %v5238 = vadd.f32 %v4949, %v5237
  %v5239 = vpop.f32.mrb[0].mxu0
  %v5240 = vpop.f32.mrb[0].mxu0
  %v5241 = vadd.f32 %v4952, %v5240
  %v5242 = vpop.f32.mrb[0].mxu0
  %5243 = vmatprep.mubr.bf16.mxu0 %v2503
  %5244 = vmatmul.mubr.bf16.gmra.mrb[0].mxu0 %v2502
  %v5245 = vpop.f32.mrb[0].mxu0
  %v5246 = vadd.f32 %v4957, %v5245
  %v5247 = vpop.f32.mrb[0].mxu0
  %v5248 = vpop.f32.mrb[0].mxu0
  %v5249 = vadd.f32 %v4960, %v5248
  %v5250 = vpop.f32.mrb[0].mxu0
  %5251 = vmatprep.mubr.bf16.mxu0 %v2518
  %5252 = vmatmul.mubr.bf16.gmra.mrb[0].mxu0 %v2517
  %v5253 = vpop.f32.mrb[0].mxu0
  %v5254 = vadd.f32 %v4965, %v5253
  %v5255 = vpop.f32.mrb[0].mxu0
  %v5256 = vpop.f32.mrb[0].mxu0
  %v5257 = vadd.f32 %v4968, %v5256
  %v5258 = vpop.f32.mrb[0].mxu0
  %5259 = vmatprep.mubr.bf16.mxu0 %v2533
  %5260 = vmatmul.mubr.bf16.gmra.mrb[0].mxu0 %v2532
  %v5261 = vpop.f32.mrb[0].mxu0
  %v5262 = vadd.f32 %v4973, %v5261
  %v5263 = vpop.f32.mrb[0].mxu0
  %v5264 = vpop.f32.mrb[0].mxu0
  %v5265 = vadd.f32 %v4976, %v5264
  %v5266 = vpop.f32.mrb[0].mxu0
  %5267 = vmatprep.mubr.bf16.mxu0 %v2548
  %5268 = vmatmul.mubr.bf16.gmra.mrb[0].mxu0 %v2547
  %v5269 = vpop.f32.mrb[0].mxu0
  %v5270 = vadd.f32 %v4981, %v5269
  %v5271 = vpop.f32.mrb[0].mxu0
  %v5272 = vpop.f32.mrb[0].mxu0
  %v5273 = vadd.f32 %v4984, %v5272
  %v5274 = vpop.f32.mrb[0].mxu0
  %5275 = vmatprep.mubr.bf16.mxu0 %v2563
  %5276 = vmatmul.mubr.bf16.gmra.mrb[0].mxu0 %v2562
  %v5277 = vpop.f32.mrb[0].mxu0
  %v5278 = vadd.f32 %v4989, %v5277
  %v5279 = vpop.f32.mrb[0].mxu0
  %v5280 = vpop.f32.mrb[0].mxu0
  %v5281 = vadd.f32 %v4992, %v5280
  %v5282 = vpop.f32.mrb[0].mxu0
  %5283 = vmatprep.mubr.bf16.mxu0 %v2578
  %5284 = vmatmul.mubr.bf16.gmra.mrb[0].mxu0 %v2577
  %v5285 = vpop.f32.mrb[0].mxu0
  %v5286 = vadd.f32 %v4997, %v5285
  %v5287 = vpop.f32.mrb[0].mxu0
  %v5288 = vpop.f32.mrb[0].mxu0
  %v5289 = vadd.f32 %v5000, %v5288
  %v5290 = vpop.f32.mrb[0].mxu0
  %5291 = vmatprep.mubr.bf16.mxu0 %v2593
  %5292 = vmatmul.mubr.bf16.gmra.mrb[0].mxu0 %v2592
  %v5293 = vpop.f32.mrb[0].mxu0
  %v5294 = vadd.f32 %v5005, %v5293
  %v5295 = vpop.f32.mrb[0].mxu0
  %v5296 = vpop.f32.mrb[0].mxu0
  %v5297 = vadd.f32 %v5008, %v5296
  %v5298 = vpop.f32.mrb[0].mxu0
  %5299 = vmatprep.mubr.bf16.mxu0 %v2608
  %5300 = vmatmul.mubr.bf16.gmra.mrb[0].mxu0 %v2607
  %v5301 = vpop.f32.mrb[0].mxu0
  %v5302 = vadd.f32 %v5013, %v5301
  %v5303 = vpop.f32.mrb[0].mxu0
  %v5304 = vpop.f32.mrb[0].mxu0
  %v5305 = vadd.f32 %v5016, %v5304
  %v5306 = vpop.f32.mrb[0].mxu0
  %5307 = vmatprep.mubr.bf16.mxu0 %v2623
  %5308 = vmatmul.mubr.bf16.gmra.mrb[0].mxu0 %v2622
  %v5309 = vpop.f32.mrb[0].mxu0
  %v5310 = vadd.f32 %v5021, %v5309
  %v5311 = vpop.f32.mrb[0].mxu0
  %v5312 = vpop.f32.mrb[0].mxu0
  %v5313 = vadd.f32 %v5024, %v5312
  %v5314 = vpop.f32.mrb[0].mxu0
  %5315 = vmatprep.mubr.bf16.mxu0 %v2638
  %5316 = vmatmul.mubr.bf16.gmra.mrb[0].mxu0 %v2637
  %v5317 = vpop.f32.mrb[0].mxu0
  %v5318 = vadd.f32 %v5029, %v5317
  %v5319 = vpop.f32.mrb[0].mxu0
  %v5320 = vpop.f32.mrb[0].mxu0
  %v5321 = vadd.f32 %v5032, %v5320
  %v5322 = vpop.f32.mrb[0].mxu0
  %5323 = vmatprep.mubr.bf16.mxu0 %v2653
  %5324 = vmatmul.mubr.bf16.gmra.mrb[0].mxu0 %v2652
  %v5325 = vpop.f32.mrb[0].mxu0
  %v5326 = vadd.f32 %v5037, %v5325
  %v5327 = vpop.f32.mrb[0].mxu0
  %v5328 = vpop.f32.mrb[0].mxu0
  %v5329 = vadd.f32 %v5040, %v5328
  %v5330 = vpop.f32.mrb[0].mxu0
  %5331 = vmatprep.mubr.bf16.mxu0 %v2668
  %5332 = vmatmul.mubr.bf16.gmra.mrb[0].mxu0 %v2667
  %v5333 = vpop.f32.mrb[0].mxu0
  %v5334 = vadd.f32 %v5045, %v5333
  %v5335 = vpop.f32.mrb[0].mxu0
  %v5336 = vpop.f32.mrb[0].mxu0
  %v5337 = vadd.f32 %v5048, %v5336
  %v5338 = vpop.f32.mrb[0].mxu0
  %5339 = vmatprep.mubr.bf16.mxu0 %v2683
  %5340 = vmatmul.mubr.bf16.gmra.mrb[0].mxu0 %v2682
  %v5341 = vpop.f32.mrb[0].mxu0
  %v5342 = vadd.f32 %v5053, %v5341
  %v5343 = vpop.f32.mrb[0].mxu0
  %v5344 = vpop.f32.mrb[0].mxu0
  %v5345 = vadd.f32 %v5056, %v5344
  %v5346 = vpop.f32.mrb[0].mxu0
  %5347 = vmatprep.mubr.bf16.mxu0 %v2698
  %5348 = vmatmul.mubr.bf16.gmra.mrb[0].mxu0 %v2697
  %v5349 = vpop.f32.mrb[0].mxu0
  %v5350 = vadd.f32 %v5061, %v5349
  %v5351 = vpop.f32.mrb[0].mxu0
  %v5352 = vpop.f32.mrb[0].mxu0
  %v5353 = vadd.f32 %v5064, %v5352
  %v5354 = vpop.f32.mrb[0].mxu0
  %5355 = vmatprep.mubr.bf16.mxu0 %v2713
  %5356 = vmatmul.mubr.bf16.gmra.mrb[0].mxu0 %v2712
  %v5357 = vpop.f32.mrb[0].mxu0
  %v5358 = vadd.f32 %v5069, %v5357
  %v5359 = vpop.f32.mrb[0].mxu0
  %v5360 = vpop.f32.mrb[0].mxu0
  %v5361 = vadd.f32 %v5072, %v5360
  %v5362 = vpop.f32.mrb[0].mxu0
  %5363 = vdwg.mxu0
  %5364 = vmatprep.subr.bf16.mxu0 0
  %5365 = vmatpush1.bf16.msra.mxu0 %v3759
  %5366 = vmatprep.subr.bf16.mxu0 0
  %5367 = vmatpush1.bf16.msra.mxu0 %v3760
  %5368 = vmatprep.subr.bf16.mxu0 0
  %5369 = vmatpush1.bf16.msra.mxu0 %v3761
  %5370 = vmatprep.subr.bf16.mxu0 0
  %5371 = vmatpush1.bf16.msra.mxu0 %v3762
  %5372 = vmatprep.subr.bf16.mxu0 0
  %5373 = vmatpush1.bf16.msra.mxu0 %v3763
  %5374 = vmatprep.subr.bf16.mxu0 0
  %5375 = vmatpush1.bf16.msra.mxu0 %v3764
  %5376 = vmatprep.subr.bf16.mxu0 0
  %5377 = vmatpush1.bf16.msra.mxu0 %v3765
  %5378 = vmatprep.subr.bf16.mxu0 0
  %5379 = vmatpush1.bf16.msra.mxu0 %v3766
  %5380 = vmatprep.subr.bf16.mxu0 0
  %5381 = vmatpush1.bf16.msra.mxu0 %v3767
  %5382 = vmatprep.subr.bf16.mxu0 0
  %5383 = vmatpush1.bf16.msra.mxu0 %v3768
  %5384 = vmatprep.subr.bf16.mxu0 0
  %5385 = vmatpush1.bf16.msra.mxu0 %v3769
  %5386 = vmatprep.subr.bf16.mxu0 0
  %5387 = vmatpush1.bf16.msra.mxu0 %v3770
  %5388 = vmatprep.subr.bf16.mxu0 0
  %5389 = vmatpush1.bf16.msra.mxu0 %v3771
  %5390 = vmatprep.subr.bf16.mxu0 0
  %5391 = vmatpush1.bf16.msra.mxu0 %v3772
  %5392 = vmatprep.subr.bf16.mxu0 0
  %5393 = vmatpush1.bf16.msra.mxu0 %v3773
  %5394 = vmatprep.subr.bf16.mxu0 0
  %5395 = vmatpush1.bf16.msra.mxu0 %v3774
  %5396 = vmatprep.mubr.bf16.mxu0 %v2250
  %5397 = vmatmul.mubr.bf16.gmra.mrb[0].mxu0 %v2249
  %v5398 = vpop.f32.mrb[0].mxu0
  %v5399 = vadd.f32 %v5110, %v5398
  %v5400 = vpop.f32.mrb[0].mxu0
  %v5401 = vpop.f32.mrb[0].mxu0
  %v5402 = vadd.f32 %v5113, %v5401
  %v5403 = vpop.f32.mrb[0].mxu0
  %5404 = vmatprep.mubr.bf16.mxu0 %v2265
  %5405 = vmatmul.mubr.bf16.gmra.mrb[0].mxu0 %v2264
  %v5406 = vpop.f32.mrb[0].mxu0
  %v5407 = vadd.f32 %v5118, %v5406
  %v5408 = vpop.f32.mrb[0].mxu0
  %v5409 = vpop.f32.mrb[0].mxu0
  %v5410 = vadd.f32 %v5121, %v5409
  %v5411 = vpop.f32.mrb[0].mxu0
  %5412 = vmatprep.mubr.bf16.mxu0 %v2280
  %5413 = vmatmul.mubr.bf16.gmra.mrb[0].mxu0 %v2279
  %v5414 = vpop.f32.mrb[0].mxu0
  %v5415 = vadd.f32 %v5126, %v5414
  %v5416 = vpop.f32.mrb[0].mxu0
  %v5417 = vpop.f32.mrb[0].mxu0
  %v5418 = vadd.f32 %v5129, %v5417
  %v5419 = vpop.f32.mrb[0].mxu0
  %5420 = vmatprep.mubr.bf16.mxu0 %v2295
  %5421 = vmatmul.mubr.bf16.gmra.mrb[0].mxu0 %v2294
  %v5422 = vpop.f32.mrb[0].mxu0
  %v5423 = vadd.f32 %v5134, %v5422
  %v5424 = vpop.f32.mrb[0].mxu0
  %v5425 = vpop.f32.mrb[0].mxu0
  %v5426 = vadd.f32 %v5137, %v5425
  %v5427 = vpop.f32.mrb[0].mxu0
  %5428 = vmatprep.mubr.bf16.mxu0 %v2310
  %5429 = vmatmul.mubr.bf16.gmra.mrb[0].mxu0 %v2309
  %v5430 = vpop.f32.mrb[0].mxu0
  %v5431 = vadd.f32 %v5142, %v5430
  %v5432 = vpop.f32.mrb[0].mxu0
  %v5433 = vpop.f32.mrb[0].mxu0
  %v5434 = vadd.f32 %v5145, %v5433
  %v5435 = vpop.f32.mrb[0].mxu0
  %5436 = vmatprep.mubr.bf16.mxu0 %v2325
  %5437 = vmatmul.mubr.bf16.gmra.mrb[0].mxu0 %v2324
  %v5438 = vpop.f32.mrb[0].mxu0
  %v5439 = vadd.f32 %v5150, %v5438
  %v5440 = vpop.f32.mrb[0].mxu0
  %v5441 = vpop.f32.mrb[0].mxu0
  %v5442 = vadd.f32 %v5153, %v5441
  %v5443 = vpop.f32.mrb[0].mxu0
  %5444 = vmatprep.mubr.bf16.mxu0 %v2340
  %5445 = vmatmul.mubr.bf16.gmra.mrb[0].mxu0 %v2339
  %v5446 = vpop.f32.mrb[0].mxu0
  %v5447 = vadd.f32 %v5158, %v5446
  %v5448 = vpop.f32.mrb[0].mxu0
  %v5449 = vpop.f32.mrb[0].mxu0
  %v5450 = vadd.f32 %v5161, %v5449
  %v5451 = vpop.f32.mrb[0].mxu0
  %5452 = vmatprep.mubr.bf16.mxu0 %v2355
  %5453 = vmatmul.mubr.bf16.gmra.mrb[0].mxu0 %v2354
  %v5454 = vpop.f32.mrb[0].mxu0
  %v5455 = vadd.f32 %v5166, %v5454
  %v5456 = vpop.f32.mrb[0].mxu0
  %v5457 = vpop.f32.mrb[0].mxu0
  %v5458 = vadd.f32 %v5169, %v5457
  %v5459 = vpop.f32.mrb[0].mxu0
  %5460 = vmatprep.mubr.bf16.mxu0 %v2370
  %5461 = vmatmul.mubr.bf16.gmra.mrb[0].mxu0 %v2369
  %v5462 = vpop.f32.mrb[0].mxu0
  %v5463 = vadd.f32 %v5174, %v5462
  %v5464 = vpop.f32.mrb[0].mxu0
  %v5465 = vpop.f32.mrb[0].mxu0
  %v5466 = vadd.f32 %v5177, %v5465
  %v5467 = vpop.f32.mrb[0].mxu0
  %5468 = vmatprep.mubr.bf16.mxu0 %v2385
  %5469 = vmatmul.mubr.bf16.gmra.mrb[0].mxu0 %v2384
  %v5470 = vpop.f32.mrb[0].mxu0
  %v5471 = vadd.f32 %v5182, %v5470
  %v5472 = vpop.f32.mrb[0].mxu0
  %v5473 = vpop.f32.mrb[0].mxu0
  %v5474 = vadd.f32 %v5185, %v5473
  %v5475 = vpop.f32.mrb[0].mxu0
  %5476 = vmatprep.mubr.bf16.mxu0 %v2400
  %5477 = vmatmul.mubr.bf16.gmra.mrb[0].mxu0 %v2399
  %v5478 = vpop.f32.mrb[0].mxu0
  %v5479 = vadd.f32 %v5190, %v5478
  %v5480 = vpop.f32.mrb[0].mxu0
  %v5481 = vpop.f32.mrb[0].mxu0
  %v5482 = vadd.f32 %v5193, %v5481
  %v5483 = vpop.f32.mrb[0].mxu0
  %5484 = vmatprep.mubr.bf16.mxu0 %v2415
  %5485 = vmatmul.mubr.bf16.gmra.mrb[0].mxu0 %v2414
  %v5486 = vpop.f32.mrb[0].mxu0
  %v5487 = vadd.f32 %v5198, %v5486
  %v5488 = vpop.f32.mrb[0].mxu0
  %v5489 = vpop.f32.mrb[0].mxu0
  %v5490 = vadd.f32 %v5201, %v5489
  %v5491 = vpop.f32.mrb[0].mxu0
  %5492 = vmatprep.mubr.bf16.mxu0 %v2430
  %5493 = vmatmul.mubr.bf16.gmra.mrb[0].mxu0 %v2429
  %v5494 = vpop.f32.mrb[0].mxu0
  %v5495 = vadd.f32 %v5206, %v5494
  %v5496 = vpop.f32.mrb[0].mxu0
  %v5497 = vpop.f32.mrb[0].mxu0
  %v5498 = vadd.f32 %v5209, %v5497
  %v5499 = vpop.f32.mrb[0].mxu0
  %5500 = vmatprep.mubr.bf16.mxu0 %v2445
  %5501 = vmatmul.mubr.bf16.gmra.mrb[0].mxu0 %v2444
  %v5502 = vpop.f32.mrb[0].mxu0
  %v5503 = vadd.f32 %v5214, %v5502
  %v5504 = vpop.f32.mrb[0].mxu0
  %v5505 = vpop.f32.mrb[0].mxu0
  %v5506 = vadd.f32 %v5217, %v5505
  %v5507 = vpop.f32.mrb[0].mxu0
  %5508 = vmatprep.mubr.bf16.mxu0 %v2460
  %5509 = vmatmul.mubr.bf16.gmra.mrb[0].mxu0 %v2459
  %v5510 = vpop.f32.mrb[0].mxu0
  %v5511 = vadd.f32 %v5222, %v5510
  %v5512 = vpop.f32.mrb[0].mxu0
  %v5513 = vpop.f32.mrb[0].mxu0
  %v5514 = vadd.f32 %v5225, %v5513
  %v5515 = vpop.f32.mrb[0].mxu0
  %5516 = vmatprep.mubr.bf16.mxu0 %v2475
  %5517 = vmatmul.mubr.bf16.gmra.mrb[0].mxu0 %v2474
  %v5518 = vpop.f32.mrb[0].mxu0
  %v5519 = vadd.f32 %v5230, %v5518
  %v5520 = vpop.f32.mrb[0].mxu0
  %v5521 = vpop.f32.mrb[0].mxu0
  %v5522 = vadd.f32 %v5233, %v5521
  %v5523 = vpop.f32.mrb[0].mxu0
  %5524 = vmatprep.mubr.bf16.mxu0 %v2490
  %5525 = vmatmul.mubr.bf16.gmra.mrb[0].mxu0 %v2489
  %v5526 = vpop.f32.mrb[0].mxu0
  %v5527 = vadd.f32 %v5238, %v5526
  %v5528 = vpop.f32.mrb[0].mxu0
  %v5529 = vpop.f32.mrb[0].mxu0
  %v5530 = vadd.f32 %v5241, %v5529
  %v5531 = vpop.f32.mrb[0].mxu0
  %5532 = vmatprep.mubr.bf16.mxu0 %v2505
  %5533 = vmatmul.mubr.bf16.gmra.mrb[0].mxu0 %v2504
  %v5534 = vpop.f32.mrb[0].mxu0
  %v5535 = vadd.f32 %v5246, %v5534
  %v5536 = vpop.f32.mrb[0].mxu0
  %v5537 = vpop.f32.mrb[0].mxu0
  %v5538 = vadd.f32 %v5249, %v5537
  %v5539 = vpop.f32.mrb[0].mxu0
  %5540 = vmatprep.mubr.bf16.mxu0 %v2520
  %5541 = vmatmul.mubr.bf16.gmra.mrb[0].mxu0 %v2519
  %v5542 = vpop.f32.mrb[0].mxu0
  %v5543 = vadd.f32 %v5254, %v5542
  %v5544 = vpop.f32.mrb[0].mxu0
  %v5545 = vpop.f32.mrb[0].mxu0
  %v5546 = vadd.f32 %v5257, %v5545
  %v5547 = vpop.f32.mrb[0].mxu0
  %5548 = vmatprep.mubr.bf16.mxu0 %v2535
  %5549 = vmatmul.mubr.bf16.gmra.mrb[0].mxu0 %v2534
  %v5550 = vpop.f32.mrb[0].mxu0
  %v5551 = vadd.f32 %v5262, %v5550
  %v5552 = vpop.f32.mrb[0].mxu0
  %v5553 = vpop.f32.mrb[0].mxu0
  %v5554 = vadd.f32 %v5265, %v5553
  %v5555 = vpop.f32.mrb[0].mxu0
  %5556 = vmatprep.mubr.bf16.mxu0 %v2550
  %5557 = vmatmul.mubr.bf16.gmra.mrb[0].mxu0 %v2549
  %v5558 = vpop.f32.mrb[0].mxu0
  %v5559 = vadd.f32 %v5270, %v5558
  %v5560 = vpop.f32.mrb[0].mxu0
  %v5561 = vpop.f32.mrb[0].mxu0
  %v5562 = vadd.f32 %v5273, %v5561
  %v5563 = vpop.f32.mrb[0].mxu0
  %5564 = vmatprep.mubr.bf16.mxu0 %v2565
  %5565 = vmatmul.mubr.bf16.gmra.mrb[0].mxu0 %v2564
  %v5566 = vpop.f32.mrb[0].mxu0
  %v5567 = vadd.f32 %v5278, %v5566
  %v5568 = vpop.f32.mrb[0].mxu0
  %v5569 = vpop.f32.mrb[0].mxu0
  %v5570 = vadd.f32 %v5281, %v5569
  %v5571 = vpop.f32.mrb[0].mxu0
  %5572 = vmatprep.mubr.bf16.mxu0 %v2580
  %5573 = vmatmul.mubr.bf16.gmra.mrb[0].mxu0 %v2579
  %v5574 = vpop.f32.mrb[0].mxu0
  %v5575 = vadd.f32 %v5286, %v5574
  %v5576 = vpop.f32.mrb[0].mxu0
  %v5577 = vpop.f32.mrb[0].mxu0
  %v5578 = vadd.f32 %v5289, %v5577
  %v5579 = vpop.f32.mrb[0].mxu0
  %5580 = vmatprep.mubr.bf16.mxu0 %v2595
  %5581 = vmatmul.mubr.bf16.gmra.mrb[0].mxu0 %v2594
  %v5582 = vpop.f32.mrb[0].mxu0
  %v5583 = vadd.f32 %v5294, %v5582
  %v5584 = vpop.f32.mrb[0].mxu0
  %v5585 = vpop.f32.mrb[0].mxu0
  %v5586 = vadd.f32 %v5297, %v5585
  %v5587 = vpop.f32.mrb[0].mxu0
  %5588 = vmatprep.mubr.bf16.mxu0 %v2610
  %5589 = vmatmul.mubr.bf16.gmra.mrb[0].mxu0 %v2609
  %v5590 = vpop.f32.mrb[0].mxu0
  %v5591 = vadd.f32 %v5302, %v5590
  %v5592 = vpop.f32.mrb[0].mxu0
  %v5593 = vpop.f32.mrb[0].mxu0
  %v5594 = vadd.f32 %v5305, %v5593
  %v5595 = vpop.f32.mrb[0].mxu0
  %5596 = vmatprep.mubr.bf16.mxu0 %v2625
  %5597 = vmatmul.mubr.bf16.gmra.mrb[0].mxu0 %v2624
  %v5598 = vpop.f32.mrb[0].mxu0
  %v5599 = vadd.f32 %v5310, %v5598
  %v5600 = vpop.f32.mrb[0].mxu0
  %v5601 = vpop.f32.mrb[0].mxu0
  %v5602 = vadd.f32 %v5313, %v5601
  %v5603 = vpop.f32.mrb[0].mxu0
  %5604 = vmatprep.mubr.bf16.mxu0 %v2640
  %5605 = vmatmul.mubr.bf16.gmra.mrb[0].mxu0 %v2639
  %v5606 = vpop.f32.mrb[0].mxu0
  %v5607 = vadd.f32 %v5318, %v5606
  %v5608 = vpop.f32.mrb[0].mxu0
  %v5609 = vpop.f32.mrb[0].mxu0
  %v5610 = vadd.f32 %v5321, %v5609
  %v5611 = vpop.f32.mrb[0].mxu0
  %5612 = vmatprep.mubr.bf16.mxu0 %v2655
  %5613 = vmatmul.mubr.bf16.gmra.mrb[0].mxu0 %v2654
  %v5614 = vpop.f32.mrb[0].mxu0
  %v5615 = vadd.f32 %v5326, %v5614
  %v5616 = vpop.f32.mrb[0].mxu0
  %v5617 = vpop.f32.mrb[0].mxu0
  %v5618 = vadd.f32 %v5329, %v5617
  %v5619 = vpop.f32.mrb[0].mxu0
  %5620 = vmatprep.mubr.bf16.mxu0 %v2670
  %5621 = vmatmul.mubr.bf16.gmra.mrb[0].mxu0 %v2669
  %v5622 = vpop.f32.mrb[0].mxu0
  %v5623 = vadd.f32 %v5334, %v5622
  %v5624 = vpop.f32.mrb[0].mxu0
  %v5625 = vpop.f32.mrb[0].mxu0
  %v5626 = vadd.f32 %v5337, %v5625
  %v5627 = vpop.f32.mrb[0].mxu0
  %5628 = vmatprep.mubr.bf16.mxu0 %v2685
  %5629 = vmatmul.mubr.bf16.gmra.mrb[0].mxu0 %v2684
  %v5630 = vpop.f32.mrb[0].mxu0
  %v5631 = vadd.f32 %v5342, %v5630
  %v5632 = vpop.f32.mrb[0].mxu0
  %v5633 = vpop.f32.mrb[0].mxu0
  %v5634 = vadd.f32 %v5345, %v5633
  %v5635 = vpop.f32.mrb[0].mxu0
  %5636 = vmatprep.mubr.bf16.mxu0 %v2700
  %5637 = vmatmul.mubr.bf16.gmra.mrb[0].mxu0 %v2699
  %v5638 = vpop.f32.mrb[0].mxu0
  %v5639 = vadd.f32 %v5350, %v5638
  %v5640 = vpop.f32.mrb[0].mxu0
  %v5641 = vpop.f32.mrb[0].mxu0
  %v5642 = vadd.f32 %v5353, %v5641
  %v5643 = vpop.f32.mrb[0].mxu0
  %5644 = vmatprep.mubr.bf16.mxu0 %v2715
  %5645 = vmatmul.mubr.bf16.gmra.mrb[0].mxu0 %v2714
  %v5646 = vpop.f32.mrb[0].mxu0
  %v5647 = vadd.f32 %v5358, %v5646
  %v5648 = vpop.f32.mrb[0].mxu0
  %v5649 = vpop.f32.mrb[0].mxu0
  %v5650 = vadd.f32 %v5361, %v5649
  %v5651 = vpop.f32.mrb[0].mxu0
  %5652 = vdwg.mxu0
  %5653 = vmatprep.subr.bf16.mxu0 0
  %5654 = vmatpush1.bf16.msra.mxu0 %v3775
  %5655 = vmatprep.subr.bf16.mxu0 0
  %5656 = vmatpush1.bf16.msra.mxu0 %v3776
  %5657 = vmatprep.subr.bf16.mxu0 0
  %5658 = vmatpush1.bf16.msra.mxu0 %v3777
  %5659 = vmatprep.subr.bf16.mxu0 0
  %5660 = vmatpush1.bf16.msra.mxu0 %v3778
  %5661 = vmatprep.subr.bf16.mxu0 0
  %5662 = vmatpush1.bf16.msra.mxu0 %v3779
  %5663 = vmatprep.subr.bf16.mxu0 0
  %5664 = vmatpush1.bf16.msra.mxu0 %v3780
  %5665 = vmatprep.subr.bf16.mxu0 0
  %5666 = vmatpush1.bf16.msra.mxu0 %v3781
  %5667 = vmatprep.subr.bf16.mxu0 0
  %5668 = vmatpush1.bf16.msra.mxu0 %v3782
  %5669 = vmatprep.subr.bf16.mxu0 0
  %5670 = vmatpush1.bf16.msra.mxu0 %v3783
  %5671 = vmatprep.subr.bf16.mxu0 0
  %5672 = vmatpush1.bf16.msra.mxu0 %v3784
  %5673 = vmatprep.subr.bf16.mxu0 0
  %5674 = vmatpush1.bf16.msra.mxu0 %v3785
  %5675 = vmatprep.subr.bf16.mxu0 0
  %5676 = vmatpush1.bf16.msra.mxu0 %v3786
  %5677 = vmatprep.subr.bf16.mxu0 0
  %5678 = vmatpush1.bf16.msra.mxu0 %v3787
  %5679 = vmatprep.subr.bf16.mxu0 0
  %5680 = vmatpush1.bf16.msra.mxu0 %v3788
  %5681 = vmatprep.subr.bf16.mxu0 0
  %5682 = vmatpush1.bf16.msra.mxu0 %v3789
  %5683 = vmatprep.subr.bf16.mxu0 0
  %5684 = vmatpush1.bf16.msra.mxu0 %v3790
  %5685 = vmatprep.mubr.bf16.mxu0 %v2252
  %5686 = vmatmul.mubr.bf16.gmra.mrb[0].mxu0 %v2251
  %v5687 = vpop.f32.mrb[0].mxu0
  %v5688 = vadd.f32 %v5399, %v5687
  %v5689 = vpop.f32.mrb[0].mxu0
  %v5690 = vpop.f32.mrb[0].mxu0
  %v5691 = vadd.f32 %v5402, %v5690
  %v5692 = vpop.f32.mrb[0].mxu0
  %5693 = vmatprep.mubr.bf16.mxu0 %v2267
  %5694 = vmatmul.mubr.bf16.gmra.mrb[0].mxu0 %v2266
  %v5695 = vpop.f32.mrb[0].mxu0
  %v5696 = vadd.f32 %v5407, %v5695
  %v5697 = vpop.f32.mrb[0].mxu0
  %v5698 = vpop.f32.mrb[0].mxu0
  %v5699 = vadd.f32 %v5410, %v5698
  %v5700 = vpop.f32.mrb[0].mxu0
  %5701 = vmatprep.mubr.bf16.mxu0 %v2282
  %5702 = vmatmul.mubr.bf16.gmra.mrb[0].mxu0 %v2281
  %v5703 = vpop.f32.mrb[0].mxu0
  %v5704 = vadd.f32 %v5415, %v5703
  %v5705 = vpop.f32.mrb[0].mxu0
  %v5706 = vpop.f32.mrb[0].mxu0
  %v5707 = vadd.f32 %v5418, %v5706
  %v5708 = vpop.f32.mrb[0].mxu0
  %5709 = vmatprep.mubr.bf16.mxu0 %v2297
  %5710 = vmatmul.mubr.bf16.gmra.mrb[0].mxu0 %v2296
  %v5711 = vpop.f32.mrb[0].mxu0
  %v5712 = vadd.f32 %v5423, %v5711
  %v5713 = vpop.f32.mrb[0].mxu0
  %v5714 = vpop.f32.mrb[0].mxu0
  %v5715 = vadd.f32 %v5426, %v5714
  %v5716 = vpop.f32.mrb[0].mxu0
  %5717 = vmatprep.mubr.bf16.mxu0 %v2312
  %5718 = vmatmul.mubr.bf16.gmra.mrb[0].mxu0 %v2311
  %v5719 = vpop.f32.mrb[0].mxu0
  %v5720 = vadd.f32 %v5431, %v5719
  %v5721 = vpop.f32.mrb[0].mxu0
  %v5722 = vpop.f32.mrb[0].mxu0
  %v5723 = vadd.f32 %v5434, %v5722
  %v5724 = vpop.f32.mrb[0].mxu0
  %5725 = vmatprep.mubr.bf16.mxu0 %v2327
  %5726 = vmatmul.mubr.bf16.gmra.mrb[0].mxu0 %v2326
  %v5727 = vpop.f32.mrb[0].mxu0
  %v5728 = vadd.f32 %v5439, %v5727
  %v5729 = vpop.f32.mrb[0].mxu0
  %v5730 = vpop.f32.mrb[0].mxu0
  %v5731 = vadd.f32 %v5442, %v5730
  %v5732 = vpop.f32.mrb[0].mxu0
  %5733 = vmatprep.mubr.bf16.mxu0 %v2342
  %5734 = vmatmul.mubr.bf16.gmra.mrb[0].mxu0 %v2341
  %v5735 = vpop.f32.mrb[0].mxu0
  %v5736 = vadd.f32 %v5447, %v5735
  %v5737 = vpop.f32.mrb[0].mxu0
  %v5738 = vpop.f32.mrb[0].mxu0
  %v5739 = vadd.f32 %v5450, %v5738
  %v5740 = vpop.f32.mrb[0].mxu0
  %5741 = vmatprep.mubr.bf16.mxu0 %v2357
  %5742 = vmatmul.mubr.bf16.gmra.mrb[0].mxu0 %v2356
  %v5743 = vpop.f32.mrb[0].mxu0
  %v5744 = vadd.f32 %v5455, %v5743
  %v5745 = vpop.f32.mrb[0].mxu0
  %v5746 = vpop.f32.mrb[0].mxu0
  %v5747 = vadd.f32 %v5458, %v5746
  %v5748 = vpop.f32.mrb[0].mxu0
  %5749 = vmatprep.mubr.bf16.mxu0 %v2372
  %5750 = vmatmul.mubr.bf16.gmra.mrb[0].mxu0 %v2371
  %v5751 = vpop.f32.mrb[0].mxu0
  %v5752 = vadd.f32 %v5463, %v5751
  %v5753 = vpop.f32.mrb[0].mxu0
  %v5754 = vpop.f32.mrb[0].mxu0
  %v5755 = vadd.f32 %v5466, %v5754
  %v5756 = vpop.f32.mrb[0].mxu0
  %5757 = vmatprep.mubr.bf16.mxu0 %v2387
  %5758 = vmatmul.mubr.bf16.gmra.mrb[0].mxu0 %v2386
  %v5759 = vpop.f32.mrb[0].mxu0
  %v5760 = vadd.f32 %v5471, %v5759
  %v5761 = vpop.f32.mrb[0].mxu0
  %v5762 = vpop.f32.mrb[0].mxu0
  %v5763 = vadd.f32 %v5474, %v5762
  %v5764 = vpop.f32.mrb[0].mxu0
  %5765 = vmatprep.mubr.bf16.mxu0 %v2402
  %5766 = vmatmul.mubr.bf16.gmra.mrb[0].mxu0 %v2401
  %v5767 = vpop.f32.mrb[0].mxu0
  %v5768 = vadd.f32 %v5479, %v5767
  %v5769 = vpop.f32.mrb[0].mxu0
  %v5770 = vpop.f32.mrb[0].mxu0
  %v5771 = vadd.f32 %v5482, %v5770
  %v5772 = vpop.f32.mrb[0].mxu0
  %5773 = vmatprep.mubr.bf16.mxu0 %v2417
  %5774 = vmatmul.mubr.bf16.gmra.mrb[0].mxu0 %v2416
  %v5775 = vpop.f32.mrb[0].mxu0
  %v5776 = vadd.f32 %v5487, %v5775
  %v5777 = vpop.f32.mrb[0].mxu0
  %v5778 = vpop.f32.mrb[0].mxu0
  %v5779 = vadd.f32 %v5490, %v5778
  %v5780 = vpop.f32.mrb[0].mxu0
  %5781 = vmatprep.mubr.bf16.mxu0 %v2432
  %5782 = vmatmul.mubr.bf16.gmra.mrb[0].mxu0 %v2431
  %v5783 = vpop.f32.mrb[0].mxu0
  %v5784 = vadd.f32 %v5495, %v5783
  %v5785 = vpop.f32.mrb[0].mxu0
  %v5786 = vpop.f32.mrb[0].mxu0
  %v5787 = vadd.f32 %v5498, %v5786
  %v5788 = vpop.f32.mrb[0].mxu0
  %5789 = vmatprep.mubr.bf16.mxu0 %v2447
  %5790 = vmatmul.mubr.bf16.gmra.mrb[0].mxu0 %v2446
  %v5791 = vpop.f32.mrb[0].mxu0
  %v5792 = vadd.f32 %v5503, %v5791
  %v5793 = vpop.f32.mrb[0].mxu0
  %v5794 = vpop.f32.mrb[0].mxu0
  %v5795 = vadd.f32 %v5506, %v5794
  %v5796 = vpop.f32.mrb[0].mxu0
  %5797 = vmatprep.mubr.bf16.mxu0 %v2462
  %5798 = vmatmul.mubr.bf16.gmra.mrb[0].mxu0 %v2461
  %v5799 = vpop.f32.mrb[0].mxu0
  %v5800 = vadd.f32 %v5511, %v5799
  %v5801 = vpop.f32.mrb[0].mxu0
  %v5802 = vpop.f32.mrb[0].mxu0
  %v5803 = vadd.f32 %v5514, %v5802
  %v5804 = vpop.f32.mrb[0].mxu0
  %5805 = vmatprep.mubr.bf16.mxu0 %v2477
  %5806 = vmatmul.mubr.bf16.gmra.mrb[0].mxu0 %v2476
  %v5807 = vpop.f32.mrb[0].mxu0
  %v5808 = vadd.f32 %v5519, %v5807
  %v5809 = vpop.f32.mrb[0].mxu0
  %v5810 = vpop.f32.mrb[0].mxu0
  %v5811 = vadd.f32 %v5522, %v5810
  %v5812 = vpop.f32.mrb[0].mxu0
  %5813 = vmatprep.mubr.bf16.mxu0 %v2492
  %5814 = vmatmul.mubr.bf16.gmra.mrb[0].mxu0 %v2491
  %v5815 = vpop.f32.mrb[0].mxu0
  %v5816 = vadd.f32 %v5527, %v5815
  %v5817 = vpop.f32.mrb[0].mxu0
  %v5818 = vpop.f32.mrb[0].mxu0
  %v5819 = vadd.f32 %v5530, %v5818
  %v5820 = vpop.f32.mrb[0].mxu0
  %5821 = vmatprep.mubr.bf16.mxu0 %v2507
  %5822 = vmatmul.mubr.bf16.gmra.mrb[0].mxu0 %v2506
  %v5823 = vpop.f32.mrb[0].mxu0
  %v5824 = vadd.f32 %v5535, %v5823
  %v5825 = vpop.f32.mrb[0].mxu0
  %v5826 = vpop.f32.mrb[0].mxu0
  %v5827 = vadd.f32 %v5538, %v5826
  %v5828 = vpop.f32.mrb[0].mxu0
  %5829 = vmatprep.mubr.bf16.mxu0 %v2522
  %5830 = vmatmul.mubr.bf16.gmra.mrb[0].mxu0 %v2521
  %v5831 = vpop.f32.mrb[0].mxu0
  %v5832 = vadd.f32 %v5543, %v5831
  %v5833 = vpop.f32.mrb[0].mxu0
  %v5834 = vpop.f32.mrb[0].mxu0
  %v5835 = vadd.f32 %v5546, %v5834
  %v5836 = vpop.f32.mrb[0].mxu0
  %5837 = vmatprep.mubr.bf16.mxu0 %v2537
  %5838 = vmatmul.mubr.bf16.gmra.mrb[0].mxu0 %v2536
  %v5839 = vpop.f32.mrb[0].mxu0
  %v5840 = vadd.f32 %v5551, %v5839
  %v5841 = vpop.f32.mrb[0].mxu0
  %v5842 = vpop.f32.mrb[0].mxu0
  %v5843 = vadd.f32 %v5554, %v5842
  %v5844 = vpop.f32.mrb[0].mxu0
  %5845 = vmatprep.mubr.bf16.mxu0 %v2552
  %5846 = vmatmul.mubr.bf16.gmra.mrb[0].mxu0 %v2551
  %v5847 = vpop.f32.mrb[0].mxu0
  %v5848 = vadd.f32 %v5559, %v5847
  %v5849 = vpop.f32.mrb[0].mxu0
  %v5850 = vpop.f32.mrb[0].mxu0
  %v5851 = vadd.f32 %v5562, %v5850
  %v5852 = vpop.f32.mrb[0].mxu0
  %5853 = vmatprep.mubr.bf16.mxu0 %v2567
  %5854 = vmatmul.mubr.bf16.gmra.mrb[0].mxu0 %v2566
  %v5855 = vpop.f32.mrb[0].mxu0
  %v5856 = vadd.f32 %v5567, %v5855
  %v5857 = vpop.f32.mrb[0].mxu0
  %v5858 = vpop.f32.mrb[0].mxu0
  %v5859 = vadd.f32 %v5570, %v5858
  %v5860 = vpop.f32.mrb[0].mxu0
  %5861 = vmatprep.mubr.bf16.mxu0 %v2582
  %5862 = vmatmul.mubr.bf16.gmra.mrb[0].mxu0 %v2581
  %v5863 = vpop.f32.mrb[0].mxu0
  %v5864 = vadd.f32 %v5575, %v5863
  %v5865 = vpop.f32.mrb[0].mxu0
  %v5866 = vpop.f32.mrb[0].mxu0
  %v5867 = vadd.f32 %v5578, %v5866
  %v5868 = vpop.f32.mrb[0].mxu0
  %5869 = vmatprep.mubr.bf16.mxu0 %v2597
  %5870 = vmatmul.mubr.bf16.gmra.mrb[0].mxu0 %v2596
  %v5871 = vpop.f32.mrb[0].mxu0
  %v5872 = vadd.f32 %v5583, %v5871
  %v5873 = vpop.f32.mrb[0].mxu0
  %v5874 = vpop.f32.mrb[0].mxu0
  %v5875 = vadd.f32 %v5586, %v5874
  %v5876 = vpop.f32.mrb[0].mxu0
  %5877 = vmatprep.mubr.bf16.mxu0 %v2612
  %5878 = vmatmul.mubr.bf16.gmra.mrb[0].mxu0 %v2611
  %v5879 = vpop.f32.mrb[0].mxu0
  %v5880 = vadd.f32 %v5591, %v5879
  %v5881 = vpop.f32.mrb[0].mxu0
  %v5882 = vpop.f32.mrb[0].mxu0
  %v5883 = vadd.f32 %v5594, %v5882
  %v5884 = vpop.f32.mrb[0].mxu0
  %5885 = vmatprep.mubr.bf16.mxu0 %v2627
  %5886 = vmatmul.mubr.bf16.gmra.mrb[0].mxu0 %v2626
  %v5887 = vpop.f32.mrb[0].mxu0
  %v5888 = vadd.f32 %v5599, %v5887
  %v5889 = vpop.f32.mrb[0].mxu0
  %v5890 = vpop.f32.mrb[0].mxu0
  %v5891 = vadd.f32 %v5602, %v5890
  %v5892 = vpop.f32.mrb[0].mxu0
  %5893 = vmatprep.mubr.bf16.mxu0 %v2642
  %5894 = vmatmul.mubr.bf16.gmra.mrb[0].mxu0 %v2641
  %v5895 = vpop.f32.mrb[0].mxu0
  %v5896 = vadd.f32 %v5607, %v5895
  %v5897 = vpop.f32.mrb[0].mxu0
  %v5898 = vpop.f32.mrb[0].mxu0
  %v5899 = vadd.f32 %v5610, %v5898
  %v5900 = vpop.f32.mrb[0].mxu0
  %5901 = vmatprep.mubr.bf16.mxu0 %v2657
  %5902 = vmatmul.mubr.bf16.gmra.mrb[0].mxu0 %v2656
  %v5903 = vpop.f32.mrb[0].mxu0
  %v5904 = vadd.f32 %v5615, %v5903
  %v5905 = vpop.f32.mrb[0].mxu0
  %v5906 = vpop.f32.mrb[0].mxu0
  %v5907 = vadd.f32 %v5618, %v5906
  %v5908 = vpop.f32.mrb[0].mxu0
  %5909 = vmatprep.mubr.bf16.mxu0 %v2672
  %5910 = vmatmul.mubr.bf16.gmra.mrb[0].mxu0 %v2671
  %v5911 = vpop.f32.mrb[0].mxu0
  %v5912 = vadd.f32 %v5623, %v5911
  %v5913 = vpop.f32.mrb[0].mxu0
  %v5914 = vpop.f32.mrb[0].mxu0
  %v5915 = vadd.f32 %v5626, %v5914
  %v5916 = vpop.f32.mrb[0].mxu0
  %5917 = vmatprep.mubr.bf16.mxu0 %v2687
  %5918 = vmatmul.mubr.bf16.gmra.mrb[0].mxu0 %v2686
  %v5919 = vpop.f32.mrb[0].mxu0
  %v5920 = vadd.f32 %v5631, %v5919
  %v5921 = vpop.f32.mrb[0].mxu0
  %v5922 = vpop.f32.mrb[0].mxu0
  %v5923 = vadd.f32 %v5634, %v5922
  %v5924 = vpop.f32.mrb[0].mxu0
  %5925 = vmatprep.mubr.bf16.mxu0 %v2702
  %5926 = vmatmul.mubr.bf16.gmra.mrb[0].mxu0 %v2701
  %v5927 = vpop.f32.mrb[0].mxu0
  %v5928 = vadd.f32 %v5639, %v5927
  %v5929 = vpop.f32.mrb[0].mxu0
  %v5930 = vpop.f32.mrb[0].mxu0
  %v5931 = vadd.f32 %v5642, %v5930
  %v5932 = vpop.f32.mrb[0].mxu0
  %5933 = vmatprep.mubr.bf16.mxu0 %v2717
  %5934 = vmatmul.mubr.bf16.gmra.mrb[0].mxu0 %v2716
  %v5935 = vpop.f32.mrb[0].mxu0
  %v5936 = vadd.f32 %v5647, %v5935
  %v5937 = vpop.f32.mrb[0].mxu0
  %v5938 = vpop.f32.mrb[0].mxu0
  %v5939 = vadd.f32 %v5650, %v5938
  %v5940 = vpop.f32.mrb[0].mxu0
  %5941 = vdwg.mxu0
  %5942 = vmatprep.subr.bf16.mxu0 0
  %5943 = vmatpush1.bf16.msra.mxu0 %v3791
  %5944 = vmatprep.subr.bf16.mxu0 0
  %5945 = vmatpush1.bf16.msra.mxu0 %v3792
  %5946 = vmatprep.subr.bf16.mxu0 0
  %5947 = vmatpush1.bf16.msra.mxu0 %v3793
  %5948 = vmatprep.subr.bf16.mxu0 0
  %5949 = vmatpush1.bf16.msra.mxu0 %v3794
  %5950 = vmatprep.subr.bf16.mxu0 0
  %5951 = vmatpush1.bf16.msra.mxu0 %v3795
  %5952 = vmatprep.subr.bf16.mxu0 0
  %5953 = vmatpush1.bf16.msra.mxu0 %v3796
  %5954 = vmatprep.subr.bf16.mxu0 0
  %5955 = vmatpush1.bf16.msra.mxu0 %v3797
  %5956 = vmatprep.subr.bf16.mxu0 0
  %5957 = vmatpush1.bf16.msra.mxu0 %v3798
  %5958 = vmatprep.subr.bf16.mxu0 0
  %5959 = vmatpush1.bf16.msra.mxu0 0
  %5960 = vmatprep.subr.bf16.mxu0 0
  %5961 = vmatpush1.bf16.msra.mxu0 0
  %5962 = vmatprep.subr.bf16.mxu0 0
  %5963 = vmatpush1.bf16.msra.mxu0 0
  %5964 = vmatprep.subr.bf16.mxu0 0
  %5965 = vmatpush1.bf16.msra.mxu0 0
  %5966 = vmatprep.subr.bf16.mxu0 0
  %5967 = vmatpush1.bf16.msra.mxu0 0
  %5968 = vmatprep.subr.bf16.mxu0 0
  %5969 = vmatpush1.bf16.msra.mxu0 0
  %5970 = vmatprep.subr.bf16.mxu0 0
  %5971 = vmatpush1.bf16.msra.mxu0 0
  %5972 = vmatprep.subr.bf16.mxu0 0
  %5973 = vmatpush1.bf16.msra.mxu0 0
  %5974 = vmatprep.mubr.bf16.mxu0 0
  %5975 = vmatmul.mubr.bf16.gmra.mrb[0].mxu0 %v2253
  %v5976 = vpop.f32.mrb[0].mxu0
  %v5977 = vadd.f32 %v5688, %v5976
  %v5978 = vpop.f32.mrb[0].mxu0
  %v5979 = vpop.f32.mrb[0].mxu0
  %v5980 = vadd.f32 %v5691, %v5979
  %v5981 = vpop.f32.mrb[0].mxu0
  %5982 = vmatprep.mubr.bf16.mxu0 0
  %5983 = vmatmul.mubr.bf16.gmra.mrb[0].mxu0 %v2268
  %v5984 = vpop.f32.mrb[0].mxu0
  %v5985 = vadd.f32 %v5696, %v5984
  %v5986 = vpop.f32.mrb[0].mxu0
  %v5987 = vpop.f32.mrb[0].mxu0
  %v5988 = vadd.f32 %v5699, %v5987
  %v5989 = vpop.f32.mrb[0].mxu0
  %5990 = vmatprep.mubr.bf16.mxu0 0
  %5991 = vmatmul.mubr.bf16.gmra.mrb[0].mxu0 %v2283
  %v5992 = vpop.f32.mrb[0].mxu0
  %v5993 = vadd.f32 %v5704, %v5992
  %v5994 = vpop.f32.mrb[0].mxu0
  %v5995 = vpop.f32.mrb[0].mxu0
  %v5996 = vadd.f32 %v5707, %v5995
  %v5997 = vpop.f32.mrb[0].mxu0
  %5998 = vmatprep.mubr.bf16.mxu0 0
  %5999 = vmatmul.mubr.bf16.gmra.mrb[0].mxu0 %v2298
  %v6000 = vpop.f32.mrb[0].mxu0
  %v6001 = vadd.f32 %v5712, %v6000
  %v6002 = vpop.f32.mrb[0].mxu0
  %v6003 = vpop.f32.mrb[0].mxu0
  %v6004 = vadd.f32 %v5715, %v6003
  %v6005 = vpop.f32.mrb[0].mxu0
  %6006 = vmatprep.mubr.bf16.mxu0 0
  %6007 = vmatmul.mubr.bf16.gmra.mrb[0].mxu0 %v2313
  %v6008 = vpop.f32.mrb[0].mxu0
  %v6009 = vadd.f32 %v5720, %v6008
  %v6010 = vpop.f32.mrb[0].mxu0
  %v6011 = vpop.f32.mrb[0].mxu0
  %v6012 = vadd.f32 %v5723, %v6011
  %v6013 = vpop.f32.mrb[0].mxu0
  %6014 = vmatprep.mubr.bf16.mxu0 0
  %6015 = vmatmul.mubr.bf16.gmra.mrb[0].mxu0 %v2328
  %v6016 = vpop.f32.mrb[0].mxu0
  %v6017 = vadd.f32 %v5728, %v6016
  %v6018 = vpop.f32.mrb[0].mxu0
  %v6019 = vpop.f32.mrb[0].mxu0
  %v6020 = vadd.f32 %v5731, %v6019
  %v6021 = vpop.f32.mrb[0].mxu0
  %6022 = vmatprep.mubr.bf16.mxu0 0
  %6023 = vmatmul.mubr.bf16.gmra.mrb[0].mxu0 %v2343
  %v6024 = vpop.f32.mrb[0].mxu0
  %v6025 = vadd.f32 %v5736, %v6024
  %v6026 = vpop.f32.mrb[0].mxu0
  %v6027 = vpop.f32.mrb[0].mxu0
  %v6028 = vadd.f32 %v5739, %v6027
  %v6029 = vpop.f32.mrb[0].mxu0
  %6030 = vmatprep.mubr.bf16.mxu0 0
  %6031 = vmatmul.mubr.bf16.gmra.mrb[0].mxu0 %v2358
  %v6032 = vpop.f32.mrb[0].mxu0
  %v6033 = vadd.f32 %v5744, %v6032
  %v6034 = vpop.f32.mrb[0].mxu0
  %v6035 = vpop.f32.mrb[0].mxu0
  %v6036 = vadd.f32 %v5747, %v6035
  %v6037 = vpop.f32.mrb[0].mxu0
  %6038 = vmatprep.mubr.bf16.mxu0 0
  %6039 = vmatmul.mubr.bf16.gmra.mrb[0].mxu0 %v2373
  %v6040 = vpop.f32.mrb[0].mxu0
  %v6041 = vadd.f32 %v5752, %v6040
  %v6042 = vpop.f32.mrb[0].mxu0
  %v6043 = vpop.f32.mrb[0].mxu0
  %v6044 = vadd.f32 %v5755, %v6043
  %v6045 = vpop.f32.mrb[0].mxu0
  %6046 = vmatprep.mubr.bf16.mxu0 0
  %6047 = vmatmul.mubr.bf16.gmra.mrb[0].mxu0 %v2388
  %v6048 = vpop.f32.mrb[0].mxu0
  %v6049 = vadd.f32 %v5760, %v6048
  %v6050 = vpop.f32.mrb[0].mxu0
  %v6051 = vpop.f32.mrb[0].mxu0
  %v6052 = vadd.f32 %v5763, %v6051
  %v6053 = vpop.f32.mrb[0].mxu0
  %6054 = vmatprep.mubr.bf16.mxu0 0
  %6055 = vmatmul.mubr.bf16.gmra.mrb[0].mxu0 %v2403
  %v6056 = vpop.f32.mrb[0].mxu0
  %v6057 = vadd.f32 %v5768, %v6056
  %v6058 = vpop.f32.mrb[0].mxu0
  %v6059 = vpop.f32.mrb[0].mxu0
  %v6060 = vadd.f32 %v5771, %v6059
  %v6061 = vpop.f32.mrb[0].mxu0
  %6062 = vmatprep.mubr.bf16.mxu0 0
  %6063 = vmatmul.mubr.bf16.gmra.mrb[0].mxu0 %v2418
  %v6064 = vpop.f32.mrb[0].mxu0
  %v6065 = vadd.f32 %v5776, %v6064
  %v6066 = vpop.f32.mrb[0].mxu0
  %v6067 = vpop.f32.mrb[0].mxu0
  %v6068 = vadd.f32 %v5779, %v6067
  %v6069 = vpop.f32.mrb[0].mxu0
  %6070 = vmatprep.mubr.bf16.mxu0 0
  %6071 = vmatmul.mubr.bf16.gmra.mrb[0].mxu0 %v2433
  %v6072 = vpop.f32.mrb[0].mxu0
  %v6073 = vadd.f32 %v5784, %v6072
  %v6074 = vpop.f32.mrb[0].mxu0
  %v6075 = vpop.f32.mrb[0].mxu0
  %v6076 = vadd.f32 %v5787, %v6075
  %v6077 = vpop.f32.mrb[0].mxu0
  %6078 = vmatprep.mubr.bf16.mxu0 0
  %6079 = vmatmul.mubr.bf16.gmra.mrb[0].mxu0 %v2448
  %v6080 = vpop.f32.mrb[0].mxu0
  %v6081 = vadd.f32 %v5792, %v6080
  %v6082 = vpop.f32.mrb[0].mxu0
  %v6083 = vpop.f32.mrb[0].mxu0
  %v6084 = vadd.f32 %v5795, %v6083
  %v6085 = vpop.f32.mrb[0].mxu0
  %6086 = vmatprep.mubr.bf16.mxu0 0
  %6087 = vmatmul.mubr.bf16.gmra.mrb[0].mxu0 %v2463
  %v6088 = vpop.f32.mrb[0].mxu0
  %v6089 = vadd.f32 %v5800, %v6088
  %v6090 = vpop.f32.mrb[0].mxu0
  %v6091 = vpop.f32.mrb[0].mxu0
  %v6092 = vadd.f32 %v5803, %v6091
  %v6093 = vpop.f32.mrb[0].mxu0
  %6094 = vmatprep.mubr.bf16.mxu0 0
  %6095 = vmatmul.mubr.bf16.gmra.mrb[0].mxu0 %v2478
  %v6096 = vpop.f32.mrb[0].mxu0
  %v6097 = vadd.f32 %v5808, %v6096
  %v6098 = vpop.f32.mrb[0].mxu0
  %v6099 = vpop.f32.mrb[0].mxu0
  %v6100 = vadd.f32 %v5811, %v6099
  %v6101 = vpop.f32.mrb[0].mxu0
  %6102 = vmatprep.mubr.bf16.mxu0 0
  %6103 = vmatmul.mubr.bf16.gmra.mrb[0].mxu0 %v2493
  %v6104 = vpop.f32.mrb[0].mxu0
  %v6105 = vadd.f32 %v5816, %v6104
  %v6106 = vpop.f32.mrb[0].mxu0
  %v6107 = vpop.f32.mrb[0].mxu0
  %v6108 = vadd.f32 %v5819, %v6107
  %v6109 = vpop.f32.mrb[0].mxu0
  %6110 = vmatprep.mubr.bf16.mxu0 0
  %6111 = vmatmul.mubr.bf16.gmra.mrb[0].mxu0 %v2508
  %v6112 = vpop.f32.mrb[0].mxu0
  %v6113 = vadd.f32 %v5824, %v6112
  %v6114 = vpop.f32.mrb[0].mxu0
  %v6115 = vpop.f32.mrb[0].mxu0
  %v6116 = vadd.f32 %v5827, %v6115
  %v6117 = vpop.f32.mrb[0].mxu0
  %6118 = vmatprep.mubr.bf16.mxu0 0
  %6119 = vmatmul.mubr.bf16.gmra.mrb[0].mxu0 %v2523
  %v6120 = vpop.f32.mrb[0].mxu0
  %v6121 = vadd.f32 %v5832, %v6120
  %v6122 = vpop.f32.mrb[0].mxu0
  %v6123 = vpop.f32.mrb[0].mxu0
  %v6124 = vadd.f32 %v5835, %v6123
  %v6125 = vpop.f32.mrb[0].mxu0
  %6126 = vmatprep.mubr.bf16.mxu0 0
  %6127 = vmatmul.mubr.bf16.gmra.mrb[0].mxu0 %v2538
  %v6128 = vpop.f32.mrb[0].mxu0
  %v6129 = vadd.f32 %v5840, %v6128
  %v6130 = vpop.f32.mrb[0].mxu0
  %v6131 = vpop.f32.mrb[0].mxu0
  %v6132 = vadd.f32 %v5843, %v6131
  %v6133 = vpop.f32.mrb[0].mxu0
  %6134 = vmatprep.mubr.bf16.mxu0 0
  %6135 = vmatmul.mubr.bf16.gmra.mrb[0].mxu0 %v2553
  %v6136 = vpop.f32.mrb[0].mxu0
  %v6137 = vadd.f32 %v5848, %v6136
  %v6138 = vpop.f32.mrb[0].mxu0
  %v6139 = vpop.f32.mrb[0].mxu0
  %v6140 = vadd.f32 %v5851, %v6139
  %v6141 = vpop.f32.mrb[0].mxu0
  %6142 = vmatprep.mubr.bf16.mxu0 0
  %6143 = vmatmul.mubr.bf16.gmra.mrb[0].mxu0 %v2568
  %v6144 = vpop.f32.mrb[0].mxu0
  %v6145 = vadd.f32 %v5856, %v6144
  %v6146 = vpop.f32.mrb[0].mxu0
  %v6147 = vpop.f32.mrb[0].mxu0
  %v6148 = vadd.f32 %v5859, %v6147
  %v6149 = vpop.f32.mrb[0].mxu0
  %6150 = vmatprep.mubr.bf16.mxu0 0
  %6151 = vmatmul.mubr.bf16.gmra.mrb[0].mxu0 %v2583
  %v6152 = vpop.f32.mrb[0].mxu0
  %v6153 = vadd.f32 %v5864, %v6152
  %v6154 = vpop.f32.mrb[0].mxu0
  %v6155 = vpop.f32.mrb[0].mxu0
  %v6156 = vadd.f32 %v5867, %v6155
  %v6157 = vpop.f32.mrb[0].mxu0
  %6158 = vmatprep.mubr.bf16.mxu0 0
  %6159 = vmatmul.mubr.bf16.gmra.mrb[0].mxu0 %v2598
  %v6160 = vpop.f32.mrb[0].mxu0
  %v6161 = vadd.f32 %v5872, %v6160
  %v6162 = vpop.f32.mrb[0].mxu0
  %v6163 = vpop.f32.mrb[0].mxu0
  %v6164 = vadd.f32 %v5875, %v6163
  %v6165 = vpop.f32.mrb[0].mxu0
  %6166 = vmatprep.mubr.bf16.mxu0 0
  %6167 = vmatmul.mubr.bf16.gmra.mrb[0].mxu0 %v2613
  %v6168 = vpop.f32.mrb[0].mxu0
  %v6169 = vadd.f32 %v5880, %v6168
  %v6170 = vpop.f32.mrb[0].mxu0
  %v6171 = vpop.f32.mrb[0].mxu0
  %v6172 = vadd.f32 %v5883, %v6171
  %v6173 = vpop.f32.mrb[0].mxu0
  %6174 = vmatprep.mubr.bf16.mxu0 0
  %6175 = vmatmul.mubr.bf16.gmra.mrb[0].mxu0 %v2628
  %v6176 = vpop.f32.mrb[0].mxu0
  %v6177 = vadd.f32 %v5888, %v6176
  %v6178 = vpop.f32.mrb[0].mxu0
  %v6179 = vpop.f32.mrb[0].mxu0
  %v6180 = vadd.f32 %v5891, %v6179
  %v6181 = vpop.f32.mrb[0].mxu0
  %6182 = vmatprep.mubr.bf16.mxu0 0
  %6183 = vmatmul.mubr.bf16.gmra.mrb[0].mxu0 %v2643
  %v6184 = vpop.f32.mrb[0].mxu0
  %v6185 = vadd.f32 %v5896, %v6184
  %v6186 = vpop.f32.mrb[0].mxu0
  %v6187 = vpop.f32.mrb[0].mxu0
  %v6188 = vadd.f32 %v5899, %v6187
  %v6189 = vpop.f32.mrb[0].mxu0
  %6190 = vmatprep.mubr.bf16.mxu0 0
  %6191 = vmatmul.mubr.bf16.gmra.mrb[0].mxu0 %v2658
  %v6192 = vpop.f32.mrb[0].mxu0
  %v6193 = vadd.f32 %v5904, %v6192
  %v6194 = vpop.f32.mrb[0].mxu0
  %v6195 = vpop.f32.mrb[0].mxu0
  %v6196 = vadd.f32 %v5907, %v6195
  %v6197 = vpop.f32.mrb[0].mxu0
  %6198 = vmatprep.mubr.bf16.mxu0 0
  %6199 = vmatmul.mubr.bf16.gmra.mrb[0].mxu0 %v2673
  %v6200 = vpop.f32.mrb[0].mxu0
  %v6201 = vadd.f32 %v5912, %v6200
  %v6202 = vpop.f32.mrb[0].mxu0
  %v6203 = vpop.f32.mrb[0].mxu0
  %v6204 = vadd.f32 %v5915, %v6203
  %v6205 = vpop.f32.mrb[0].mxu0
  %6206 = vmatprep.mubr.bf16.mxu0 0
  %6207 = vmatmul.mubr.bf16.gmra.mrb[0].mxu0 %v2688
  %v6208 = vpop.f32.mrb[0].mxu0
  %v6209 = vadd.f32 %v5920, %v6208
  %v6210 = vpop.f32.mrb[0].mxu0
  %v6211 = vpop.f32.mrb[0].mxu0
  %v6212 = vadd.f32 %v5923, %v6211
  %v6213 = vpop.f32.mrb[0].mxu0
  %6214 = vmatprep.mubr.bf16.mxu0 0
  %6215 = vmatmul.mubr.bf16.gmra.mrb[0].mxu0 %v2703
  %v6216 = vpop.f32.mrb[0].mxu0
  %v6217 = vadd.f32 %v5928, %v6216
  %v6218 = vpop.f32.mrb[0].mxu0
  %v6219 = vpop.f32.mrb[0].mxu0
  %v6220 = vadd.f32 %v5931, %v6219
  %v6221 = vpop.f32.mrb[0].mxu0
  %6222 = vmatprep.mubr.bf16.mxu0 0
  %6223 = vmatmul.mubr.bf16.gmra.mrb[0].mxu0 %v2718
  %v6224 = vpop.f32.mrb[0].mxu0
  %v6225 = vadd.f32 %v5936, %v6224
  %v6226 = vpop.f32.mrb[0].mxu0
  %v6227 = vpop.f32.mrb[0].mxu0
  %v6228 = vadd.f32 %v5939, %v6227
  %v6229 = vpop.f32.mrb[0].mxu0
  %6230 = vdwg.mxu0
  %v6231 = vld [vmem:[%s2] sm:$0x1]
  %v6232 = vlaneseq
  %v6233 = vshrl.u32 %v6232, 7
  %v6234 = vsub.s32 0, %v6233
  %v6235 = vrot.slane %v6231, %v6234
  %v6236 = vmul.f32 %v5977, %v6235
  %v6237 = vmul.f32 %v5980, %v6235
  %v6238 = vmul.f32 %v5985, %v6235
  %v6239 = vmul.f32 %v5988, %v6235
  %v6240 = vmul.f32 %v5993, %v6235
  %v6241 = vmul.f32 %v5996, %v6235
  %v6242 = vmul.f32 %v6001, %v6235
  %v6243 = vmul.f32 %v6004, %v6235
  %v6244 = vmul.f32 %v6009, %v6235
  %v6245 = vmul.f32 %v6012, %v6235
  %v6246 = vmul.f32 %v6017, %v6235
  %v6247 = vmul.f32 %v6020, %v6235
  %v6248 = vmul.f32 %v6025, %v6235
  %v6249 = vmul.f32 %v6028, %v6235
  %v6250 = vmul.f32 %v6033, %v6235
  %v6251 = vmul.f32 %v6036, %v6235
  %v6252 = vmul.f32 %v6041, %v6235
  %v6253 = vmul.f32 %v6044, %v6235
  %v6254 = vmul.f32 %v6049, %v6235
  %v6255 = vmul.f32 %v6052, %v6235
  %v6256 = vmul.f32 %v6057, %v6235
  %v6257 = vmul.f32 %v6060, %v6235
  %v6258 = vmul.f32 %v6065, %v6235
  %v6259 = vmul.f32 %v6068, %v6235
  %v6260 = vmul.f32 %v6073, %v6235
  %v6261 = vmul.f32 %v6076, %v6235
  %v6262 = vmul.f32 %v6081, %v6235
  %v6263 = vmul.f32 %v6084, %v6235
  %v6264 = vmul.f32 %v6089, %v6235
  %v6265 = vmul.f32 %v6092, %v6235
  %v6266 = vmul.f32 %v6097, %v6235
  %v6267 = vmul.f32 %v6100, %v6235
  %v6268 = vmul.f32 %v6105, %v6235
  %v6269 = vmul.f32 %v6108, %v6235
  %v6270 = vmul.f32 %v6113, %v6235
  %v6271 = vmul.f32 %v6116, %v6235
  %v6272 = vmul.f32 %v6121, %v6235
  %v6273 = vmul.f32 %v6124, %v6235
  %v6274 = vmul.f32 %v6129, %v6235
  %v6275 = vmul.f32 %v6132, %v6235
  %v6276 = vmul.f32 %v6137, %v6235
  %v6277 = vmul.f32 %v6140, %v6235
  %v6278 = vmul.f32 %v6145, %v6235
  %v6279 = vmul.f32 %v6148, %v6235
  %v6280 = vmul.f32 %v6153, %v6235
  %v6281 = vmul.f32 %v6156, %v6235
  %v6282 = vmul.f32 %v6161, %v6235
  %v6283 = vmul.f32 %v6164, %v6235
  %v6284 = vmul.f32 %v6169, %v6235
  %v6285 = vmul.f32 %v6172, %v6235
  %v6286 = vmul.f32 %v6177, %v6235
  %v6287 = vmul.f32 %v6180, %v6235
  %v6288 = vmul.f32 %v6185, %v6235
  %v6289 = vmul.f32 %v6188, %v6235
  %v6290 = vmul.f32 %v6193, %v6235
  %v6291 = vmul.f32 %v6196, %v6235
  %v6292 = vmul.f32 %v6201, %v6235
  %v6293 = vmul.f32 %v6204, %v6235
  %v6294 = vmul.f32 %v6209, %v6235
  %v6295 = vmul.f32 %v6212, %v6235
  %v6296 = vmul.f32 %v6217, %v6235
  %v6297 = vmul.f32 %v6220, %v6235
  %v6298 = vmul.f32 %v6225, %v6235
  %v6299 = vmul.f32 %v6228, %v6235
  %v6300 = vld [vmem:[%s2 + $0x1] sm:$0x1]
  %v6301 = vlaneseq
  %v6302 = vshrl.u32 %v6301, 7
  %v6303 = vsub.s32 0, %v6302
  %v6304 = vrot.slane %v6300, %v6303
  %v6305 = vadd.f32 %v6236, %v6304
  %v6306 = vadd.f32 %v6237, %v6304
  %v6307 = vadd.f32 %v6238, %v6304
  %v6308 = vadd.f32 %v6239, %v6304
  %v6309 = vadd.f32 %v6240, %v6304
  %v6310 = vadd.f32 %v6241, %v6304
  %v6311 = vadd.f32 %v6242, %v6304
  %v6312 = vadd.f32 %v6243, %v6304
  %v6313 = vadd.f32 %v6244, %v6304
  %v6314 = vadd.f32 %v6245, %v6304
  %v6315 = vadd.f32 %v6246, %v6304
  %v6316 = vadd.f32 %v6247, %v6304
  %v6317 = vadd.f32 %v6248, %v6304
  %v6318 = vadd.f32 %v6249, %v6304
  %v6319 = vadd.f32 %v6250, %v6304
  %v6320 = vadd.f32 %v6251, %v6304
  %v6321 = vadd.f32 %v6252, %v6304
  %v6322 = vadd.f32 %v6253, %v6304
  %v6323 = vadd.f32 %v6254, %v6304
  %v6324 = vadd.f32 %v6255, %v6304
  %v6325 = vadd.f32 %v6256, %v6304
  %v6326 = vadd.f32 %v6257, %v6304
  %v6327 = vadd.f32 %v6258, %v6304
  %v6328 = vadd.f32 %v6259, %v6304
  %v6329 = vadd.f32 %v6260, %v6304
  %v6330 = vadd.f32 %v6261, %v6304
  %v6331 = vadd.f32 %v6262, %v6304
  %v6332 = vadd.f32 %v6263, %v6304
  %v6333 = vadd.f32 %v6264, %v6304
  %v6334 = vadd.f32 %v6265, %v6304
  %v6335 = vadd.f32 %v6266, %v6304
  %v6336 = vadd.f32 %v6267, %v6304
  %v6337 = vadd.f32 %v6268, %v6304
  %v6338 = vadd.f32 %v6269, %v6304
  %v6339 = vadd.f32 %v6270, %v6304
  %v6340 = vadd.f32 %v6271, %v6304
  %v6341 = vadd.f32 %v6272, %v6304
  %v6342 = vadd.f32 %v6273, %v6304
  %v6343 = vadd.f32 %v6274, %v6304
  %v6344 = vadd.f32 %v6275, %v6304
  %v6345 = vadd.f32 %v6276, %v6304
  %v6346 = vadd.f32 %v6277, %v6304
  %v6347 = vadd.f32 %v6278, %v6304
  %v6348 = vadd.f32 %v6279, %v6304
  %v6349 = vadd.f32 %v6280, %v6304
  %v6350 = vadd.f32 %v6281, %v6304
  %v6351 = vadd.f32 %v6282, %v6304
  %v6352 = vadd.f32 %v6283, %v6304
  %v6353 = vadd.f32 %v6284, %v6304
  %v6354 = vadd.f32 %v6285, %v6304
  %v6355 = vadd.f32 %v6286, %v6304
  %v6356 = vadd.f32 %v6287, %v6304
  %v6357 = vadd.f32 %v6288, %v6304
  %v6358 = vadd.f32 %v6289, %v6304
  %v6359 = vadd.f32 %v6290, %v6304
  %v6360 = vadd.f32 %v6291, %v6304
  %v6361 = vadd.f32 %v6292, %v6304
  %v6362 = vadd.f32 %v6293, %v6304
  %v6363 = vadd.f32 %v6294, %v6304
  %v6364 = vadd.f32 %v6295, %v6304
  %v6365 = vadd.f32 %v6296, %v6304
  %v6366 = vadd.f32 %v6297, %v6304
  %v6367 = vadd.f32 %v6298, %v6304
  %v6368 = vadd.f32 %v6299, %v6304
  %v6369 = vmax.f32 %v6305, 0.0
  %v6370 = vmax.f32 %v6306, 0.0
  %v6371 = vmax.f32 %v6307, 0.0
  %v6372 = vmax.f32 %v6308, 0.0
  %v6373 = vmax.f32 %v6309, 0.0
  %v6374 = vmax.f32 %v6310, 0.0
  %v6375 = vmax.f32 %v6311, 0.0
  %v6376 = vmax.f32 %v6312, 0.0
  %v6377 = vmax.f32 %v6313, 0.0
  %v6378 = vmax.f32 %v6314, 0.0
  %v6379 = vmax.f32 %v6315, 0.0
  %v6380 = vmax.f32 %v6316, 0.0
  %v6381 = vmax.f32 %v6317, 0.0
  %v6382 = vmax.f32 %v6318, 0.0
  %v6383 = vmax.f32 %v6319, 0.0
  %v6384 = vmax.f32 %v6320, 0.0
  %v6385 = vmax.f32 %v6321, 0.0
  %v6386 = vmax.f32 %v6322, 0.0
  %v6387 = vmax.f32 %v6323, 0.0
  %v6388 = vmax.f32 %v6324, 0.0
  %v6389 = vmax.f32 %v6325, 0.0
  %v6390 = vmax.f32 %v6326, 0.0
  %v6391 = vmax.f32 %v6327, 0.0
  %v6392 = vmax.f32 %v6328, 0.0
  %v6393 = vmax.f32 %v6329, 0.0
  %v6394 = vmax.f32 %v6330, 0.0
  %v6395 = vmax.f32 %v6331, 0.0
  %v6396 = vmax.f32 %v6332, 0.0
  %v6397 = vmax.f32 %v6333, 0.0
  %v6398 = vmax.f32 %v6334, 0.0
  %v6399 = vmax.f32 %v6335, 0.0
  %v6400 = vmax.f32 %v6336, 0.0
  %v6401 = vmax.f32 %v6337, 0.0
  %v6402 = vmax.f32 %v6338, 0.0
  %v6403 = vmax.f32 %v6339, 0.0
  %v6404 = vmax.f32 %v6340, 0.0
  %v6405 = vmax.f32 %v6341, 0.0
  %v6406 = vmax.f32 %v6342, 0.0
  %v6407 = vmax.f32 %v6343, 0.0
  %v6408 = vmax.f32 %v6344, 0.0
  %v6409 = vmax.f32 %v6345, 0.0
  %v6410 = vmax.f32 %v6346, 0.0
  %v6411 = vmax.f32 %v6347, 0.0
  %v6412 = vmax.f32 %v6348, 0.0
  %v6413 = vmax.f32 %v6349, 0.0
  %v6414 = vmax.f32 %v6350, 0.0
  %v6415 = vmax.f32 %v6351, 0.0
  %v6416 = vmax.f32 %v6352, 0.0
  %v6417 = vmax.f32 %v6353, 0.0
  %v6418 = vmax.f32 %v6354, 0.0
  %v6419 = vmax.f32 %v6355, 0.0
  %v6420 = vmax.f32 %v6356, 0.0
  %v6421 = vmax.f32 %v6357, 0.0
  %v6422 = vmax.f32 %v6358, 0.0
  %v6423 = vmax.f32 %v6359, 0.0
  %v6424 = vmax.f32 %v6360, 0.0
  %v6425 = vmax.f32 %v6361, 0.0
  %v6426 = vmax.f32 %v6362, 0.0
  %v6427 = vmax.f32 %v6363, 0.0
  %v6428 = vmax.f32 %v6364, 0.0
  %v6429 = vmax.f32 %v6365, 0.0
  %v6430 = vmax.f32 %v6366, 0.0
  %v6431 = vmax.f32 %v6367, 0.0
  %v6432 = vmax.f32 %v6368, 0.0
  %v6433 = vpack.c.bf16 %v6370, %v6369
  %v6434 = vpack.c.bf16 %v6372, %v6371
  %v6435 = vpack.c.bf16 %v6374, %v6373
  %v6436 = vpack.c.bf16 %v6376, %v6375
  %v6437 = vpack.c.bf16 %v6378, %v6377
  %v6438 = vpack.c.bf16 %v6380, %v6379
  %v6439 = vpack.c.bf16 %v6382, %v6381
  %v6440 = vpack.c.bf16 %v6384, %v6383
  %v6441 = vpack.c.bf16 %v6386, %v6385
  %v6442 = vpack.c.bf16 %v6388, %v6387
  %v6443 = vpack.c.bf16 %v6390, %v6389
  %v6444 = vpack.c.bf16 %v6392, %v6391
  %v6445 = vpack.c.bf16 %v6394, %v6393
  %v6446 = vpack.c.bf16 %v6396, %v6395
  %v6447 = vpack.c.bf16 %v6398, %v6397
  %v6448 = vpack.c.bf16 %v6400, %v6399
  %v6449 = vpack.c.bf16 %v6402, %v6401
  %v6450 = vpack.c.bf16 %v6404, %v6403
  %v6451 = vpack.c.bf16 %v6406, %v6405
  %v6452 = vpack.c.bf16 %v6408, %v6407
  %v6453 = vpack.c.bf16 %v6410, %v6409
  %v6454 = vpack.c.bf16 %v6412, %v6411
  %v6455 = vpack.c.bf16 %v6414, %v6413
  %v6456 = vpack.c.bf16 %v6416, %v6415
  %v6457 = vpack.c.bf16 %v6418, %v6417
  %v6458 = vpack.c.bf16 %v6420, %v6419
  %v6459 = vpack.c.bf16 %v6422, %v6421
  %v6460 = vpack.c.bf16 %v6424, %v6423
  %v6461 = vpack.c.bf16 %v6426, %v6425
  %v6462 = vpack.c.bf16 %v6428, %v6427
  %v6463 = vpack.c.bf16 %v6430, %v6429
  %v6464 = vpack.c.bf16 %v6432, %v6431
  %v6497 = vunpack.c.l.b16 %v6433
  %v6498 = vunpack.c.h.b16 %v6433
  %v6499 = vunpack.c.l.b16 %v6434
  %v6500 = vunpack.c.h.b16 %v6434
  %v6501 = vunpack.c.l.b16 %v6435
  %v6502 = vunpack.c.h.b16 %v6435
  %v6503 = vunpack.c.l.b16 %v6436
  %v6504 = vunpack.c.h.b16 %v6436
  %v6505 = vunpack.c.l.b16 %v6437
  %v6506 = vunpack.c.h.b16 %v6437
  %v6507 = vunpack.c.l.b16 %v6438
  %v6508 = vunpack.c.h.b16 %v6438
  %v6509 = vunpack.c.l.b16 %v6439
  %v6510 = vunpack.c.h.b16 %v6439
  %v6511 = vunpack.c.l.b16 %v6440
  %v6512 = vunpack.c.h.b16 %v6440
  %v6513 = vunpack.c.l.b16 %v6441
  %v6514 = vunpack.c.h.b16 %v6441
  %v6515 = vunpack.c.l.b16 %v6442
  %v6516 = vunpack.c.h.b16 %v6442
  %v6517 = vunpack.c.l.b16 %v6443
  %v6518 = vunpack.c.h.b16 %v6443
  %v6519 = vunpack.c.l.b16 %v6444
  %v6520 = vunpack.c.h.b16 %v6444
  %v6521 = vunpack.c.l.b16 %v6445
  %v6522 = vunpack.c.h.b16 %v6445
  %v6523 = vunpack.c.l.b16 %v6446
  %v6524 = vunpack.c.h.b16 %v6446
  %v6525 = vunpack.c.l.b16 %v6447
  %v6526 = vunpack.c.h.b16 %v6447
  %v6527 = vunpack.c.l.b16 %v6448
  %v6528 = vunpack.c.h.b16 %v6448
  %v6529 = vunpack.c.l.b16 %v6449
  %v6530 = vunpack.c.h.b16 %v6449
  %v6531 = vunpack.c.l.b16 %v6450
  %v6532 = vunpack.c.h.b16 %v6450
  %v6533 = vunpack.c.l.b16 %v6451
  %v6534 = vunpack.c.h.b16 %v6451
  %v6535 = vunpack.c.l.b16 %v6452
  %v6536 = vunpack.c.h.b16 %v6452
  %v6537 = vunpack.c.l.b16 %v6453
  %v6538 = vunpack.c.h.b16 %v6453
  %v6539 = vunpack.c.l.b16 %v6454
  %v6540 = vunpack.c.h.b16 %v6454
  %v6541 = vunpack.c.l.b16 %v6455
  %v6542 = vunpack.c.h.b16 %v6455
  %v6543 = vunpack.c.l.b16 %v6456
  %v6544 = vunpack.c.h.b16 %v6456
  %v6545 = vunpack.c.l.b16 %v6457
  %v6546 = vunpack.c.h.b16 %v6457
  %v6547 = vunpack.c.l.b16 %v6458
  %v6548 = vunpack.c.h.b16 %v6458
  %v6549 = vunpack.c.l.b16 %v6459
  %v6550 = vunpack.c.h.b16 %v6459
  %v6551 = vunpack.c.l.b16 %v6460
  %v6552 = vunpack.c.h.b16 %v6460
  %v6553 = vunpack.c.l.b16 %v6461
  %v6554 = vunpack.c.h.b16 %v6461
  %v6555 = vunpack.c.l.b16 %v6462
  %v6556 = vunpack.c.h.b16 %v6462
  %v6557 = vunpack.c.l.b16 %v6463
  %v6558 = vunpack.c.h.b16 %v6463
  %v6559 = vunpack.c.l.b16 %v6464
  %v6560 = vunpack.c.h.b16 %v6464
  %v6561 = vpack.c.b16 %v6497, %v6497
  %v6562 = vpack.c.b16 %v6498, %v6498
  %v6563 = vpack.c.b16 %v6499, %v6499
  %v6564 = vpack.c.b16 %v6500, %v6500
  %v6565 = vpack.c.b16 %v6501, %v6501
  %v6566 = vpack.c.b16 %v6502, %v6502
  %v6567 = vpack.c.b16 %v6503, %v6503
  %v6568 = vpack.c.b16 %v6504, %v6504
  %v6569 = vpack.c.b16 %v6505, %v6505
  %v6570 = vpack.c.b16 %v6506, %v6506
  %v6571 = vpack.c.b16 %v6507, %v6507
  %v6572 = vpack.c.b16 %v6508, %v6508
  %v6573 = vpack.c.b16 %v6509, %v6509
  %v6574 = vpack.c.b16 %v6510, %v6510
  %v6575 = vpack.c.b16 %v6511, %v6511
  %v6576 = vpack.c.b16 %v6512, %v6512
  %v6577 = vpack.c.b16 %v6513, %v6513
  %v6578 = vpack.c.b16 %v6514, %v6514
  %v6579 = vpack.c.b16 %v6515, %v6515
  %v6580 = vpack.c.b16 %v6516, %v6516
  %v6581 = vpack.c.b16 %v6517, %v6517
  %v6582 = vpack.c.b16 %v6518, %v6518
  %v6583 = vpack.c.b16 %v6519, %v6519
  %v6584 = vpack.c.b16 %v6520, %v6520
  %v6585 = vpack.c.b16 %v6521, %v6521
  %v6586 = vpack.c.b16 %v6522, %v6522
  %v6587 = vpack.c.b16 %v6523, %v6523
  %v6588 = vpack.c.b16 %v6524, %v6524
  %v6589 = vpack.c.b16 %v6525, %v6525
  %v6590 = vpack.c.b16 %v6526, %v6526
  %v6591 = vpack.c.b16 %v6527, %v6527
  %v6592 = vpack.c.b16 %v6528, %v6528
  %v6593 = vpack.c.b16 %v6529, %v6529
  %v6594 = vpack.c.b16 %v6530, %v6530
  %v6595 = vpack.c.b16 %v6531, %v6531
  %v6596 = vpack.c.b16 %v6532, %v6532
  %v6597 = vpack.c.b16 %v6533, %v6533
  %v6598 = vpack.c.b16 %v6534, %v6534
  %v6599 = vpack.c.b16 %v6535, %v6535
  %v6600 = vpack.c.b16 %v6536, %v6536
  %v6601 = vpack.c.b16 %v6537, %v6537
  %v6602 = vpack.c.b16 %v6538, %v6538
  %v6603 = vpack.c.b16 %v6539, %v6539
  %v6604 = vpack.c.b16 %v6540, %v6540
  %v6605 = vpack.c.b16 %v6541, %v6541
  %v6606 = vpack.c.b16 %v6542, %v6542
  %v6607 = vpack.c.b16 %v6543, %v6543
  %v6608 = vpack.c.b16 %v6544, %v6544
  %v6609 = vpack.c.b16 %v6545, %v6545
  %v6610 = vpack.c.b16 %v6546, %v6546
  %v6611 = vpack.c.b16 %v6547, %v6547
  %v6612 = vpack.c.b16 %v6548, %v6548
  %v6613 = vpack.c.b16 %v6549, %v6549
  %v6614 = vpack.c.b16 %v6550, %v6550
  %v6615 = vpack.c.b16 %v6551, %v6551
  %v6616 = vpack.c.b16 %v6552, %v6552
  %v6617 = vpack.c.b16 %v6553, %v6553
  %v6618 = vpack.c.b16 %v6554, %v6554
  %v6619 = vpack.c.b16 %v6555, %v6555
  %v6620 = vpack.c.b16 %v6556, %v6556
  %v6621 = vpack.c.b16 %v6557, %v6557
  %v6622 = vpack.c.b16 %v6558, %v6558
  %v6623 = vpack.c.b16 %v6559, %v6559
  %v6624 = vpack.c.b16 %v6560, %v6560
  %6689 = vst [vmem:[%s3] sm:$0xf] %v6561
  %6690 = vst [vmem:[%s3 + $0x4] sm:$0xf] %v6562
  %6691 = vst [vmem:[%s3 + $0x8] sm:$0xf] %v6563
  %6692 = vst [vmem:[%s3 + $0xc] sm:$0xf] %v6564
  %6693 = vst [vmem:[%s3 + $0x10] sm:$0xf] %v6565
  %6694 = vst [vmem:[%s3 + $0x14] sm:$0xf] %v6566
  %6695 = vst [vmem:[%s3 + $0x18] sm:$0xf] %v6567
  %6696 = vst [vmem:[%s3 + $0x1c] sm:$0xf] %v6568
  %6697 = vst [vmem:[%s3 + $0x20] sm:$0xf] %v6569
  %6698 = vst [vmem:[%s3 + $0x24] sm:$0xf] %v6570
  %6699 = vst [vmem:[%s3 + $0x28] sm:$0xf] %v6571
  %6700 = vst [vmem:[%s3 + $0x2c] sm:$0xf] %v6572
  %6701 = vst [vmem:[%s3 + $0x30] sm:$0xf] %v6573
  %6702 = vst [vmem:[%s3 + $0x34] sm:$0xf] %v6574
  %6703 = vst [vmem:[%s3 + $0x38] sm:$0xf] %v6575
  %6704 = vst [vmem:[%s3 + $0x3c] sm:$0xf] %v6576
  %6705 = vst [vmem:[%s3 + $0x40] sm:$0xf] %v6577
  %6706 = vst [vmem:[%s3 + $0x44] sm:$0xf] %v6578
  %6707 = vst [vmem:[%s3 + $0x48] sm:$0xf] %v6579
  %6708 = vst [vmem:[%s3 + $0x4c] sm:$0xf] %v6580
  %6709 = vst [vmem:[%s3 + $0x50] sm:$0xf] %v6581
  %6710 = vst [vmem:[%s3 + $0x54] sm:$0xf] %v6582
  %6711 = vst [vmem:[%s3 + $0x58] sm:$0xf] %v6583
  %6712 = vst [vmem:[%s3 + $0x5c] sm:$0xf] %v6584
  %6713 = vst [vmem:[%s3 + $0x60] sm:$0xf] %v6585
  %6714 = vst [vmem:[%s3 + $0x64] sm:$0xf] %v6586
  %6715 = vst [vmem:[%s3 + $0x68] sm:$0xf] %v6587
  %6716 = vst [vmem:[%s3 + $0x6c] sm:$0xf] %v6588
  %6717 = vst [vmem:[%s3 + $0x70] sm:$0xf] %v6589
  %6718 = vst [vmem:[%s3 + $0x74] sm:$0xf] %v6590
  %6719 = vst [vmem:[%s3 + $0x78] sm:$0xf] %v6591
  %6720 = vst [vmem:[%s3 + $0x7c] sm:$0xf] %v6592
  %6721 = vst [vmem:[%s3 + $0x80] sm:$0xf] %v6593
  %6722 = vst [vmem:[%s3 + $0x84] sm:$0xf] %v6594
  %6723 = vst [vmem:[%s3 + $0x88] sm:$0xf] %v6595
  %6724 = vst [vmem:[%s3 + $0x8c] sm:$0xf] %v6596
  %6725 = vst [vmem:[%s3 + $0x90] sm:$0xf] %v6597
  %6726 = vst [vmem:[%s3 + $0x94] sm:$0xf] %v6598
  %6727 = vst [vmem:[%s3 + $0x98] sm:$0xf] %v6599
  %6728 = vst [vmem:[%s3 + $0x9c] sm:$0xf] %v6600
  %6729 = vst [vmem:[%s3 + $0xa0] sm:$0xf] %v6601
  %6730 = vst [vmem:[%s3 + $0xa4] sm:$0xf] %v6602
  %6731 = vst [vmem:[%s3 + $0xa8] sm:$0xf] %v6603
  %6732 = vst [vmem:[%s3 + $0xac] sm:$0xf] %v6604
  %6733 = vst [vmem:[%s3 + $0xb0] sm:$0xf] %v6605
  %6734 = vst [vmem:[%s3 + $0xb4] sm:$0xf] %v6606
  %6735 = vst [vmem:[%s3 + $0xb8] sm:$0xf] %v6607
  %6736 = vst [vmem:[%s3 + $0xbc] sm:$0xf] %v6608
  %6737 = vst [vmem:[%s3 + $0xc0] sm:$0xf] %v6609
  %6738 = vst [vmem:[%s3 + $0xc4] sm:$0xf] %v6610
  %6739 = vst [vmem:[%s3 + $0xc8] sm:$0xf] %v6611
  %6740 = vst [vmem:[%s3 + $0xcc] sm:$0xf] %v6612
  %6741 = vst [vmem:[%s3 + $0xd0] sm:$0xf] %v6613
  %6742 = vst [vmem:[%s3 + $0xd4] sm:$0xf] %v6614
  %6743 = vst [vmem:[%s3 + $0xd8] sm:$0xf] %v6615
  %6744 = vst [vmem:[%s3 + $0xdc] sm:$0xf] %v6616
  %6745 = vst [vmem:[%s3 + $0xe0] sm:$0xf] %v6617
  %6746 = vst [vmem:[%s3 + $0xe4] sm:$0xf] %v6618
  %6747 = vst [vmem:[%s3 + $0xe8] sm:$0xf] %v6619
  %6748 = vst [vmem:[%s3 + $0xec] sm:$0xf] %v6620
  %6749 = vst [vmem:[%s3 + $0xf0] sm:$0xf] %v6621
  %6750 = vst [vmem:[%s3 + $0xf4] sm:$0xf] %v6622
  %6751 = vst [vmem:[%s3 + $0xf8] sm:$0xf] %v6623
  %6752 = vst [vmem:[%s3 + $0xfc] sm:$0xf] %v6624
  // Predicated region
  $region14: #{implicit_network_forward.4} parent=0 // pred_check
    _
  $region15: #{implicit_network_forward.4} parent=0 // pred_check_branch
    %6754 = sbr.rel (0) target = $region17
  $region16: #{implicit_network_forward.4} parent=0 // pred_region
    _
  $region17: #{implicit_network_forward.4} parent=0 // pred_fallthru
    _
  // Predicated region
  $region18: #{implicit_network_forward.4} parent=0 // pred_check
    _
  $region19: #{implicit_network_forward.4} parent=0 // pred_check_branch
    %6756 = sbr.rel (0) target = $region21
  $region20: #{implicit_network_forward.4} parent=0 // pred_region
    _
  $region21: #{implicit_network_forward.4} parent=0 // pred_fallthru
    _

// kernel: implicit_network_forward.5
$region0: #{implicit_network_forward.5}
  #allocation0 [shape = 'u32[]', space=smem, size = 0x4, offset = 0x4, fixed_abs, tag = 'smem constant byte address 0x4 - core index']
  #allocation1 [shape = 'u32[144,128]{1,0:T(1,128)}', space=vmem, size = 0x12000, scoped, tag = 'internal scratch']
  %s0 = inlined_call_operand.vmem [shape: bf16[512,1152], index: 0, kind: input, shape index: {}]
  %s1 = inlined_call_operand.vmem [shape: bf16[1152,128], index: 1, kind: input, shape index: {}]
  %s2 = inlined_call_operand.vmem [shape: f32[2,128], index: 2, kind: input, shape index: {}]
  %s3 = inlined_call_operand.vmem [shape: f32[512,128], index: 3, kind: output, shape index: {}]
  %s4 = sld [smem:[#allocation0]]
  $region22: #{implicit_network_forward.5} parent=0
    _
  %s6 = ssub.s32 1, %s4
  %s7 = scalar_select 0, %s6, %s4
  // Predicated region
  $region2: #{implicit_network_forward.5} parent=0 // pred_check
    _
  $region3: #{implicit_network_forward.5} parent=0 // pred_check_branch
    %9 = sbr.rel (0) target = $region5
  $region4: #{implicit_network_forward.5} parent=0 // pred_region
    _
  $region5: #{implicit_network_forward.5} parent=0 // pred_fallthru
    _
  // Predicated region
  $region6: #{implicit_network_forward.5} parent=0 // pred_check
    _
  $region7: #{implicit_network_forward.5} parent=0 // pred_check_branch
    %11 = sbr.rel (0) target = $region9
  $region8: #{implicit_network_forward.5} parent=0 // pred_region
    _
  $region9: #{implicit_network_forward.5} parent=0 // pred_fallthru
    _
  // Predicated region
  $region10: #{implicit_network_forward.5} parent=0 // pred_check
    _
  $region11: #{implicit_network_forward.5} parent=0 // pred_check_branch
    %13 = sbr.rel (0) target = $region13
  $region12: #{implicit_network_forward.5} parent=0 // pred_region
    _
  $region13: #{implicit_network_forward.5} parent=0 // pred_fallthru
    _
  %v15 = vld [vmem:[%s0] sm:$0xff]
  %v16 = vld [vmem:[%s0 + $0x8] sm:$0xff]
  %v17 = vld [vmem:[%s0 + $0x10] sm:$0xff]
  %v18 = vld [vmem:[%s0 + $0x18] sm:$0xff]
  %v19 = vld [vmem:[%s0 + $0x20] sm:$0xf]
  %v20 = vld [vmem:[%s0 + $0x24] sm:$0xff]
  %v21 = vld [vmem:[%s0 + $0x2c] sm:$0xff]
  %v22 = vld [vmem:[%s0 + $0x34] sm:$0xff]
  %v23 = vld [vmem:[%s0 + $0x3c] sm:$0xff]
  %v24 = vld [vmem:[%s0 + $0x44] sm:$0xf]
  %v25 = vld [vmem:[%s0 + $0x48] sm:$0xff]
  %v26 = vld [vmem:[%s0 + $0x50] sm:$0xff]
  %v27 = vld [vmem:[%s0 + $0x58] sm:$0xff]
  %v28 = vld [vmem:[%s0 + $0x60] sm:$0xff]
  %v29 = vld [vmem:[%s0 + $0x68] sm:$0xf]
  %v30 = vld [vmem:[%s0 + $0x6c] sm:$0xff]
  %v31 = vld [vmem:[%s0 + $0x74] sm:$0xff]
  %v32 = vld [vmem:[%s0 + $0x7c] sm:$0xff]
  %v33 = vld [vmem:[%s0 + $0x84] sm:$0xff]
  %v34 = vld [vmem:[%s0 + $0x8c] sm:$0xf]
  %v35 = vld [vmem:[%s0 + $0x90] sm:$0xff]
  %v36 = vld [vmem:[%s0 + $0x98] sm:$0xff]
  %v37 = vld [vmem:[%s0 + $0xa0] sm:$0xff]
  %v38 = vld [vmem:[%s0 + $0xa8] sm:$0xff]
  %v39 = vld [vmem:[%s0 + $0xb0] sm:$0xf]
  %v40 = vld [vmem:[%s0 + $0xb4] sm:$0xff]
  %v41 = vld [vmem:[%s0 + $0xbc] sm:$0xff]
  %v42 = vld [vmem:[%s0 + $0xc4] sm:$0xff]
  %v43 = vld [vmem:[%s0 + $0xcc] sm:$0xff]
  %v44 = vld [vmem:[%s0 + $0xd4] sm:$0xf]
  %v45 = vld [vmem:[%s0 + $0xd8] sm:$0xff]
  %v46 = vld [vmem:[%s0 + $0xe0] sm:$0xff]
  %v47 = vld [vmem:[%s0 + $0xe8] sm:$0xff]
  %v48 = vld [vmem:[%s0 + $0xf0] sm:$0xff]
  %v49 = vld [vmem:[%s0 + $0xf8] sm:$0xf]
  %v50 = vld [vmem:[%s0 + $0xfc] sm:$0xff]
  %v51 = vld [vmem:[%s0 + $0x104] sm:$0xff]
  %v52 = vld [vmem:[%s0 + $0x10c] sm:$0xff]
  %v53 = vld [vmem:[%s0 + $0x114] sm:$0xff]
  %v54 = vld [vmem:[%s0 + $0x11c] sm:$0xf]
  %v55 = vld [vmem:[%s0 + $0x120] sm:$0xff]
  %v56 = vld [vmem:[%s0 + $0x128] sm:$0xff]
  %v57 = vld [vmem:[%s0 + $0x130] sm:$0xff]
  %v58 = vld [vmem:[%s0 + $0x138] sm:$0xff]
  %v59 = vld [vmem:[%s0 + $0x140] sm:$0xf]
  %v60 = vld [vmem:[%s0 + $0x144] sm:$0xff]
  %v61 = vld [vmem:[%s0 + $0x14c] sm:$0xff]
  %v62 = vld [vmem:[%s0 + $0x154] sm:$0xff]
  %v63 = vld [vmem:[%s0 + $0x15c] sm:$0xff]
  %v64 = vld [vmem:[%s0 + $0x164] sm:$0xf]
  %v65 = vld [vmem:[%s0 + $0x168] sm:$0xff]
  %v66 = vld [vmem:[%s0 + $0x170] sm:$0xff]
  %v67 = vld [vmem:[%s0 + $0x178] sm:$0xff]
  %v68 = vld [vmem:[%s0 + $0x180] sm:$0xff]
  %v69 = vld [vmem:[%s0 + $0x188] sm:$0xf]
  %v70 = vld [vmem:[%s0 + $0x18c] sm:$0xff]
  %v71 = vld [vmem:[%s0 + $0x194] sm:$0xff]
  %v72 = vld [vmem:[%s0 + $0x19c] sm:$0xff]
  %v73 = vld [vmem:[%s0 + $0x1a4] sm:$0xff]
  %v74 = vld [vmem:[%s0 + $0x1ac] sm:$0xf]
  %v75 = vld [vmem:[%s0 + $0x1b0] sm:$0xff]
  %v76 = vld [vmem:[%s0 + $0x1b8] sm:$0xff]
  %v77 = vld [vmem:[%s0 + $0x1c0] sm:$0xff]
  %v78 = vld [vmem:[%s0 + $0x1c8] sm:$0xff]
  %v79 = vld [vmem:[%s0 + $0x1d0] sm:$0xf]
  %v80 = vld [vmem:[%s0 + $0x1d4] sm:$0xff]
  %v81 = vld [vmem:[%s0 + $0x1dc] sm:$0xff]
  %v82 = vld [vmem:[%s0 + $0x1e4] sm:$0xff]
  %v83 = vld [vmem:[%s0 + $0x1ec] sm:$0xff]
  %v84 = vld [vmem:[%s0 + $0x1f4] sm:$0xf]
  %v85 = vld [vmem:[%s0 + $0x1f8] sm:$0xff]
  %v86 = vld [vmem:[%s0 + $0x200] sm:$0xff]
  %v87 = vld [vmem:[%s0 + $0x208] sm:$0xff]
  %v88 = vld [vmem:[%s0 + $0x210] sm:$0xff]
  %v89 = vld [vmem:[%s0 + $0x218] sm:$0xf]
  %v90 = vld [vmem:[%s0 + $0x21c] sm:$0xff]
  %v91 = vld [vmem:[%s0 + $0x224] sm:$0xff]
  %v92 = vld [vmem:[%s0 + $0x22c] sm:$0xff]
  %v93 = vld [vmem:[%s0 + $0x234] sm:$0xff]
  %v94 = vld [vmem:[%s0 + $0x23c] sm:$0xf]
  %v95 = vld [vmem:[%s0 + $0x240] sm:$0xff]
  %v96 = vld [vmem:[%s0 + $0x248] sm:$0xff]
  %v97 = vld [vmem:[%s0 + $0x250] sm:$0xff]
  %v98 = vld [vmem:[%s0 + $0x258] sm:$0xff]
  %v99 = vld [vmem:[%s0 + $0x260] sm:$0xf]
  %v100 = vld [vmem:[%s0 + $0x264] sm:$0xff]
  %v101 = vld [vmem:[%s0 + $0x26c] sm:$0xff]
  %v102 = vld [vmem:[%s0 + $0x274] sm:$0xff]
  %v103 = vld [vmem:[%s0 + $0x27c] sm:$0xff]
  %v104 = vld [vmem:[%s0 + $0x284] sm:$0xf]
  %v105 = vld [vmem:[%s0 + $0x288] sm:$0xff]
  %v106 = vld [vmem:[%s0 + $0x290] sm:$0xff]
  %v107 = vld [vmem:[%s0 + $0x298] sm:$0xff]
  %v108 = vld [vmem:[%s0 + $0x2a0] sm:$0xff]
  %v109 = vld [vmem:[%s0 + $0x2a8] sm:$0xf]
  %v110 = vld [vmem:[%s0 + $0x2ac] sm:$0xff]
  %v111 = vld [vmem:[%s0 + $0x2b4] sm:$0xff]
  %v112 = vld [vmem:[%s0 + $0x2bc] sm:$0xff]
  %v113 = vld [vmem:[%s0 + $0x2c4] sm:$0xff]
  %v114 = vld [vmem:[%s0 + $0x2cc] sm:$0xf]
  %v115 = vld [vmem:[%s0 + $0x2d0] sm:$0xff]
  %v116 = vld [vmem:[%s0 + $0x2d8] sm:$0xff]
  %v117 = vld [vmem:[%s0 + $0x2e0] sm:$0xff]
  %v118 = vld [vmem:[%s0 + $0x2e8] sm:$0xff]
  %v119 = vld [vmem:[%s0 + $0x2f0] sm:$0xf]
  %v120 = vld [vmem:[%s0 + $0x2f4] sm:$0xff]
  %v121 = vld [vmem:[%s0 + $0x2fc] sm:$0xff]
  %v122 = vld [vmem:[%s0 + $0x304] sm:$0xff]
  %v123 = vld [vmem:[%s0 + $0x30c] sm:$0xff]
  %v124 = vld [vmem:[%s0 + $0x314] sm:$0xf]
  %v125 = vld [vmem:[%s0 + $0x318] sm:$0xff]
  %v126 = vld [vmem:[%s0 + $0x320] sm:$0xff]
  %v127 = vld [vmem:[%s0 + $0x328] sm:$0xff]
  %v128 = vld [vmem:[%s0 + $0x330] sm:$0xff]
  %v129 = vld [vmem:[%s0 + $0x338] sm:$0xf]
  %v130 = vld [vmem:[%s0 + $0x33c] sm:$0xff]
  %v131 = vld [vmem:[%s0 + $0x344] sm:$0xff]
  %v132 = vld [vmem:[%s0 + $0x34c] sm:$0xff]
  %v133 = vld [vmem:[%s0 + $0x354] sm:$0xff]
  %v134 = vld [vmem:[%s0 + $0x35c] sm:$0xf]
  %v135 = vld [vmem:[%s0 + $0x360] sm:$0xff]
  %v136 = vld [vmem:[%s0 + $0x368] sm:$0xff]
  %v137 = vld [vmem:[%s0 + $0x370] sm:$0xff]
  %v138 = vld [vmem:[%s0 + $0x378] sm:$0xff]
  %v139 = vld [vmem:[%s0 + $0x380] sm:$0xf]
  %v140 = vld [vmem:[%s0 + $0x384] sm:$0xff]
  %v141 = vld [vmem:[%s0 + $0x38c] sm:$0xff]
  %v142 = vld [vmem:[%s0 + $0x394] sm:$0xff]
  %v143 = vld [vmem:[%s0 + $0x39c] sm:$0xff]
  %v144 = vld [vmem:[%s0 + $0x3a4] sm:$0xf]
  %v145 = vld [vmem:[%s0 + $0x3a8] sm:$0xff]
  %v146 = vld [vmem:[%s0 + $0x3b0] sm:$0xff]
  %v147 = vld [vmem:[%s0 + $0x3b8] sm:$0xff]
  %v148 = vld [vmem:[%s0 + $0x3c0] sm:$0xff]
  %v149 = vld [vmem:[%s0 + $0x3c8] sm:$0xf]
  %v150 = vld [vmem:[%s0 + $0x3cc] sm:$0xff]
  %v151 = vld [vmem:[%s0 + $0x3d4] sm:$0xff]
  %v152 = vld [vmem:[%s0 + $0x3dc] sm:$0xff]
  %v153 = vld [vmem:[%s0 + $0x3e4] sm:$0xff]
  %v154 = vld [vmem:[%s0 + $0x3ec] sm:$0xf]
  %v155 = vld [vmem:[%s0 + $0x3f0] sm:$0xff]
  %v156 = vld [vmem:[%s0 + $0x3f8] sm:$0xff]
  %v157 = vld [vmem:[%s0 + $0x400] sm:$0xff]
  %v158 = vld [vmem:[%s0 + $0x408] sm:$0xff]
  %v159 = vld [vmem:[%s0 + $0x410] sm:$0xf]
  %v160 = vld [vmem:[%s0 + $0x414] sm:$0xff]
  %v161 = vld [vmem:[%s0 + $0x41c] sm:$0xff]
  %v162 = vld [vmem:[%s0 + $0x424] sm:$0xff]
  %v163 = vld [vmem:[%s0 + $0x42c] sm:$0xff]
  %v164 = vld [vmem:[%s0 + $0x434] sm:$0xf]
  %v165 = vld [vmem:[%s0 + $0x438] sm:$0xff]
  %v166 = vld [vmem:[%s0 + $0x440] sm:$0xff]
  %v167 = vld [vmem:[%s0 + $0x448] sm:$0xff]
  %v168 = vld [vmem:[%s0 + $0x450] sm:$0xff]
  %v169 = vld [vmem:[%s0 + $0x458] sm:$0xf]
  %v170 = vld [vmem:[%s0 + $0x45c] sm:$0xff]
  %v171 = vld [vmem:[%s0 + $0x464] sm:$0xff]
  %v172 = vld [vmem:[%s0 + $0x46c] sm:$0xff]
  %v173 = vld [vmem:[%s0 + $0x474] sm:$0xff]
  %v174 = vld [vmem:[%s0 + $0x47c] sm:$0xf]
  %v175 = vld [vmem:[%s0 + $0x480] sm:$0xff]
  %v176 = vld [vmem:[%s0 + $0x488] sm:$0xff]
  %v177 = vld [vmem:[%s0 + $0x490] sm:$0xff]
  %v178 = vld [vmem:[%s0 + $0x498] sm:$0xff]
  %v179 = vld [vmem:[%s0 + $0x4a0] sm:$0xf]
  %v180 = vld [vmem:[%s0 + $0x4a4] sm:$0xff]
  %v181 = vld [vmem:[%s0 + $0x4ac] sm:$0xff]
  %v182 = vld [vmem:[%s0 + $0x4b4] sm:$0xff]
  %v183 = vld [vmem:[%s0 + $0x4bc] sm:$0xff]
  %v184 = vld [vmem:[%s0 + $0x4c4] sm:$0xf]
  %v185 = vld [vmem:[%s0 + $0x4c8] sm:$0xff]
  %v186 = vld [vmem:[%s0 + $0x4d0] sm:$0xff]
  %v187 = vld [vmem:[%s0 + $0x4d8] sm:$0xff]
  %v188 = vld [vmem:[%s0 + $0x4e0] sm:$0xff]
  %v189 = vld [vmem:[%s0 + $0x4e8] sm:$0xf]
  %v190 = vld [vmem:[%s0 + $0x4ec] sm:$0xff]
  %v191 = vld [vmem:[%s0 + $0x4f4] sm:$0xff]
  %v192 = vld [vmem:[%s0 + $0x4fc] sm:$0xff]
  %v193 = vld [vmem:[%s0 + $0x504] sm:$0xff]
  %v194 = vld [vmem:[%s0 + $0x50c] sm:$0xf]
  %v195 = vld [vmem:[%s0 + $0x510] sm:$0xff]
  %v196 = vld [vmem:[%s0 + $0x518] sm:$0xff]
  %v197 = vld [vmem:[%s0 + $0x520] sm:$0xff]
  %v198 = vld [vmem:[%s0 + $0x528] sm:$0xff]
  %v199 = vld [vmem:[%s0 + $0x530] sm:$0xf]
  %v200 = vld [vmem:[%s0 + $0x534] sm:$0xff]
  %v201 = vld [vmem:[%s0 + $0x53c] sm:$0xff]
  %v202 = vld [vmem:[%s0 + $0x544] sm:$0xff]
  %v203 = vld [vmem:[%s0 + $0x54c] sm:$0xff]
  %v204 = vld [vmem:[%s0 + $0x554] sm:$0xf]
  %v205 = vld [vmem:[%s0 + $0x558] sm:$0xff]
  %v206 = vld [vmem:[%s0 + $0x560] sm:$0xff]
  %v207 = vld [vmem:[%s0 + $0x568] sm:$0xff]
  %v208 = vld [vmem:[%s0 + $0x570] sm:$0xff]
  %v209 = vld [vmem:[%s0 + $0x578] sm:$0xf]
  %v210 = vld [vmem:[%s0 + $0x57c] sm:$0xff]
  %v211 = vld [vmem:[%s0 + $0x584] sm:$0xff]
  %v212 = vld [vmem:[%s0 + $0x58c] sm:$0xff]
  %v213 = vld [vmem:[%s0 + $0x594] sm:$0xff]
  %v214 = vld [vmem:[%s0 + $0x59c] sm:$0xf]
  %v215 = vld [vmem:[%s0 + $0x5a0] sm:$0xff]
  %v216 = vld [vmem:[%s0 + $0x5a8] sm:$0xff]
  %v217 = vld [vmem:[%s0 + $0x5b0] sm:$0xff]
  %v218 = vld [vmem:[%s0 + $0x5b8] sm:$0xff]
  %v219 = vld [vmem:[%s0 + $0x5c0] sm:$0xf]
  %v220 = vld [vmem:[%s0 + $0x5c4] sm:$0xff]
  %v221 = vld [vmem:[%s0 + $0x5cc] sm:$0xff]
  %v222 = vld [vmem:[%s0 + $0x5d4] sm:$0xff]
  %v223 = vld [vmem:[%s0 + $0x5dc] sm:$0xff]
  %v224 = vld [vmem:[%s0 + $0x5e4] sm:$0xf]
  %v225 = vld [vmem:[%s0 + $0x5e8] sm:$0xff]
  %v226 = vld [vmem:[%s0 + $0x5f0] sm:$0xff]
  %v227 = vld [vmem:[%s0 + $0x5f8] sm:$0xff]
  %v228 = vld [vmem:[%s0 + $0x600] sm:$0xff]
  %v229 = vld [vmem:[%s0 + $0x608] sm:$0xf]
  %v230 = vld [vmem:[%s0 + $0x60c] sm:$0xff]
  %v231 = vld [vmem:[%s0 + $0x614] sm:$0xff]
  %v232 = vld [vmem:[%s0 + $0x61c] sm:$0xff]
  %v233 = vld [vmem:[%s0 + $0x624] sm:$0xff]
  %v234 = vld [vmem:[%s0 + $0x62c] sm:$0xf]
  %v235 = vld [vmem:[%s0 + $0x630] sm:$0xff]
  %v236 = vld [vmem:[%s0 + $0x638] sm:$0xff]
  %v237 = vld [vmem:[%s0 + $0x640] sm:$0xff]
  %v238 = vld [vmem:[%s0 + $0x648] sm:$0xff]
  %v239 = vld [vmem:[%s0 + $0x650] sm:$0xf]
  %v240 = vld [vmem:[%s0 + $0x654] sm:$0xff]
  %v241 = vld [vmem:[%s0 + $0x65c] sm:$0xff]
  %v242 = vld [vmem:[%s0 + $0x664] sm:$0xff]
  %v243 = vld [vmem:[%s0 + $0x66c] sm:$0xff]
  %v244 = vld [vmem:[%s0 + $0x674] sm:$0xf]
  %v245 = vld [vmem:[%s0 + $0x678] sm:$0xff]
  %v246 = vld [vmem:[%s0 + $0x680] sm:$0xff]
  %v247 = vld [vmem:[%s0 + $0x688] sm:$0xff]
  %v248 = vld [vmem:[%s0 + $0x690] sm:$0xff]
  %v249 = vld [vmem:[%s0 + $0x698] sm:$0xf]
  %v250 = vld [vmem:[%s0 + $0x69c] sm:$0xff]
  %v251 = vld [vmem:[%s0 + $0x6a4] sm:$0xff]
  %v252 = vld [vmem:[%s0 + $0x6ac] sm:$0xff]
  %v253 = vld [vmem:[%s0 + $0x6b4] sm:$0xff]
  %v254 = vld [vmem:[%s0 + $0x6bc] sm:$0xf]
  %v255 = vld [vmem:[%s0 + $0x6c0] sm:$0xff]
  %v256 = vld [vmem:[%s0 + $0x6c8] sm:$0xff]
  %v257 = vld [vmem:[%s0 + $0x6d0] sm:$0xff]
  %v258 = vld [vmem:[%s0 + $0x6d8] sm:$0xff]
  %v259 = vld [vmem:[%s0 + $0x6e0] sm:$0xf]
  %v260 = vld [vmem:[%s0 + $0x6e4] sm:$0xff]
  %v261 = vld [vmem:[%s0 + $0x6ec] sm:$0xff]
  %v262 = vld [vmem:[%s0 + $0x6f4] sm:$0xff]
  %v263 = vld [vmem:[%s0 + $0x6fc] sm:$0xff]
  %v264 = vld [vmem:[%s0 + $0x704] sm:$0xf]
  %v265 = vld [vmem:[%s0 + $0x708] sm:$0xff]
  %v266 = vld [vmem:[%s0 + $0x710] sm:$0xff]
  %v267 = vld [vmem:[%s0 + $0x718] sm:$0xff]
  %v268 = vld [vmem:[%s0 + $0x720] sm:$0xff]
  %v269 = vld [vmem:[%s0 + $0x728] sm:$0xf]
  %v270 = vld [vmem:[%s0 + $0x72c] sm:$0xff]
  %v271 = vld [vmem:[%s0 + $0x734] sm:$0xff]
  %v272 = vld [vmem:[%s0 + $0x73c] sm:$0xff]
  %v273 = vld [vmem:[%s0 + $0x744] sm:$0xff]
  %v274 = vld [vmem:[%s0 + $0x74c] sm:$0xf]
  %v275 = vld [vmem:[%s0 + $0x750] sm:$0xff]
  %v276 = vld [vmem:[%s0 + $0x758] sm:$0xff]
  %v277 = vld [vmem:[%s0 + $0x760] sm:$0xff]
  %v278 = vld [vmem:[%s0 + $0x768] sm:$0xff]
  %v279 = vld [vmem:[%s0 + $0x770] sm:$0xf]
  %v280 = vld [vmem:[%s0 + $0x774] sm:$0xff]
  %v281 = vld [vmem:[%s0 + $0x77c] sm:$0xff]
  %v282 = vld [vmem:[%s0 + $0x784] sm:$0xff]
  %v283 = vld [vmem:[%s0 + $0x78c] sm:$0xff]
  %v284 = vld [vmem:[%s0 + $0x794] sm:$0xf]
  %v285 = vld [vmem:[%s0 + $0x798] sm:$0xff]
  %v286 = vld [vmem:[%s0 + $0x7a0] sm:$0xff]
  %v287 = vld [vmem:[%s0 + $0x7a8] sm:$0xff]
  %v288 = vld [vmem:[%s0 + $0x7b0] sm:$0xff]
  %v289 = vld [vmem:[%s0 + $0x7b8] sm:$0xf]
  %v290 = vld [vmem:[%s0 + $0x7bc] sm:$0xff]
  %v291 = vld [vmem:[%s0 + $0x7c4] sm:$0xff]
  %v292 = vld [vmem:[%s0 + $0x7cc] sm:$0xff]
  %v293 = vld [vmem:[%s0 + $0x7d4] sm:$0xff]
  %v294 = vld [vmem:[%s0 + $0x7dc] sm:$0xf]
  %v295 = vld [vmem:[%s0 + $0x7e0] sm:$0xff]
  %v296 = vld [vmem:[%s0 + $0x7e8] sm:$0xff]
  %v297 = vld [vmem:[%s0 + $0x7f0] sm:$0xff]
  %v298 = vld [vmem:[%s0 + $0x7f8] sm:$0xff]
  %v299 = vld [vmem:[%s0 + $0x800] sm:$0xf]
  %v300 = vld [vmem:[%s0 + $0x804] sm:$0xff]
  %v301 = vld [vmem:[%s0 + $0x80c] sm:$0xff]
  %v302 = vld [vmem:[%s0 + $0x814] sm:$0xff]
  %v303 = vld [vmem:[%s0 + $0x81c] sm:$0xff]
  %v304 = vld [vmem:[%s0 + $0x824] sm:$0xf]
  %v305 = vld [vmem:[%s0 + $0x828] sm:$0xff]
  %v306 = vld [vmem:[%s0 + $0x830] sm:$0xff]
  %v307 = vld [vmem:[%s0 + $0x838] sm:$0xff]
  %v308 = vld [vmem:[%s0 + $0x840] sm:$0xff]
  %v309 = vld [vmem:[%s0 + $0x848] sm:$0xf]
  %v310 = vld [vmem:[%s0 + $0x84c] sm:$0xff]
  %v311 = vld [vmem:[%s0 + $0x854] sm:$0xff]
  %v312 = vld [vmem:[%s0 + $0x85c] sm:$0xff]
  %v313 = vld [vmem:[%s0 + $0x864] sm:$0xff]
  %v314 = vld [vmem:[%s0 + $0x86c] sm:$0xf]
  %v315 = vld [vmem:[%s0 + $0x870] sm:$0xff]
  %v316 = vld [vmem:[%s0 + $0x878] sm:$0xff]
  %v317 = vld [vmem:[%s0 + $0x880] sm:$0xff]
  %v318 = vld [vmem:[%s0 + $0x888] sm:$0xff]
  %v319 = vld [vmem:[%s0 + $0x890] sm:$0xf]
  %v320 = vld [vmem:[%s0 + $0x894] sm:$0xff]
  %v321 = vld [vmem:[%s0 + $0x89c] sm:$0xff]
  %v322 = vld [vmem:[%s0 + $0x8a4] sm:$0xff]
  %v323 = vld [vmem:[%s0 + $0x8ac] sm:$0xff]
  %v324 = vld [vmem:[%s0 + $0x8b4] sm:$0xf]
  %v325 = vld [vmem:[%s0 + $0x8b8] sm:$0xff]
  %v326 = vld [vmem:[%s0 + $0x8c0] sm:$0xff]
  %v327 = vld [vmem:[%s0 + $0x8c8] sm:$0xff]
  %v328 = vld [vmem:[%s0 + $0x8d0] sm:$0xff]
  %v329 = vld [vmem:[%s0 + $0x8d8] sm:$0xf]
  %v330 = vld [vmem:[%s0 + $0x8dc] sm:$0xff]
  %v331 = vld [vmem:[%s0 + $0x8e4] sm:$0xff]
  %v332 = vld [vmem:[%s0 + $0x8ec] sm:$0xff]
  %v333 = vld [vmem:[%s0 + $0x8f4] sm:$0xff]
  %v334 = vld [vmem:[%s0 + $0x8fc] sm:$0xf]
  %v335 = vld [vmem:[%s1] sm:$0xf]
  %v336 = vld [vmem:[%s1 + $0x4] sm:$0xf]
  %v337 = vld [vmem:[%s1 + $0x8] sm:$0xf]
  %v338 = vld [vmem:[%s1 + $0xc] sm:$0xf]
  %v339 = vld [vmem:[%s1 + $0x10] sm:$0xf]
  %v340 = vld [vmem:[%s1 + $0x14] sm:$0xf]
  %v341 = vld [vmem:[%s1 + $0x18] sm:$0xf]
  %v342 = vld [vmem:[%s1 + $0x1c] sm:$0xf]
  %v343 = vld [vmem:[%s1 + $0x20] sm:$0xf]
  %v344 = vld [vmem:[%s1 + $0x24] sm:$0xf]
  %v345 = vld [vmem:[%s1 + $0x28] sm:$0xf]
  %v346 = vld [vmem:[%s1 + $0x2c] sm:$0xf]
  %v347 = vld [vmem:[%s1 + $0x30] sm:$0xf]
  %v348 = vld [vmem:[%s1 + $0x34] sm:$0xf]
  %v349 = vld [vmem:[%s1 + $0x38] sm:$0xf]
  %v350 = vld [vmem:[%s1 + $0x3c] sm:$0xf]
  %v351 = vld [vmem:[%s1 + $0x40] sm:$0xf]
  %v352 = vld [vmem:[%s1 + $0x44] sm:$0xf]
  %v353 = vld [vmem:[%s1 + $0x48] sm:$0xf]
  %v354 = vld [vmem:[%s1 + $0x4c] sm:$0xf]
  %v355 = vld [vmem:[%s1 + $0x50] sm:$0xf]
  %v356 = vld [vmem:[%s1 + $0x54] sm:$0xf]
  %v357 = vld [vmem:[%s1 + $0x58] sm:$0xf]
  %v358 = vld [vmem:[%s1 + $0x5c] sm:$0xf]
  %v359 = vld [vmem:[%s1 + $0x60] sm:$0xf]
  %v360 = vld [vmem:[%s1 + $0x64] sm:$0xf]
  %v361 = vld [vmem:[%s1 + $0x68] sm:$0xf]
  %v362 = vld [vmem:[%s1 + $0x6c] sm:$0xf]
  %v363 = vld [vmem:[%s1 + $0x70] sm:$0xf]
  %v364 = vld [vmem:[%s1 + $0x74] sm:$0xf]
  %v365 = vld [vmem:[%s1 + $0x78] sm:$0xf]
  %v366 = vld [vmem:[%s1 + $0x7c] sm:$0xf]
  %v367 = vld [vmem:[%s1 + $0x80] sm:$0xf]
  %v368 = vld [vmem:[%s1 + $0x84] sm:$0xf]
  %v369 = vld [vmem:[%s1 + $0x88] sm:$0xf]
  %v370 = vld [vmem:[%s1 + $0x8c] sm:$0xf]
  %v371 = vld [vmem:[%s1 + $0x90] sm:$0xf]
  %v372 = vld [vmem:[%s1 + $0x94] sm:$0xf]
  %v373 = vld [vmem:[%s1 + $0x98] sm:$0xf]
  %v374 = vld [vmem:[%s1 + $0x9c] sm:$0xf]
  %v375 = vld [vmem:[%s1 + $0xa0] sm:$0xf]
  %v376 = vld [vmem:[%s1 + $0xa4] sm:$0xf]
  %v377 = vld [vmem:[%s1 + $0xa8] sm:$0xf]
  %v378 = vld [vmem:[%s1 + $0xac] sm:$0xf]
  %v379 = vld [vmem:[%s1 + $0xb0] sm:$0xf]
  %v380 = vld [vmem:[%s1 + $0xb4] sm:$0xf]
  %v381 = vld [vmem:[%s1 + $0xb8] sm:$0xf]
  %v382 = vld [vmem:[%s1 + $0xbc] sm:$0xf]
  %v383 = vld [vmem:[%s1 + $0xc0] sm:$0xf]
  %v384 = vld [vmem:[%s1 + $0xc4] sm:$0xf]
  %v385 = vld [vmem:[%s1 + $0xc8] sm:$0xf]
  %v386 = vld [vmem:[%s1 + $0xcc] sm:$0xf]
  %v387 = vld [vmem:[%s1 + $0xd0] sm:$0xf]
  %v388 = vld [vmem:[%s1 + $0xd4] sm:$0xf]
  %v389 = vld [vmem:[%s1 + $0xd8] sm:$0xf]
  %v390 = vld [vmem:[%s1 + $0xdc] sm:$0xf]
  %v391 = vld [vmem:[%s1 + $0xe0] sm:$0xf]
  %v392 = vld [vmem:[%s1 + $0xe4] sm:$0xf]
  %v393 = vld [vmem:[%s1 + $0xe8] sm:$0xf]
  %v394 = vld [vmem:[%s1 + $0xec] sm:$0xf]
  %v395 = vld [vmem:[%s1 + $0xf0] sm:$0xf]
  %v396 = vld [vmem:[%s1 + $0xf4] sm:$0xf]
  %v397 = vld [vmem:[%s1 + $0xf8] sm:$0xf]
  %v398 = vld [vmem:[%s1 + $0xfc] sm:$0xf]
  %v399 = vld [vmem:[%s1 + $0x100] sm:$0xf]
  %v400 = vld [vmem:[%s1 + $0x104] sm:$0xf]
  %v401 = vld [vmem:[%s1 + $0x108] sm:$0xf]
  %v402 = vld [vmem:[%s1 + $0x10c] sm:$0xf]
  %v403 = vld [vmem:[%s1 + $0x110] sm:$0xf]
  %v404 = vld [vmem:[%s1 + $0x114] sm:$0xf]
  %v405 = vld [vmem:[%s1 + $0x118] sm:$0xf]
  %v406 = vld [vmem:[%s1 + $0x11c] sm:$0xf]
  %v407 = vld [vmem:[%s1 + $0x120] sm:$0xf]
  %v408 = vld [vmem:[%s1 + $0x124] sm:$0xf]
  %v409 = vld [vmem:[%s1 + $0x128] sm:$0xf]
  %v410 = vld [vmem:[%s1 + $0x12c] sm:$0xf]
  %v411 = vld [vmem:[%s1 + $0x130] sm:$0xf]
  %v412 = vld [vmem:[%s1 + $0x134] sm:$0xf]
  %v413 = vld [vmem:[%s1 + $0x138] sm:$0xf]
  %v414 = vld [vmem:[%s1 + $0x13c] sm:$0xf]
  %v415 = vld [vmem:[%s1 + $0x140] sm:$0xf]
  %v416 = vld [vmem:[%s1 + $0x144] sm:$0xf]
  %v417 = vld [vmem:[%s1 + $0x148] sm:$0xf]
  %v418 = vld [vmem:[%s1 + $0x14c] sm:$0xf]
  %v419 = vld [vmem:[%s1 + $0x150] sm:$0xf]
  %v420 = vld [vmem:[%s1 + $0x154] sm:$0xf]
  %v421 = vld [vmem:[%s1 + $0x158] sm:$0xf]
  %v422 = vld [vmem:[%s1 + $0x15c] sm:$0xf]
  %v423 = vld [vmem:[%s1 + $0x160] sm:$0xf]
  %v424 = vld [vmem:[%s1 + $0x164] sm:$0xf]
  %v425 = vld [vmem:[%s1 + $0x168] sm:$0xf]
  %v426 = vld [vmem:[%s1 + $0x16c] sm:$0xf]
  %v427 = vld [vmem:[%s1 + $0x170] sm:$0xf]
  %v428 = vld [vmem:[%s1 + $0x174] sm:$0xf]
  %v429 = vld [vmem:[%s1 + $0x178] sm:$0xf]
  %v430 = vld [vmem:[%s1 + $0x17c] sm:$0xf]
  %v431 = vld [vmem:[%s1 + $0x180] sm:$0xf]
  %v432 = vld [vmem:[%s1 + $0x184] sm:$0xf]
  %v433 = vld [vmem:[%s1 + $0x188] sm:$0xf]
  %v434 = vld [vmem:[%s1 + $0x18c] sm:$0xf]
  %v435 = vld [vmem:[%s1 + $0x190] sm:$0xf]
  %v436 = vld [vmem:[%s1 + $0x194] sm:$0xf]
  %v437 = vld [vmem:[%s1 + $0x198] sm:$0xf]
  %v438 = vld [vmem:[%s1 + $0x19c] sm:$0xf]
  %v439 = vld [vmem:[%s1 + $0x1a0] sm:$0xf]
  %v440 = vld [vmem:[%s1 + $0x1a4] sm:$0xf]
  %v441 = vld [vmem:[%s1 + $0x1a8] sm:$0xf]
  %v442 = vld [vmem:[%s1 + $0x1ac] sm:$0xf]
  %v443 = vld [vmem:[%s1 + $0x1b0] sm:$0xf]
  %v444 = vld [vmem:[%s1 + $0x1b4] sm:$0xf]
  %v445 = vld [vmem:[%s1 + $0x1b8] sm:$0xf]
  %v446 = vld [vmem:[%s1 + $0x1bc] sm:$0xf]
  %v447 = vld [vmem:[%s1 + $0x1c0] sm:$0xf]
  %v448 = vld [vmem:[%s1 + $0x1c4] sm:$0xf]
  %v449 = vld [vmem:[%s1 + $0x1c8] sm:$0xf]
  %v450 = vld [vmem:[%s1 + $0x1cc] sm:$0xf]
  %v451 = vld [vmem:[%s1 + $0x1d0] sm:$0xf]
  %v452 = vld [vmem:[%s1 + $0x1d4] sm:$0xf]
  %v453 = vld [vmem:[%s1 + $0x1d8] sm:$0xf]
  %v454 = vld [vmem:[%s1 + $0x1dc] sm:$0xf]
  %v455 = vld [vmem:[%s1 + $0x1e0] sm:$0xf]
  %v456 = vld [vmem:[%s1 + $0x1e4] sm:$0xf]
  %v457 = vld [vmem:[%s1 + $0x1e8] sm:$0xf]
  %v458 = vld [vmem:[%s1 + $0x1ec] sm:$0xf]
  %v459 = vld [vmem:[%s1 + $0x1f0] sm:$0xf]
  %v460 = vld [vmem:[%s1 + $0x1f4] sm:$0xf]
  %v461 = vld [vmem:[%s1 + $0x1f8] sm:$0xf]
  %v462 = vld [vmem:[%s1 + $0x1fc] sm:$0xf]
  %v463 = vld [vmem:[%s1 + $0x200] sm:$0xf]
  %v464 = vld [vmem:[%s1 + $0x204] sm:$0xf]
  %v465 = vld [vmem:[%s1 + $0x208] sm:$0xf]
  %v466 = vld [vmem:[%s1 + $0x20c] sm:$0xf]
  %v467 = vld [vmem:[%s1 + $0x210] sm:$0xf]
  %v468 = vld [vmem:[%s1 + $0x214] sm:$0xf]
  %v469 = vld [vmem:[%s1 + $0x218] sm:$0xf]
  %v470 = vld [vmem:[%s1 + $0x21c] sm:$0xf]
  %v471 = vld [vmem:[%s1 + $0x220] sm:$0xf]
  %v472 = vld [vmem:[%s1 + $0x224] sm:$0xf]
  %v473 = vld [vmem:[%s1 + $0x228] sm:$0xf]
  %v474 = vld [vmem:[%s1 + $0x22c] sm:$0xf]
  %v475 = vld [vmem:[%s1 + $0x230] sm:$0xf]
  %v476 = vld [vmem:[%s1 + $0x234] sm:$0xf]
  %v477 = vld [vmem:[%s1 + $0x238] sm:$0xf]
  %v478 = vld [vmem:[%s1 + $0x23c] sm:$0xf]
  %v799 = vunpack.c.l.b16 %v15
  %v800 = vunpack.c.h.b16 %v15
  %v801 = vunpack.c.l.b16 %v16
  %v802 = vunpack.c.h.b16 %v16
  %v803 = vunpack.c.l.b16 %v17
  %v804 = vunpack.c.h.b16 %v17
  %v805 = vunpack.c.l.b16 %v18
  %v806 = vunpack.c.h.b16 %v18
  %v807 = vunpack.c.l.b16 %v19
  %v808 = vunpack.c.l.b16 %v20
  %v809 = vunpack.c.h.b16 %v20
  %v810 = vunpack.c.l.b16 %v21
  %v811 = vunpack.c.h.b16 %v21
  %v812 = vunpack.c.l.b16 %v22
  %v813 = vunpack.c.h.b16 %v22
  %v814 = vunpack.c.l.b16 %v23
  %v815 = vunpack.c.h.b16 %v23
  %v816 = vunpack.c.l.b16 %v24
  %v817 = vunpack.c.l.b16 %v25
  %v818 = vunpack.c.h.b16 %v25
  %v819 = vunpack.c.l.b16 %v26
  %v820 = vunpack.c.h.b16 %v26
  %v821 = vunpack.c.l.b16 %v27
  %v822 = vunpack.c.h.b16 %v27
  %v823 = vunpack.c.l.b16 %v28
  %v824 = vunpack.c.h.b16 %v28
  %v825 = vunpack.c.l.b16 %v29
  %v826 = vunpack.c.l.b16 %v30
  %v827 = vunpack.c.h.b16 %v30
  %v828 = vunpack.c.l.b16 %v31
  %v829 = vunpack.c.h.b16 %v31
  %v830 = vunpack.c.l.b16 %v32
  %v831 = vunpack.c.h.b16 %v32
  %v832 = vunpack.c.l.b16 %v33
  %v833 = vunpack.c.h.b16 %v33
  %v834 = vunpack.c.l.b16 %v34
  %v835 = vunpack.c.l.b16 %v35
  %v836 = vunpack.c.h.b16 %v35
  %v837 = vunpack.c.l.b16 %v36
  %v838 = vunpack.c.h.b16 %v36
  %v839 = vunpack.c.l.b16 %v37
  %v840 = vunpack.c.h.b16 %v37
  %v841 = vunpack.c.l.b16 %v38
  %v842 = vunpack.c.h.b16 %v38
  %v843 = vunpack.c.l.b16 %v39
  %v844 = vunpack.c.l.b16 %v40
  %v845 = vunpack.c.h.b16 %v40
  %v846 = vunpack.c.l.b16 %v41
  %v847 = vunpack.c.h.b16 %v41
  %v848 = vunpack.c.l.b16 %v42
  %v849 = vunpack.c.h.b16 %v42
  %v850 = vunpack.c.l.b16 %v43
  %v851 = vunpack.c.h.b16 %v43
  %v852 = vunpack.c.l.b16 %v44
  %v853 = vunpack.c.l.b16 %v45
  %v854 = vunpack.c.h.b16 %v45
  %v855 = vunpack.c.l.b16 %v46
  %v856 = vunpack.c.h.b16 %v46
  %v857 = vunpack.c.l.b16 %v47
  %v858 = vunpack.c.h.b16 %v47
  %v859 = vunpack.c.l.b16 %v48
  %v860 = vunpack.c.h.b16 %v48
  %v861 = vunpack.c.l.b16 %v49
  %v862 = vunpack.c.l.b16 %v50
  %v863 = vunpack.c.h.b16 %v50
  %v864 = vunpack.c.l.b16 %v51
  %v865 = vunpack.c.h.b16 %v51
  %v866 = vunpack.c.l.b16 %v52
  %v867 = vunpack.c.h.b16 %v52
  %v868 = vunpack.c.l.b16 %v53
  %v869 = vunpack.c.h.b16 %v53
  %v870 = vunpack.c.l.b16 %v54
  %v871 = vunpack.c.l.b16 %v55
  %v872 = vunpack.c.h.b16 %v55
  %v873 = vunpack.c.l.b16 %v56
  %v874 = vunpack.c.h.b16 %v56
  %v875 = vunpack.c.l.b16 %v57
  %v876 = vunpack.c.h.b16 %v57
  %v877 = vunpack.c.l.b16 %v58
  %v878 = vunpack.c.h.b16 %v58
  %v879 = vunpack.c.l.b16 %v59
  %v880 = vunpack.c.l.b16 %v60
  %v881 = vunpack.c.h.b16 %v60
  %v882 = vunpack.c.l.b16 %v61
  %v883 = vunpack.c.h.b16 %v61
  %v884 = vunpack.c.l.b16 %v62
  %v885 = vunpack.c.h.b16 %v62
  %v886 = vunpack.c.l.b16 %v63
  %v887 = vunpack.c.h.b16 %v63
  %v888 = vunpack.c.l.b16 %v64
  %v889 = vunpack.c.l.b16 %v65
  %v890 = vunpack.c.h.b16 %v65
  %v891 = vunpack.c.l.b16 %v66
  %v892 = vunpack.c.h.b16 %v66
  %v893 = vunpack.c.l.b16 %v67
  %v894 = vunpack.c.h.b16 %v67
  %v895 = vunpack.c.l.b16 %v68
  %v896 = vunpack.c.h.b16 %v68
  %v897 = vunpack.c.l.b16 %v69
  %v898 = vunpack.c.l.b16 %v70
  %v899 = vunpack.c.h.b16 %v70
  %v900 = vunpack.c.l.b16 %v71
  %v901 = vunpack.c.h.b16 %v71
  %v902 = vunpack.c.l.b16 %v72
  %v903 = vunpack.c.h.b16 %v72
  %v904 = vunpack.c.l.b16 %v73
  %v905 = vunpack.c.h.b16 %v73
  %v906 = vunpack.c.l.b16 %v74
  %v907 = vunpack.c.l.b16 %v75
  %v908 = vunpack.c.h.b16 %v75
  %v909 = vunpack.c.l.b16 %v76
  %v910 = vunpack.c.h.b16 %v76
  %v911 = vunpack.c.l.b16 %v77
  %v912 = vunpack.c.h.b16 %v77
  %v913 = vunpack.c.l.b16 %v78
  %v914 = vunpack.c.h.b16 %v78
  %v915 = vunpack.c.l.b16 %v79
  %v916 = vunpack.c.l.b16 %v80
  %v917 = vunpack.c.h.b16 %v80
  %v918 = vunpack.c.l.b16 %v81
  %v919 = vunpack.c.h.b16 %v81
  %v920 = vunpack.c.l.b16 %v82
  %v921 = vunpack.c.h.b16 %v82
  %v922 = vunpack.c.l.b16 %v83
  %v923 = vunpack.c.h.b16 %v83
  %v924 = vunpack.c.l.b16 %v84
  %v925 = vunpack.c.l.b16 %v85
  %v926 = vunpack.c.h.b16 %v85
  %v927 = vunpack.c.l.b16 %v86
  %v928 = vunpack.c.h.b16 %v86
  %v929 = vunpack.c.l.b16 %v87
  %v930 = vunpack.c.h.b16 %v87
  %v931 = vunpack.c.l.b16 %v88
  %v932 = vunpack.c.h.b16 %v88
  %v933 = vunpack.c.l.b16 %v89
  %v934 = vunpack.c.l.b16 %v90
  %v935 = vunpack.c.h.b16 %v90
  %v936 = vunpack.c.l.b16 %v91
  %v937 = vunpack.c.h.b16 %v91
  %v938 = vunpack.c.l.b16 %v92
  %v939 = vunpack.c.h.b16 %v92
  %v940 = vunpack.c.l.b16 %v93
  %v941 = vunpack.c.h.b16 %v93
  %v942 = vunpack.c.l.b16 %v94
  %v943 = vunpack.c.l.b16 %v95
  %v944 = vunpack.c.h.b16 %v95
  %v945 = vunpack.c.l.b16 %v96
  %v946 = vunpack.c.h.b16 %v96
  %v947 = vunpack.c.l.b16 %v97
  %v948 = vunpack.c.h.b16 %v97
  %v949 = vunpack.c.l.b16 %v98
  %v950 = vunpack.c.h.b16 %v98
  %v951 = vunpack.c.l.b16 %v99
  %v952 = vunpack.c.l.b16 %v100
  %v953 = vunpack.c.h.b16 %v100
  %v954 = vunpack.c.l.b16 %v101
  %v955 = vunpack.c.h.b16 %v101
  %v956 = vunpack.c.l.b16 %v102
  %v957 = vunpack.c.h.b16 %v102
  %v958 = vunpack.c.l.b16 %v103
  %v959 = vunpack.c.h.b16 %v103
  %v960 = vunpack.c.l.b16 %v104
  %v961 = vunpack.c.l.b16 %v105
  %v962 = vunpack.c.h.b16 %v105
  %v963 = vunpack.c.l.b16 %v106
  %v964 = vunpack.c.h.b16 %v106
  %v965 = vunpack.c.l.b16 %v107
  %v966 = vunpack.c.h.b16 %v107
  %v967 = vunpack.c.l.b16 %v108
  %v968 = vunpack.c.h.b16 %v108
  %v969 = vunpack.c.l.b16 %v109
  %v970 = vunpack.c.l.b16 %v110
  %v971 = vunpack.c.h.b16 %v110
  %v972 = vunpack.c.l.b16 %v111
  %v973 = vunpack.c.h.b16 %v111
  %v974 = vunpack.c.l.b16 %v112
  %v975 = vunpack.c.h.b16 %v112
  %v976 = vunpack.c.l.b16 %v113
  %v977 = vunpack.c.h.b16 %v113
  %v978 = vunpack.c.l.b16 %v114
  %v979 = vunpack.c.l.b16 %v115
  %v980 = vunpack.c.h.b16 %v115
  %v981 = vunpack.c.l.b16 %v116
  %v982 = vunpack.c.h.b16 %v116
  %v983 = vunpack.c.l.b16 %v117
  %v984 = vunpack.c.h.b16 %v117
  %v985 = vunpack.c.l.b16 %v118
  %v986 = vunpack.c.h.b16 %v118
  %v987 = vunpack.c.l.b16 %v119
  %v988 = vunpack.c.l.b16 %v120
  %v989 = vunpack.c.h.b16 %v120
  %v990 = vunpack.c.l.b16 %v121
  %v991 = vunpack.c.h.b16 %v121
  %v992 = vunpack.c.l.b16 %v122
  %v993 = vunpack.c.h.b16 %v122
  %v994 = vunpack.c.l.b16 %v123
  %v995 = vunpack.c.h.b16 %v123
  %v996 = vunpack.c.l.b16 %v124
  %v997 = vunpack.c.l.b16 %v125
  %v998 = vunpack.c.h.b16 %v125
  %v999 = vunpack.c.l.b16 %v126
  %v1000 = vunpack.c.h.b16 %v126
  %v1001 = vunpack.c.l.b16 %v127
  %v1002 = vunpack.c.h.b16 %v127
  %v1003 = vunpack.c.l.b16 %v128
  %v1004 = vunpack.c.h.b16 %v128
  %v1005 = vunpack.c.l.b16 %v129
  %v1006 = vunpack.c.l.b16 %v130
  %v1007 = vunpack.c.h.b16 %v130
  %v1008 = vunpack.c.l.b16 %v131
  %v1009 = vunpack.c.h.b16 %v131
  %v1010 = vunpack.c.l.b16 %v132
  %v1011 = vunpack.c.h.b16 %v132
  %v1012 = vunpack.c.l.b16 %v133
  %v1013 = vunpack.c.h.b16 %v133
  %v1014 = vunpack.c.l.b16 %v134
  %v1015 = vunpack.c.l.b16 %v135
  %v1016 = vunpack.c.h.b16 %v135
  %v1017 = vunpack.c.l.b16 %v136
  %v1018 = vunpack.c.h.b16 %v136
  %v1019 = vunpack.c.l.b16 %v137
  %v1020 = vunpack.c.h.b16 %v137
  %v1021 = vunpack.c.l.b16 %v138
  %v1022 = vunpack.c.h.b16 %v138
  %v1023 = vunpack.c.l.b16 %v139
  %v1024 = vunpack.c.l.b16 %v140
  %v1025 = vunpack.c.h.b16 %v140
  %v1026 = vunpack.c.l.b16 %v141
  %v1027 = vunpack.c.h.b16 %v141
  %v1028 = vunpack.c.l.b16 %v142
  %v1029 = vunpack.c.h.b16 %v142
  %v1030 = vunpack.c.l.b16 %v143
  %v1031 = vunpack.c.h.b16 %v143
  %v1032 = vunpack.c.l.b16 %v144
  %v1033 = vunpack.c.l.b16 %v145
  %v1034 = vunpack.c.h.b16 %v145
  %v1035 = vunpack.c.l.b16 %v146
  %v1036 = vunpack.c.h.b16 %v146
  %v1037 = vunpack.c.l.b16 %v147
  %v1038 = vunpack.c.h.b16 %v147
  %v1039 = vunpack.c.l.b16 %v148
  %v1040 = vunpack.c.h.b16 %v148
  %v1041 = vunpack.c.l.b16 %v149
  %v1042 = vunpack.c.l.b16 %v150
  %v1043 = vunpack.c.h.b16 %v150
  %v1044 = vunpack.c.l.b16 %v151
  %v1045 = vunpack.c.h.b16 %v151
  %v1046 = vunpack.c.l.b16 %v152
  %v1047 = vunpack.c.h.b16 %v152
  %v1048 = vunpack.c.l.b16 %v153
  %v1049 = vunpack.c.h.b16 %v153
  %v1050 = vunpack.c.l.b16 %v154
  %v1051 = vunpack.c.l.b16 %v155
  %v1052 = vunpack.c.h.b16 %v155
  %v1053 = vunpack.c.l.b16 %v156
  %v1054 = vunpack.c.h.b16 %v156
  %v1055 = vunpack.c.l.b16 %v157
  %v1056 = vunpack.c.h.b16 %v157
  %v1057 = vunpack.c.l.b16 %v158
  %v1058 = vunpack.c.h.b16 %v158
  %v1059 = vunpack.c.l.b16 %v159
  %v1060 = vunpack.c.l.b16 %v160
  %v1061 = vunpack.c.h.b16 %v160
  %v1062 = vunpack.c.l.b16 %v161
  %v1063 = vunpack.c.h.b16 %v161
  %v1064 = vunpack.c.l.b16 %v162
  %v1065 = vunpack.c.h.b16 %v162
  %v1066 = vunpack.c.l.b16 %v163
  %v1067 = vunpack.c.h.b16 %v163
  %v1068 = vunpack.c.l.b16 %v164
  %v1069 = vunpack.c.l.b16 %v165
  %v1070 = vunpack.c.h.b16 %v165
  %v1071 = vunpack.c.l.b16 %v166
  %v1072 = vunpack.c.h.b16 %v166
  %v1073 = vunpack.c.l.b16 %v167
  %v1074 = vunpack.c.h.b16 %v167
  %v1075 = vunpack.c.l.b16 %v168
  %v1076 = vunpack.c.h.b16 %v168
  %v1077 = vunpack.c.l.b16 %v169
  %v1078 = vunpack.c.l.b16 %v170
  %v1079 = vunpack.c.h.b16 %v170
  %v1080 = vunpack.c.l.b16 %v171
  %v1081 = vunpack.c.h.b16 %v171
  %v1082 = vunpack.c.l.b16 %v172
  %v1083 = vunpack.c.h.b16 %v172
  %v1084 = vunpack.c.l.b16 %v173
  %v1085 = vunpack.c.h.b16 %v173
  %v1086 = vunpack.c.l.b16 %v174
  %v1087 = vunpack.c.l.b16 %v175
  %v1088 = vunpack.c.h.b16 %v175
  %v1089 = vunpack.c.l.b16 %v176
  %v1090 = vunpack.c.h.b16 %v176
  %v1091 = vunpack.c.l.b16 %v177
  %v1092 = vunpack.c.h.b16 %v177
  %v1093 = vunpack.c.l.b16 %v178
  %v1094 = vunpack.c.h.b16 %v178
  %v1095 = vunpack.c.l.b16 %v179
  %v1096 = vunpack.c.l.b16 %v180
  %v1097 = vunpack.c.h.b16 %v180
  %v1098 = vunpack.c.l.b16 %v181
  %v1099 = vunpack.c.h.b16 %v181
  %v1100 = vunpack.c.l.b16 %v182
  %v1101 = vunpack.c.h.b16 %v182
  %v1102 = vunpack.c.l.b16 %v183
  %v1103 = vunpack.c.h.b16 %v183
  %v1104 = vunpack.c.l.b16 %v184
  %v1105 = vunpack.c.l.b16 %v185
  %v1106 = vunpack.c.h.b16 %v185
  %v1107 = vunpack.c.l.b16 %v186
  %v1108 = vunpack.c.h.b16 %v186
  %v1109 = vunpack.c.l.b16 %v187
  %v1110 = vunpack.c.h.b16 %v187
  %v1111 = vunpack.c.l.b16 %v188
  %v1112 = vunpack.c.h.b16 %v188
  %v1113 = vunpack.c.l.b16 %v189
  %v1114 = vunpack.c.l.b16 %v190
  %v1115 = vunpack.c.h.b16 %v190
  %v1116 = vunpack.c.l.b16 %v191
  %v1117 = vunpack.c.h.b16 %v191
  %v1118 = vunpack.c.l.b16 %v192
  %v1119 = vunpack.c.h.b16 %v192
  %v1120 = vunpack.c.l.b16 %v193
  %v1121 = vunpack.c.h.b16 %v193
  %v1122 = vunpack.c.l.b16 %v194
  %v1123 = vunpack.c.l.b16 %v195
  %v1124 = vunpack.c.h.b16 %v195
  %v1125 = vunpack.c.l.b16 %v196
  %v1126 = vunpack.c.h.b16 %v196
  %v1127 = vunpack.c.l.b16 %v197
  %v1128 = vunpack.c.h.b16 %v197
  %v1129 = vunpack.c.l.b16 %v198
  %v1130 = vunpack.c.h.b16 %v198
  %v1131 = vunpack.c.l.b16 %v199
  %v1132 = vunpack.c.l.b16 %v200
  %v1133 = vunpack.c.h.b16 %v200
  %v1134 = vunpack.c.l.b16 %v201
  %v1135 = vunpack.c.h.b16 %v201
  %v1136 = vunpack.c.l.b16 %v202
  %v1137 = vunpack.c.h.b16 %v202
  %v1138 = vunpack.c.l.b16 %v203
  %v1139 = vunpack.c.h.b16 %v203
  %v1140 = vunpack.c.l.b16 %v204
  %v1141 = vunpack.c.l.b16 %v205
  %v1142 = vunpack.c.h.b16 %v205
  %v1143 = vunpack.c.l.b16 %v206
  %v1144 = vunpack.c.h.b16 %v206
  %v1145 = vunpack.c.l.b16 %v207
  %v1146 = vunpack.c.h.b16 %v207
  %v1147 = vunpack.c.l.b16 %v208
  %v1148 = vunpack.c.h.b16 %v208
  %v1149 = vunpack.c.l.b16 %v209
  %v1150 = vunpack.c.l.b16 %v210
  %v1151 = vunpack.c.h.b16 %v210
  %v1152 = vunpack.c.l.b16 %v211
  %v1153 = vunpack.c.h.b16 %v211
  %v1154 = vunpack.c.l.b16 %v212
  %v1155 = vunpack.c.h.b16 %v212
  %v1156 = vunpack.c.l.b16 %v213
  %v1157 = vunpack.c.h.b16 %v213
  %v1158 = vunpack.c.l.b16 %v214
  %v1159 = vunpack.c.l.b16 %v215
  %v1160 = vunpack.c.h.b16 %v215
  %v1161 = vunpack.c.l.b16 %v216
  %v1162 = vunpack.c.h.b16 %v216
  %v1163 = vunpack.c.l.b16 %v217
  %v1164 = vunpack.c.h.b16 %v217
  %v1165 = vunpack.c.l.b16 %v218
  %v1166 = vunpack.c.h.b16 %v218
  %v1167 = vunpack.c.l.b16 %v219
  %v1168 = vunpack.c.l.b16 %v220
  %v1169 = vunpack.c.h.b16 %v220
  %v1170 = vunpack.c.l.b16 %v221
  %v1171 = vunpack.c.h.b16 %v221
  %v1172 = vunpack.c.l.b16 %v222
  %v1173 = vunpack.c.h.b16 %v222
  %v1174 = vunpack.c.l.b16 %v223
  %v1175 = vunpack.c.h.b16 %v223
  %v1176 = vunpack.c.l.b16 %v224
  %v1177 = vunpack.c.l.b16 %v225
  %v1178 = vunpack.c.h.b16 %v225
  %v1179 = vunpack.c.l.b16 %v226
  %v1180 = vunpack.c.h.b16 %v226
  %v1181 = vunpack.c.l.b16 %v227
  %v1182 = vunpack.c.h.b16 %v227
  %v1183 = vunpack.c.l.b16 %v228
  %v1184 = vunpack.c.h.b16 %v228
  %v1185 = vunpack.c.l.b16 %v229
  %v1186 = vunpack.c.l.b16 %v230
  %v1187 = vunpack.c.h.b16 %v230
  %v1188 = vunpack.c.l.b16 %v231
  %v1189 = vunpack.c.h.b16 %v231
  %v1190 = vunpack.c.l.b16 %v232
  %v1191 = vunpack.c.h.b16 %v232
  %v1192 = vunpack.c.l.b16 %v233
  %v1193 = vunpack.c.h.b16 %v233
  %v1194 = vunpack.c.l.b16 %v234
  %v1195 = vunpack.c.l.b16 %v235
  %v1196 = vunpack.c.h.b16 %v235
  %v1197 = vunpack.c.l.b16 %v236
  %v1198 = vunpack.c.h.b16 %v236
  %v1199 = vunpack.c.l.b16 %v237
  %v1200 = vunpack.c.h.b16 %v237
  %v1201 = vunpack.c.l.b16 %v238
  %v1202 = vunpack.c.h.b16 %v238
  %v1203 = vunpack.c.l.b16 %v239
  %v1204 = vunpack.c.l.b16 %v240
  %v1205 = vunpack.c.h.b16 %v240
  %v1206 = vunpack.c.l.b16 %v241
  %v1207 = vunpack.c.h.b16 %v241
  %v1208 = vunpack.c.l.b16 %v242
  %v1209 = vunpack.c.h.b16 %v242
  %v1210 = vunpack.c.l.b16 %v243
  %v1211 = vunpack.c.h.b16 %v243
  %v1212 = vunpack.c.l.b16 %v244
  %v1213 = vunpack.c.l.b16 %v245
  %v1214 = vunpack.c.h.b16 %v245
  %v1215 = vunpack.c.l.b16 %v246
  %v1216 = vunpack.c.h.b16 %v246
  %v1217 = vunpack.c.l.b16 %v247
  %v1218 = vunpack.c.h.b16 %v247
  %v1219 = vunpack.c.l.b16 %v248
  %v1220 = vunpack.c.h.b16 %v248
  %v1221 = vunpack.c.l.b16 %v249
  %v1222 = vunpack.c.l.b16 %v250
  %v1223 = vunpack.c.h.b16 %v250
  %v1224 = vunpack.c.l.b16 %v251
  %v1225 = vunpack.c.h.b16 %v251
  %v1226 = vunpack.c.l.b16 %v252
  %v1227 = vunpack.c.h.b16 %v252
  %v1228 = vunpack.c.l.b16 %v253
  %v1229 = vunpack.c.h.b16 %v253
  %v1230 = vunpack.c.l.b16 %v254
  %v1231 = vunpack.c.l.b16 %v255
  %v1232 = vunpack.c.h.b16 %v255
  %v1233 = vunpack.c.l.b16 %v256
  %v1234 = vunpack.c.h.b16 %v256
  %v1235 = vunpack.c.l.b16 %v257
  %v1236 = vunpack.c.h.b16 %v257
  %v1237 = vunpack.c.l.b16 %v258
  %v1238 = vunpack.c.h.b16 %v258
  %v1239 = vunpack.c.l.b16 %v259
  %v1240 = vunpack.c.l.b16 %v260
  %v1241 = vunpack.c.h.b16 %v260
  %v1242 = vunpack.c.l.b16 %v261
  %v1243 = vunpack.c.h.b16 %v261
  %v1244 = vunpack.c.l.b16 %v262
  %v1245 = vunpack.c.h.b16 %v262
  %v1246 = vunpack.c.l.b16 %v263
  %v1247 = vunpack.c.h.b16 %v263
  %v1248 = vunpack.c.l.b16 %v264
  %v1249 = vunpack.c.l.b16 %v265
  %v1250 = vunpack.c.h.b16 %v265
  %v1251 = vunpack.c.l.b16 %v266
  %v1252 = vunpack.c.h.b16 %v266
  %v1253 = vunpack.c.l.b16 %v267
  %v1254 = vunpack.c.h.b16 %v267
  %v1255 = vunpack.c.l.b16 %v268
  %v1256 = vunpack.c.h.b16 %v268
  %v1257 = vunpack.c.l.b16 %v269
  %v1258 = vunpack.c.l.b16 %v270
  %v1259 = vunpack.c.h.b16 %v270
  %v1260 = vunpack.c.l.b16 %v271
  %v1261 = vunpack.c.h.b16 %v271
  %v1262 = vunpack.c.l.b16 %v272
  %v1263 = vunpack.c.h.b16 %v272
  %v1264 = vunpack.c.l.b16 %v273
  %v1265 = vunpack.c.h.b16 %v273
  %v1266 = vunpack.c.l.b16 %v274
  %v1267 = vunpack.c.l.b16 %v275
  %v1268 = vunpack.c.h.b16 %v275
  %v1269 = vunpack.c.l.b16 %v276
  %v1270 = vunpack.c.h.b16 %v276
  %v1271 = vunpack.c.l.b16 %v277
  %v1272 = vunpack.c.h.b16 %v277
  %v1273 = vunpack.c.l.b16 %v278
  %v1274 = vunpack.c.h.b16 %v278
  %v1275 = vunpack.c.l.b16 %v279
  %v1276 = vunpack.c.l.b16 %v280
  %v1277 = vunpack.c.h.b16 %v280
  %v1278 = vunpack.c.l.b16 %v281
  %v1279 = vunpack.c.h.b16 %v281
  %v1280 = vunpack.c.l.b16 %v282
  %v1281 = vunpack.c.h.b16 %v282
  %v1282 = vunpack.c.l.b16 %v283
  %v1283 = vunpack.c.h.b16 %v283
  %v1284 = vunpack.c.l.b16 %v284
  %v1285 = vunpack.c.l.b16 %v285
  %v1286 = vunpack.c.h.b16 %v285
  %v1287 = vunpack.c.l.b16 %v286
  %v1288 = vunpack.c.h.b16 %v286
  %v1289 = vunpack.c.l.b16 %v287
  %v1290 = vunpack.c.h.b16 %v287
  %v1291 = vunpack.c.l.b16 %v288
  %v1292 = vunpack.c.h.b16 %v288
  %v1293 = vunpack.c.l.b16 %v289
  %v1294 = vunpack.c.l.b16 %v290
  %v1295 = vunpack.c.h.b16 %v290
  %v1296 = vunpack.c.l.b16 %v291
  %v1297 = vunpack.c.h.b16 %v291
  %v1298 = vunpack.c.l.b16 %v292
  %v1299 = vunpack.c.h.b16 %v292
  %v1300 = vunpack.c.l.b16 %v293
  %v1301 = vunpack.c.h.b16 %v293
  %v1302 = vunpack.c.l.b16 %v294
  %v1303 = vunpack.c.l.b16 %v295
  %v1304 = vunpack.c.h.b16 %v295
  %v1305 = vunpack.c.l.b16 %v296
  %v1306 = vunpack.c.h.b16 %v296
  %v1307 = vunpack.c.l.b16 %v297
  %v1308 = vunpack.c.h.b16 %v297
  %v1309 = vunpack.c.l.b16 %v298
  %v1310 = vunpack.c.h.b16 %v298
  %v1311 = vunpack.c.l.b16 %v299
  %v1312 = vunpack.c.l.b16 %v300
  %v1313 = vunpack.c.h.b16 %v300
  %v1314 = vunpack.c.l.b16 %v301
  %v1315 = vunpack.c.h.b16 %v301
  %v1316 = vunpack.c.l.b16 %v302
  %v1317 = vunpack.c.h.b16 %v302
  %v1318 = vunpack.c.l.b16 %v303
  %v1319 = vunpack.c.h.b16 %v303
  %v1320 = vunpack.c.l.b16 %v304
  %v1321 = vunpack.c.l.b16 %v305
  %v1322 = vunpack.c.h.b16 %v305
  %v1323 = vunpack.c.l.b16 %v306
  %v1324 = vunpack.c.h.b16 %v306
  %v1325 = vunpack.c.l.b16 %v307
  %v1326 = vunpack.c.h.b16 %v307
  %v1327 = vunpack.c.l.b16 %v308
  %v1328 = vunpack.c.h.b16 %v308
  %v1329 = vunpack.c.l.b16 %v309
  %v1330 = vunpack.c.l.b16 %v310
  %v1331 = vunpack.c.h.b16 %v310
  %v1332 = vunpack.c.l.b16 %v311
  %v1333 = vunpack.c.h.b16 %v311
  %v1334 = vunpack.c.l.b16 %v312
  %v1335 = vunpack.c.h.b16 %v312
  %v1336 = vunpack.c.l.b16 %v313
  %v1337 = vunpack.c.h.b16 %v313
  %v1338 = vunpack.c.l.b16 %v314
  %v1339 = vunpack.c.l.b16 %v315
  %v1340 = vunpack.c.h.b16 %v315
  %v1341 = vunpack.c.l.b16 %v316
  %v1342 = vunpack.c.h.b16 %v316
  %v1343 = vunpack.c.l.b16 %v317
  %v1344 = vunpack.c.h.b16 %v317
  %v1345 = vunpack.c.l.b16 %v318
  %v1346 = vunpack.c.h.b16 %v318
  %v1347 = vunpack.c.l.b16 %v319
  %v1348 = vunpack.c.l.b16 %v320
  %v1349 = vunpack.c.h.b16 %v320
  %v1350 = vunpack.c.l.b16 %v321
  %v1351 = vunpack.c.h.b16 %v321
  %v1352 = vunpack.c.l.b16 %v322
  %v1353 = vunpack.c.h.b16 %v322
  %v1354 = vunpack.c.l.b16 %v323
  %v1355 = vunpack.c.h.b16 %v323
  %v1356 = vunpack.c.l.b16 %v324
  %v1357 = vunpack.c.l.b16 %v325
  %v1358 = vunpack.c.h.b16 %v325
  %v1359 = vunpack.c.l.b16 %v326
  %v1360 = vunpack.c.h.b16 %v326
  %v1361 = vunpack.c.l.b16 %v327
  %v1362 = vunpack.c.h.b16 %v327
  %v1363 = vunpack.c.l.b16 %v328
  %v1364 = vunpack.c.h.b16 %v328
  %v1365 = vunpack.c.l.b16 %v329
  %v1366 = vunpack.c.l.b16 %v330
  %v1367 = vunpack.c.h.b16 %v330
  %v1368 = vunpack.c.l.b16 %v331
  %v1369 = vunpack.c.h.b16 %v331
  %v1370 = vunpack.c.l.b16 %v332
  %v1371 = vunpack.c.h.b16 %v332
  %v1372 = vunpack.c.l.b16 %v333
  %v1373 = vunpack.c.h.b16 %v333
  %v1374 = vunpack.c.l.b16 %v334
  %v1375 = vpack.c.b16 %v808, %v799
  %v1376 = vpack.c.b16 %v809, %v800
  %v1377 = vpack.c.b16 %v810, %v801
  %v1378 = vpack.c.b16 %v811, %v802
  %v1379 = vpack.c.b16 %v812, %v803
  %v1380 = vpack.c.b16 %v813, %v804
  %v1381 = vpack.c.b16 %v814, %v805
  %v1382 = vpack.c.b16 %v815, %v806
  %v1383 = vpack.c.b16 %v816, %v807
  %v1384 = vpack.c.b16 %v826, %v817
  %v1385 = vpack.c.b16 %v827, %v818
  %v1386 = vpack.c.b16 %v828, %v819
  %v1387 = vpack.c.b16 %v829, %v820
  %v1388 = vpack.c.b16 %v830, %v821
  %v1389 = vpack.c.b16 %v831, %v822
  %v1390 = vpack.c.b16 %v832, %v823
  %v1391 = vpack.c.b16 %v833, %v824
  %v1392 = vpack.c.b16 %v834, %v825
  %v1393 = vpack.c.b16 %v844, %v835
  %v1394 = vpack.c.b16 %v845, %v836
  %v1395 = vpack.c.b16 %v846, %v837
  %v1396 = vpack.c.b16 %v847, %v838
  %v1397 = vpack.c.b16 %v848, %v839
  %v1398 = vpack.c.b16 %v849, %v840
  %v1399 = vpack.c.b16 %v850, %v841
  %v1400 = vpack.c.b16 %v851, %v842
  %v1401 = vpack.c.b16 %v852, %v843
  %v1402 = vpack.c.b16 %v862, %v853
  %v1403 = vpack.c.b16 %v863, %v854
  %v1404 = vpack.c.b16 %v864, %v855
  %v1405 = vpack.c.b16 %v865, %v856
  %v1406 = vpack.c.b16 %v866, %v857
  %v1407 = vpack.c.b16 %v867, %v858
  %v1408 = vpack.c.b16 %v868, %v859
  %v1409 = vpack.c.b16 %v869, %v860
  %v1410 = vpack.c.b16 %v870, %v861
  %v1411 = vpack.c.b16 %v880, %v871
  %v1412 = vpack.c.b16 %v881, %v872
  %v1413 = vpack.c.b16 %v882, %v873
  %v1414 = vpack.c.b16 %v883, %v874
  %v1415 = vpack.c.b16 %v884, %v875
  %v1416 = vpack.c.b16 %v885, %v876
  %v1417 = vpack.c.b16 %v886, %v877
  %v1418 = vpack.c.b16 %v887, %v878
  %v1419 = vpack.c.b16 %v888, %v879
  %v1420 = vpack.c.b16 %v898, %v889
  %v1421 = vpack.c.b16 %v899, %v890
  %v1422 = vpack.c.b16 %v900, %v891
  %v1423 = vpack.c.b16 %v901, %v892
  %v1424 = vpack.c.b16 %v902, %v893
  %v1425 = vpack.c.b16 %v903, %v894
  %v1426 = vpack.c.b16 %v904, %v895
  %v1427 = vpack.c.b16 %v905, %v896
  %v1428 = vpack.c.b16 %v906, %v897
  %v1429 = vpack.c.b16 %v916, %v907
  %v1430 = vpack.c.b16 %v917, %v908
  %v1431 = vpack.c.b16 %v918, %v909
  %v1432 = vpack.c.b16 %v919, %v910
  %v1433 = vpack.c.b16 %v920, %v911
  %v1434 = vpack.c.b16 %v921, %v912
  %v1435 = vpack.c.b16 %v922, %v913
  %v1436 = vpack.c.b16 %v923, %v914
  %v1437 = vpack.c.b16 %v924, %v915
  %v1438 = vpack.c.b16 %v934, %v925
  %v1439 = vpack.c.b16 %v935, %v926
  %v1440 = vpack.c.b16 %v936, %v927
  %v1441 = vpack.c.b16 %v937, %v928
  %v1442 = vpack.c.b16 %v938, %v929
  %v1443 = vpack.c.b16 %v939, %v930
  %v1444 = vpack.c.b16 %v940, %v931
  %v1445 = vpack.c.b16 %v941, %v932
  %v1446 = vpack.c.b16 %v942, %v933
  %v1447 = vpack.c.b16 %v952, %v943
  %v1448 = vpack.c.b16 %v953, %v944
  %v1449 = vpack.c.b16 %v954, %v945
  %v1450 = vpack.c.b16 %v955, %v946
  %v1451 = vpack.c.b16 %v956, %v947
  %v1452 = vpack.c.b16 %v957, %v948
  %v1453 = vpack.c.b16 %v958, %v949
  %v1454 = vpack.c.b16 %v959, %v950
  %v1455 = vpack.c.b16 %v960, %v951
  %v1456 = vpack.c.b16 %v970, %v961
  %v1457 = vpack.c.b16 %v971, %v962
  %v1458 = vpack.c.b16 %v972, %v963
  %v1459 = vpack.c.b16 %v973, %v964
  %v1460 = vpack.c.b16 %v974, %v965
  %v1461 = vpack.c.b16 %v975, %v966
  %v1462 = vpack.c.b16 %v976, %v967
  %v1463 = vpack.c.b16 %v977, %v968
  %v1464 = vpack.c.b16 %v978, %v969
  %v1465 = vpack.c.b16 %v988, %v979
  %v1466 = vpack.c.b16 %v989, %v980
  %v1467 = vpack.c.b16 %v990, %v981
  %v1468 = vpack.c.b16 %v991, %v982
  %v1469 = vpack.c.b16 %v992, %v983
  %v1470 = vpack.c.b16 %v993, %v984
  %v1471 = vpack.c.b16 %v994, %v985
  %v1472 = vpack.c.b16 %v995, %v986
  %v1473 = vpack.c.b16 %v996, %v987
  %v1474 = vpack.c.b16 %v1006, %v997
  %v1475 = vpack.c.b16 %v1007, %v998
  %v1476 = vpack.c.b16 %v1008, %v999
  %v1477 = vpack.c.b16 %v1009, %v1000
  %v1478 = vpack.c.b16 %v1010, %v1001
  %v1479 = vpack.c.b16 %v1011, %v1002
  %v1480 = vpack.c.b16 %v1012, %v1003
  %v1481 = vpack.c.b16 %v1013, %v1004
  %v1482 = vpack.c.b16 %v1014, %v1005
  %v1483 = vpack.c.b16 %v1024, %v1015
  %v1484 = vpack.c.b16 %v1025, %v1016
  %v1485 = vpack.c.b16 %v1026, %v1017
  %v1486 = vpack.c.b16 %v1027, %v1018
  %v1487 = vpack.c.b16 %v1028, %v1019
  %v1488 = vpack.c.b16 %v1029, %v1020
  %v1489 = vpack.c.b16 %v1030, %v1021
  %v1490 = vpack.c.b16 %v1031, %v1022
  %v1491 = vpack.c.b16 %v1032, %v1023
  %v1492 = vpack.c.b16 %v1042, %v1033
  %v1493 = vpack.c.b16 %v1043, %v1034
  %v1494 = vpack.c.b16 %v1044, %v1035
  %v1495 = vpack.c.b16 %v1045, %v1036
  %v1496 = vpack.c.b16 %v1046, %v1037
  %v1497 = vpack.c.b16 %v1047, %v1038
  %v1498 = vpack.c.b16 %v1048, %v1039
  %v1499 = vpack.c.b16 %v1049, %v1040
  %v1500 = vpack.c.b16 %v1050, %v1041
  %v1501 = vpack.c.b16 %v1060, %v1051
  %v1502 = vpack.c.b16 %v1061, %v1052
  %v1503 = vpack.c.b16 %v1062, %v1053
  %v1504 = vpack.c.b16 %v1063, %v1054
  %v1505 = vpack.c.b16 %v1064, %v1055
  %v1506 = vpack.c.b16 %v1065, %v1056
  %v1507 = vpack.c.b16 %v1066, %v1057
  %v1508 = vpack.c.b16 %v1067, %v1058
  %v1509 = vpack.c.b16 %v1068, %v1059
  %v1510 = vpack.c.b16 %v1078, %v1069
  %v1511 = vpack.c.b16 %v1079, %v1070
  %v1512 = vpack.c.b16 %v1080, %v1071
  %v1513 = vpack.c.b16 %v1081, %v1072
  %v1514 = vpack.c.b16 %v1082, %v1073
  %v1515 = vpack.c.b16 %v1083, %v1074
  %v1516 = vpack.c.b16 %v1084, %v1075
  %v1517 = vpack.c.b16 %v1085, %v1076
  %v1518 = vpack.c.b16 %v1086, %v1077
  %v1519 = vpack.c.b16 %v1096, %v1087
  %v1520 = vpack.c.b16 %v1097, %v1088
  %v1521 = vpack.c.b16 %v1098, %v1089
  %v1522 = vpack.c.b16 %v1099, %v1090
  %v1523 = vpack.c.b16 %v1100, %v1091
  %v1524 = vpack.c.b16 %v1101, %v1092
  %v1525 = vpack.c.b16 %v1102, %v1093
  %v1526 = vpack.c.b16 %v1103, %v1094
  %v1527 = vpack.c.b16 %v1104, %v1095
  %v1528 = vpack.c.b16 %v1114, %v1105
  %v1529 = vpack.c.b16 %v1115, %v1106
  %v1530 = vpack.c.b16 %v1116, %v1107
  %v1531 = vpack.c.b16 %v1117, %v1108
  %v1532 = vpack.c.b16 %v1118, %v1109
  %v1533 = vpack.c.b16 %v1119, %v1110
  %v1534 = vpack.c.b16 %v1120, %v1111
  %v1535 = vpack.c.b16 %v1121, %v1112
  %v1536 = vpack.c.b16 %v1122, %v1113
  %v1537 = vpack.c.b16 %v1132, %v1123
  %v1538 = vpack.c.b16 %v1133, %v1124
  %v1539 = vpack.c.b16 %v1134, %v1125
  %v1540 = vpack.c.b16 %v1135, %v1126
  %v1541 = vpack.c.b16 %v1136, %v1127
  %v1542 = vpack.c.b16 %v1137, %v1128
  %v1543 = vpack.c.b16 %v1138, %v1129
  %v1544 = vpack.c.b16 %v1139, %v1130
  %v1545 = vpack.c.b16 %v1140, %v1131
  %v1546 = vpack.c.b16 %v1150, %v1141
  %v1547 = vpack.c.b16 %v1151, %v1142
  %v1548 = vpack.c.b16 %v1152, %v1143
  %v1549 = vpack.c.b16 %v1153, %v1144
  %v1550 = vpack.c.b16 %v1154, %v1145
  %v1551 = vpack.c.b16 %v1155, %v1146
  %v1552 = vpack.c.b16 %v1156, %v1147
  %v1553 = vpack.c.b16 %v1157, %v1148
  %v1554 = vpack.c.b16 %v1158, %v1149
  %v1555 = vpack.c.b16 %v1168, %v1159
  %v1556 = vpack.c.b16 %v1169, %v1160
  %v1557 = vpack.c.b16 %v1170, %v1161
  %v1558 = vpack.c.b16 %v1171, %v1162
  %v1559 = vpack.c.b16 %v1172, %v1163
  %v1560 = vpack.c.b16 %v1173, %v1164
  %v1561 = vpack.c.b16 %v1174, %v1165
  %v1562 = vpack.c.b16 %v1175, %v1166
  %v1563 = vpack.c.b16 %v1176, %v1167
  %v1564 = vpack.c.b16 %v1186, %v1177
  %v1565 = vpack.c.b16 %v1187, %v1178
  %v1566 = vpack.c.b16 %v1188, %v1179
  %v1567 = vpack.c.b16 %v1189, %v1180
  %v1568 = vpack.c.b16 %v1190, %v1181
  %v1569 = vpack.c.b16 %v1191, %v1182
  %v1570 = vpack.c.b16 %v1192, %v1183
  %v1571 = vpack.c.b16 %v1193, %v1184
  %v1572 = vpack.c.b16 %v1194, %v1185
  %v1573 = vpack.c.b16 %v1204, %v1195
  %v1574 = vpack.c.b16 %v1205, %v1196
  %v1575 = vpack.c.b16 %v1206, %v1197
  %v1576 = vpack.c.b16 %v1207, %v1198
  %v1577 = vpack.c.b16 %v1208, %v1199
  %v1578 = vpack.c.b16 %v1209, %v1200
  %v1579 = vpack.c.b16 %v1210, %v1201
  %v1580 = vpack.c.b16 %v1211, %v1202
  %v1581 = vpack.c.b16 %v1212, %v1203
  %v1582 = vpack.c.b16 %v1222, %v1213
  %v1583 = vpack.c.b16 %v1223, %v1214
  %v1584 = vpack.c.b16 %v1224, %v1215
  %v1585 = vpack.c.b16 %v1225, %v1216
  %v1586 = vpack.c.b16 %v1226, %v1217
  %v1587 = vpack.c.b16 %v1227, %v1218
  %v1588 = vpack.c.b16 %v1228, %v1219
  %v1589 = vpack.c.b16 %v1229, %v1220
  %v1590 = vpack.c.b16 %v1230, %v1221
  %v1591 = vpack.c.b16 %v1240, %v1231
  %v1592 = vpack.c.b16 %v1241, %v1232
  %v1593 = vpack.c.b16 %v1242, %v1233
  %v1594 = vpack.c.b16 %v1243, %v1234
  %v1595 = vpack.c.b16 %v1244, %v1235
  %v1596 = vpack.c.b16 %v1245, %v1236
  %v1597 = vpack.c.b16 %v1246, %v1237
  %v1598 = vpack.c.b16 %v1247, %v1238
  %v1599 = vpack.c.b16 %v1248, %v1239
  %v1600 = vpack.c.b16 %v1258, %v1249
  %v1601 = vpack.c.b16 %v1259, %v1250
  %v1602 = vpack.c.b16 %v1260, %v1251
  %v1603 = vpack.c.b16 %v1261, %v1252
  %v1604 = vpack.c.b16 %v1262, %v1253
  %v1605 = vpack.c.b16 %v1263, %v1254
  %v1606 = vpack.c.b16 %v1264, %v1255
  %v1607 = vpack.c.b16 %v1265, %v1256
  %v1608 = vpack.c.b16 %v1266, %v1257
  %v1609 = vpack.c.b16 %v1276, %v1267
  %v1610 = vpack.c.b16 %v1277, %v1268
  %v1611 = vpack.c.b16 %v1278, %v1269
  %v1612 = vpack.c.b16 %v1279, %v1270
  %v1613 = vpack.c.b16 %v1280, %v1271
  %v1614 = vpack.c.b16 %v1281, %v1272
  %v1615 = vpack.c.b16 %v1282, %v1273
  %v1616 = vpack.c.b16 %v1283, %v1274
  %v1617 = vpack.c.b16 %v1284, %v1275
  %v1618 = vpack.c.b16 %v1294, %v1285
  %v1619 = vpack.c.b16 %v1295, %v1286
  %v1620 = vpack.c.b16 %v1296, %v1287
  %v1621 = vpack.c.b16 %v1297, %v1288
  %v1622 = vpack.c.b16 %v1298, %v1289
  %v1623 = vpack.c.b16 %v1299, %v1290
  %v1624 = vpack.c.b16 %v1300, %v1291
  %v1625 = vpack.c.b16 %v1301, %v1292
  %v1626 = vpack.c.b16 %v1302, %v1293
  %v1627 = vpack.c.b16 %v1312, %v1303
  %v1628 = vpack.c.b16 %v1313, %v1304
  %v1629 = vpack.c.b16 %v1314, %v1305
  %v1630 = vpack.c.b16 %v1315, %v1306
  %v1631 = vpack.c.b16 %v1316, %v1307
  %v1632 = vpack.c.b16 %v1317, %v1308
  %v1633 = vpack.c.b16 %v1318, %v1309
  %v1634 = vpack.c.b16 %v1319, %v1310
  %v1635 = vpack.c.b16 %v1320, %v1311
  %v1636 = vpack.c.b16 %v1330, %v1321
  %v1637 = vpack.c.b16 %v1331, %v1322
  %v1638 = vpack.c.b16 %v1332, %v1323
  %v1639 = vpack.c.b16 %v1333, %v1324
  %v1640 = vpack.c.b16 %v1334, %v1325
  %v1641 = vpack.c.b16 %v1335, %v1326
  %v1642 = vpack.c.b16 %v1336, %v1327
  %v1643 = vpack.c.b16 %v1337, %v1328
  %v1644 = vpack.c.b16 %v1338, %v1329
  %v1645 = vpack.c.b16 %v1348, %v1339
  %v1646 = vpack.c.b16 %v1349, %v1340
  %v1647 = vpack.c.b16 %v1350, %v1341
  %v1648 = vpack.c.b16 %v1351, %v1342
  %v1649 = vpack.c.b16 %v1352, %v1343
  %v1650 = vpack.c.b16 %v1353, %v1344
  %v1651 = vpack.c.b16 %v1354, %v1345
  %v1652 = vpack.c.b16 %v1355, %v1346
  %v1653 = vpack.c.b16 %v1356, %v1347
  %v1654 = vpack.c.b16 %v1366, %v1357
  %v1655 = vpack.c.b16 %v1367, %v1358
  %v1656 = vpack.c.b16 %v1368, %v1359
  %v1657 = vpack.c.b16 %v1369, %v1360
  %v1658 = vpack.c.b16 %v1370, %v1361
  %v1659 = vpack.c.b16 %v1371, %v1362
  %v1660 = vpack.c.b16 %v1372, %v1363
  %v1661 = vpack.c.b16 %v1373, %v1364
  %v1662 = vpack.c.b16 %v1374, %v1365
  %v2095 = vunpack.c.l.b16 %v335
  %v2096 = vunpack.c.l.b16 %v336
  %v2097 = vunpack.c.l.b16 %v337
  %v2098 = vunpack.c.l.b16 %v338
  %v2099 = vunpack.c.l.b16 %v339
  %v2100 = vunpack.c.l.b16 %v340
  %v2101 = vunpack.c.l.b16 %v341
  %v2102 = vunpack.c.l.b16 %v342
  %v2103 = vunpack.c.l.b16 %v343
  %v2104 = vunpack.c.l.b16 %v344
  %v2105 = vunpack.c.l.b16 %v345
  %v2106 = vunpack.c.l.b16 %v346
  %v2107 = vunpack.c.l.b16 %v347
  %v2108 = vunpack.c.l.b16 %v348
  %v2109 = vunpack.c.l.b16 %v349
  %v2110 = vunpack.c.l.b16 %v350
  %v2111 = vunpack.c.l.b16 %v351
  %v2112 = vunpack.c.l.b16 %v352
  %v2113 = vunpack.c.l.b16 %v353
  %v2114 = vunpack.c.l.b16 %v354
  %v2115 = vunpack.c.l.b16 %v355
  %v2116 = vunpack.c.l.b16 %v356
  %v2117 = vunpack.c.l.b16 %v357
  %v2118 = vunpack.c.l.b16 %v358
  %v2119 = vunpack.c.l.b16 %v359
  %v2120 = vunpack.c.l.b16 %v360
  %v2121 = vunpack.c.l.b16 %v361
  %v2122 = vunpack.c.l.b16 %v362
  %v2123 = vunpack.c.l.b16 %v363
  %v2124 = vunpack.c.l.b16 %v364
  %v2125 = vunpack.c.l.b16 %v365
  %v2126 = vunpack.c.l.b16 %v366
  %v2127 = vunpack.c.l.b16 %v367
  %v2128 = vunpack.c.l.b16 %v368
  %v2129 = vunpack.c.l.b16 %v369
  %v2130 = vunpack.c.l.b16 %v370
  %v2131 = vunpack.c.l.b16 %v371
  %v2132 = vunpack.c.l.b16 %v372
  %v2133 = vunpack.c.l.b16 %v373
  %v2134 = vunpack.c.l.b16 %v374
  %v2135 = vunpack.c.l.b16 %v375
  %v2136 = vunpack.c.l.b16 %v376
  %v2137 = vunpack.c.l.b16 %v377
  %v2138 = vunpack.c.l.b16 %v378
  %v2139 = vunpack.c.l.b16 %v379
  %v2140 = vunpack.c.l.b16 %v380
  %v2141 = vunpack.c.l.b16 %v381
  %v2142 = vunpack.c.l.b16 %v382
  %v2143 = vunpack.c.l.b16 %v383
  %v2144 = vunpack.c.l.b16 %v384
  %v2145 = vunpack.c.l.b16 %v385
  %v2146 = vunpack.c.l.b16 %v386
  %v2147 = vunpack.c.l.b16 %v387
  %v2148 = vunpack.c.l.b16 %v388
  %v2149 = vunpack.c.l.b16 %v389
  %v2150 = vunpack.c.l.b16 %v390
  %v2151 = vunpack.c.l.b16 %v391
  %v2152 = vunpack.c.l.b16 %v392
  %v2153 = vunpack.c.l.b16 %v393
  %v2154 = vunpack.c.l.b16 %v394
  %v2155 = vunpack.c.l.b16 %v395
  %v2156 = vunpack.c.l.b16 %v396
  %v2157 = vunpack.c.l.b16 %v397
  %v2158 = vunpack.c.l.b16 %v398
  %v2159 = vunpack.c.l.b16 %v399
  %v2160 = vunpack.c.l.b16 %v400
  %v2161 = vunpack.c.l.b16 %v401
  %v2162 = vunpack.c.l.b16 %v402
  %v2163 = vunpack.c.l.b16 %v403
  %v2164 = vunpack.c.l.b16 %v404
  %v2165 = vunpack.c.l.b16 %v405
  %v2166 = vunpack.c.l.b16 %v406
  %v2167 = vunpack.c.l.b16 %v407
  %v2168 = vunpack.c.l.b16 %v408
  %v2169 = vunpack.c.l.b16 %v409
  %v2170 = vunpack.c.l.b16 %v410
  %v2171 = vunpack.c.l.b16 %v411
  %v2172 = vunpack.c.l.b16 %v412
  %v2173 = vunpack.c.l.b16 %v413
  %v2174 = vunpack.c.l.b16 %v414
  %v2175 = vunpack.c.l.b16 %v415
  %v2176 = vunpack.c.l.b16 %v416
  %v2177 = vunpack.c.l.b16 %v417
  %v2178 = vunpack.c.l.b16 %v418
  %v2179 = vunpack.c.l.b16 %v419
  %v2180 = vunpack.c.l.b16 %v420
  %v2181 = vunpack.c.l.b16 %v421
  %v2182 = vunpack.c.l.b16 %v422
  %v2183 = vunpack.c.l.b16 %v423
  %v2184 = vunpack.c.l.b16 %v424
  %v2185 = vunpack.c.l.b16 %v425
  %v2186 = vunpack.c.l.b16 %v426
  %v2187 = vunpack.c.l.b16 %v427
  %v2188 = vunpack.c.l.b16 %v428
  %v2189 = vunpack.c.l.b16 %v429
  %v2190 = vunpack.c.l.b16 %v430
  %v2191 = vunpack.c.l.b16 %v431
  %v2192 = vunpack.c.l.b16 %v432
  %v2193 = vunpack.c.l.b16 %v433
  %v2194 = vunpack.c.l.b16 %v434
  %v2195 = vunpack.c.l.b16 %v435
  %v2196 = vunpack.c.l.b16 %v436
  %v2197 = vunpack.c.l.b16 %v437
  %v2198 = vunpack.c.l.b16 %v438
  %v2199 = vunpack.c.l.b16 %v439
  %v2200 = vunpack.c.l.b16 %v440
  %v2201 = vunpack.c.l.b16 %v441
  %v2202 = vunpack.c.l.b16 %v442
  %v2203 = vunpack.c.l.b16 %v443
  %v2204 = vunpack.c.l.b16 %v444
  %v2205 = vunpack.c.l.b16 %v445
  %v2206 = vunpack.c.l.b16 %v446
  %v2207 = vunpack.c.l.b16 %v447
  %v2208 = vunpack.c.l.b16 %v448
  %v2209 = vunpack.c.l.b16 %v449
  %v2210 = vunpack.c.l.b16 %v450
  %v2211 = vunpack.c.l.b16 %v451
  %v2212 = vunpack.c.l.b16 %v452
  %v2213 = vunpack.c.l.b16 %v453
  %v2214 = vunpack.c.l.b16 %v454
  %v2215 = vunpack.c.l.b16 %v455
  %v2216 = vunpack.c.l.b16 %v456
  %v2217 = vunpack.c.l.b16 %v457
  %v2218 = vunpack.c.l.b16 %v458
  %v2219 = vunpack.c.l.b16 %v459
  %v2220 = vunpack.c.l.b16 %v460
  %v2221 = vunpack.c.l.b16 %v461
  %v2222 = vunpack.c.l.b16 %v462
  %v2223 = vunpack.c.l.b16 %v463
  %v2224 = vunpack.c.l.b16 %v464
  %v2225 = vunpack.c.l.b16 %v465
  %v2226 = vunpack.c.l.b16 %v466
  %v2227 = vunpack.c.l.b16 %v467
  %v2228 = vunpack.c.l.b16 %v468
  %v2229 = vunpack.c.l.b16 %v469
  %v2230 = vunpack.c.l.b16 %v470
  %v2231 = vunpack.c.l.b16 %v471
  %v2232 = vunpack.c.l.b16 %v472
  %v2233 = vunpack.c.l.b16 %v473
  %v2234 = vunpack.c.l.b16 %v474
  %v2235 = vunpack.c.l.b16 %v475
  %v2236 = vunpack.c.l.b16 %v476
  %v2237 = vunpack.c.l.b16 %v477
  %v2238 = vunpack.c.l.b16 %v478
  %v2239 = vpack.c.b16 %v2096, %v2095
  %v2240 = vpack.c.b16 %v2098, %v2097
  %v2241 = vpack.c.b16 %v2100, %v2099
  %v2242 = vpack.c.b16 %v2102, %v2101
  %v2243 = vpack.c.b16 %v2104, %v2103
  %v2244 = vpack.c.b16 %v2106, %v2105
  %v2245 = vpack.c.b16 %v2108, %v2107
  %v2246 = vpack.c.b16 %v2110, %v2109
  %v2247 = vpack.c.b16 %v2112, %v2111
  %v2248 = vpack.c.b16 %v2114, %v2113
  %v2249 = vpack.c.b16 %v2116, %v2115
  %v2250 = vpack.c.b16 %v2118, %v2117
  %v2251 = vpack.c.b16 %v2120, %v2119
  %v2252 = vpack.c.b16 %v2122, %v2121
  %v2253 = vpack.c.b16 %v2124, %v2123
  %v2254 = vpack.c.b16 %v2126, %v2125
  %v2255 = vpack.c.b16 %v2128, %v2127
  %v2256 = vpack.c.b16 %v2130, %v2129
  %v2257 = vpack.c.b16 %v2132, %v2131
  %v2258 = vpack.c.b16 %v2134, %v2133
  %v2259 = vpack.c.b16 %v2136, %v2135
  %v2260 = vpack.c.b16 %v2138, %v2137
  %v2261 = vpack.c.b16 %v2140, %v2139
  %v2262 = vpack.c.b16 %v2142, %v2141
  %v2263 = vpack.c.b16 %v2144, %v2143
  %v2264 = vpack.c.b16 %v2146, %v2145
  %v2265 = vpack.c.b16 %v2148, %v2147
  %v2266 = vpack.c.b16 %v2150, %v2149
  %v2267 = vpack.c.b16 %v2152, %v2151
  %v2268 = vpack.c.b16 %v2154, %v2153
  %v2269 = vpack.c.b16 %v2156, %v2155
  %v2270 = vpack.c.b16 %v2158, %v2157
  %v2271 = vpack.c.b16 %v2160, %v2159
  %v2272 = vpack.c.b16 %v2162, %v2161
  %v2273 = vpack.c.b16 %v2164, %v2163
  %v2274 = vpack.c.b16 %v2166, %v2165
  %v2275 = vpack.c.b16 %v2168, %v2167
  %v2276 = vpack.c.b16 %v2170, %v2169
  %v2277 = vpack.c.b16 %v2172, %v2171
  %v2278 = vpack.c.b16 %v2174, %v2173
  %v2279 = vpack.c.b16 %v2176, %v2175
  %v2280 = vpack.c.b16 %v2178, %v2177
  %v2281 = vpack.c.b16 %v2180, %v2179
  %v2282 = vpack.c.b16 %v2182, %v2181
  %v2283 = vpack.c.b16 %v2184, %v2183
  %v2284 = vpack.c.b16 %v2186, %v2185
  %v2285 = vpack.c.b16 %v2188, %v2187
  %v2286 = vpack.c.b16 %v2190, %v2189
  %v2287 = vpack.c.b16 %v2192, %v2191
  %v2288 = vpack.c.b16 %v2194, %v2193
  %v2289 = vpack.c.b16 %v2196, %v2195
  %v2290 = vpack.c.b16 %v2198, %v2197
  %v2291 = vpack.c.b16 %v2200, %v2199
  %v2292 = vpack.c.b16 %v2202, %v2201
  %v2293 = vpack.c.b16 %v2204, %v2203
  %v2294 = vpack.c.b16 %v2206, %v2205
  %v2295 = vpack.c.b16 %v2208, %v2207
  %v2296 = vpack.c.b16 %v2210, %v2209
  %v2297 = vpack.c.b16 %v2212, %v2211
  %v2298 = vpack.c.b16 %v2214, %v2213
  %v2299 = vpack.c.b16 %v2216, %v2215
  %v2300 = vpack.c.b16 %v2218, %v2217
  %v2301 = vpack.c.b16 %v2220, %v2219
  %v2302 = vpack.c.b16 %v2222, %v2221
  %v2303 = vpack.c.b16 %v2224, %v2223
  %v2304 = vpack.c.b16 %v2226, %v2225
  %v2305 = vpack.c.b16 %v2228, %v2227
  %v2306 = vpack.c.b16 %v2230, %v2229
  %v2307 = vpack.c.b16 %v2232, %v2231
  %v2308 = vpack.c.b16 %v2234, %v2233
  %v2309 = vpack.c.b16 %v2236, %v2235
  %v2310 = vpack.c.b16 %v2238, %v2237
  %2383 = vmatprep.subr.bf16.mxu0 0
  %2384 = vmatpush1.bf16.msra.mxu0 %v2239
  %2385 = vmatprep.subr.bf16.mxu0 0
  %2386 = vmatpush1.bf16.msra.mxu0 %v2240
  %2387 = vmatprep.subr.bf16.mxu0 0
  %2388 = vmatpush1.bf16.msra.mxu0 %v2241
  %2389 = vmatprep.subr.bf16.mxu0 0
  %2390 = vmatpush1.bf16.msra.mxu0 %v2242
  %2391 = vmatprep.subr.bf16.mxu0 0
  %2392 = vmatpush1.bf16.msra.mxu0 %v2243
  %2393 = vmatprep.subr.bf16.mxu0 0
  %2394 = vmatpush1.bf16.msra.mxu0 %v2244
  %2395 = vmatprep.subr.bf16.mxu0 0
  %2396 = vmatpush1.bf16.msra.mxu0 %v2245
  %2397 = vmatprep.subr.bf16.mxu0 0
  %2398 = vmatpush1.bf16.msra.mxu0 %v2246
  %2399 = vmatprep.subr.bf16.mxu0 0
  %2400 = vmatpush1.bf16.msra.mxu0 %v2247
  %2401 = vmatprep.subr.bf16.mxu0 0
  %2402 = vmatpush1.bf16.msra.mxu0 %v2248
  %2403 = vmatprep.subr.bf16.mxu0 0
  %2404 = vmatpush1.bf16.msra.mxu0 %v2249
  %2405 = vmatprep.subr.bf16.mxu0 0
  %2406 = vmatpush1.bf16.msra.mxu0 %v2250
  %2407 = vmatprep.subr.bf16.mxu0 0
  %2408 = vmatpush1.bf16.msra.mxu0 %v2251
  %2409 = vmatprep.subr.bf16.mxu0 0
  %2410 = vmatpush1.bf16.msra.mxu0 %v2252
  %2411 = vmatprep.subr.bf16.mxu0 0
  %2412 = vmatpush1.bf16.msra.mxu0 %v2253
  %2413 = vmatprep.subr.bf16.mxu0 0
  %2414 = vmatpush1.bf16.msra.mxu0 %v2254
  %2415 = vmatprep.mubr.bf16.mxu0 %v1376
  %2416 = vmatmul.mubr.bf16.gmra.mrb[0].mxu0 %v1375
  %v2417 = vpop.f32.mrb[0].mxu0
  %v2418 = vadd.f32 0.0, %v2417
  %v2419 = vpop.f32.mrb[0].mxu0
  %v2420 = vpop.f32.mrb[0].mxu0
  %v2421 = vadd.f32 0.0, %v2420
  %v2422 = vpop.f32.mrb[0].mxu0
  %2423 = vmatprep.mubr.bf16.mxu0 %v1385
  %2424 = vmatmul.mubr.bf16.gmra.mrb[0].mxu0 %v1384
  %v2425 = vpop.f32.mrb[0].mxu0
  %v2426 = vadd.f32 0.0, %v2425
  %v2427 = vpop.f32.mrb[0].mxu0
  %v2428 = vpop.f32.mrb[0].mxu0
  %v2429 = vadd.f32 0.0, %v2428
  %v2430 = vpop.f32.mrb[0].mxu0
  %2431 = vmatprep.mubr.bf16.mxu0 %v1394
  %2432 = vmatmul.mubr.bf16.gmra.mrb[0].mxu0 %v1393
  %v2433 = vpop.f32.mrb[0].mxu0
  %v2434 = vadd.f32 0.0, %v2433
  %v2435 = vpop.f32.mrb[0].mxu0
  %v2436 = vpop.f32.mrb[0].mxu0
  %v2437 = vadd.f32 0.0, %v2436
  %v2438 = vpop.f32.mrb[0].mxu0
  %2439 = vmatprep.mubr.bf16.mxu0 %v1403
  %2440 = vmatmul.mubr.bf16.gmra.mrb[0].mxu0 %v1402
  %v2441 = vpop.f32.mrb[0].mxu0
  %v2442 = vadd.f32 0.0, %v2441
  %v2443 = vpop.f32.mrb[0].mxu0
  %v2444 = vpop.f32.mrb[0].mxu0
  %v2445 = vadd.f32 0.0, %v2444
  %v2446 = vpop.f32.mrb[0].mxu0
  %2447 = vmatprep.mubr.bf16.mxu0 %v1412
  %2448 = vmatmul.mubr.bf16.gmra.mrb[0].mxu0 %v1411
  %v2449 = vpop.f32.mrb[0].mxu0
  %v2450 = vadd.f32 0.0, %v2449
  %v2451 = vpop.f32.mrb[0].mxu0
  %v2452 = vpop.f32.mrb[0].mxu0
  %v2453 = vadd.f32 0.0, %v2452
  %v2454 = vpop.f32.mrb[0].mxu0
  %2455 = vmatprep.mubr.bf16.mxu0 %v1421
  %2456 = vmatmul.mubr.bf16.gmra.mrb[0].mxu0 %v1420
  %v2457 = vpop.f32.mrb[0].mxu0
  %v2458 = vadd.f32 0.0, %v2457
  %v2459 = vpop.f32.mrb[0].mxu0
  %v2460 = vpop.f32.mrb[0].mxu0
  %v2461 = vadd.f32 0.0, %v2460
  %v2462 = vpop.f32.mrb[0].mxu0
  %2463 = vmatprep.mubr.bf16.mxu0 %v1430
  %2464 = vmatmul.mubr.bf16.gmra.mrb[0].mxu0 %v1429
  %v2465 = vpop.f32.mrb[0].mxu0
  %v2466 = vadd.f32 0.0, %v2465
  %v2467 = vpop.f32.mrb[0].mxu0
  %v2468 = vpop.f32.mrb[0].mxu0
  %v2469 = vadd.f32 0.0, %v2468
  %v2470 = vpop.f32.mrb[0].mxu0
  %2471 = vmatprep.mubr.bf16.mxu0 %v1439
  %2472 = vmatmul.mubr.bf16.gmra.mrb[0].mxu0 %v1438
  %v2473 = vpop.f32.mrb[0].mxu0
  %v2474 = vadd.f32 0.0, %v2473
  %v2475 = vpop.f32.mrb[0].mxu0
  %v2476 = vpop.f32.mrb[0].mxu0
  %v2477 = vadd.f32 0.0, %v2476
  %v2478 = vpop.f32.mrb[0].mxu0
  %2479 = vmatprep.mubr.bf16.mxu0 %v1448
  %2480 = vmatmul.mubr.bf16.gmra.mrb[0].mxu0 %v1447
  %v2481 = vpop.f32.mrb[0].mxu0
  %v2482 = vadd.f32 0.0, %v2481
  %v2483 = vpop.f32.mrb[0].mxu0
  %v2484 = vpop.f32.mrb[0].mxu0
  %v2485 = vadd.f32 0.0, %v2484
  %v2486 = vpop.f32.mrb[0].mxu0
  %2487 = vmatprep.mubr.bf16.mxu0 %v1457
  %2488 = vmatmul.mubr.bf16.gmra.mrb[0].mxu0 %v1456
  %v2489 = vpop.f32.mrb[0].mxu0
  %v2490 = vadd.f32 0.0, %v2489
  %v2491 = vpop.f32.mrb[0].mxu0
  %v2492 = vpop.f32.mrb[0].mxu0
  %v2493 = vadd.f32 0.0, %v2492
  %v2494 = vpop.f32.mrb[0].mxu0
  %2495 = vmatprep.mubr.bf16.mxu0 %v1466
  %2496 = vmatmul.mubr.bf16.gmra.mrb[0].mxu0 %v1465
  %v2497 = vpop.f32.mrb[0].mxu0
  %v2498 = vadd.f32 0.0, %v2497
  %v2499 = vpop.f32.mrb[0].mxu0
  %v2500 = vpop.f32.mrb[0].mxu0
  %v2501 = vadd.f32 0.0, %v2500
  %v2502 = vpop.f32.mrb[0].mxu0
  %2503 = vmatprep.mubr.bf16.mxu0 %v1475
  %2504 = vmatmul.mubr.bf16.gmra.mrb[0].mxu0 %v1474
  %v2505 = vpop.f32.mrb[0].mxu0
  %v2506 = vadd.f32 0.0, %v2505
  %v2507 = vpop.f32.mrb[0].mxu0
  %v2508 = vpop.f32.mrb[0].mxu0
  %v2509 = vadd.f32 0.0, %v2508
  %v2510 = vpop.f32.mrb[0].mxu0
  %2511 = vmatprep.mubr.bf16.mxu0 %v1484
  %2512 = vmatmul.mubr.bf16.gmra.mrb[0].mxu0 %v1483
  %v2513 = vpop.f32.mrb[0].mxu0
  %v2514 = vadd.f32 0.0, %v2513
  %v2515 = vpop.f32.mrb[0].mxu0
  %v2516 = vpop.f32.mrb[0].mxu0
  %v2517 = vadd.f32 0.0, %v2516
  %v2518 = vpop.f32.mrb[0].mxu0
  %2519 = vmatprep.mubr.bf16.mxu0 %v1493
  %2520 = vmatmul.mubr.bf16.gmra.mrb[0].mxu0 %v1492
  %v2521 = vpop.f32.mrb[0].mxu0
  %v2522 = vadd.f32 0.0, %v2521
  %v2523 = vpop.f32.mrb[0].mxu0
  %v2524 = vpop.f32.mrb[0].mxu0
  %v2525 = vadd.f32 0.0, %v2524
  %v2526 = vpop.f32.mrb[0].mxu0
  %2527 = vmatprep.mubr.bf16.mxu0 %v1502
  %2528 = vmatmul.mubr.bf16.gmra.mrb[0].mxu0 %v1501
  %v2529 = vpop.f32.mrb[0].mxu0
  %v2530 = vadd.f32 0.0, %v2529
  %v2531 = vpop.f32.mrb[0].mxu0
  %v2532 = vpop.f32.mrb[0].mxu0
  %v2533 = vadd.f32 0.0, %v2532
  %v2534 = vpop.f32.mrb[0].mxu0
  %2535 = vmatprep.mubr.bf16.mxu0 %v1511
  %2536 = vmatmul.mubr.bf16.gmra.mrb[0].mxu0 %v1510
  %v2537 = vpop.f32.mrb[0].mxu0
  %v2538 = vadd.f32 0.0, %v2537
  %v2539 = vpop.f32.mrb[0].mxu0
  %v2540 = vpop.f32.mrb[0].mxu0
  %v2541 = vadd.f32 0.0, %v2540
  %v2542 = vpop.f32.mrb[0].mxu0
  %2543 = vmatprep.mubr.bf16.mxu0 %v1520
  %2544 = vmatmul.mubr.bf16.gmra.mrb[0].mxu0 %v1519
  %v2545 = vpop.f32.mrb[0].mxu0
  %v2546 = vadd.f32 0.0, %v2545
  %v2547 = vpop.f32.mrb[0].mxu0
  %v2548 = vpop.f32.mrb[0].mxu0
  %v2549 = vadd.f32 0.0, %v2548
  %v2550 = vpop.f32.mrb[0].mxu0
  %2551 = vmatprep.mubr.bf16.mxu0 %v1529
  %2552 = vmatmul.mubr.bf16.gmra.mrb[0].mxu0 %v1528
  %v2553 = vpop.f32.mrb[0].mxu0
  %v2554 = vadd.f32 0.0, %v2553
  %v2555 = vpop.f32.mrb[0].mxu0
  %v2556 = vpop.f32.mrb[0].mxu0
  %v2557 = vadd.f32 0.0, %v2556
  %v2558 = vpop.f32.mrb[0].mxu0
  %2559 = vmatprep.mubr.bf16.mxu0 %v1538
  %2560 = vmatmul.mubr.bf16.gmra.mrb[0].mxu0 %v1537
  %v2561 = vpop.f32.mrb[0].mxu0
  %v2562 = vadd.f32 0.0, %v2561
  %v2563 = vpop.f32.mrb[0].mxu0
  %v2564 = vpop.f32.mrb[0].mxu0
  %v2565 = vadd.f32 0.0, %v2564
  %v2566 = vpop.f32.mrb[0].mxu0
  %2567 = vmatprep.mubr.bf16.mxu0 %v1547
  %2568 = vmatmul.mubr.bf16.gmra.mrb[0].mxu0 %v1546
  %v2569 = vpop.f32.mrb[0].mxu0
  %v2570 = vadd.f32 0.0, %v2569
  %v2571 = vpop.f32.mrb[0].mxu0
  %v2572 = vpop.f32.mrb[0].mxu0
  %v2573 = vadd.f32 0.0, %v2572
  %v2574 = vpop.f32.mrb[0].mxu0
  %2575 = vmatprep.mubr.bf16.mxu0 %v1556
  %2576 = vmatmul.mubr.bf16.gmra.mrb[0].mxu0 %v1555
  %v2577 = vpop.f32.mrb[0].mxu0
  %v2578 = vadd.f32 0.0, %v2577
  %v2579 = vpop.f32.mrb[0].mxu0
  %v2580 = vpop.f32.mrb[0].mxu0
  %v2581 = vadd.f32 0.0, %v2580
  %v2582 = vpop.f32.mrb[0].mxu0
  %2583 = vmatprep.mubr.bf16.mxu0 %v1565
  %2584 = vmatmul.mubr.bf16.gmra.mrb[0].mxu0 %v1564
  %v2585 = vpop.f32.mrb[0].mxu0
  %v2586 = vadd.f32 0.0, %v2585
  %v2587 = vpop.f32.mrb[0].mxu0
  %v2588 = vpop.f32.mrb[0].mxu0
  %v2589 = vadd.f32 0.0, %v2588
  %v2590 = vpop.f32.mrb[0].mxu0
  %2591 = vmatprep.mubr.bf16.mxu0 %v1574
  %2592 = vmatmul.mubr.bf16.gmra.mrb[0].mxu0 %v1573
  %v2593 = vpop.f32.mrb[0].mxu0
  %v2594 = vadd.f32 0.0, %v2593
  %v2595 = vpop.f32.mrb[0].mxu0
  %v2596 = vpop.f32.mrb[0].mxu0
  %v2597 = vadd.f32 0.0, %v2596
  %v2598 = vpop.f32.mrb[0].mxu0
  %2599 = vmatprep.mubr.bf16.mxu0 %v1583
  %2600 = vmatmul.mubr.bf16.gmra.mrb[0].mxu0 %v1582
  %v2601 = vpop.f32.mrb[0].mxu0
  %v2602 = vadd.f32 0.0, %v2601
  %v2603 = vpop.f32.mrb[0].mxu0
  %v2604 = vpop.f32.mrb[0].mxu0
  %v2605 = vadd.f32 0.0, %v2604
  %v2606 = vpop.f32.mrb[0].mxu0
  %2607 = vmatprep.mubr.bf16.mxu0 %v1592
  %2608 = vmatmul.mubr.bf16.gmra.mrb[0].mxu0 %v1591
  %v2609 = vpop.f32.mrb[0].mxu0
  %v2610 = vadd.f32 0.0, %v2609
  %v2611 = vpop.f32.mrb[0].mxu0
  %v2612 = vpop.f32.mrb[0].mxu0
  %v2613 = vadd.f32 0.0, %v2612
  %v2614 = vpop.f32.mrb[0].mxu0
  %2615 = vmatprep.mubr.bf16.mxu0 %v1601
  %2616 = vmatmul.mubr.bf16.gmra.mrb[0].mxu0 %v1600
  %v2617 = vpop.f32.mrb[0].mxu0
  %v2618 = vadd.f32 0.0, %v2617
  %v2619 = vpop.f32.mrb[0].mxu0
  %v2620 = vpop.f32.mrb[0].mxu0
  %v2621 = vadd.f32 0.0, %v2620
  %v2622 = vpop.f32.mrb[0].mxu0
  %2623 = vmatprep.mubr.bf16.mxu0 %v1610
  %2624 = vmatmul.mubr.bf16.gmra.mrb[0].mxu0 %v1609
  %v2625 = vpop.f32.mrb[0].mxu0
  %v2626 = vadd.f32 0.0, %v2625
  %v2627 = vpop.f32.mrb[0].mxu0
  %v2628 = vpop.f32.mrb[0].mxu0
  %v2629 = vadd.f32 0.0, %v2628
  %v2630 = vpop.f32.mrb[0].mxu0
  %2631 = vmatprep.mubr.bf16.mxu0 %v1619
  %2632 = vmatmul.mubr.bf16.gmra.mrb[0].mxu0 %v1618
  %v2633 = vpop.f32.mrb[0].mxu0
  %v2634 = vadd.f32 0.0, %v2633
  %v2635 = vpop.f32.mrb[0].mxu0
  %v2636 = vpop.f32.mrb[0].mxu0
  %v2637 = vadd.f32 0.0, %v2636
  %v2638 = vpop.f32.mrb[0].mxu0
  %2639 = vmatprep.mubr.bf16.mxu0 %v1628
  %2640 = vmatmul.mubr.bf16.gmra.mrb[0].mxu0 %v1627
  %v2641 = vpop.f32.mrb[0].mxu0
  %v2642 = vadd.f32 0.0, %v2641
  %v2643 = vpop.f32.mrb[0].mxu0
  %v2644 = vpop.f32.mrb[0].mxu0
  %v2645 = vadd.f32 0.0, %v2644
  %v2646 = vpop.f32.mrb[0].mxu0
  %2647 = vmatprep.mubr.bf16.mxu0 %v1637
  %2648 = vmatmul.mubr.bf16.gmra.mrb[0].mxu0 %v1636
  %v2649 = vpop.f32.mrb[0].mxu0
  %v2650 = vadd.f32 0.0, %v2649
  %v2651 = vpop.f32.mrb[0].mxu0
  %v2652 = vpop.f32.mrb[0].mxu0
  %v2653 = vadd.f32 0.0, %v2652
  %v2654 = vpop.f32.mrb[0].mxu0
  %2655 = vmatprep.mubr.bf16.mxu0 %v1646
  %2656 = vmatmul.mubr.bf16.gmra.mrb[0].mxu0 %v1645
  %v2657 = vpop.f32.mrb[0].mxu0
  %v2658 = vadd.f32 0.0, %v2657
  %v2659 = vpop.f32.mrb[0].mxu0
  %v2660 = vpop.f32.mrb[0].mxu0
  %v2661 = vadd.f32 0.0, %v2660
  %v2662 = vpop.f32.mrb[0].mxu0
  %2663 = vmatprep.mubr.bf16.mxu0 %v1655
  %2664 = vmatmul.mubr.bf16.gmra.mrb[0].mxu0 %v1654
  %v2665 = vpop.f32.mrb[0].mxu0
  %v2666 = vadd.f32 0.0, %v2665
  %v2667 = vpop.f32.mrb[0].mxu0
  %v2668 = vpop.f32.mrb[0].mxu0
  %v2669 = vadd.f32 0.0, %v2668
  %v2670 = vpop.f32.mrb[0].mxu0
  %2671 = vdwg.mxu0
  %2672 = vmatprep.subr.bf16.mxu0 0
  %2673 = vmatpush1.bf16.msra.mxu0 %v2255
  %2674 = vmatprep.subr.bf16.mxu0 0
  %2675 = vmatpush1.bf16.msra.mxu0 %v2256
  %2676 = vmatprep.subr.bf16.mxu0 0
  %2677 = vmatpush1.bf16.msra.mxu0 %v2257
  %2678 = vmatprep.subr.bf16.mxu0 0
  %2679 = vmatpush1.bf16.msra.mxu0 %v2258
  %2680 = vmatprep.subr.bf16.mxu0 0
  %2681 = vmatpush1.bf16.msra.mxu0 %v2259
  %2682 = vmatprep.subr.bf16.mxu0 0
  %2683 = vmatpush1.bf16.msra.mxu0 %v2260
  %2684 = vmatprep.subr.bf16.mxu0 0
  %2685 = vmatpush1.bf16.msra.mxu0 %v2261
  %2686 = vmatprep.subr.bf16.mxu0 0
  %2687 = vmatpush1.bf16.msra.mxu0 %v2262
  %2688 = vmatprep.subr.bf16.mxu0 0
  %2689 = vmatpush1.bf16.msra.mxu0 %v2263
  %2690 = vmatprep.subr.bf16.mxu0 0
  %2691 = vmatpush1.bf16.msra.mxu0 %v2264
  %2692 = vmatprep.subr.bf16.mxu0 0
  %2693 = vmatpush1.bf16.msra.mxu0 %v2265
  %2694 = vmatprep.subr.bf16.mxu0 0
  %2695 = vmatpush1.bf16.msra.mxu0 %v2266
  %2696 = vmatprep.subr.bf16.mxu0 0
  %2697 = vmatpush1.bf16.msra.mxu0 %v2267
  %2698 = vmatprep.subr.bf16.mxu0 0
  %2699 = vmatpush1.bf16.msra.mxu0 %v2268
  %2700 = vmatprep.subr.bf16.mxu0 0
  %2701 = vmatpush1.bf16.msra.mxu0 %v2269
  %2702 = vmatprep.subr.bf16.mxu0 0
  %2703 = vmatpush1.bf16.msra.mxu0 %v2270
  %2704 = vmatprep.mubr.bf16.mxu0 %v1378
  %2705 = vmatmul.mubr.bf16.gmra.mrb[0].mxu0 %v1377
  %v2706 = vpop.f32.mrb[0].mxu0
  %v2707 = vadd.f32 %v2418, %v2706
  %v2708 = vpop.f32.mrb[0].mxu0
  %v2709 = vpop.f32.mrb[0].mxu0
  %v2710 = vadd.f32 %v2421, %v2709
  %v2711 = vpop.f32.mrb[0].mxu0
  %2712 = vmatprep.mubr.bf16.mxu0 %v1387
  %2713 = vmatmul.mubr.bf16.gmra.mrb[0].mxu0 %v1386
  %v2714 = vpop.f32.mrb[0].mxu0
  %v2715 = vadd.f32 %v2426, %v2714
  %v2716 = vpop.f32.mrb[0].mxu0
  %v2717 = vpop.f32.mrb[0].mxu0
  %v2718 = vadd.f32 %v2429, %v2717
  %v2719 = vpop.f32.mrb[0].mxu0
  %2720 = vmatprep.mubr.bf16.mxu0 %v1396
  %2721 = vmatmul.mubr.bf16.gmra.mrb[0].mxu0 %v1395
  %v2722 = vpop.f32.mrb[0].mxu0
  %v2723 = vadd.f32 %v2434, %v2722
  %v2724 = vpop.f32.mrb[0].mxu0
  %v2725 = vpop.f32.mrb[0].mxu0
  %v2726 = vadd.f32 %v2437, %v2725
  %v2727 = vpop.f32.mrb[0].mxu0
  %2728 = vmatprep.mubr.bf16.mxu0 %v1405
  %2729 = vmatmul.mubr.bf16.gmra.mrb[0].mxu0 %v1404
  %v2730 = vpop.f32.mrb[0].mxu0
  %v2731 = vadd.f32 %v2442, %v2730
  %v2732 = vpop.f32.mrb[0].mxu0
  %v2733 = vpop.f32.mrb[0].mxu0
  %v2734 = vadd.f32 %v2445, %v2733
  %v2735 = vpop.f32.mrb[0].mxu0
  %2736 = vmatprep.mubr.bf16.mxu0 %v1414
  %2737 = vmatmul.mubr.bf16.gmra.mrb[0].mxu0 %v1413
  %v2738 = vpop.f32.mrb[0].mxu0
  %v2739 = vadd.f32 %v2450, %v2738
  %v2740 = vpop.f32.mrb[0].mxu0
  %v2741 = vpop.f32.mrb[0].mxu0
  %v2742 = vadd.f32 %v2453, %v2741
  %v2743 = vpop.f32.mrb[0].mxu0
  %2744 = vmatprep.mubr.bf16.mxu0 %v1423
  %2745 = vmatmul.mubr.bf16.gmra.mrb[0].mxu0 %v1422
  %v2746 = vpop.f32.mrb[0].mxu0
  %v2747 = vadd.f32 %v2458, %v2746
  %v2748 = vpop.f32.mrb[0].mxu0
  %v2749 = vpop.f32.mrb[0].mxu0
  %v2750 = vadd.f32 %v2461, %v2749
  %v2751 = vpop.f32.mrb[0].mxu0
  %2752 = vmatprep.mubr.bf16.mxu0 %v1432
  %2753 = vmatmul.mubr.bf16.gmra.mrb[0].mxu0 %v1431
  %v2754 = vpop.f32.mrb[0].mxu0
  %v2755 = vadd.f32 %v2466, %v2754
  %v2756 = vpop.f32.mrb[0].mxu0
  %v2757 = vpop.f32.mrb[0].mxu0
  %v2758 = vadd.f32 %v2469, %v2757
  %v2759 = vpop.f32.mrb[0].mxu0
  %2760 = vmatprep.mubr.bf16.mxu0 %v1441
  %2761 = vmatmul.mubr.bf16.gmra.mrb[0].mxu0 %v1440
  %v2762 = vpop.f32.mrb[0].mxu0
  %v2763 = vadd.f32 %v2474, %v2762
  %v2764 = vpop.f32.mrb[0].mxu0
  %v2765 = vpop.f32.mrb[0].mxu0
  %v2766 = vadd.f32 %v2477, %v2765
  %v2767 = vpop.f32.mrb[0].mxu0
  %2768 = vmatprep.mubr.bf16.mxu0 %v1450
  %2769 = vmatmul.mubr.bf16.gmra.mrb[0].mxu0 %v1449
  %v2770 = vpop.f32.mrb[0].mxu0
  %v2771 = vadd.f32 %v2482, %v2770
  %v2772 = vpop.f32.mrb[0].mxu0
  %v2773 = vpop.f32.mrb[0].mxu0
  %v2774 = vadd.f32 %v2485, %v2773
  %v2775 = vpop.f32.mrb[0].mxu0
  %2776 = vmatprep.mubr.bf16.mxu0 %v1459
  %2777 = vmatmul.mubr.bf16.gmra.mrb[0].mxu0 %v1458
  %v2778 = vpop.f32.mrb[0].mxu0
  %v2779 = vadd.f32 %v2490, %v2778
  %v2780 = vpop.f32.mrb[0].mxu0
  %v2781 = vpop.f32.mrb[0].mxu0
  %v2782 = vadd.f32 %v2493, %v2781
  %v2783 = vpop.f32.mrb[0].mxu0
  %2784 = vmatprep.mubr.bf16.mxu0 %v1468
  %2785 = vmatmul.mubr.bf16.gmra.mrb[0].mxu0 %v1467
  %v2786 = vpop.f32.mrb[0].mxu0
  %v2787 = vadd.f32 %v2498, %v2786
  %v2788 = vpop.f32.mrb[0].mxu0
  %v2789 = vpop.f32.mrb[0].mxu0
  %v2790 = vadd.f32 %v2501, %v2789
  %v2791 = vpop.f32.mrb[0].mxu0
  %2792 = vmatprep.mubr.bf16.mxu0 %v1477
  %2793 = vmatmul.mubr.bf16.gmra.mrb[0].mxu0 %v1476
  %v2794 = vpop.f32.mrb[0].mxu0
  %v2795 = vadd.f32 %v2506, %v2794
  %v2796 = vpop.f32.mrb[0].mxu0
  %v2797 = vpop.f32.mrb[0].mxu0
  %v2798 = vadd.f32 %v2509, %v2797
  %v2799 = vpop.f32.mrb[0].mxu0
  %2800 = vmatprep.mubr.bf16.mxu0 %v1486
  %2801 = vmatmul.mubr.bf16.gmra.mrb[0].mxu0 %v1485
  %v2802 = vpop.f32.mrb[0].mxu0
  %v2803 = vadd.f32 %v2514, %v2802
  %v2804 = vpop.f32.mrb[0].mxu0
  %v2805 = vpop.f32.mrb[0].mxu0
  %v2806 = vadd.f32 %v2517, %v2805
  %v2807 = vpop.f32.mrb[0].mxu0
  %2808 = vmatprep.mubr.bf16.mxu0 %v1495
  %2809 = vmatmul.mubr.bf16.gmra.mrb[0].mxu0 %v1494
  %v2810 = vpop.f32.mrb[0].mxu0
  %v2811 = vadd.f32 %v2522, %v2810
  %v2812 = vpop.f32.mrb[0].mxu0
  %v2813 = vpop.f32.mrb[0].mxu0
  %v2814 = vadd.f32 %v2525, %v2813
  %v2815 = vpop.f32.mrb[0].mxu0
  %2816 = vmatprep.mubr.bf16.mxu0 %v1504
  %2817 = vmatmul.mubr.bf16.gmra.mrb[0].mxu0 %v1503
  %v2818 = vpop.f32.mrb[0].mxu0
  %v2819 = vadd.f32 %v2530, %v2818
  %v2820 = vpop.f32.mrb[0].mxu0
  %v2821 = vpop.f32.mrb[0].mxu0
  %v2822 = vadd.f32 %v2533, %v2821
  %v2823 = vpop.f32.mrb[0].mxu0
  %2824 = vmatprep.mubr.bf16.mxu0 %v1513
  %2825 = vmatmul.mubr.bf16.gmra.mrb[0].mxu0 %v1512
  %v2826 = vpop.f32.mrb[0].mxu0
  %v2827 = vadd.f32 %v2538, %v2826
  %v2828 = vpop.f32.mrb[0].mxu0
  %v2829 = vpop.f32.mrb[0].mxu0
  %v2830 = vadd.f32 %v2541, %v2829
  %v2831 = vpop.f32.mrb[0].mxu0
  %2832 = vmatprep.mubr.bf16.mxu0 %v1522
  %2833 = vmatmul.mubr.bf16.gmra.mrb[0].mxu0 %v1521
  %v2834 = vpop.f32.mrb[0].mxu0
  %v2835 = vadd.f32 %v2546, %v2834
  %v2836 = vpop.f32.mrb[0].mxu0
  %v2837 = vpop.f32.mrb[0].mxu0
  %v2838 = vadd.f32 %v2549, %v2837
  %v2839 = vpop.f32.mrb[0].mxu0
  %2840 = vmatprep.mubr.bf16.mxu0 %v1531
  %2841 = vmatmul.mubr.bf16.gmra.mrb[0].mxu0 %v1530
  %v2842 = vpop.f32.mrb[0].mxu0
  %v2843 = vadd.f32 %v2554, %v2842
  %v2844 = vpop.f32.mrb[0].mxu0
  %v2845 = vpop.f32.mrb[0].mxu0
  %v2846 = vadd.f32 %v2557, %v2845
  %v2847 = vpop.f32.mrb[0].mxu0
  %2848 = vmatprep.mubr.bf16.mxu0 %v1540
  %2849 = vmatmul.mubr.bf16.gmra.mrb[0].mxu0 %v1539
  %v2850 = vpop.f32.mrb[0].mxu0
  %v2851 = vadd.f32 %v2562, %v2850
  %v2852 = vpop.f32.mrb[0].mxu0
  %v2853 = vpop.f32.mrb[0].mxu0
  %v2854 = vadd.f32 %v2565, %v2853
  %v2855 = vpop.f32.mrb[0].mxu0
  %2856 = vmatprep.mubr.bf16.mxu0 %v1549
  %2857 = vmatmul.mubr.bf16.gmra.mrb[0].mxu0 %v1548
  %v2858 = vpop.f32.mrb[0].mxu0
  %v2859 = vadd.f32 %v2570, %v2858
  %v2860 = vpop.f32.mrb[0].mxu0
  %v2861 = vpop.f32.mrb[0].mxu0
  %v2862 = vadd.f32 %v2573, %v2861
  %v2863 = vpop.f32.mrb[0].mxu0
  %2864 = vmatprep.mubr.bf16.mxu0 %v1558
  %2865 = vmatmul.mubr.bf16.gmra.mrb[0].mxu0 %v1557
  %v2866 = vpop.f32.mrb[0].mxu0
  %v2867 = vadd.f32 %v2578, %v2866
  %v2868 = vpop.f32.mrb[0].mxu0
  %v2869 = vpop.f32.mrb[0].mxu0
  %v2870 = vadd.f32 %v2581, %v2869
  %v2871 = vpop.f32.mrb[0].mxu0
  %2872 = vmatprep.mubr.bf16.mxu0 %v1567
  %2873 = vmatmul.mubr.bf16.gmra.mrb[0].mxu0 %v1566
  %v2874 = vpop.f32.mrb[0].mxu0
  %v2875 = vadd.f32 %v2586, %v2874
  %v2876 = vpop.f32.mrb[0].mxu0
  %v2877 = vpop.f32.mrb[0].mxu0
  %v2878 = vadd.f32 %v2589, %v2877
  %v2879 = vpop.f32.mrb[0].mxu0
  %2880 = vmatprep.mubr.bf16.mxu0 %v1576
  %2881 = vmatmul.mubr.bf16.gmra.mrb[0].mxu0 %v1575
  %v2882 = vpop.f32.mrb[0].mxu0
  %v2883 = vadd.f32 %v2594, %v2882
  %v2884 = vpop.f32.mrb[0].mxu0
  %v2885 = vpop.f32.mrb[0].mxu0
  %v2886 = vadd.f32 %v2597, %v2885
  %v2887 = vpop.f32.mrb[0].mxu0
  %2888 = vmatprep.mubr.bf16.mxu0 %v1585
  %2889 = vmatmul.mubr.bf16.gmra.mrb[0].mxu0 %v1584
  %v2890 = vpop.f32.mrb[0].mxu0
  %v2891 = vadd.f32 %v2602, %v2890
  %v2892 = vpop.f32.mrb[0].mxu0
  %v2893 = vpop.f32.mrb[0].mxu0
  %v2894 = vadd.f32 %v2605, %v2893
  %v2895 = vpop.f32.mrb[0].mxu0
  %2896 = vmatprep.mubr.bf16.mxu0 %v1594
  %2897 = vmatmul.mubr.bf16.gmra.mrb[0].mxu0 %v1593
  %v2898 = vpop.f32.mrb[0].mxu0
  %v2899 = vadd.f32 %v2610, %v2898
  %v2900 = vpop.f32.mrb[0].mxu0
  %v2901 = vpop.f32.mrb[0].mxu0
  %v2902 = vadd.f32 %v2613, %v2901
  %v2903 = vpop.f32.mrb[0].mxu0
  %2904 = vmatprep.mubr.bf16.mxu0 %v1603
  %2905 = vmatmul.mubr.bf16.gmra.mrb[0].mxu0 %v1602
  %v2906 = vpop.f32.mrb[0].mxu0
  %v2907 = vadd.f32 %v2618, %v2906
  %v2908 = vpop.f32.mrb[0].mxu0
  %v2909 = vpop.f32.mrb[0].mxu0
  %v2910 = vadd.f32 %v2621, %v2909
  %v2911 = vpop.f32.mrb[0].mxu0
  %2912 = vmatprep.mubr.bf16.mxu0 %v1612
  %2913 = vmatmul.mubr.bf16.gmra.mrb[0].mxu0 %v1611
  %v2914 = vpop.f32.mrb[0].mxu0
  %v2915 = vadd.f32 %v2626, %v2914
  %v2916 = vpop.f32.mrb[0].mxu0
  %v2917 = vpop.f32.mrb[0].mxu0
  %v2918 = vadd.f32 %v2629, %v2917
  %v2919 = vpop.f32.mrb[0].mxu0
  %2920 = vmatprep.mubr.bf16.mxu0 %v1621
  %2921 = vmatmul.mubr.bf16.gmra.mrb[0].mxu0 %v1620
  %v2922 = vpop.f32.mrb[0].mxu0
  %v2923 = vadd.f32 %v2634, %v2922
  %v2924 = vpop.f32.mrb[0].mxu0
  %v2925 = vpop.f32.mrb[0].mxu0
  %v2926 = vadd.f32 %v2637, %v2925
  %v2927 = vpop.f32.mrb[0].mxu0
  %2928 = vmatprep.mubr.bf16.mxu0 %v1630
  %2929 = vmatmul.mubr.bf16.gmra.mrb[0].mxu0 %v1629
  %v2930 = vpop.f32.mrb[0].mxu0
  %v2931 = vadd.f32 %v2642, %v2930
  %v2932 = vpop.f32.mrb[0].mxu0
  %v2933 = vpop.f32.mrb[0].mxu0
  %v2934 = vadd.f32 %v2645, %v2933
  %v2935 = vpop.f32.mrb[0].mxu0
  %2936 = vmatprep.mubr.bf16.mxu0 %v1639
  %2937 = vmatmul.mubr.bf16.gmra.mrb[0].mxu0 %v1638
  %v2938 = vpop.f32.mrb[0].mxu0
  %v2939 = vadd.f32 %v2650, %v2938
  %v2940 = vpop.f32.mrb[0].mxu0
  %v2941 = vpop.f32.mrb[0].mxu0
  %v2942 = vadd.f32 %v2653, %v2941
  %v2943 = vpop.f32.mrb[0].mxu0
  %2944 = vmatprep.mubr.bf16.mxu0 %v1648
  %2945 = vmatmul.mubr.bf16.gmra.mrb[0].mxu0 %v1647
  %v2946 = vpop.f32.mrb[0].mxu0
  %v2947 = vadd.f32 %v2658, %v2946
  %v2948 = vpop.f32.mrb[0].mxu0
  %v2949 = vpop.f32.mrb[0].mxu0
  %v2950 = vadd.f32 %v2661, %v2949
  %v2951 = vpop.f32.mrb[0].mxu0
  %2952 = vmatprep.mubr.bf16.mxu0 %v1657
  %2953 = vmatmul.mubr.bf16.gmra.mrb[0].mxu0 %v1656
  %v2954 = vpop.f32.mrb[0].mxu0
  %v2955 = vadd.f32 %v2666, %v2954
  %v2956 = vpop.f32.mrb[0].mxu0
  %v2957 = vpop.f32.mrb[0].mxu0
  %v2958 = vadd.f32 %v2669, %v2957
  %v2959 = vpop.f32.mrb[0].mxu0
  %2960 = vdwg.mxu0
  %2961 = vmatprep.subr.bf16.mxu0 0
  %2962 = vmatpush1.bf16.msra.mxu0 %v2271
  %2963 = vmatprep.subr.bf16.mxu0 0
  %2964 = vmatpush1.bf16.msra.mxu0 %v2272
  %2965 = vmatprep.subr.bf16.mxu0 0
  %2966 = vmatpush1.bf16.msra.mxu0 %v2273
  %2967 = vmatprep.subr.bf16.mxu0 0
  %2968 = vmatpush1.bf16.msra.mxu0 %v2274
  %2969 = vmatprep.subr.bf16.mxu0 0
  %2970 = vmatpush1.bf16.msra.mxu0 %v2275
  %2971 = vmatprep.subr.bf16.mxu0 0
  %2972 = vmatpush1.bf16.msra.mxu0 %v2276
  %2973 = vmatprep.subr.bf16.mxu0 0
  %2974 = vmatpush1.bf16.msra.mxu0 %v2277
  %2975 = vmatprep.subr.bf16.mxu0 0
  %2976 = vmatpush1.bf16.msra.mxu0 %v2278
  %2977 = vmatprep.subr.bf16.mxu0 0
  %2978 = vmatpush1.bf16.msra.mxu0 %v2279
  %2979 = vmatprep.subr.bf16.mxu0 0
  %2980 = vmatpush1.bf16.msra.mxu0 %v2280
  %2981 = vmatprep.subr.bf16.mxu0 0
  %2982 = vmatpush1.bf16.msra.mxu0 %v2281
  %2983 = vmatprep.subr.bf16.mxu0 0
  %2984 = vmatpush1.bf16.msra.mxu0 %v2282
  %2985 = vmatprep.subr.bf16.mxu0 0
  %2986 = vmatpush1.bf16.msra.mxu0 %v2283
  %2987 = vmatprep.subr.bf16.mxu0 0
  %2988 = vmatpush1.bf16.msra.mxu0 %v2284
  %2989 = vmatprep.subr.bf16.mxu0 0
  %2990 = vmatpush1.bf16.msra.mxu0 %v2285
  %2991 = vmatprep.subr.bf16.mxu0 0
  %2992 = vmatpush1.bf16.msra.mxu0 %v2286
  %2993 = vmatprep.mubr.bf16.mxu0 %v1380
  %2994 = vmatmul.mubr.bf16.gmra.mrb[0].mxu0 %v1379
  %v2995 = vpop.f32.mrb[0].mxu0
  %v2996 = vadd.f32 %v2707, %v2995
  %v2997 = vpop.f32.mrb[0].mxu0
  %v2998 = vpop.f32.mrb[0].mxu0
  %v2999 = vadd.f32 %v2710, %v2998
  %v3000 = vpop.f32.mrb[0].mxu0
  %3001 = vmatprep.mubr.bf16.mxu0 %v1389
  %3002 = vmatmul.mubr.bf16.gmra.mrb[0].mxu0 %v1388
  %v3003 = vpop.f32.mrb[0].mxu0
  %v3004 = vadd.f32 %v2715, %v3003
  %v3005 = vpop.f32.mrb[0].mxu0
  %v3006 = vpop.f32.mrb[0].mxu0
  %v3007 = vadd.f32 %v2718, %v3006
  %v3008 = vpop.f32.mrb[0].mxu0
  %3009 = vmatprep.mubr.bf16.mxu0 %v1398
  %3010 = vmatmul.mubr.bf16.gmra.mrb[0].mxu0 %v1397
  %v3011 = vpop.f32.mrb[0].mxu0
  %v3012 = vadd.f32 %v2723, %v3011
  %v3013 = vpop.f32.mrb[0].mxu0
  %v3014 = vpop.f32.mrb[0].mxu0
  %v3015 = vadd.f32 %v2726, %v3014
  %v3016 = vpop.f32.mrb[0].mxu0
  %3017 = vmatprep.mubr.bf16.mxu0 %v1407
  %3018 = vmatmul.mubr.bf16.gmra.mrb[0].mxu0 %v1406
  %v3019 = vpop.f32.mrb[0].mxu0
  %v3020 = vadd.f32 %v2731, %v3019
  %v3021 = vpop.f32.mrb[0].mxu0
  %v3022 = vpop.f32.mrb[0].mxu0
  %v3023 = vadd.f32 %v2734, %v3022
  %v3024 = vpop.f32.mrb[0].mxu0
  %3025 = vmatprep.mubr.bf16.mxu0 %v1416
  %3026 = vmatmul.mubr.bf16.gmra.mrb[0].mxu0 %v1415
  %v3027 = vpop.f32.mrb[0].mxu0
  %v3028 = vadd.f32 %v2739, %v3027
  %v3029 = vpop.f32.mrb[0].mxu0
  %v3030 = vpop.f32.mrb[0].mxu0
  %v3031 = vadd.f32 %v2742, %v3030
  %v3032 = vpop.f32.mrb[0].mxu0
  %3033 = vmatprep.mubr.bf16.mxu0 %v1425
  %3034 = vmatmul.mubr.bf16.gmra.mrb[0].mxu0 %v1424
  %v3035 = vpop.f32.mrb[0].mxu0
  %v3036 = vadd.f32 %v2747, %v3035
  %v3037 = vpop.f32.mrb[0].mxu0
  %v3038 = vpop.f32.mrb[0].mxu0
  %v3039 = vadd.f32 %v2750, %v3038
  %v3040 = vpop.f32.mrb[0].mxu0
  %3041 = vmatprep.mubr.bf16.mxu0 %v1434
  %3042 = vmatmul.mubr.bf16.gmra.mrb[0].mxu0 %v1433
  %v3043 = vpop.f32.mrb[0].mxu0
  %v3044 = vadd.f32 %v2755, %v3043
  %v3045 = vpop.f32.mrb[0].mxu0
  %v3046 = vpop.f32.mrb[0].mxu0
  %v3047 = vadd.f32 %v2758, %v3046
  %v3048 = vpop.f32.mrb[0].mxu0
  %3049 = vmatprep.mubr.bf16.mxu0 %v1443
  %3050 = vmatmul.mubr.bf16.gmra.mrb[0].mxu0 %v1442
  %v3051 = vpop.f32.mrb[0].mxu0
  %v3052 = vadd.f32 %v2763, %v3051
  %v3053 = vpop.f32.mrb[0].mxu0
  %v3054 = vpop.f32.mrb[0].mxu0
  %v3055 = vadd.f32 %v2766, %v3054
  %v3056 = vpop.f32.mrb[0].mxu0
  %3057 = vmatprep.mubr.bf16.mxu0 %v1452
  %3058 = vmatmul.mubr.bf16.gmra.mrb[0].mxu0 %v1451
  %v3059 = vpop.f32.mrb[0].mxu0
  %v3060 = vadd.f32 %v2771, %v3059
  %v3061 = vpop.f32.mrb[0].mxu0
  %v3062 = vpop.f32.mrb[0].mxu0
  %v3063 = vadd.f32 %v2774, %v3062
  %v3064 = vpop.f32.mrb[0].mxu0
  %3065 = vmatprep.mubr.bf16.mxu0 %v1461
  %3066 = vmatmul.mubr.bf16.gmra.mrb[0].mxu0 %v1460
  %v3067 = vpop.f32.mrb[0].mxu0
  %v3068 = vadd.f32 %v2779, %v3067
  %v3069 = vpop.f32.mrb[0].mxu0
  %v3070 = vpop.f32.mrb[0].mxu0
  %v3071 = vadd.f32 %v2782, %v3070
  %v3072 = vpop.f32.mrb[0].mxu0
  %3073 = vmatprep.mubr.bf16.mxu0 %v1470
  %3074 = vmatmul.mubr.bf16.gmra.mrb[0].mxu0 %v1469
  %v3075 = vpop.f32.mrb[0].mxu0
  %v3076 = vadd.f32 %v2787, %v3075
  %v3077 = vpop.f32.mrb[0].mxu0
  %v3078 = vpop.f32.mrb[0].mxu0
  %v3079 = vadd.f32 %v2790, %v3078
  %v3080 = vpop.f32.mrb[0].mxu0
  %3081 = vmatprep.mubr.bf16.mxu0 %v1479
  %3082 = vmatmul.mubr.bf16.gmra.mrb[0].mxu0 %v1478
  %v3083 = vpop.f32.mrb[0].mxu0
  %v3084 = vadd.f32 %v2795, %v3083
  %v3085 = vpop.f32.mrb[0].mxu0
  %v3086 = vpop.f32.mrb[0].mxu0
  %v3087 = vadd.f32 %v2798, %v3086
  %v3088 = vpop.f32.mrb[0].mxu0
  %3089 = vmatprep.mubr.bf16.mxu0 %v1488
  %3090 = vmatmul.mubr.bf16.gmra.mrb[0].mxu0 %v1487
  %v3091 = vpop.f32.mrb[0].mxu0
  %v3092 = vadd.f32 %v2803, %v3091
  %v3093 = vpop.f32.mrb[0].mxu0
  %v3094 = vpop.f32.mrb[0].mxu0
  %v3095 = vadd.f32 %v2806, %v3094
  %v3096 = vpop.f32.mrb[0].mxu0
  %3097 = vmatprep.mubr.bf16.mxu0 %v1497
  %3098 = vmatmul.mubr.bf16.gmra.mrb[0].mxu0 %v1496
  %v3099 = vpop.f32.mrb[0].mxu0
  %v3100 = vadd.f32 %v2811, %v3099
  %v3101 = vpop.f32.mrb[0].mxu0
  %v3102 = vpop.f32.mrb[0].mxu0
  %v3103 = vadd.f32 %v2814, %v3102
  %v3104 = vpop.f32.mrb[0].mxu0
  %3105 = vmatprep.mubr.bf16.mxu0 %v1506
  %3106 = vmatmul.mubr.bf16.gmra.mrb[0].mxu0 %v1505
  %v3107 = vpop.f32.mrb[0].mxu0
  %v3108 = vadd.f32 %v2819, %v3107
  %v3109 = vpop.f32.mrb[0].mxu0
  %v3110 = vpop.f32.mrb[0].mxu0
  %v3111 = vadd.f32 %v2822, %v3110
  %v3112 = vpop.f32.mrb[0].mxu0
  %3113 = vmatprep.mubr.bf16.mxu0 %v1515
  %3114 = vmatmul.mubr.bf16.gmra.mrb[0].mxu0 %v1514
  %v3115 = vpop.f32.mrb[0].mxu0
  %v3116 = vadd.f32 %v2827, %v3115
  %v3117 = vpop.f32.mrb[0].mxu0
  %v3118 = vpop.f32.mrb[0].mxu0
  %v3119 = vadd.f32 %v2830, %v3118
  %v3120 = vpop.f32.mrb[0].mxu0
  %3121 = vmatprep.mubr.bf16.mxu0 %v1524
  %3122 = vmatmul.mubr.bf16.gmra.mrb[0].mxu0 %v1523
  %v3123 = vpop.f32.mrb[0].mxu0
  %v3124 = vadd.f32 %v2835, %v3123
  %v3125 = vpop.f32.mrb[0].mxu0
  %v3126 = vpop.f32.mrb[0].mxu0
  %v3127 = vadd.f32 %v2838, %v3126
  %v3128 = vpop.f32.mrb[0].mxu0
  %3129 = vmatprep.mubr.bf16.mxu0 %v1533
  %3130 = vmatmul.mubr.bf16.gmra.mrb[0].mxu0 %v1532
  %v3131 = vpop.f32.mrb[0].mxu0
  %v3132 = vadd.f32 %v2843, %v3131
  %v3133 = vpop.f32.mrb[0].mxu0
  %v3134 = vpop.f32.mrb[0].mxu0
  %v3135 = vadd.f32 %v2846, %v3134
  %v3136 = vpop.f32.mrb[0].mxu0
  %3137 = vmatprep.mubr.bf16.mxu0 %v1542
  %3138 = vmatmul.mubr.bf16.gmra.mrb[0].mxu0 %v1541
  %v3139 = vpop.f32.mrb[0].mxu0
  %v3140 = vadd.f32 %v2851, %v3139
  %v3141 = vpop.f32.mrb[0].mxu0
  %v3142 = vpop.f32.mrb[0].mxu0
  %v3143 = vadd.f32 %v2854, %v3142
  %v3144 = vpop.f32.mrb[0].mxu0
  %3145 = vmatprep.mubr.bf16.mxu0 %v1551
  %3146 = vmatmul.mubr.bf16.gmra.mrb[0].mxu0 %v1550
  %v3147 = vpop.f32.mrb[0].mxu0
  %v3148 = vadd.f32 %v2859, %v3147
  %v3149 = vpop.f32.mrb[0].mxu0
  %v3150 = vpop.f32.mrb[0].mxu0
  %v3151 = vadd.f32 %v2862, %v3150
  %v3152 = vpop.f32.mrb[0].mxu0
  %3153 = vmatprep.mubr.bf16.mxu0 %v1560
  %3154 = vmatmul.mubr.bf16.gmra.mrb[0].mxu0 %v1559
  %v3155 = vpop.f32.mrb[0].mxu0
  %v3156 = vadd.f32 %v2867, %v3155
  %v3157 = vpop.f32.mrb[0].mxu0
  %v3158 = vpop.f32.mrb[0].mxu0
  %v3159 = vadd.f32 %v2870, %v3158
  %v3160 = vpop.f32.mrb[0].mxu0
  %3161 = vmatprep.mubr.bf16.mxu0 %v1569
  %3162 = vmatmul.mubr.bf16.gmra.mrb[0].mxu0 %v1568
  %v3163 = vpop.f32.mrb[0].mxu0
  %v3164 = vadd.f32 %v2875, %v3163
  %v3165 = vpop.f32.mrb[0].mxu0
  %v3166 = vpop.f32.mrb[0].mxu0
  %v3167 = vadd.f32 %v2878, %v3166
  %v3168 = vpop.f32.mrb[0].mxu0
  %3169 = vmatprep.mubr.bf16.mxu0 %v1578
  %3170 = vmatmul.mubr.bf16.gmra.mrb[0].mxu0 %v1577
  %v3171 = vpop.f32.mrb[0].mxu0
  %v3172 = vadd.f32 %v2883, %v3171
  %v3173 = vpop.f32.mrb[0].mxu0
  %v3174 = vpop.f32.mrb[0].mxu0
  %v3175 = vadd.f32 %v2886, %v3174
  %v3176 = vpop.f32.mrb[0].mxu0
  %3177 = vmatprep.mubr.bf16.mxu0 %v1587
  %3178 = vmatmul.mubr.bf16.gmra.mrb[0].mxu0 %v1586
  %v3179 = vpop.f32.mrb[0].mxu0
  %v3180 = vadd.f32 %v2891, %v3179
  %v3181 = vpop.f32.mrb[0].mxu0
  %v3182 = vpop.f32.mrb[0].mxu0
  %v3183 = vadd.f32 %v2894, %v3182
  %v3184 = vpop.f32.mrb[0].mxu0
  %3185 = vmatprep.mubr.bf16.mxu0 %v1596
  %3186 = vmatmul.mubr.bf16.gmra.mrb[0].mxu0 %v1595
  %v3187 = vpop.f32.mrb[0].mxu0
  %v3188 = vadd.f32 %v2899, %v3187
  %v3189 = vpop.f32.mrb[0].mxu0
  %v3190 = vpop.f32.mrb[0].mxu0
  %v3191 = vadd.f32 %v2902, %v3190
  %v3192 = vpop.f32.mrb[0].mxu0
  %3193 = vmatprep.mubr.bf16.mxu0 %v1605
  %3194 = vmatmul.mubr.bf16.gmra.mrb[0].mxu0 %v1604
  %v3195 = vpop.f32.mrb[0].mxu0
  %v3196 = vadd.f32 %v2907, %v3195
  %v3197 = vpop.f32.mrb[0].mxu0
  %v3198 = vpop.f32.mrb[0].mxu0
  %v3199 = vadd.f32 %v2910, %v3198
  %v3200 = vpop.f32.mrb[0].mxu0
  %3201 = vmatprep.mubr.bf16.mxu0 %v1614
  %3202 = vmatmul.mubr.bf16.gmra.mrb[0].mxu0 %v1613
  %v3203 = vpop.f32.mrb[0].mxu0
  %v3204 = vadd.f32 %v2915, %v3203
  %v3205 = vpop.f32.mrb[0].mxu0
  %v3206 = vpop.f32.mrb[0].mxu0
  %v3207 = vadd.f32 %v2918, %v3206
  %v3208 = vpop.f32.mrb[0].mxu0
  %3209 = vmatprep.mubr.bf16.mxu0 %v1623
  %3210 = vmatmul.mubr.bf16.gmra.mrb[0].mxu0 %v1622
  %v3211 = vpop.f32.mrb[0].mxu0
  %v3212 = vadd.f32 %v2923, %v3211
  %v3213 = vpop.f32.mrb[0].mxu0
  %v3214 = vpop.f32.mrb[0].mxu0
  %v3215 = vadd.f32 %v2926, %v3214
  %v3216 = vpop.f32.mrb[0].mxu0
  %3217 = vmatprep.mubr.bf16.mxu0 %v1632
  %3218 = vmatmul.mubr.bf16.gmra.mrb[0].mxu0 %v1631
  %v3219 = vpop.f32.mrb[0].mxu0
  %v3220 = vadd.f32 %v2931, %v3219
  %v3221 = vpop.f32.mrb[0].mxu0
  %v3222 = vpop.f32.mrb[0].mxu0
  %v3223 = vadd.f32 %v2934, %v3222
  %v3224 = vpop.f32.mrb[0].mxu0
  %3225 = vmatprep.mubr.bf16.mxu0 %v1641
  %3226 = vmatmul.mubr.bf16.gmra.mrb[0].mxu0 %v1640
  %v3227 = vpop.f32.mrb[0].mxu0
  %v3228 = vadd.f32 %v2939, %v3227
  %v3229 = vpop.f32.mrb[0].mxu0
  %v3230 = vpop.f32.mrb[0].mxu0
  %v3231 = vadd.f32 %v2942, %v3230
  %v3232 = vpop.f32.mrb[0].mxu0
  %3233 = vmatprep.mubr.bf16.mxu0 %v1650
  %3234 = vmatmul.mubr.bf16.gmra.mrb[0].mxu0 %v1649
  %v3235 = vpop.f32.mrb[0].mxu0
  %v3236 = vadd.f32 %v2947, %v3235
  %v3237 = vpop.f32.mrb[0].mxu0
  %v3238 = vpop.f32.mrb[0].mxu0
  %v3239 = vadd.f32 %v2950, %v3238
  %v3240 = vpop.f32.mrb[0].mxu0
  %3241 = vmatprep.mubr.bf16.mxu0 %v1659
  %3242 = vmatmul.mubr.bf16.gmra.mrb[0].mxu0 %v1658
  %v3243 = vpop.f32.mrb[0].mxu0
  %v3244 = vadd.f32 %v2955, %v3243
  %v3245 = vpop.f32.mrb[0].mxu0
  %v3246 = vpop.f32.mrb[0].mxu0
  %v3247 = vadd.f32 %v2958, %v3246
  %v3248 = vpop.f32.mrb[0].mxu0
  %3249 = vdwg.mxu0
  %3250 = vmatprep.subr.bf16.mxu0 0
  %3251 = vmatpush1.bf16.msra.mxu0 %v2287
  %3252 = vmatprep.subr.bf16.mxu0 0
  %3253 = vmatpush1.bf16.msra.mxu0 %v2288
  %3254 = vmatprep.subr.bf16.mxu0 0
  %3255 = vmatpush1.bf16.msra.mxu0 %v2289
  %3256 = vmatprep.subr.bf16.mxu0 0
  %3257 = vmatpush1.bf16.msra.mxu0 %v2290
  %3258 = vmatprep.subr.bf16.mxu0 0
  %3259 = vmatpush1.bf16.msra.mxu0 %v2291
  %3260 = vmatprep.subr.bf16.mxu0 0
  %3261 = vmatpush1.bf16.msra.mxu0 %v2292
  %3262 = vmatprep.subr.bf16.mxu0 0
  %3263 = vmatpush1.bf16.msra.mxu0 %v2293
  %3264 = vmatprep.subr.bf16.mxu0 0
  %3265 = vmatpush1.bf16.msra.mxu0 %v2294
  %3266 = vmatprep.subr.bf16.mxu0 0
  %3267 = vmatpush1.bf16.msra.mxu0 %v2295
  %3268 = vmatprep.subr.bf16.mxu0 0
  %3269 = vmatpush1.bf16.msra.mxu0 %v2296
  %3270 = vmatprep.subr.bf16.mxu0 0
  %3271 = vmatpush1.bf16.msra.mxu0 %v2297
  %3272 = vmatprep.subr.bf16.mxu0 0
  %3273 = vmatpush1.bf16.msra.mxu0 %v2298
  %3274 = vmatprep.subr.bf16.mxu0 0
  %3275 = vmatpush1.bf16.msra.mxu0 %v2299
  %3276 = vmatprep.subr.bf16.mxu0 0
  %3277 = vmatpush1.bf16.msra.mxu0 %v2300
  %3278 = vmatprep.subr.bf16.mxu0 0
  %3279 = vmatpush1.bf16.msra.mxu0 %v2301
  %3280 = vmatprep.subr.bf16.mxu0 0
  %3281 = vmatpush1.bf16.msra.mxu0 %v2302
  %3282 = vmatprep.mubr.bf16.mxu0 %v1382
  %3283 = vmatmul.mubr.bf16.gmra.mrb[0].mxu0 %v1381
  %v3284 = vpop.f32.mrb[0].mxu0
  %v3285 = vadd.f32 %v2996, %v3284
  %v3286 = vpop.f32.mrb[0].mxu0
  %v3287 = vpop.f32.mrb[0].mxu0
  %v3288 = vadd.f32 %v2999, %v3287
  %v3289 = vpop.f32.mrb[0].mxu0
  %3290 = vmatprep.mubr.bf16.mxu0 %v1391
  %3291 = vmatmul.mubr.bf16.gmra.mrb[0].mxu0 %v1390
  %v3292 = vpop.f32.mrb[0].mxu0
  %v3293 = vadd.f32 %v3004, %v3292
  %v3294 = vpop.f32.mrb[0].mxu0
  %v3295 = vpop.f32.mrb[0].mxu0
  %v3296 = vadd.f32 %v3007, %v3295
  %v3297 = vpop.f32.mrb[0].mxu0
  %3298 = vmatprep.mubr.bf16.mxu0 %v1400
  %3299 = vmatmul.mubr.bf16.gmra.mrb[0].mxu0 %v1399
  %v3300 = vpop.f32.mrb[0].mxu0
  %v3301 = vadd.f32 %v3012, %v3300
  %v3302 = vpop.f32.mrb[0].mxu0
  %v3303 = vpop.f32.mrb[0].mxu0
  %v3304 = vadd.f32 %v3015, %v3303
  %v3305 = vpop.f32.mrb[0].mxu0
  %3306 = vmatprep.mubr.bf16.mxu0 %v1409
  %3307 = vmatmul.mubr.bf16.gmra.mrb[0].mxu0 %v1408
  %v3308 = vpop.f32.mrb[0].mxu0
  %v3309 = vadd.f32 %v3020, %v3308
  %v3310 = vpop.f32.mrb[0].mxu0
  %v3311 = vpop.f32.mrb[0].mxu0
  %v3312 = vadd.f32 %v3023, %v3311
  %v3313 = vpop.f32.mrb[0].mxu0
  %3314 = vmatprep.mubr.bf16.mxu0 %v1418
  %3315 = vmatmul.mubr.bf16.gmra.mrb[0].mxu0 %v1417
  %v3316 = vpop.f32.mrb[0].mxu0
  %v3317 = vadd.f32 %v3028, %v3316
  %v3318 = vpop.f32.mrb[0].mxu0
  %v3319 = vpop.f32.mrb[0].mxu0
  %v3320 = vadd.f32 %v3031, %v3319
  %v3321 = vpop.f32.mrb[0].mxu0
  %3322 = vmatprep.mubr.bf16.mxu0 %v1427
  %3323 = vmatmul.mubr.bf16.gmra.mrb[0].mxu0 %v1426
  %v3324 = vpop.f32.mrb[0].mxu0
  %v3325 = vadd.f32 %v3036, %v3324
  %v3326 = vpop.f32.mrb[0].mxu0
  %v3327 = vpop.f32.mrb[0].mxu0
  %v3328 = vadd.f32 %v3039, %v3327
  %v3329 = vpop.f32.mrb[0].mxu0
  %3330 = vmatprep.mubr.bf16.mxu0 %v1436
  %3331 = vmatmul.mubr.bf16.gmra.mrb[0].mxu0 %v1435
  %v3332 = vpop.f32.mrb[0].mxu0
  %v3333 = vadd.f32 %v3044, %v3332
  %v3334 = vpop.f32.mrb[0].mxu0
  %v3335 = vpop.f32.mrb[0].mxu0
  %v3336 = vadd.f32 %v3047, %v3335
  %v3337 = vpop.f32.mrb[0].mxu0
  %3338 = vmatprep.mubr.bf16.mxu0 %v1445
  %3339 = vmatmul.mubr.bf16.gmra.mrb[0].mxu0 %v1444
  %v3340 = vpop.f32.mrb[0].mxu0
  %v3341 = vadd.f32 %v3052, %v3340
  %v3342 = vpop.f32.mrb[0].mxu0
  %v3343 = vpop.f32.mrb[0].mxu0
  %v3344 = vadd.f32 %v3055, %v3343
  %v3345 = vpop.f32.mrb[0].mxu0
  %3346 = vmatprep.mubr.bf16.mxu0 %v1454
  %3347 = vmatmul.mubr.bf16.gmra.mrb[0].mxu0 %v1453
  %v3348 = vpop.f32.mrb[0].mxu0
  %v3349 = vadd.f32 %v3060, %v3348
  %v3350 = vpop.f32.mrb[0].mxu0
  %v3351 = vpop.f32.mrb[0].mxu0
  %v3352 = vadd.f32 %v3063, %v3351
  %v3353 = vpop.f32.mrb[0].mxu0
  %3354 = vmatprep.mubr.bf16.mxu0 %v1463
  %3355 = vmatmul.mubr.bf16.gmra.mrb[0].mxu0 %v1462
  %v3356 = vpop.f32.mrb[0].mxu0
  %v3357 = vadd.f32 %v3068, %v3356
  %v3358 = vpop.f32.mrb[0].mxu0
  %v3359 = vpop.f32.mrb[0].mxu0
  %v3360 = vadd.f32 %v3071, %v3359
  %v3361 = vpop.f32.mrb[0].mxu0
  %3362 = vmatprep.mubr.bf16.mxu0 %v1472
  %3363 = vmatmul.mubr.bf16.gmra.mrb[0].mxu0 %v1471
  %v3364 = vpop.f32.mrb[0].mxu0
  %v3365 = vadd.f32 %v3076, %v3364
  %v3366 = vpop.f32.mrb[0].mxu0
  %v3367 = vpop.f32.mrb[0].mxu0
  %v3368 = vadd.f32 %v3079, %v3367
  %v3369 = vpop.f32.mrb[0].mxu0
  %3370 = vmatprep.mubr.bf16.mxu0 %v1481
  %3371 = vmatmul.mubr.bf16.gmra.mrb[0].mxu0 %v1480
  %v3372 = vpop.f32.mrb[0].mxu0
  %v3373 = vadd.f32 %v3084, %v3372
  %v3374 = vpop.f32.mrb[0].mxu0
  %v3375 = vpop.f32.mrb[0].mxu0
  %v3376 = vadd.f32 %v3087, %v3375
  %v3377 = vpop.f32.mrb[0].mxu0
  %3378 = vmatprep.mubr.bf16.mxu0 %v1490
  %3379 = vmatmul.mubr.bf16.gmra.mrb[0].mxu0 %v1489
  %v3380 = vpop.f32.mrb[0].mxu0
  %v3381 = vadd.f32 %v3092, %v3380
  %v3382 = vpop.f32.mrb[0].mxu0
  %v3383 = vpop.f32.mrb[0].mxu0
  %v3384 = vadd.f32 %v3095, %v3383
  %v3385 = vpop.f32.mrb[0].mxu0
  %3386 = vmatprep.mubr.bf16.mxu0 %v1499
  %3387 = vmatmul.mubr.bf16.gmra.mrb[0].mxu0 %v1498
  %v3388 = vpop.f32.mrb[0].mxu0
  %v3389 = vadd.f32 %v3100, %v3388
  %v3390 = vpop.f32.mrb[0].mxu0
  %v3391 = vpop.f32.mrb[0].mxu0
  %v3392 = vadd.f32 %v3103, %v3391
  %v3393 = vpop.f32.mrb[0].mxu0
  %3394 = vmatprep.mubr.bf16.mxu0 %v1508
  %3395 = vmatmul.mubr.bf16.gmra.mrb[0].mxu0 %v1507
  %v3396 = vpop.f32.mrb[0].mxu0
  %v3397 = vadd.f32 %v3108, %v3396
  %v3398 = vpop.f32.mrb[0].mxu0
  %v3399 = vpop.f32.mrb[0].mxu0
  %v3400 = vadd.f32 %v3111, %v3399
  %v3401 = vpop.f32.mrb[0].mxu0
  %3402 = vmatprep.mubr.bf16.mxu0 %v1517
  %3403 = vmatmul.mubr.bf16.gmra.mrb[0].mxu0 %v1516
  %v3404 = vpop.f32.mrb[0].mxu0
  %v3405 = vadd.f32 %v3116, %v3404
  %v3406 = vpop.f32.mrb[0].mxu0
  %v3407 = vpop.f32.mrb[0].mxu0
  %v3408 = vadd.f32 %v3119, %v3407
  %v3409 = vpop.f32.mrb[0].mxu0
  %3410 = vmatprep.mubr.bf16.mxu0 %v1526
  %3411 = vmatmul.mubr.bf16.gmra.mrb[0].mxu0 %v1525
  %v3412 = vpop.f32.mrb[0].mxu0
  %v3413 = vadd.f32 %v3124, %v3412
  %v3414 = vpop.f32.mrb[0].mxu0
  %v3415 = vpop.f32.mrb[0].mxu0
  %v3416 = vadd.f32 %v3127, %v3415
  %v3417 = vpop.f32.mrb[0].mxu0
  %3418 = vmatprep.mubr.bf16.mxu0 %v1535
  %3419 = vmatmul.mubr.bf16.gmra.mrb[0].mxu0 %v1534
  %v3420 = vpop.f32.mrb[0].mxu0
  %v3421 = vadd.f32 %v3132, %v3420
  %v3422 = vpop.f32.mrb[0].mxu0
  %v3423 = vpop.f32.mrb[0].mxu0
  %v3424 = vadd.f32 %v3135, %v3423
  %v3425 = vpop.f32.mrb[0].mxu0
  %3426 = vmatprep.mubr.bf16.mxu0 %v1544
  %3427 = vmatmul.mubr.bf16.gmra.mrb[0].mxu0 %v1543
  %v3428 = vpop.f32.mrb[0].mxu0
  %v3429 = vadd.f32 %v3140, %v3428
  %v3430 = vpop.f32.mrb[0].mxu0
  %v3431 = vpop.f32.mrb[0].mxu0
  %v3432 = vadd.f32 %v3143, %v3431
  %v3433 = vpop.f32.mrb[0].mxu0
  %3434 = vmatprep.mubr.bf16.mxu0 %v1553
  %3435 = vmatmul.mubr.bf16.gmra.mrb[0].mxu0 %v1552
  %v3436 = vpop.f32.mrb[0].mxu0
  %v3437 = vadd.f32 %v3148, %v3436
  %v3438 = vpop.f32.mrb[0].mxu0
  %v3439 = vpop.f32.mrb[0].mxu0
  %v3440 = vadd.f32 %v3151, %v3439
  %v3441 = vpop.f32.mrb[0].mxu0
  %3442 = vmatprep.mubr.bf16.mxu0 %v1562
  %3443 = vmatmul.mubr.bf16.gmra.mrb[0].mxu0 %v1561
  %v3444 = vpop.f32.mrb[0].mxu0
  %v3445 = vadd.f32 %v3156, %v3444
  %v3446 = vpop.f32.mrb[0].mxu0
  %v3447 = vpop.f32.mrb[0].mxu0
  %v3448 = vadd.f32 %v3159, %v3447
  %v3449 = vpop.f32.mrb[0].mxu0
  %3450 = vmatprep.mubr.bf16.mxu0 %v1571
  %3451 = vmatmul.mubr.bf16.gmra.mrb[0].mxu0 %v1570
  %v3452 = vpop.f32.mrb[0].mxu0
  %v3453 = vadd.f32 %v3164, %v3452
  %v3454 = vpop.f32.mrb[0].mxu0
  %v3455 = vpop.f32.mrb[0].mxu0
  %v3456 = vadd.f32 %v3167, %v3455
  %v3457 = vpop.f32.mrb[0].mxu0
  %3458 = vmatprep.mubr.bf16.mxu0 %v1580
  %3459 = vmatmul.mubr.bf16.gmra.mrb[0].mxu0 %v1579
  %v3460 = vpop.f32.mrb[0].mxu0
  %v3461 = vadd.f32 %v3172, %v3460
  %v3462 = vpop.f32.mrb[0].mxu0
  %v3463 = vpop.f32.mrb[0].mxu0
  %v3464 = vadd.f32 %v3175, %v3463
  %v3465 = vpop.f32.mrb[0].mxu0
  %3466 = vmatprep.mubr.bf16.mxu0 %v1589
  %3467 = vmatmul.mubr.bf16.gmra.mrb[0].mxu0 %v1588
  %v3468 = vpop.f32.mrb[0].mxu0
  %v3469 = vadd.f32 %v3180, %v3468
  %v3470 = vpop.f32.mrb[0].mxu0
  %v3471 = vpop.f32.mrb[0].mxu0
  %v3472 = vadd.f32 %v3183, %v3471
  %v3473 = vpop.f32.mrb[0].mxu0
  %3474 = vmatprep.mubr.bf16.mxu0 %v1598
  %3475 = vmatmul.mubr.bf16.gmra.mrb[0].mxu0 %v1597
  %v3476 = vpop.f32.mrb[0].mxu0
  %v3477 = vadd.f32 %v3188, %v3476
  %v3478 = vpop.f32.mrb[0].mxu0
  %v3479 = vpop.f32.mrb[0].mxu0
  %v3480 = vadd.f32 %v3191, %v3479
  %v3481 = vpop.f32.mrb[0].mxu0
  %3482 = vmatprep.mubr.bf16.mxu0 %v1607
  %3483 = vmatmul.mubr.bf16.gmra.mrb[0].mxu0 %v1606
  %v3484 = vpop.f32.mrb[0].mxu0
  %v3485 = vadd.f32 %v3196, %v3484
  %v3486 = vpop.f32.mrb[0].mxu0
  %v3487 = vpop.f32.mrb[0].mxu0
  %v3488 = vadd.f32 %v3199, %v3487
  %v3489 = vpop.f32.mrb[0].mxu0
  %3490 = vmatprep.mubr.bf16.mxu0 %v1616
  %3491 = vmatmul.mubr.bf16.gmra.mrb[0].mxu0 %v1615
  %v3492 = vpop.f32.mrb[0].mxu0
  %v3493 = vadd.f32 %v3204, %v3492
  %v3494 = vpop.f32.mrb[0].mxu0
  %v3495 = vpop.f32.mrb[0].mxu0
  %v3496 = vadd.f32 %v3207, %v3495
  %v3497 = vpop.f32.mrb[0].mxu0
  %3498 = vmatprep.mubr.bf16.mxu0 %v1625
  %3499 = vmatmul.mubr.bf16.gmra.mrb[0].mxu0 %v1624
  %v3500 = vpop.f32.mrb[0].mxu0
  %v3501 = vadd.f32 %v3212, %v3500
  %v3502 = vpop.f32.mrb[0].mxu0
  %v3503 = vpop.f32.mrb[0].mxu0
  %v3504 = vadd.f32 %v3215, %v3503
  %v3505 = vpop.f32.mrb[0].mxu0
  %3506 = vmatprep.mubr.bf16.mxu0 %v1634
  %3507 = vmatmul.mubr.bf16.gmra.mrb[0].mxu0 %v1633
  %v3508 = vpop.f32.mrb[0].mxu0
  %v3509 = vadd.f32 %v3220, %v3508
  %v3510 = vpop.f32.mrb[0].mxu0
  %v3511 = vpop.f32.mrb[0].mxu0
  %v3512 = vadd.f32 %v3223, %v3511
  %v3513 = vpop.f32.mrb[0].mxu0
  %3514 = vmatprep.mubr.bf16.mxu0 %v1643
  %3515 = vmatmul.mubr.bf16.gmra.mrb[0].mxu0 %v1642
  %v3516 = vpop.f32.mrb[0].mxu0
  %v3517 = vadd.f32 %v3228, %v3516
  %v3518 = vpop.f32.mrb[0].mxu0
  %v3519 = vpop.f32.mrb[0].mxu0
  %v3520 = vadd.f32 %v3231, %v3519
  %v3521 = vpop.f32.mrb[0].mxu0
  %3522 = vmatprep.mubr.bf16.mxu0 %v1652
  %3523 = vmatmul.mubr.bf16.gmra.mrb[0].mxu0 %v1651
  %v3524 = vpop.f32.mrb[0].mxu0
  %v3525 = vadd.f32 %v3236, %v3524
  %v3526 = vpop.f32.mrb[0].mxu0
  %v3527 = vpop.f32.mrb[0].mxu0
  %v3528 = vadd.f32 %v3239, %v3527
  %v3529 = vpop.f32.mrb[0].mxu0
  %3530 = vmatprep.mubr.bf16.mxu0 %v1661
  %3531 = vmatmul.mubr.bf16.gmra.mrb[0].mxu0 %v1660
  %v3532 = vpop.f32.mrb[0].mxu0
  %v3533 = vadd.f32 %v3244, %v3532
  %v3534 = vpop.f32.mrb[0].mxu0
  %v3535 = vpop.f32.mrb[0].mxu0
  %v3536 = vadd.f32 %v3247, %v3535
  %v3537 = vpop.f32.mrb[0].mxu0
  %3538 = vdwg.mxu0
  %3539 = vmatprep.subr.bf16.mxu0 0
  %3540 = vmatpush1.bf16.msra.mxu0 %v2303
  %3541 = vmatprep.subr.bf16.mxu0 0
  %3542 = vmatpush1.bf16.msra.mxu0 %v2304
  %3543 = vmatprep.subr.bf16.mxu0 0
  %3544 = vmatpush1.bf16.msra.mxu0 %v2305
  %3545 = vmatprep.subr.bf16.mxu0 0
  %3546 = vmatpush1.bf16.msra.mxu0 %v2306
  %3547 = vmatprep.subr.bf16.mxu0 0
  %3548 = vmatpush1.bf16.msra.mxu0 %v2307
  %3549 = vmatprep.subr.bf16.mxu0 0
  %3550 = vmatpush1.bf16.msra.mxu0 %v2308
  %3551 = vmatprep.subr.bf16.mxu0 0
  %3552 = vmatpush1.bf16.msra.mxu0 %v2309
  %3553 = vmatprep.subr.bf16.mxu0 0
  %3554 = vmatpush1.bf16.msra.mxu0 %v2310
  %3555 = vmatprep.subr.bf16.mxu0 0
  %3556 = vmatpush1.bf16.msra.mxu0 0
  %3557 = vmatprep.subr.bf16.mxu0 0
  %3558 = vmatpush1.bf16.msra.mxu0 0
  %3559 = vmatprep.subr.bf16.mxu0 0
  %3560 = vmatpush1.bf16.msra.mxu0 0
  %3561 = vmatprep.subr.bf16.mxu0 0
  %3562 = vmatpush1.bf16.msra.mxu0 0
  %3563 = vmatprep.subr.bf16.mxu0 0
  %3564 = vmatpush1.bf16.msra.mxu0 0
  %3565 = vmatprep.subr.bf16.mxu0 0
  %3566 = vmatpush1.bf16.msra.mxu0 0
  %3567 = vmatprep.subr.bf16.mxu0 0
  %3568 = vmatpush1.bf16.msra.mxu0 0
  %3569 = vmatprep.subr.bf16.mxu0 0
  %3570 = vmatpush1.bf16.msra.mxu0 0
  %3571 = vmatprep.mubr.bf16.mxu0 0
  %3572 = vmatmul.mubr.bf16.gmra.mrb[0].mxu0 %v1383
  %v3573 = vpop.f32.mrb[0].mxu0
  %v3574 = vadd.f32 %v3285, %v3573
  %v3575 = vpop.f32.mrb[0].mxu0
  %v3576 = vpop.f32.mrb[0].mxu0
  %v3577 = vadd.f32 %v3288, %v3576
  %v3578 = vpop.f32.mrb[0].mxu0
  %3579 = vmatprep.mubr.bf16.mxu0 0
  %3580 = vmatmul.mubr.bf16.gmra.mrb[0].mxu0 %v1392
  %v3581 = vpop.f32.mrb[0].mxu0
  %v3582 = vadd.f32 %v3293, %v3581
  %v3583 = vpop.f32.mrb[0].mxu0
  %v3584 = vpop.f32.mrb[0].mxu0
  %v3585 = vadd.f32 %v3296, %v3584
  %v3586 = vpop.f32.mrb[0].mxu0
  %3587 = vmatprep.mubr.bf16.mxu0 0
  %3588 = vmatmul.mubr.bf16.gmra.mrb[0].mxu0 %v1401
  %v3589 = vpop.f32.mrb[0].mxu0
  %v3590 = vadd.f32 %v3301, %v3589
  %v3591 = vpop.f32.mrb[0].mxu0
  %v3592 = vpop.f32.mrb[0].mxu0
  %v3593 = vadd.f32 %v3304, %v3592
  %v3594 = vpop.f32.mrb[0].mxu0
  %3595 = vmatprep.mubr.bf16.mxu0 0
  %3596 = vmatmul.mubr.bf16.gmra.mrb[0].mxu0 %v1410
  %v3597 = vpop.f32.mrb[0].mxu0
  %v3598 = vadd.f32 %v3309, %v3597
  %v3599 = vpop.f32.mrb[0].mxu0
  %v3600 = vpop.f32.mrb[0].mxu0
  %v3601 = vadd.f32 %v3312, %v3600
  %v3602 = vpop.f32.mrb[0].mxu0
  %3603 = vmatprep.mubr.bf16.mxu0 0
  %3604 = vmatmul.mubr.bf16.gmra.mrb[0].mxu0 %v1419
  %v3605 = vpop.f32.mrb[0].mxu0
  %v3606 = vadd.f32 %v3317, %v3605
  %v3607 = vpop.f32.mrb[0].mxu0
  %v3608 = vpop.f32.mrb[0].mxu0
  %v3609 = vadd.f32 %v3320, %v3608
  %v3610 = vpop.f32.mrb[0].mxu0
  %3611 = vmatprep.mubr.bf16.mxu0 0
  %3612 = vmatmul.mubr.bf16.gmra.mrb[0].mxu0 %v1428
  %v3613 = vpop.f32.mrb[0].mxu0
  %v3614 = vadd.f32 %v3325, %v3613
  %v3615 = vpop.f32.mrb[0].mxu0
  %v3616 = vpop.f32.mrb[0].mxu0
  %v3617 = vadd.f32 %v3328, %v3616
  %v3618 = vpop.f32.mrb[0].mxu0
  %3619 = vmatprep.mubr.bf16.mxu0 0
  %3620 = vmatmul.mubr.bf16.gmra.mrb[0].mxu0 %v1437
  %v3621 = vpop.f32.mrb[0].mxu0
  %v3622 = vadd.f32 %v3333, %v3621
  %v3623 = vpop.f32.mrb[0].mxu0
  %v3624 = vpop.f32.mrb[0].mxu0
  %v3625 = vadd.f32 %v3336, %v3624
  %v3626 = vpop.f32.mrb[0].mxu0
  %3627 = vmatprep.mubr.bf16.mxu0 0
  %3628 = vmatmul.mubr.bf16.gmra.mrb[0].mxu0 %v1446
  %v3629 = vpop.f32.mrb[0].mxu0
  %v3630 = vadd.f32 %v3341, %v3629
  %v3631 = vpop.f32.mrb[0].mxu0
  %v3632 = vpop.f32.mrb[0].mxu0
  %v3633 = vadd.f32 %v3344, %v3632
  %v3634 = vpop.f32.mrb[0].mxu0
  %3635 = vmatprep.mubr.bf16.mxu0 0
  %3636 = vmatmul.mubr.bf16.gmra.mrb[0].mxu0 %v1455
  %v3637 = vpop.f32.mrb[0].mxu0
  %v3638 = vadd.f32 %v3349, %v3637
  %v3639 = vpop.f32.mrb[0].mxu0
  %v3640 = vpop.f32.mrb[0].mxu0
  %v3641 = vadd.f32 %v3352, %v3640
  %v3642 = vpop.f32.mrb[0].mxu0
  %3643 = vmatprep.mubr.bf16.mxu0 0
  %3644 = vmatmul.mubr.bf16.gmra.mrb[0].mxu0 %v1464
  %v3645 = vpop.f32.mrb[0].mxu0
  %v3646 = vadd.f32 %v3357, %v3645
  %v3647 = vpop.f32.mrb[0].mxu0
  %v3648 = vpop.f32.mrb[0].mxu0
  %v3649 = vadd.f32 %v3360, %v3648
  %v3650 = vpop.f32.mrb[0].mxu0
  %3651 = vmatprep.mubr.bf16.mxu0 0
  %3652 = vmatmul.mubr.bf16.gmra.mrb[0].mxu0 %v1473
  %v3653 = vpop.f32.mrb[0].mxu0
  %v3654 = vadd.f32 %v3365, %v3653
  %v3655 = vpop.f32.mrb[0].mxu0
  %v3656 = vpop.f32.mrb[0].mxu0
  %v3657 = vadd.f32 %v3368, %v3656
  %v3658 = vpop.f32.mrb[0].mxu0
  %3659 = vmatprep.mubr.bf16.mxu0 0
  %3660 = vmatmul.mubr.bf16.gmra.mrb[0].mxu0 %v1482
  %v3661 = vpop.f32.mrb[0].mxu0
  %v3662 = vadd.f32 %v3373, %v3661
  %v3663 = vpop.f32.mrb[0].mxu0
  %v3664 = vpop.f32.mrb[0].mxu0
  %v3665 = vadd.f32 %v3376, %v3664
  %v3666 = vpop.f32.mrb[0].mxu0
  %3667 = vmatprep.mubr.bf16.mxu0 0
  %3668 = vmatmul.mubr.bf16.gmra.mrb[0].mxu0 %v1491
  %v3669 = vpop.f32.mrb[0].mxu0
  %v3670 = vadd.f32 %v3381, %v3669
  %v3671 = vpop.f32.mrb[0].mxu0
  %v3672 = vpop.f32.mrb[0].mxu0
  %v3673 = vadd.f32 %v3384, %v3672
  %v3674 = vpop.f32.mrb[0].mxu0
  %3675 = vmatprep.mubr.bf16.mxu0 0
  %3676 = vmatmul.mubr.bf16.gmra.mrb[0].mxu0 %v1500
  %v3677 = vpop.f32.mrb[0].mxu0
  %v3678 = vadd.f32 %v3389, %v3677
  %v3679 = vpop.f32.mrb[0].mxu0
  %v3680 = vpop.f32.mrb[0].mxu0
  %v3681 = vadd.f32 %v3392, %v3680
  %v3682 = vpop.f32.mrb[0].mxu0
  %3683 = vmatprep.mubr.bf16.mxu0 0
  %3684 = vmatmul.mubr.bf16.gmra.mrb[0].mxu0 %v1509
  %v3685 = vpop.f32.mrb[0].mxu0
  %v3686 = vadd.f32 %v3397, %v3685
  %v3687 = vpop.f32.mrb[0].mxu0
  %v3688 = vpop.f32.mrb[0].mxu0
  %v3689 = vadd.f32 %v3400, %v3688
  %v3690 = vpop.f32.mrb[0].mxu0
  %3691 = vmatprep.mubr.bf16.mxu0 0
  %3692 = vmatmul.mubr.bf16.gmra.mrb[0].mxu0 %v1518
  %v3693 = vpop.f32.mrb[0].mxu0
  %v3694 = vadd.f32 %v3405, %v3693
  %v3695 = vpop.f32.mrb[0].mxu0
  %v3696 = vpop.f32.mrb[0].mxu0
  %v3697 = vadd.f32 %v3408, %v3696
  %v3698 = vpop.f32.mrb[0].mxu0
  %3699 = vmatprep.mubr.bf16.mxu0 0
  %3700 = vmatmul.mubr.bf16.gmra.mrb[0].mxu0 %v1527
  %v3701 = vpop.f32.mrb[0].mxu0
  %v3702 = vadd.f32 %v3413, %v3701
  %v3703 = vpop.f32.mrb[0].mxu0
  %v3704 = vpop.f32.mrb[0].mxu0
  %v3705 = vadd.f32 %v3416, %v3704
  %v3706 = vpop.f32.mrb[0].mxu0
  %3707 = vmatprep.mubr.bf16.mxu0 0
  %3708 = vmatmul.mubr.bf16.gmra.mrb[0].mxu0 %v1536
  %v3709 = vpop.f32.mrb[0].mxu0
  %v3710 = vadd.f32 %v3421, %v3709
  %v3711 = vpop.f32.mrb[0].mxu0
  %v3712 = vpop.f32.mrb[0].mxu0
  %v3713 = vadd.f32 %v3424, %v3712
  %v3714 = vpop.f32.mrb[0].mxu0
  %3715 = vmatprep.mubr.bf16.mxu0 0
  %3716 = vmatmul.mubr.bf16.gmra.mrb[0].mxu0 %v1545
  %v3717 = vpop.f32.mrb[0].mxu0
  %v3718 = vadd.f32 %v3429, %v3717
  %v3719 = vpop.f32.mrb[0].mxu0
  %v3720 = vpop.f32.mrb[0].mxu0
  %v3721 = vadd.f32 %v3432, %v3720
  %v3722 = vpop.f32.mrb[0].mxu0
  %3723 = vmatprep.mubr.bf16.mxu0 0
  %3724 = vmatmul.mubr.bf16.gmra.mrb[0].mxu0 %v1554
  %v3725 = vpop.f32.mrb[0].mxu0
  %v3726 = vadd.f32 %v3437, %v3725
  %v3727 = vpop.f32.mrb[0].mxu0
  %v3728 = vpop.f32.mrb[0].mxu0
  %v3729 = vadd.f32 %v3440, %v3728
  %v3730 = vpop.f32.mrb[0].mxu0
  %3731 = vmatprep.mubr.bf16.mxu0 0
  %3732 = vmatmul.mubr.bf16.gmra.mrb[0].mxu0 %v1563
  %v3733 = vpop.f32.mrb[0].mxu0
  %v3734 = vadd.f32 %v3445, %v3733
  %v3735 = vpop.f32.mrb[0].mxu0
  %v3736 = vpop.f32.mrb[0].mxu0
  %v3737 = vadd.f32 %v3448, %v3736
  %v3738 = vpop.f32.mrb[0].mxu0
  %3739 = vmatprep.mubr.bf16.mxu0 0
  %3740 = vmatmul.mubr.bf16.gmra.mrb[0].mxu0 %v1572
  %v3741 = vpop.f32.mrb[0].mxu0
  %v3742 = vadd.f32 %v3453, %v3741
  %v3743 = vpop.f32.mrb[0].mxu0
  %v3744 = vpop.f32.mrb[0].mxu0
  %v3745 = vadd.f32 %v3456, %v3744
  %v3746 = vpop.f32.mrb[0].mxu0
  %3747 = vmatprep.mubr.bf16.mxu0 0
  %3748 = vmatmul.mubr.bf16.gmra.mrb[0].mxu0 %v1581
  %v3749 = vpop.f32.mrb[0].mxu0
  %v3750 = vadd.f32 %v3461, %v3749
  %v3751 = vpop.f32.mrb[0].mxu0
  %v3752 = vpop.f32.mrb[0].mxu0
  %v3753 = vadd.f32 %v3464, %v3752
  %v3754 = vpop.f32.mrb[0].mxu0
  %3755 = vmatprep.mubr.bf16.mxu0 0
  %3756 = vmatmul.mubr.bf16.gmra.mrb[0].mxu0 %v1590
  %v3757 = vpop.f32.mrb[0].mxu0
  %v3758 = vadd.f32 %v3469, %v3757
  %v3759 = vpop.f32.mrb[0].mxu0
  %v3760 = vpop.f32.mrb[0].mxu0
  %v3761 = vadd.f32 %v3472, %v3760
  %v3762 = vpop.f32.mrb[0].mxu0
  %3763 = vmatprep.mubr.bf16.mxu0 0
  %3764 = vmatmul.mubr.bf16.gmra.mrb[0].mxu0 %v1599
  %v3765 = vpop.f32.mrb[0].mxu0
  %v3766 = vadd.f32 %v3477, %v3765
  %v3767 = vpop.f32.mrb[0].mxu0
  %v3768 = vpop.f32.mrb[0].mxu0
  %v3769 = vadd.f32 %v3480, %v3768
  %v3770 = vpop.f32.mrb[0].mxu0
  %3771 = vmatprep.mubr.bf16.mxu0 0
  %3772 = vmatmul.mubr.bf16.gmra.mrb[0].mxu0 %v1608
  %v3773 = vpop.f32.mrb[0].mxu0
  %v3774 = vadd.f32 %v3485, %v3773
  %v3775 = vpop.f32.mrb[0].mxu0
  %v3776 = vpop.f32.mrb[0].mxu0
  %v3777 = vadd.f32 %v3488, %v3776
  %v3778 = vpop.f32.mrb[0].mxu0
  %3779 = vmatprep.mubr.bf16.mxu0 0
  %3780 = vmatmul.mubr.bf16.gmra.mrb[0].mxu0 %v1617
  %v3781 = vpop.f32.mrb[0].mxu0
  %v3782 = vadd.f32 %v3493, %v3781
  %v3783 = vpop.f32.mrb[0].mxu0
  %v3784 = vpop.f32.mrb[0].mxu0
  %v3785 = vadd.f32 %v3496, %v3784
  %v3786 = vpop.f32.mrb[0].mxu0
  %3787 = vmatprep.mubr.bf16.mxu0 0
  %3788 = vmatmul.mubr.bf16.gmra.mrb[0].mxu0 %v1626
  %v3789 = vpop.f32.mrb[0].mxu0
  %v3790 = vadd.f32 %v3501, %v3789
  %v3791 = vpop.f32.mrb[0].mxu0
  %v3792 = vpop.f32.mrb[0].mxu0
  %v3793 = vadd.f32 %v3504, %v3792
  %v3794 = vpop.f32.mrb[0].mxu0
  %3795 = vmatprep.mubr.bf16.mxu0 0
  %3796 = vmatmul.mubr.bf16.gmra.mrb[0].mxu0 %v1635
  %v3797 = vpop.f32.mrb[0].mxu0
  %v3798 = vadd.f32 %v3509, %v3797
  %v3799 = vpop.f32.mrb[0].mxu0
  %v3800 = vpop.f32.mrb[0].mxu0
  %v3801 = vadd.f32 %v3512, %v3800
  %v3802 = vpop.f32.mrb[0].mxu0
  %3803 = vmatprep.mubr.bf16.mxu0 0
  %3804 = vmatmul.mubr.bf16.gmra.mrb[0].mxu0 %v1644
  %v3805 = vpop.f32.mrb[0].mxu0
  %v3806 = vadd.f32 %v3517, %v3805
  %v3807 = vpop.f32.mrb[0].mxu0
  %v3808 = vpop.f32.mrb[0].mxu0
  %v3809 = vadd.f32 %v3520, %v3808
  %v3810 = vpop.f32.mrb[0].mxu0
  %3811 = vmatprep.mubr.bf16.mxu0 0
  %3812 = vmatmul.mubr.bf16.gmra.mrb[0].mxu0 %v1653
  %v3813 = vpop.f32.mrb[0].mxu0
  %v3814 = vadd.f32 %v3525, %v3813
  %v3815 = vpop.f32.mrb[0].mxu0
  %v3816 = vpop.f32.mrb[0].mxu0
  %v3817 = vadd.f32 %v3528, %v3816
  %v3818 = vpop.f32.mrb[0].mxu0
  %3819 = vmatprep.mubr.bf16.mxu0 0
  %3820 = vmatmul.mubr.bf16.gmra.mrb[0].mxu0 %v1662
  %v3821 = vpop.f32.mrb[0].mxu0
  %v3822 = vadd.f32 %v3533, %v3821
  %v3823 = vpop.f32.mrb[0].mxu0
  %v3824 = vpop.f32.mrb[0].mxu0
  %v3825 = vadd.f32 %v3536, %v3824
  %v3826 = vpop.f32.mrb[0].mxu0
  %3827 = vdwg.mxu0
  %v3828 = vld [vmem:[%s2] sm:$0x1]
  %v3829 = vlaneseq
  %v3830 = vshrl.u32 %v3829, 7
  %v3831 = vsub.s32 0, %v3830
  %v3832 = vrot.slane %v3828, %v3831
  %v3833 = vmul.f32 %v3574, %v3832
  %v3834 = vmul.f32 %v3577, %v3832
  %v3835 = vmul.f32 %v3582, %v3832
  %v3836 = vmul.f32 %v3585, %v3832
  %v3837 = vmul.f32 %v3590, %v3832
  %v3838 = vmul.f32 %v3593, %v3832
  %v3839 = vmul.f32 %v3598, %v3832
  %v3840 = vmul.f32 %v3601, %v3832
  %v3841 = vmul.f32 %v3606, %v3832
  %v3842 = vmul.f32 %v3609, %v3832
  %v3843 = vmul.f32 %v3614, %v3832
  %v3844 = vmul.f32 %v3617, %v3832
  %v3845 = vmul.f32 %v3622, %v3832
  %v3846 = vmul.f32 %v3625, %v3832
  %v3847 = vmul.f32 %v3630, %v3832
  %v3848 = vmul.f32 %v3633, %v3832
  %v3849 = vmul.f32 %v3638, %v3832
  %v3850 = vmul.f32 %v3641, %v3832
  %v3851 = vmul.f32 %v3646, %v3832
  %v3852 = vmul.f32 %v3649, %v3832
  %v3853 = vmul.f32 %v3654, %v3832
  %v3854 = vmul.f32 %v3657, %v3832
  %v3855 = vmul.f32 %v3662, %v3832
  %v3856 = vmul.f32 %v3665, %v3832
  %v3857 = vmul.f32 %v3670, %v3832
  %v3858 = vmul.f32 %v3673, %v3832
  %v3859 = vmul.f32 %v3678, %v3832
  %v3860 = vmul.f32 %v3681, %v3832
  %v3861 = vmul.f32 %v3686, %v3832
  %v3862 = vmul.f32 %v3689, %v3832
  %v3863 = vmul.f32 %v3694, %v3832
  %v3864 = vmul.f32 %v3697, %v3832
  %v3865 = vmul.f32 %v3702, %v3832
  %v3866 = vmul.f32 %v3705, %v3832
  %v3867 = vmul.f32 %v3710, %v3832
  %v3868 = vmul.f32 %v3713, %v3832
  %v3869 = vmul.f32 %v3718, %v3832
  %v3870 = vmul.f32 %v3721, %v3832
  %v3871 = vmul.f32 %v3726, %v3832
  %v3872 = vmul.f32 %v3729, %v3832
  %v3873 = vmul.f32 %v3734, %v3832
  %v3874 = vmul.f32 %v3737, %v3832
  %v3875 = vmul.f32 %v3742, %v3832
  %v3876 = vmul.f32 %v3745, %v3832
  %v3877 = vmul.f32 %v3750, %v3832
  %v3878 = vmul.f32 %v3753, %v3832
  %v3879 = vmul.f32 %v3758, %v3832
  %v3880 = vmul.f32 %v3761, %v3832
  %v3881 = vmul.f32 %v3766, %v3832
  %v3882 = vmul.f32 %v3769, %v3832
  %v3883 = vmul.f32 %v3774, %v3832
  %v3884 = vmul.f32 %v3777, %v3832
  %v3885 = vmul.f32 %v3782, %v3832
  %v3886 = vmul.f32 %v3785, %v3832
  %v3887 = vmul.f32 %v3790, %v3832
  %v3888 = vmul.f32 %v3793, %v3832
  %v3889 = vmul.f32 %v3798, %v3832
  %v3890 = vmul.f32 %v3801, %v3832
  %v3891 = vmul.f32 %v3806, %v3832
  %v3892 = vmul.f32 %v3809, %v3832
  %v3893 = vmul.f32 %v3814, %v3832
  %v3894 = vmul.f32 %v3817, %v3832
  %v3895 = vmul.f32 %v3822, %v3832
  %v3896 = vmul.f32 %v3825, %v3832
  %v3897 = vld [vmem:[%s2 + $0x1] sm:$0x1]
  %v3898 = vlaneseq
  %v3899 = vshrl.u32 %v3898, 7
  %v3900 = vsub.s32 0, %v3899
  %v3901 = vrot.slane %v3897, %v3900
  %v3902 = vadd.f32 %v3833, %v3901
  %v3903 = vadd.f32 %v3834, %v3901
  %v3904 = vadd.f32 %v3835, %v3901
  %v3905 = vadd.f32 %v3836, %v3901
  %v3906 = vadd.f32 %v3837, %v3901
  %v3907 = vadd.f32 %v3838, %v3901
  %v3908 = vadd.f32 %v3839, %v3901
  %v3909 = vadd.f32 %v3840, %v3901
  %v3910 = vadd.f32 %v3841, %v3901
  %v3911 = vadd.f32 %v3842, %v3901
  %v3912 = vadd.f32 %v3843, %v3901
  %v3913 = vadd.f32 %v3844, %v3901
  %v3914 = vadd.f32 %v3845, %v3901
  %v3915 = vadd.f32 %v3846, %v3901
  %v3916 = vadd.f32 %v3847, %v3901
  %v3917 = vadd.f32 %v3848, %v3901
  %v3918 = vadd.f32 %v3849, %v3901
  %v3919 = vadd.f32 %v3850, %v3901
  %v3920 = vadd.f32 %v3851, %v3901
  %v3921 = vadd.f32 %v3852, %v3901
  %v3922 = vadd.f32 %v3853, %v3901
  %v3923 = vadd.f32 %v3854, %v3901
  %v3924 = vadd.f32 %v3855, %v3901
  %v3925 = vadd.f32 %v3856, %v3901
  %v3926 = vadd.f32 %v3857, %v3901
  %v3927 = vadd.f32 %v3858, %v3901
  %v3928 = vadd.f32 %v3859, %v3901
  %v3929 = vadd.f32 %v3860, %v3901
  %v3930 = vadd.f32 %v3861, %v3901
  %v3931 = vadd.f32 %v3862, %v3901
  %v3932 = vadd.f32 %v3863, %v3901
  %v3933 = vadd.f32 %v3864, %v3901
  %v3934 = vadd.f32 %v3865, %v3901
  %v3935 = vadd.f32 %v3866, %v3901
  %v3936 = vadd.f32 %v3867, %v3901
  %v3937 = vadd.f32 %v3868, %v3901
  %v3938 = vadd.f32 %v3869, %v3901
  %v3939 = vadd.f32 %v3870, %v3901
  %v3940 = vadd.f32 %v3871, %v3901
  %v3941 = vadd.f32 %v3872, %v3901
  %v3942 = vadd.f32 %v3873, %v3901
  %v3943 = vadd.f32 %v3874, %v3901
  %v3944 = vadd.f32 %v3875, %v3901
  %v3945 = vadd.f32 %v3876, %v3901
  %v3946 = vadd.f32 %v3877, %v3901
  %v3947 = vadd.f32 %v3878, %v3901
  %v3948 = vadd.f32 %v3879, %v3901
  %v3949 = vadd.f32 %v3880, %v3901
  %v3950 = vadd.f32 %v3881, %v3901
  %v3951 = vadd.f32 %v3882, %v3901
  %v3952 = vadd.f32 %v3883, %v3901
  %v3953 = vadd.f32 %v3884, %v3901
  %v3954 = vadd.f32 %v3885, %v3901
  %v3955 = vadd.f32 %v3886, %v3901
  %v3956 = vadd.f32 %v3887, %v3901
  %v3957 = vadd.f32 %v3888, %v3901
  %v3958 = vadd.f32 %v3889, %v3901
  %v3959 = vadd.f32 %v3890, %v3901
  %v3960 = vadd.f32 %v3891, %v3901
  %v3961 = vadd.f32 %v3892, %v3901
  %v3962 = vadd.f32 %v3893, %v3901
  %v3963 = vadd.f32 %v3894, %v3901
  %v3964 = vadd.f32 %v3895, %v3901
  %v3965 = vadd.f32 %v3896, %v3901
  %3966 = vst [vmem:[%s3] sm:$0xff] %v3902
  %3967 = vst [vmem:[%s3 + $0x8] sm:$0xff] %v3903
  %3968 = vst [vmem:[%s3 + $0x10] sm:$0xff] %v3904
  %3969 = vst [vmem:[%s3 + $0x18] sm:$0xff] %v3905
  %3970 = vst [vmem:[%s3 + $0x20] sm:$0xff] %v3906
  %3971 = vst [vmem:[%s3 + $0x28] sm:$0xff] %v3907
  %3972 = vst [vmem:[%s3 + $0x30] sm:$0xff] %v3908
  %3973 = vst [vmem:[%s3 + $0x38] sm:$0xff] %v3909
  %3974 = vst [vmem:[%s3 + $0x40] sm:$0xff] %v3910
  %3975 = vst [vmem:[%s3 + $0x48] sm:$0xff] %v3911
  %3976 = vst [vmem:[%s3 + $0x50] sm:$0xff] %v3912
  %3977 = vst [vmem:[%s3 + $0x58] sm:$0xff] %v3913
  %3978 = vst [vmem:[%s3 + $0x60] sm:$0xff] %v3914
  %3979 = vst [vmem:[%s3 + $0x68] sm:$0xff] %v3915
  %3980 = vst [vmem:[%s3 + $0x70] sm:$0xff] %v3916
  %3981 = vst [vmem:[%s3 + $0x78] sm:$0xff] %v3917
  %3982 = vst [vmem:[%s3 + $0x80] sm:$0xff] %v3918
  %3983 = vst [vmem:[%s3 + $0x88] sm:$0xff] %v3919
  %3984 = vst [vmem:[%s3 + $0x90] sm:$0xff] %v3920
  %3985 = vst [vmem:[%s3 + $0x98] sm:$0xff] %v3921
  %3986 = vst [vmem:[%s3 + $0xa0] sm:$0xff] %v3922
  %3987 = vst [vmem:[%s3 + $0xa8] sm:$0xff] %v3923
  %3988 = vst [vmem:[%s3 + $0xb0] sm:$0xff] %v3924
  %3989 = vst [vmem:[%s3 + $0xb8] sm:$0xff] %v3925
  %3990 = vst [vmem:[%s3 + $0xc0] sm:$0xff] %v3926
  %3991 = vst [vmem:[%s3 + $0xc8] sm:$0xff] %v3927
  %3992 = vst [vmem:[%s3 + $0xd0] sm:$0xff] %v3928
  %3993 = vst [vmem:[%s3 + $0xd8] sm:$0xff] %v3929
  %3994 = vst [vmem:[%s3 + $0xe0] sm:$0xff] %v3930
  %3995 = vst [vmem:[%s3 + $0xe8] sm:$0xff] %v3931
  %3996 = vst [vmem:[%s3 + $0xf0] sm:$0xff] %v3932
  %3997 = vst [vmem:[%s3 + $0xf8] sm:$0xff] %v3933
  %3998 = vst [vmem:[%s3 + $0x100] sm:$0xff] %v3934
  %3999 = vst [vmem:[%s3 + $0x108] sm:$0xff] %v3935
  %4000 = vst [vmem:[%s3 + $0x110] sm:$0xff] %v3936
  %4001 = vst [vmem:[%s3 + $0x118] sm:$0xff] %v3937
  %4002 = vst [vmem:[%s3 + $0x120] sm:$0xff] %v3938
  %4003 = vst [vmem:[%s3 + $0x128] sm:$0xff] %v3939
  %4004 = vst [vmem:[%s3 + $0x130] sm:$0xff] %v3940
  %4005 = vst [vmem:[%s3 + $0x138] sm:$0xff] %v3941
  %4006 = vst [vmem:[%s3 + $0x140] sm:$0xff] %v3942
  %4007 = vst [vmem:[%s3 + $0x148] sm:$0xff] %v3943
  %4008 = vst [vmem:[%s3 + $0x150] sm:$0xff] %v3944
  %4009 = vst [vmem:[%s3 + $0x158] sm:$0xff] %v3945
  %4010 = vst [vmem:[%s3 + $0x160] sm:$0xff] %v3946
  %4011 = vst [vmem:[%s3 + $0x168] sm:$0xff] %v3947
  %4012 = vst [vmem:[%s3 + $0x170] sm:$0xff] %v3948
  %4013 = vst [vmem:[%s3 + $0x178] sm:$0xff] %v3949
  %4014 = vst [vmem:[%s3 + $0x180] sm:$0xff] %v3950
  %4015 = vst [vmem:[%s3 + $0x188] sm:$0xff] %v3951
  %4016 = vst [vmem:[%s3 + $0x190] sm:$0xff] %v3952
  %4017 = vst [vmem:[%s3 + $0x198] sm:$0xff] %v3953
  %4018 = vst [vmem:[%s3 + $0x1a0] sm:$0xff] %v3954
  %4019 = vst [vmem:[%s3 + $0x1a8] sm:$0xff] %v3955
  %4020 = vst [vmem:[%s3 + $0x1b0] sm:$0xff] %v3956
  %4021 = vst [vmem:[%s3 + $0x1b8] sm:$0xff] %v3957
  %4022 = vst [vmem:[%s3 + $0x1c0] sm:$0xff] %v3958
  %4023 = vst [vmem:[%s3 + $0x1c8] sm:$0xff] %v3959
  %4024 = vst [vmem:[%s3 + $0x1d0] sm:$0xff] %v3960
  %4025 = vst [vmem:[%s3 + $0x1d8] sm:$0xff] %v3961
  %4026 = vst [vmem:[%s3 + $0x1e0] sm:$0xff] %v3962
  %4027 = vst [vmem:[%s3 + $0x1e8] sm:$0xff] %v3963
  %4028 = vst [vmem:[%s3 + $0x1f0] sm:$0xff] %v3964
  %4029 = vst [vmem:[%s3 + $0x1f8] sm:$0xff] %v3965
  // Predicated region
  $region14: #{implicit_network_forward.5} parent=0 // pred_check
    _
  $region15: #{implicit_network_forward.5} parent=0 // pred_check_branch
    %4031 = sbr.rel (0) target = $region17
  $region16: #{implicit_network_forward.5} parent=0 // pred_region
    _
  $region17: #{implicit_network_forward.5} parent=0 // pred_fallthru
    _
  // Predicated region
  $region18: #{implicit_network_forward.5} parent=0 // pred_check
    _
  $region19: #{implicit_network_forward.5} parent=0 // pred_check_branch
    %4033 = sbr.rel (0) target = $region21
  $region20: #{implicit_network_forward.5} parent=0 // pred_region
    _
  $region21: #{implicit_network_forward.5} parent=0 // pred_fallthru
    _

</llo_original>
